<compile_context>
chip_gen: v5e
topology: v5e:2x2
jax: 0.10.0
libtpu: 0.0.40
codegen_flags: <defaults>
</compile_context>

<pallas_src>
import functools

import jax
import jax.numpy as jnp
from jax.experimental import pallas as pl
from jax.experimental.pallas import tpu as pltpu

NUM_GROUPS = 2          # GroupNorm(2, C), batchn=False path of the module
GN_EPS = 1e-5
MXU_DTYPE = jnp.bfloat16  # MXU operand dtype (accumulation stays float32)


# ----------------------------------------------------------------------------
# in-kernel helpers (traced inside the Pallas kernels)
# ----------------------------------------------------------------------------
def _pad_hw(x):
    """Zero-pad H and W by 1 on each side, entirely in VMEM. x: (1, H, W, C)."""
    n, h, w, c = x.shape
    zr = jnp.zeros((n, 1, w, c), x.dtype)
    x = jnp.concatenate([zr, x, zr], axis=1)
    zc = jnp.zeros((n, h + 2, 1, c), x.dtype)
    return jnp.concatenate([zc, x, zc], axis=2)


def _conv3x3_patches(x):
    """3x3 / stride-1 / pad-1 im2col: (1, H, W, C) -> (H*W, 9*C) bf16 slab."""
    n, h, w, c = x.shape
    xp = _pad_hw(x)
    cols = [xp[:, kh:kh + h, kw:kw + w, :]
            for kh in range(3) for kw in range(3)]
    slab = jnp.concatenate(cols, axis=-1)            # (1, H, W, 9C)
    return slab.reshape(h * w, 9 * c).astype(MXU_DTYPE)


def _group_norm(y, gamma, beta):
    """GroupNorm(NUM_GROUPS) over one sample. y: (P, C) f32, gamma/beta: (1, C)."""
    p, c = y.shape
    cg = c // NUM_GROUPS
    cidx = jax.lax.broadcasted_iota(jnp.int32, (1, c), 1)
    mean = jnp.zeros((1, c), jnp.float32)
    var = jnp.zeros((1, c), jnp.float32)
    for g in range(NUM_GROUPS):
        yg = y[:, g * cg:(g + 1) * cg]
        m = jnp.mean(yg, axis=(0, 1), keepdims=True)                  # (1,1)
        v = jnp.mean(yg * yg, axis=(0, 1), keepdims=True) - m * m     # (1,1)
        sel = (cidx >= g * cg) & (cidx < (g + 1) * cg)
        mean = jnp.where(sel, m, mean)
        var = jnp.where(sel, v, var)
    scale = gamma * jax.lax.rsqrt(var + GN_EPS)
    shift = beta - mean * scale
    return y * scale + shift


# ----------------------------------------------------------------------------
# fused kernels (each processes one batch element; batch is the grid axis)
# ----------------------------------------------------------------------------
def _make_stem_kernel(h, w):
    def kernel(x_ref, w_ref, g_ref, b_ref, o_ref):
        x = x_ref[...]                                 # (1, H*W, Cin) f32
        cin = x.shape[-1]
        y = jnp.dot(_conv3x3_patches(x.reshape(1, h, w, cin)), w_ref[...],
                    preferred_element_type=jnp.float32)          # (P, Cout)
        y = jnp.maximum(_group_norm(y, g_ref[...], b_ref[...]), 0.0)
        o_ref[...] = y.reshape(o_ref.shape)
    return kernel


def _make_id_block_kernel(h, w, with_head):
    """BasicBlock with identity shortcut (stride 1, Cin == Cout)."""
    def kernel(x_ref, w1_ref, g1_ref, b1_ref, w2_ref, g2_ref, b2_ref, *rest):
        if with_head:
            lw_ref, lb_ref, o_ref = rest
        else:
            (o_ref,) = rest
        x = x_ref[...]                                 # (1, P, C) f32
        _, p, c = x.shape
        h1 = jnp.dot(_conv3x3_patches(x.reshape(1, h, w, c)), w1_ref[...],
                     preferred_element_type=jnp.float32)
        h1 = jnp.maximum(_group_norm(h1, g1_ref[...], b1_ref[...]), 0.0)
        h2 = jnp.dot(_conv3x3_patches(h1.reshape(1, h, w, c)), w2_ref[...],
                     preferred_element_type=jnp.float32)
        h2 = _group_norm(h2, g2_ref[...], b2_ref[...])
        out = jnp.maximum(h2 + x.reshape(p, c), 0.0)   # residual add + ReLU
        if with_head:
            feat = jnp.mean(out, axis=0, keepdims=True)          # avg pool
            logits = jnp.dot(feat, lw_ref[...],
                             preferred_element_type=jnp.float32) + lb_ref[...]
            o_ref[...] = logits.reshape(o_ref.shape)
        else:
            o_ref[...] = out.reshape(o_ref.shape)
    return kernel


def _make_proj_block_kernel(ho, wo, with_head):
    """BasicBlock with projection shortcut (stride != 1 or channel change).

    conv1 arrives pre-im2col'ed (stride already folded in), the shortcut input
    arrives pre-strided; everything else (GN, ReLU, conv2 with in-VMEM padding,
    1x1 projection, residual, optional pooled Linear head) is fused here.
    """
    def kernel(p1_ref, xs_ref, w1_ref, g1_ref, b1_ref, w2_ref, g2_ref, b2_ref,
               wsc_ref, gsc_ref, bsc_ref, *rest):
        if with_head:
            lw_ref, lb_ref, o_ref = rest
        else:
            (o_ref,) = rest
        po = ho * wo
        # main path: conv1 (single K=9*Cin matmul) -> GN -> ReLU
        p1 = p1_ref[...].reshape(po, p1_ref.shape[-1])
        h1 = jnp.dot(p1, w1_ref[...], preferred_element_type=jnp.float32)
        h1 = jnp.maximum(_group_norm(h1, g1_ref[...], b1_ref[...]), 0.0)
        cout = h1.shape[-1]
        # conv2 (stride 1): pad + 9-tap fold in VMEM -> GN
        h2 = jnp.dot(_conv3x3_patches(h1.reshape(1, ho, wo, cout)), w2_ref[...],
                     preferred_element_type=jnp.float32)
        h2 = _group_norm(h2, g2_ref[...], b2_ref[...])
        # projection shortcut: strided 1x1 conv (plain matmul) -> GN
        xs = xs_ref[...].reshape(po, xs_ref.shape[-1])
        sc = jnp.dot(xs, wsc_ref[...], preferred_element_type=jnp.float32)
        sc = _group_norm(sc, gsc_ref[...], bsc_ref[...])
        out = jnp.maximum(h2 + sc, 0.0)
        if with_head:
            feat = jnp.mean(out, axis=0, keepdims=True)          # avg pool
            logits = jnp.dot(feat, lw_ref[...],
                             preferred_element_type=jnp.float32) + lb_ref[...]
            o_ref[...] = logits.reshape(o_ref.shape)
        else:
            o_ref[...] = out.reshape(o_ref.shape)
    return kernel


# ----------------------------------------------------------------------------
# pallas_call wrapper: batch is a "parallel" grid dimension
# ----------------------------------------------------------------------------
def _batched_spec(shape):
    rest = len(shape) - 1

    def imap(i):
        return (i,) + (0,) * rest

    return pl.BlockSpec((1,) + tuple(shape[1:]), imap)


def _bcast_spec(shape):
    zero = (0,) * len(shape)

    def imap(i):
        return zero

    return pl.BlockSpec(tuple(shape), imap)


def _batched_call(kernel, n_batch, out_shape, args, batched):
    in_specs = [_batched_spec(a.shape) if b else _bcast_spec(a.shape)
                for a, b in zip(args, batched)]
    return pl.pallas_call(
        kernel,
        out_shape=jax.ShapeDtypeStruct(tuple(out_shape), jnp.float32),
        grid=(n_batch,),
        in_specs=in_specs,
        out_specs=_batched_spec(tuple(out_shape)),
        compiler_params=pltpu.CompilerParams(
            dimension_semantics=("parallel",)),
    )(*args)


# ----------------------------------------------------------------------------
# plain-JAX glue for the strided conv: strided im2col done once in the wrapper
# ----------------------------------------------------------------------------
def _im2col3x3_host(x4, stride):
    n, h, w, c = x4.shape
    ho, wo = (h - 1) // stride + 1, (w - 1) // stride + 1
    xp = jnp.pad(x4, ((0, 0), (1, 1), (1, 1), (0, 0)))
    cols = [xp[:, kh:kh + (ho - 1) * stride + 1:stride,
               kw:kw + (wo - 1) * stride + 1:stride, :]
            for kh in range(3) for kw in range(3)]
    return jnp.concatenate(cols, axis=-1).reshape(n, ho * wo, 9 * c).astype(MXU_DTYPE)


# ----------------------------------------------------------------------------
# parameters: synthetic init; all layout transforms hoisted to init time
# ----------------------------------------------------------------------------
def init_params(key, in_ch, feature_maps, num_blocks, num_classes):
    keys = iter(jax.random.split(key, 128))

    def conv_w(cout, cin, k):
        scale = 1.0 / float(cin * k * k) ** 0.5
        return scale * jax.random.normal(next(keys), (cout, cin, k, k), jnp.float32)

    def prep3x3(w_oihw):
        cout, cin = w_oihw.shape[0], w_oihw.shape[1]
        return jnp.transpose(w_oihw, (2, 3, 1, 0)).reshape(9 * cin, cout).astype(MXU_DTYPE)

    def prep1x1(w_oihw):
        cout, cin = w_oihw.shape[0], w_oihw.shape[1]
        return jnp.transpose(w_oihw.reshape(cout, cin), (1, 0)).astype(MXU_DTYPE)

    def gn_params(c):
        return (jnp.ones((1, c), jnp.float32), jnp.zeros((1, c), jnp.float32))

    params = {
        "conv1": prep3x3(conv_w(feature_maps, in_ch, 3)),
        "gn1": gn_params(feature_maps),
        "blocks": [],
    }
    in_planes = feature_maps
    for i, nb in enumerate(num_blocks):
        planes = (2 ** i) * feature_maps
        strides = [1 if i == 0 else 2] + [1] * (nb - 1)
        for s in strides:
            blk = {
                "stride": s,
                "in_planes": in_planes,
                "planes": planes,
                "conv1": prep3x3(conv_w(planes, in_planes, 3)),
                "gn1": gn_params(planes),
                "conv2": prep3x3(conv_w(planes, planes, 3)),
                "gn2": gn_params(planes),
            }
            if s != 1 or in_planes != planes:
                blk["sc_conv"] = prep1x1(conv_w(planes, in_planes, 1))
                blk["sc_gn"] = gn_params(planes)
            params["blocks"].append(blk)
            in_planes = planes
    final_c = (2 ** (len(num_blocks) - 1)) * feature_maps
    lin_w = (1.0 / float(final_c) ** 0.5) * jax.random.normal(
        next(keys), (num_classes, final_c), jnp.float32)
    params["lin_w"] = jnp.transpose(lin_w)                # (C, num_classes)
    params["lin_b"] = jnp.zeros((1, num_classes), jnp.float32)
    return params


# ----------------------------------------------------------------------------
# forward pass (matches ResNet.forward; head is fused into the last block)
# ----------------------------------------------------------------------------
def resnet_forward(params, x_nchw):
    x = jnp.transpose(x_nchw, (0, 2, 3, 1)).astype(jnp.float32)   # NCHW -> NHWC
    n, h, w, _ = x.shape
    c = params["gn1"][0].shape[-1]
    num_classes = params["lin_w"].shape[-1]

    # stem: relu(gn1(conv1(x))) fused
    g1, b1 = params["gn1"]
    out = _batched_call(
        _make_stem_kernel(h, w), n, (n, h * w, c),
        [x.reshape(n, h * w, -1), params["conv1"], g1, b1],
        [True, False, False, False])

    blocks = params["blocks"]
    for bi, blk in enumerate(blocks):
        s = blk["stride"]
        cin_b, cout_b = blk["in_planes"], blk["planes"]
        is_last = bi == len(blocks) - 1
        ho, wo = (h - 1) // s + 1, (w - 1) // s + 1
        g1b, b1b = blk["gn1"]
        g2b, b2b = blk["gn2"]
        head_args = [params["lin_w"], params["lin_b"]] if is_last else []
        out_shape = (n, 1, num_classes) if is_last else (n, ho * wo, cout_b)

        if "sc_conv" in blk:
            x4 = out.reshape(n, h, w, cin_b)
            patches = _im2col3x3_host(x4, s)                       # (n, Po, 9*Cin)
            xs = x4[:, ::s, ::s, :].reshape(n, ho * wo, cin_b).astype(MXU_DTYPE)
            gsc, bsc = blk["sc_gn"]
            args = [patches, xs, blk["conv1"], g1b, b1b,
                    blk["conv2"], g2b, b2b, blk["sc_conv"], gsc, bsc] + head_args
            batched = [True, True] + [False] * (len(args) - 2)
            kernel = _make_proj_block_kernel(ho, wo, is_last)
        else:
            args = [out, blk["conv1"], g1b, b1b, blk["conv2"], g2b, b2b] + head_args
            batched = [True] + [False] * (len(args) - 1)
            kernel = _make_id_block_kernel(h, w, is_last)

        out = _batched_call(kernel, n, out_shape, args, batched)
        h, w = ho, wo

    # head (avg_pool2d + view + linear) was fused into the last block's kernel
    return out.reshape(out.shape[0], -1)


if __name__ == "__main__":
    # ResNet(BasicBlock, num_blocks=[1, 1], feature_maps=8,
    #        input_shape=(4, 16, 16), num_classes=10, batchn=False), batch=2
    key = jax.random.PRNGKey(0)
    kx, kp = jax.random.split(key)
    x = jax.random.normal(kx, (2, 4, 16, 16), jnp.float32)   # NCHW like PyTorch
    params = init_params(kp, in_ch=4, feature_maps=8,
                         num_blocks=[1, 1], num_classes=10)

    fwd = jax.jit(functools.partial(resnet_forward, params))
    out = fwd(x)
    jax.block_until_ready(out)
    assert out.shape == (2, 10) and out.dtype == jnp.float32
    assert bool(jnp.all(jnp.isfinite(out)))
    print("KERNEL_OK")
</pallas_src>

<mosaic_0001>
module attributes {stable_mosaic.version = 11 : i64} {
  func.func @kernel(%arg0: i32, %arg1: memref<1x256x4xf32, #tpu.memory_space<vmem>>, %arg2: memref<36x8xbf16, #tpu.memory_space<vmem>>, %arg3: memref<1x8xf32, #tpu.memory_space<vmem>>, %arg4: memref<1x8xf32, #tpu.memory_space<vmem>>, %arg5: memref<1x256x8xf32, #tpu.memory_space<vmem>>) attributes {dimension_semantics = [#tpu.dimension_semantics<parallel>], iteration_bounds = array<i64: 2>, scalar_prefetch = 0 : i64, scratch_operands = 0 : i64, tpu.core_type = #tpu.core_type<tc>, window_params = [{transform_indices = @transform_0, window_bounds = array<i64: 1, 256, 4>}, {pipeline_mode = #tpu.pipeline_mode<synchronous>, transform_indices = @transform_1, window_bounds = array<i64: 36, 8>}, {pipeline_mode = #tpu.pipeline_mode<synchronous>, transform_indices = @transform_2, window_bounds = array<i64: 1, 8>}, {pipeline_mode = #tpu.pipeline_mode<synchronous>, transform_indices = @transform_3, window_bounds = array<i64: 1, 8>}, {transform_indices = @transform_4, window_bounds = array<i64: 1, 256, 8>}]} {
    %c0 = arith.constant 0 : index
    %c0_0 = arith.constant 0 : index
    %c0_1 = arith.constant 0 : index
    %0 = vector.load %arg1[%c0, %c0_0, %c0_1] : memref<1x256x4xf32, #tpu.memory_space<vmem>>, vector<1x256x4xf32>
    %1 = vector.shape_cast %0 : vector<1x256x4xf32> to vector<1x16x16x4xf32>
    %cst = arith.constant 0.000000e+00 : f32
    %2 = vector.broadcast %cst : f32 to vector<1x1x16x4xf32>
    %3 = tpu.concatenate %2, %1, %2 in 1 : vector<1x1x16x4xf32>, vector<1x16x16x4xf32>, vector<1x1x16x4xf32> -> vector<1x18x16x4xf32>
    %cst_2 = arith.constant 0.000000e+00 : f32
    %4 = vector.broadcast %cst_2 : f32 to vector<1x18x1x4xf32>
    %5 = tpu.concatenate %4, %3, %4 in 2 : vector<1x18x1x4xf32>, vector<1x18x16x4xf32>, vector<1x18x1x4xf32> -> vector<1x18x18x4xf32>
    %6 = vector.extract_strided_slice %5 {offsets = [0, 0, 0, 0], sizes = [1, 16, 16, 4], strides = [1, 1, 1, 1]} : vector<1x18x18x4xf32> to vector<1x16x16x4xf32>
    %7 = vector.extract_strided_slice %5 {offsets = [0, 0, 1, 0], sizes = [1, 16, 16, 4], strides = [1, 1, 1, 1]} : vector<1x18x18x4xf32> to vector<1x16x16x4xf32>
    %8 = vector.extract_strided_slice %5 {offsets = [0, 0, 2, 0], sizes = [1, 16, 16, 4], strides = [1, 1, 1, 1]} : vector<1x18x18x4xf32> to vector<1x16x16x4xf32>
    %9 = vector.extract_strided_slice %5 {offsets = [0, 1, 0, 0], sizes = [1, 16, 16, 4], strides = [1, 1, 1, 1]} : vector<1x18x18x4xf32> to vector<1x16x16x4xf32>
    %10 = vector.extract_strided_slice %5 {offsets = [0, 1, 1, 0], sizes = [1, 16, 16, 4], strides = [1, 1, 1, 1]} : vector<1x18x18x4xf32> to vector<1x16x16x4xf32>
    %11 = vector.extract_strided_slice %5 {offsets = [0, 1, 2, 0], sizes = [1, 16, 16, 4], strides = [1, 1, 1, 1]} : vector<1x18x18x4xf32> to vector<1x16x16x4xf32>
    %12 = vector.extract_strided_slice %5 {offsets = [0, 2, 0, 0], sizes = [1, 16, 16, 4], strides = [1, 1, 1, 1]} : vector<1x18x18x4xf32> to vector<1x16x16x4xf32>
    %13 = vector.extract_strided_slice %5 {offsets = [0, 2, 1, 0], sizes = [1, 16, 16, 4], strides = [1, 1, 1, 1]} : vector<1x18x18x4xf32> to vector<1x16x16x4xf32>
    %14 = vector.extract_strided_slice %5 {offsets = [0, 2, 2, 0], sizes = [1, 16, 16, 4], strides = [1, 1, 1, 1]} : vector<1x18x18x4xf32> to vector<1x16x16x4xf32>
    %15 = tpu.concatenate %6, %7, %8, %9, %10, %11, %12, %13, %14 in 3 : vector<1x16x16x4xf32>, vector<1x16x16x4xf32>, vector<1x16x16x4xf32>, vector<1x16x16x4xf32>, vector<1x16x16x4xf32>, vector<1x16x16x4xf32>, vector<1x16x16x4xf32>, vector<1x16x16x4xf32>, vector<1x16x16x4xf32> -> vector<1x16x16x36xf32>
    %16 = vector.shape_cast %15 : vector<1x16x16x36xf32> to vector<256x36xf32>
    %17 = arith.truncf %16 : vector<256x36xf32> to vector<256x36xbf16>
    %c0_3 = arith.constant 0 : index
    %c0_4 = arith.constant 0 : index
    %18 = vector.load %arg2[%c0_3, %c0_4] : memref<36x8xbf16, #tpu.memory_space<vmem>>, vector<36x8xbf16>
    %cst_5 = arith.constant dense<0.000000e+00> : vector<256x8xf32>
    %19 = tpu.matmul %17, %18, %cst_5 {dimension_numbers = #tpu.dot_dimension_numbers<[1], [0], [0], [1], [0, 0, 1, 1], [], []>} : vector<256x36xbf16>, vector<36x8xbf16>, vector<256x8xf32> -> vector<256x8xf32>
    %c0_6 = arith.constant 0 : index
    %c0_7 = arith.constant 0 : index
    %20 = vector.load %arg3[%c0_6, %c0_7] : memref<1x8xf32, #tpu.memory_space<vmem>>, vector<1x8xf32>
    %c0_8 = arith.constant 0 : index
    %c0_9 = arith.constant 0 : index
    %21 = vector.load %arg4[%c0_8, %c0_9] : memref<1x8xf32, #tpu.memory_space<vmem>>, vector<1x8xf32>
    %22 = tpu.iota {dimensions = array<i32: 1>} : vector<1x8xi32>
    %cst_10 = arith.constant 0.000000e+00 : f32
    %23 = vector.broadcast %cst_10 : f32 to vector<1x8xf32>
    %cst_11 = arith.constant 0.000000e+00 : f32
    %24 = vector.broadcast %cst_11 : f32 to vector<1x8xf32>
    %25 = vector.extract_strided_slice %19 {offsets = [0, 0], sizes = [256, 4], strides = [1, 1]} : vector<256x8xf32> to vector<256x4xf32>
    %26 = vector.shape_cast %25 : vector<256x4xf32> to vector<1x256x4xf32>
    %cst_12 = arith.constant dense<0.000000e+00> : vector<1xf32>
    %27 = vector.multi_reduction <add>, %26, %cst_12 [1, 2] : vector<1x256x4xf32> to vector<1xf32>
    %28 = vector.shape_cast %27 : vector<1xf32> to vector<1x1x1xf32>
    %29 = vector.extract %28[0, 0, 0] : f32 from vector<1x1x1xf32>
    %30 = vector.broadcast %29 : f32 to vector<1x1xf32>
    %cst_13 = arith.constant 1.024000e+03 : f32
    %31 = vector.broadcast %cst_13 : f32 to vector<1x1xf32>
    %32 = arith.divf %30, %31 : vector<1x1xf32>
    %33 = arith.mulf %25, %25 : vector<256x4xf32>
    %34 = vector.shape_cast %33 : vector<256x4xf32> to vector<1x256x4xf32>
    %cst_14 = arith.constant dense<0.000000e+00> : vector<1xf32>
    %35 = vector.multi_reduction <add>, %34, %cst_14 [1, 2] : vector<1x256x4xf32> to vector<1xf32>
    %36 = vector.shape_cast %35 : vector<1xf32> to vector<1x1x1xf32>
    %37 = vector.extract %36[0, 0, 0] : f32 from vector<1x1x1xf32>
    %38 = vector.broadcast %37 : f32 to vector<1x1xf32>
    %cst_15 = arith.constant 1.024000e+03 : f32
    %39 = vector.broadcast %cst_15 : f32 to vector<1x1xf32>
    %40 = arith.divf %38, %39 : vector<1x1xf32>
    %41 = arith.mulf %32, %32 : vector<1x1xf32>
    %42 = arith.subf %40, %41 : vector<1x1xf32>
    %c0_i32 = arith.constant 0 : i32
    %43 = vector.broadcast %c0_i32 : i32 to vector<1x8xi32>
    %44 = arith.cmpi sge, %22, %43 : vector<1x8xi32>
    %c4_i32 = arith.constant 4 : i32
    %45 = vector.broadcast %c4_i32 : i32 to vector<1x8xi32>
    %46 = arith.cmpi slt, %22, %45 : vector<1x8xi32>
    %47 = arith.andi %44, %46 : vector<1x8xi1>
    %48 = vector.shape_cast %32 : vector<1x1xf32> to vector<1x1xf32>
    %49 = vector.broadcast %48 : vector<1x1xf32> to vector<1x8xf32>
    %50 = arith.select %47, %49, %23 : vector<1x8xi1>, vector<1x8xf32>
    %51 = vector.shape_cast %42 : vector<1x1xf32> to vector<1x1xf32>
    %52 = vector.broadcast %51 : vector<1x1xf32> to vector<1x8xf32>
    %53 = arith.select %47, %52, %24 : vector<1x8xi1>, vector<1x8xf32>
    %54 = vector.extract_strided_slice %19 {offsets = [0, 4], sizes = [256, 4], strides = [1, 1]} : vector<256x8xf32> to vector<256x4xf32>
    %55 = vector.shape_cast %54 : vector<256x4xf32> to vector<1x256x4xf32>
    %cst_16 = arith.constant dense<0.000000e+00> : vector<1xf32>
    %56 = vector.multi_reduction <add>, %55, %cst_16 [1, 2] : vector<1x256x4xf32> to vector<1xf32>
    %57 = vector.shape_cast %56 : vector<1xf32> to vector<1x1x1xf32>
    %58 = vector.extract %57[0, 0, 0] : f32 from vector<1x1x1xf32>
    %59 = vector.broadcast %58 : f32 to vector<1x1xf32>
    %cst_17 = arith.constant 1.024000e+03 : f32
    %60 = vector.broadcast %cst_17 : f32 to vector<1x1xf32>
    %61 = arith.divf %59, %60 : vector<1x1xf32>
    %62 = arith.mulf %54, %54 : vector<256x4xf32>
    %63 = vector.shape_cast %62 : vector<256x4xf32> to vector<1x256x4xf32>
    %cst_18 = arith.constant dense<0.000000e+00> : vector<1xf32>
    %64 = vector.multi_reduction <add>, %63, %cst_18 [1, 2] : vector<1x256x4xf32> to vector<1xf32>
    %65 = vector.shape_cast %64 : vector<1xf32> to vector<1x1x1xf32>
    %66 = vector.extract %65[0, 0, 0] : f32 from vector<1x1x1xf32>
    %67 = vector.broadcast %66 : f32 to vector<1x1xf32>
    %cst_19 = arith.constant 1.024000e+03 : f32
    %68 = vector.broadcast %cst_19 : f32 to vector<1x1xf32>
    %69 = arith.divf %67, %68 : vector<1x1xf32>
    %70 = arith.mulf %61, %61 : vector<1x1xf32>
    %71 = arith.subf %69, %70 : vector<1x1xf32>
    %c4_i32_20 = arith.constant 4 : i32
    %72 = vector.broadcast %c4_i32_20 : i32 to vector<1x8xi32>
    %73 = arith.cmpi sge, %22, %72 : vector<1x8xi32>
    %c8_i32 = arith.constant 8 : i32
    %74 = vector.broadcast %c8_i32 : i32 to vector<1x8xi32>
    %75 = arith.cmpi slt, %22, %74 : vector<1x8xi32>
    %76 = arith.andi %73, %75 : vector<1x8xi1>
    %77 = vector.shape_cast %61 : vector<1x1xf32> to vector<1x1xf32>
    %78 = vector.broadcast %77 : vector<1x1xf32> to vector<1x8xf32>
    %79 = arith.select %76, %78, %50 : vector<1x8xi1>, vector<1x8xf32>
    %80 = vector.shape_cast %71 : vector<1x1xf32> to vector<1x1xf32>
    %81 = vector.broadcast %80 : vector<1x1xf32> to vector<1x8xf32>
    %82 = arith.select %76, %81, %53 : vector<1x8xi1>, vector<1x8xf32>
    %cst_21 = arith.constant 9.99999974E-6 : f32
    %83 = vector.broadcast %cst_21 : f32 to vector<1x8xf32>
    %84 = arith.addf %82, %83 : vector<1x8xf32>
    %85 = math.rsqrt %84 : vector<1x8xf32>
    %86 = arith.mulf %20, %85 : vector<1x8xf32>
    %87 = arith.mulf %79, %86 : vector<1x8xf32>
    %88 = arith.subf %21, %87 : vector<1x8xf32>
    %89 = vector.broadcast %86 : vector<1x8xf32> to vector<256x8xf32>
    %90 = arith.mulf %19, %89 : vector<256x8xf32>
    %91 = vector.broadcast %88 : vector<1x8xf32> to vector<256x8xf32>
    %92 = arith.addf %90, %91 : vector<256x8xf32>
    %cst_22 = arith.constant 0.000000e+00 : f32
    %93 = vector.broadcast %cst_22 : f32 to vector<256x8xf32>
    %94 = arith.maximumf %92, %93 : vector<256x8xf32>
    %95 = vector.shape_cast %94 : vector<256x8xf32> to vector<1x256x8xf32>
    %c0_23 = arith.constant 0 : index
    %c0_24 = arith.constant 0 : index
    %c0_25 = arith.constant 0 : index
    %96 = vector.load %arg5[%c0_23, %c0_24, %c0_25] : memref<1x256x8xf32, #tpu.memory_space<vmem>>, vector<1x256x8xf32>
    tpu.vector_store %arg5[%c0_23, %c0_24, %c0_25], %95 {strides = array<i32>} : memref<1x256x8xf32, #tpu.memory_space<vmem>>, vector<1x256x8xf32>,
    return
  }
  func.func @transform_0(%arg0: i32) -> (i32, i32, i32) {
    %c0_i32 = arith.constant 0 : i32
    %c0_i32_0 = arith.constant 0 : i32
    %c0_i32_1 = arith.constant 0 : i32
    return %arg0, %c0_i32, %c0_i32_0 : i32, i32, i32
  }
  func.func @transform_1(%arg0: i32) -> (i32, i32) {
    %c0_i32 = arith.constant 0 : i32
    %c0_i32_0 = arith.constant 0 : i32
    %c0_i32_1 = arith.constant 0 : i32
    return %c0_i32, %c0_i32_0 : i32, i32
  }
  func.func @transform_2(%arg0: i32) -> (i32, i32) {
    %c0_i32 = arith.constant 0 : i32
    %c0_i32_0 = arith.constant 0 : i32
    %c0_i32_1 = arith.constant 0 : i32
    return %c0_i32, %c0_i32_0 : i32, i32
  }
  func.func @transform_3(%arg0: i32) -> (i32, i32) {
    %c0_i32 = arith.constant 0 : i32
    %c0_i32_0 = arith.constant 0 : i32
    %c0_i32_1 = arith.constant 0 : i32
    return %c0_i32, %c0_i32_0 : i32, i32
  }
  func.func @transform_4(%arg0: i32) -> (i32, i32, i32) {
    %c0_i32 = arith.constant 0 : i32
    %c0_i32_0 = arith.constant 0 : i32
    %c0_i32_1 = arith.constant 0 : i32
    return %arg0, %c0_i32, %c0_i32_0 : i32, i32, i32
  }
}

module attributes {stable_mosaic.version = 11 : i64} {
  func.func @kernel(%arg0: i32, %arg1: memref<1x256x8xf32, #tpu.memory_space<vmem>>, %arg2: memref<72x8xbf16, #tpu.memory_space<vmem>>, %arg3: memref<1x8xf32, #tpu.memory_space<vmem>>, %arg4: memref<1x8xf32, #tpu.memory_space<vmem>>, %arg5: memref<72x8xbf16, #tpu.memory_space<vmem>>, %arg6: memref<1x8xf32, #tpu.memory_space<vmem>>, %arg7: memref<1x8xf32, #tpu.memory_space<vmem>>, %arg8: memref<1x256x8xf32, #tpu.memory_space<vmem>>) attributes {dimension_semantics = [#tpu.dimension_semantics<parallel>], iteration_bounds = array<i64: 2>, scalar_prefetch = 0 : i64, scratch_operands = 0 : i64, tpu.core_type = #tpu.core_type<tc>, window_params = [{transform_indices = @transform_0, window_bounds = array<i64: 1, 256, 8>}, {pipeline_mode = #tpu.pipeline_mode<synchronous>, transform_indices = @transform_1, window_bounds = array<i64: 72, 8>}, {pipeline_mode = #tpu.pipeline_mode<synchronous>, transform_indices = @transform_2, window_bounds = array<i64: 1, 8>}, {pipeline_mode = #tpu.pipeline_mode<synchronous>, transform_indices = @transform_3, window_bounds = array<i64: 1, 8>}, {pipeline_mode = #tpu.pipeline_mode<synchronous>, transform_indices = @transform_4, window_bounds = array<i64: 72, 8>}, {pipeline_mode = #tpu.pipeline_mode<synchronous>, transform_indices = @transform_5, window_bounds = array<i64: 1, 8>}, {pipeline_mode = #tpu.pipeline_mode<synchronous>, transform_indices = @transform_6, window_bounds = array<i64: 1, 8>}, {transform_indices = @transform_7, window_bounds = array<i64: 1, 256, 8>}]} {
    %c0 = arith.constant 0 : index
    %c0_0 = arith.constant 0 : index
    %c0_1 = arith.constant 0 : index
    %0 = vector.load %arg1[%c0, %c0_0, %c0_1] : memref<1x256x8xf32, #tpu.memory_space<vmem>>, vector<1x256x8xf32>
    %1 = vector.shape_cast %0 : vector<1x256x8xf32> to vector<1x16x16x8xf32>
    %cst = arith.constant 0.000000e+00 : f32
    %2 = vector.broadcast %cst : f32 to vector<1x1x16x8xf32>
    %3 = tpu.concatenate %2, %1, %2 in 1 : vector<1x1x16x8xf32>, vector<1x16x16x8xf32>, vector<1x1x16x8xf32> -> vector<1x18x16x8xf32>
    %cst_2 = arith.constant 0.000000e+00 : f32
    %4 = vector.broadcast %cst_2 : f32 to vector<1x18x1x8xf32>
    %5 = tpu.concatenate %4, %3, %4 in 2 : vector<1x18x1x8xf32>, vector<1x18x16x8xf32>, vector<1x18x1x8xf32> -> vector<1x18x18x8xf32>
    %6 = vector.extract_strided_slice %5 {offsets = [0, 0, 0, 0], sizes = [1, 16, 16, 8], strides = [1, 1, 1, 1]} : vector<1x18x18x8xf32> to vector<1x16x16x8xf32>
    %7 = vector.extract_strided_slice %5 {offsets = [0, 0, 1, 0], sizes = [1, 16, 16, 8], strides = [1, 1, 1, 1]} : vector<1x18x18x8xf32> to vector<1x16x16x8xf32>
    %8 = vector.extract_strided_slice %5 {offsets = [0, 0, 2, 0], sizes = [1, 16, 16, 8], strides = [1, 1, 1, 1]} : vector<1x18x18x8xf32> to vector<1x16x16x8xf32>
    %9 = vector.extract_strided_slice %5 {offsets = [0, 1, 0, 0], sizes = [1, 16, 16, 8], strides = [1, 1, 1, 1]} : vector<1x18x18x8xf32> to vector<1x16x16x8xf32>
    %10 = vector.extract_strided_slice %5 {offsets = [0, 1, 1, 0], sizes = [1, 16, 16, 8], strides = [1, 1, 1, 1]} : vector<1x18x18x8xf32> to vector<1x16x16x8xf32>
    %11 = vector.extract_strided_slice %5 {offsets = [0, 1, 2, 0], sizes = [1, 16, 16, 8], strides = [1, 1, 1, 1]} : vector<1x18x18x8xf32> to vector<1x16x16x8xf32>
    %12 = vector.extract_strided_slice %5 {offsets = [0, 2, 0, 0], sizes = [1, 16, 16, 8], strides = [1, 1, 1, 1]} : vector<1x18x18x8xf32> to vector<1x16x16x8xf32>
    %13 = vector.extract_strided_slice %5 {offsets = [0, 2, 1, 0], sizes = [1, 16, 16, 8], strides = [1, 1, 1, 1]} : vector<1x18x18x8xf32> to vector<1x16x16x8xf32>
    %14 = vector.extract_strided_slice %5 {offsets = [0, 2, 2, 0], sizes = [1, 16, 16, 8], strides = [1, 1, 1, 1]} : vector<1x18x18x8xf32> to vector<1x16x16x8xf32>
    %15 = tpu.concatenate %6, %7, %8, %9, %10, %11, %12, %13, %14 in 3 : vector<1x16x16x8xf32>, vector<1x16x16x8xf32>, vector<1x16x16x8xf32>, vector<1x16x16x8xf32>, vector<1x16x16x8xf32>, vector<1x16x16x8xf32>, vector<1x16x16x8xf32>, vector<1x16x16x8xf32>, vector<1x16x16x8xf32> -> vector<1x16x16x72xf32>
    %16 = vector.shape_cast %15 : vector<1x16x16x72xf32> to vector<256x72xf32>
    %17 = arith.truncf %16 : vector<256x72xf32> to vector<256x72xbf16>
    %c0_3 = arith.constant 0 : index
    %c0_4 = arith.constant 0 : index
    %18 = vector.load %arg2[%c0_3, %c0_4] : memref<72x8xbf16, #tpu.memory_space<vmem>>, vector<72x8xbf16>
    %cst_5 = arith.constant dense<0.000000e+00> : vector<256x8xf32>
    %19 = tpu.matmul %17, %18, %cst_5 {dimension_numbers = #tpu.dot_dimension_numbers<[1], [0], [0], [1], [0, 0, 1, 1], [], []>} : vector<256x72xbf16>, vector<72x8xbf16>, vector<256x8xf32> -> vector<256x8xf32>
    %c0_6 = arith.constant 0 : index
    %c0_7 = arith.constant 0 : index
    %20 = vector.load %arg3[%c0_6, %c0_7] : memref<1x8xf32, #tpu.memory_space<vmem>>, vector<1x8xf32>
    %c0_8 = arith.constant 0 : index
    %c0_9 = arith.constant 0 : index
    %21 = vector.load %arg4[%c0_8, %c0_9] : memref<1x8xf32, #tpu.memory_space<vmem>>, vector<1x8xf32>
    %22 = tpu.iota {dimensions = array<i32: 1>} : vector<1x8xi32>
    %cst_10 = arith.constant 0.000000e+00 : f32
    %23 = vector.broadcast %cst_10 : f32 to vector<1x8xf32>
    %cst_11 = arith.constant 0.000000e+00 : f32
    %24 = vector.broadcast %cst_11 : f32 to vector<1x8xf32>
    %25 = vector.extract_strided_slice %19 {offsets = [0, 0], sizes = [256, 4], strides = [1, 1]} : vector<256x8xf32> to vector<256x4xf32>
    %26 = vector.shape_cast %25 : vector<256x4xf32> to vector<1x256x4xf32>
    %cst_12 = arith.constant dense<0.000000e+00> : vector<1xf32>
    %27 = vector.multi_reduction <add>, %26, %cst_12 [1, 2] : vector<1x256x4xf32> to vector<1xf32>
    %28 = vector.shape_cast %27 : vector<1xf32> to vector<1x1x1xf32>
    %29 = vector.extract %28[0, 0, 0] : f32 from vector<1x1x1xf32>
    %30 = vector.broadcast %29 : f32 to vector<1x1xf32>
    %cst_13 = arith.constant 1.024000e+03 : f32
    %31 = vector.broadcast %cst_13 : f32 to vector<1x1xf32>
    %32 = arith.divf %30, %31 : vector<1x1xf32>
    %33 = arith.mulf %25, %25 : vector<256x4xf32>
    %34 = vector.shape_cast %33 : vector<256x4xf32> to vector<1x256x4xf32>
    %cst_14 = arith.constant dense<0.000000e+00> : vector<1xf32>
    %35 = vector.multi_reduction <add>, %34, %cst_14 [1, 2] : vector<1x256x4xf32> to vector<1xf32>
    %36 = vector.shape_cast %35 : vector<1xf32> to vector<1x1x1xf32>
    %37 = vector.extract %36[0, 0, 0] : f32 from vector<1x1x1xf32>
    %38 = vector.broadcast %37 : f32 to vector<1x1xf32>
    %cst_15 = arith.constant 1.024000e+03 : f32
    %39 = vector.broadcast %cst_15 : f32 to vector<1x1xf32>
    %40 = arith.divf %38, %39 : vector<1x1xf32>
    %41 = arith.mulf %32, %32 : vector<1x1xf32>
    %42 = arith.subf %40, %41 : vector<1x1xf32>
    %c0_i32 = arith.constant 0 : i32
    %43 = vector.broadcast %c0_i32 : i32 to vector<1x8xi32>
    %44 = arith.cmpi sge, %22, %43 : vector<1x8xi32>
    %c4_i32 = arith.constant 4 : i32
    %45 = vector.broadcast %c4_i32 : i32 to vector<1x8xi32>
    %46 = arith.cmpi slt, %22, %45 : vector<1x8xi32>
    %47 = arith.andi %44, %46 : vector<1x8xi1>
    %48 = vector.shape_cast %32 : vector<1x1xf32> to vector<1x1xf32>
    %49 = vector.broadcast %48 : vector<1x1xf32> to vector<1x8xf32>
    %50 = arith.select %47, %49, %23 : vector<1x8xi1>, vector<1x8xf32>
    %51 = vector.shape_cast %42 : vector<1x1xf32> to vector<1x1xf32>
    %52 = vector.broadcast %51 : vector<1x1xf32> to vector<1x8xf32>
    %53 = arith.select %47, %52, %24 : vector<1x8xi1>, vector<1x8xf32>
    %54 = vector.extract_strided_slice %19 {offsets = [0, 4], sizes = [256, 4], strides = [1, 1]} : vector<256x8xf32> to vector<256x4xf32>
    %55 = vector.shape_cast %54 : vector<256x4xf32> to vector<1x256x4xf32>
    %cst_16 = arith.constant dense<0.000000e+00> : vector<1xf32>
    %56 = vector.multi_reduction <add>, %55, %cst_16 [1, 2] : vector<1x256x4xf32> to vector<1xf32>
    %57 = vector.shape_cast %56 : vector<1xf32> to vector<1x1x1xf32>
    %58 = vector.extract %57[0, 0, 0] : f32 from vector<1x1x1xf32>
    %59 = vector.broadcast %58 : f32 to vector<1x1xf32>
    %cst_17 = arith.constant 1.024000e+03 : f32
    %60 = vector.broadcast %cst_17 : f32 to vector<1x1xf32>
    %61 = arith.divf %59, %60 : vector<1x1xf32>
    %62 = arith.mulf %54, %54 : vector<256x4xf32>
    %63 = vector.shape_cast %62 : vector<256x4xf32> to vector<1x256x4xf32>
    %cst_18 = arith.constant dense<0.000000e+00> : vector<1xf32>
    %64 = vector.multi_reduction <add>, %63, %cst_18 [1, 2] : vector<1x256x4xf32> to vector<1xf32>
    %65 = vector.shape_cast %64 : vector<1xf32> to vector<1x1x1xf32>
    %66 = vector.extract %65[0, 0, 0] : f32 from vector<1x1x1xf32>
    %67 = vector.broadcast %66 : f32 to vector<1x1xf32>
    %cst_19 = arith.constant 1.024000e+03 : f32
    %68 = vector.broadcast %cst_19 : f32 to vector<1x1xf32>
    %69 = arith.divf %67, %68 : vector<1x1xf32>
    %70 = arith.mulf %61, %61 : vector<1x1xf32>
    %71 = arith.subf %69, %70 : vector<1x1xf32>
    %c4_i32_20 = arith.constant 4 : i32
    %72 = vector.broadcast %c4_i32_20 : i32 to vector<1x8xi32>
    %73 = arith.cmpi sge, %22, %72 : vector<1x8xi32>
    %c8_i32 = arith.constant 8 : i32
    %74 = vector.broadcast %c8_i32 : i32 to vector<1x8xi32>
    %75 = arith.cmpi slt, %22, %74 : vector<1x8xi32>
    %76 = arith.andi %73, %75 : vector<1x8xi1>
    %77 = vector.shape_cast %61 : vector<1x1xf32> to vector<1x1xf32>
    %78 = vector.broadcast %77 : vector<1x1xf32> to vector<1x8xf32>
    %79 = arith.select %76, %78, %50 : vector<1x8xi1>, vector<1x8xf32>
    %80 = vector.shape_cast %71 : vector<1x1xf32> to vector<1x1xf32>
    %81 = vector.broadcast %80 : vector<1x1xf32> to vector<1x8xf32>
    %82 = arith.select %76, %81, %53 : vector<1x8xi1>, vector<1x8xf32>
    %cst_21 = arith.constant 9.99999974E-6 : f32
    %83 = vector.broadcast %cst_21 : f32 to vector<1x8xf32>
    %84 = arith.addf %82, %83 : vector<1x8xf32>
    %85 = math.rsqrt %84 : vector<1x8xf32>
    %86 = arith.mulf %20, %85 : vector<1x8xf32>
    %87 = arith.mulf %79, %86 : vector<1x8xf32>
    %88 = arith.subf %21, %87 : vector<1x8xf32>
    %89 = vector.broadcast %86 : vector<1x8xf32> to vector<256x8xf32>
    %90 = arith.mulf %19, %89 : vector<256x8xf32>
    %91 = vector.broadcast %88 : vector<1x8xf32> to vector<256x8xf32>
    %92 = arith.addf %90, %91 : vector<256x8xf32>
    %cst_22 = arith.constant 0.000000e+00 : f32
    %93 = vector.broadcast %cst_22 : f32 to vector<256x8xf32>
    %94 = arith.maximumf %92, %93 : vector<256x8xf32>
    %95 = vector.shape_cast %94 : vector<256x8xf32> to vector<1x16x16x8xf32>
    %cst_23 = arith.constant 0.000000e+00 : f32
    %96 = vector.broadcast %cst_23 : f32 to vector<1x1x16x8xf32>
    %97 = tpu.concatenate %96, %95, %96 in 1 : vector<1x1x16x8xf32>, vector<1x16x16x8xf32>, vector<1x1x16x8xf32> -> vector<1x18x16x8xf32>
    %cst_24 = arith.constant 0.000000e+00 : f32
    %98 = vector.broadcast %cst_24 : f32 to vector<1x18x1x8xf32>
    %99 = tpu.concatenate %98, %97, %98 in 2 : vector<1x18x1x8xf32>, vector<1x18x16x8xf32>, vector<1x18x1x8xf32> -> vector<1x18x18x8xf32>
    %100 = vector.extract_strided_slice %99 {offsets = [0, 0, 0, 0], sizes = [1, 16, 16, 8], strides = [1, 1, 1, 1]} : vector<1x18x18x8xf32> to vector<1x16x16x8xf32>
    %101 = vector.extract_strided_slice %99 {offsets = [0, 0, 1, 0], sizes = [1, 16, 16, 8], strides = [1, 1, 1, 1]} : vector<1x18x18x8xf32> to vector<1x16x16x8xf32>
    %102 = vector.extract_strided_slice %99 {offsets = [0, 0, 2, 0], sizes = [1, 16, 16, 8], strides = [1, 1, 1, 1]} : vector<1x18x18x8xf32> to vector<1x16x16x8xf32>
    %103 = vector.extract_strided_slice %99 {offsets = [0, 1, 0, 0], sizes = [1, 16, 16, 8], strides = [1, 1, 1, 1]} : vector<1x18x18x8xf32> to vector<1x16x16x8xf32>
    %104 = vector.extract_strided_slice %99 {offsets = [0, 1, 1, 0], sizes = [1, 16, 16, 8], strides = [1, 1, 1, 1]} : vector<1x18x18x8xf32> to vector<1x16x16x8xf32>
    %105 = vector.extract_strided_slice %99 {offsets = [0, 1, 2, 0], sizes = [1, 16, 16, 8], strides = [1, 1, 1, 1]} : vector<1x18x18x8xf32> to vector<1x16x16x8xf32>
    %106 = vector.extract_strided_slice %99 {offsets = [0, 2, 0, 0], sizes = [1, 16, 16, 8], strides = [1, 1, 1, 1]} : vector<1x18x18x8xf32> to vector<1x16x16x8xf32>
    %107 = vector.extract_strided_slice %99 {offsets = [0, 2, 1, 0], sizes = [1, 16, 16, 8], strides = [1, 1, 1, 1]} : vector<1x18x18x8xf32> to vector<1x16x16x8xf32>
    %108 = vector.extract_strided_slice %99 {offsets = [0, 2, 2, 0], sizes = [1, 16, 16, 8], strides = [1, 1, 1, 1]} : vector<1x18x18x8xf32> to vector<1x16x16x8xf32>
    %109 = tpu.concatenate %100, %101, %102, %103, %104, %105, %106, %107, %108 in 3 : vector<1x16x16x8xf32>, vector<1x16x16x8xf32>, vector<1x16x16x8xf32>, vector<1x16x16x8xf32>, vector<1x16x16x8xf32>, vector<1x16x16x8xf32>, vector<1x16x16x8xf32>, vector<1x16x16x8xf32>, vector<1x16x16x8xf32> -> vector<1x16x16x72xf32>
    %110 = vector.shape_cast %109 : vector<1x16x16x72xf32> to vector<256x72xf32>
    %111 = arith.truncf %110 : vector<256x72xf32> to vector<256x72xbf16>
    %c0_25 = arith.constant 0 : index
    %c0_26 = arith.constant 0 : index
    %112 = vector.load %arg5[%c0_25, %c0_26] : memref<72x8xbf16, #tpu.memory_space<vmem>>, vector<72x8xbf16>
    %cst_27 = arith.constant dense<0.000000e+00> : vector<256x8xf32>
    %113 = tpu.matmul %111, %112, %cst_27 {dimension_numbers = #tpu.dot_dimension_numbers<[1], [0], [0], [1], [0, 0, 1, 1], [], []>} : vector<256x72xbf16>, vector<72x8xbf16>, vector<256x8xf32> -> vector<256x8xf32>
    %c0_28 = arith.constant 0 : index
    %c0_29 = arith.constant 0 : index
    %114 = vector.load %arg6[%c0_28, %c0_29] : memref<1x8xf32, #tpu.memory_space<vmem>>, vector<1x8xf32>
    %c0_30 = arith.constant 0 : index
    %c0_31 = arith.constant 0 : index
    %115 = vector.load %arg7[%c0_30, %c0_31] : memref<1x8xf32, #tpu.memory_space<vmem>>, vector<1x8xf32>
    %116 = tpu.iota {dimensions = array<i32: 1>} : vector<1x8xi32>
    %cst_32 = arith.constant 0.000000e+00 : f32
    %117 = vector.broadcast %cst_32 : f32 to vector<1x8xf32>
    %cst_33 = arith.constant 0.000000e+00 : f32
    %118 = vector.broadcast %cst_33 : f32 to vector<1x8xf32>
    %119 = vector.extract_strided_slice %113 {offsets = [0, 0], sizes = [256, 4], strides = [1, 1]} : vector<256x8xf32> to vector<256x4xf32>
    %120 = vector.shape_cast %119 : vector<256x4xf32> to vector<1x256x4xf32>
    %cst_34 = arith.constant dense<0.000000e+00> : vector<1xf32>
    %121 = vector.multi_reduction <add>, %120, %cst_34 [1, 2] : vector<1x256x4xf32> to vector<1xf32>
    %122 = vector.shape_cast %121 : vector<1xf32> to vector<1x1x1xf32>
    %123 = vector.extract %122[0, 0, 0] : f32 from vector<1x1x1xf32>
    %124 = vector.broadcast %123 : f32 to vector<1x1xf32>
    %cst_35 = arith.constant 1.024000e+03 : f32
    %125 = vector.broadcast %cst_35 : f32 to vector<1x1xf32>
    %126 = arith.divf %124, %125 : vector<1x1xf32>
    %127 = arith.mulf %119, %119 : vector<256x4xf32>
    %128 = vector.shape_cast %127 : vector<256x4xf32> to vector<1x256x4xf32>
    %cst_36 = arith.constant dense<0.000000e+00> : vector<1xf32>
    %129 = vector.multi_reduction <add>, %128, %cst_36 [1, 2] : vector<1x256x4xf32> to vector<1xf32>
    %130 = vector.shape_cast %129 : vector<1xf32> to vector<1x1x1xf32>
    %131 = vector.extract %130[0, 0, 0] : f32 from vector<1x1x1xf32>
    %132 = vector.broadcast %131 : f32 to vector<1x1xf32>
    %cst_37 = arith.constant 1.024000e+03 : f32
    %133 = vector.broadcast %cst_37 : f32 to vector<1x1xf32>
    %134 = arith.divf %132, %133 : vector<1x1xf32>
    %135 = arith.mulf %126, %126 : vector<1x1xf32>
    %136 = arith.subf %134, %135 : vector<1x1xf32>
    %c0_i32_38 = arith.constant 0 : i32
    %137 = vector.broadcast %c0_i32_38 : i32 to vector<1x8xi32>
    %138 = arith.cmpi sge, %116, %137 : vector<1x8xi32>
    %c4_i32_39 = arith.constant 4 : i32
    %139 = vector.broadcast %c4_i32_39 : i32 to vector<1x8xi32>
    %140 = arith.cmpi slt, %116, %139 : vector<1x8xi32>
    %141 = arith.andi %138, %140 : vector<1x8xi1>
    %142 = vector.shape_cast %126 : vector<1x1xf32> to vector<1x1xf32>
    %143 = vector.broadcast %142 : vector<1x1xf32> to vector<1x8xf32>
    %144 = arith.select %141, %143, %117 : vector<1x8xi1>, vector<1x8xf32>
    %145 = vector.shape_cast %136 : vector<1x1xf32> to vector<1x1xf32>
    %146 = vector.broadcast %145 : vector<1x1xf32> to vector<1x8xf32>
    %147 = arith.select %141, %146, %118 : vector<1x8xi1>, vector<1x8xf32>
    %148 = vector.extract_strided_slice %113 {offsets = [0, 4], sizes = [256, 4], strides = [1, 1]} : vector<256x8xf32> to vector<256x4xf32>
    %149 = vector.shape_cast %148 : vector<256x4xf32> to vector<1x256x4xf32>
    %cst_40 = arith.constant dense<0.000000e+00> : vector<1xf32>
    %150 = vector.multi_reduction <add>, %149, %cst_40 [1, 2] : vector<1x256x4xf32> to vector<1xf32>
    %151 = vector.shape_cast %150 : vector<1xf32> to vector<1x1x1xf32>
    %152 = vector.extract %151[0, 0, 0] : f32 from vector<1x1x1xf32>
    %153 = vector.broadcast %152 : f32 to vector<1x1xf32>
    %cst_41 = arith.constant 1.024000e+03 : f32
    %154 = vector.broadcast %cst_41 : f32 to vector<1x1xf32>
    %155 = arith.divf %153, %154 : vector<1x1xf32>
    %156 = arith.mulf %148, %148 : vector<256x4xf32>
    %157 = vector.shape_cast %156 : vector<256x4xf32> to vector<1x256x4xf32>
    %cst_42 = arith.constant dense<0.000000e+00> : vector<1xf32>
    %158 = vector.multi_reduction <add>, %157, %cst_42 [1, 2] : vector<1x256x4xf32> to vector<1xf32>
    %159 = vector.shape_cast %158 : vector<1xf32> to vector<1x1x1xf32>
    %160 = vector.extract %159[0, 0, 0] : f32 from vector<1x1x1xf32>
    %161 = vector.broadcast %160 : f32 to vector<1x1xf32>
    %cst_43 = arith.constant 1.024000e+03 : f32
    %162 = vector.broadcast %cst_43 : f32 to vector<1x1xf32>
    %163 = arith.divf %161, %162 : vector<1x1xf32>
    %164 = arith.mulf %155, %155 : vector<1x1xf32>
    %165 = arith.subf %163, %164 : vector<1x1xf32>
    %c4_i32_44 = arith.constant 4 : i32
    %166 = vector.broadcast %c4_i32_44 : i32 to vector<1x8xi32>
    %167 = arith.cmpi sge, %116, %166 : vector<1x8xi32>
    %c8_i32_45 = arith.constant 8 : i32
    %168 = vector.broadcast %c8_i32_45 : i32 to vector<1x8xi32>
    %169 = arith.cmpi slt, %116, %168 : vector<1x8xi32>
    %170 = arith.andi %167, %169 : vector<1x8xi1>
    %171 = vector.shape_cast %155 : vector<1x1xf32> to vector<1x1xf32>
    %172 = vector.broadcast %171 : vector<1x1xf32> to vector<1x8xf32>
    %173 = arith.select %170, %172, %144 : vector<1x8xi1>, vector<1x8xf32>
    %174 = vector.shape_cast %165 : vector<1x1xf32> to vector<1x1xf32>
    %175 = vector.broadcast %174 : vector<1x1xf32> to vector<1x8xf32>
    %176 = arith.select %170, %175, %147 : vector<1x8xi1>, vector<1x8xf32>
    %cst_46 = arith.constant 9.99999974E-6 : f32
    %177 = vector.broadcast %cst_46 : f32 to vector<1x8xf32>
    %178 = arith.addf %176, %177 : vector<1x8xf32>
    %179 = math.rsqrt %178 : vector<1x8xf32>
    %180 = arith.mulf %114, %179 : vector<1x8xf32>
    %181 = arith.mulf %173, %180 : vector<1x8xf32>
    %182 = arith.subf %115, %181 : vector<1x8xf32>
    %183 = vector.broadcast %180 : vector<1x8xf32> to vector<256x8xf32>
    %184 = arith.mulf %113, %183 : vector<256x8xf32>
    %185 = vector.broadcast %182 : vector<1x8xf32> to vector<256x8xf32>
    %186 = arith.addf %184, %185 : vector<256x8xf32>
    %187 = vector.shape_cast %0 : vector<1x256x8xf32> to vector<256x8xf32>
    %188 = arith.addf %186, %187 : vector<256x8xf32>
    %cst_47 = arith.constant 0.000000e+00 : f32
    %189 = vector.broadcast %cst_47 : f32 to vector<256x8xf32>
    %190 = arith.maximumf %188, %189 : vector<256x8xf32>
    %191 = vector.shape_cast %190 : vector<256x8xf32> to vector<1x256x8xf32>
    %c0_48 = arith.constant 0 : index
    %c0_49 = arith.constant 0 : index
    %c0_50 = arith.constant 0 : index
    %192 = vector.load %arg8[%c0_48, %c0_49, %c0_50] : memref<1x256x8xf32, #tpu.memory_space<vmem>>, vector<1x256x8xf32>
    tpu.vector_store %arg8[%c0_48, %c0_49, %c0_50], %191 {strides = array<i32>} : memref<1x256x8xf32, #tpu.memory_space<vmem>>, vector<1x256x8xf32>,
    return
  }
  func.func @transform_0(%arg0: i32) -> (i32, i32, i32) {
    %c0_i32 = arith.constant 0 : i32
    %c0_i32_0 = arith.constant 0 : i32
    %c0_i32_1 = arith.constant 0 : i32
    return %arg0, %c0_i32, %c0_i32_0 : i32, i32, i32
  }
  func.func @transform_1(%arg0: i32) -> (i32, i32) {
    %c0_i32 = arith.constant 0 : i32
    %c0_i32_0 = arith.constant 0 : i32
    %c0_i32_1 = arith.constant 0 : i32
    return %c0_i32, %c0_i32_0 : i32, i32
  }
  func.func @transform_2(%arg0: i32) -> (i32, i32) {
    %c0_i32 = arith.constant 0 : i32
    %c0_i32_0 = arith.constant 0 : i32
    %c0_i32_1 = arith.constant 0 : i32
    return %c0_i32, %c0_i32_0 : i32, i32
  }
  func.func @transform_3(%arg0: i32) -> (i32, i32) {
    %c0_i32 = arith.constant 0 : i32
    %c0_i32_0 = arith.constant 0 : i32
    %c0_i32_1 = arith.constant 0 : i32
    return %c0_i32, %c0_i32_0 : i32, i32
  }
  func.func @transform_4(%arg0: i32) -> (i32, i32) {
    %c0_i32 = arith.constant 0 : i32
    %c0_i32_0 = arith.constant 0 : i32
    %c0_i32_1 = arith.constant 0 : i32
    return %c0_i32, %c0_i32_0 : i32, i32
  }
  func.func @transform_5(%arg0: i32) -> (i32, i32) {
    %c0_i32 = arith.constant 0 : i32
    %c0_i32_0 = arith.constant 0 : i32
    %c0_i32_1 = arith.constant 0 : i32
    return %c0_i32, %c0_i32_0 : i32, i32
  }
  func.func @transform_6(%arg0: i32) -> (i32, i32) {
    %c0_i32 = arith.constant 0 : i32
    %c0_i32_0 = arith.constant 0 : i32
    %c0_i32_1 = arith.constant 0 : i32
    return %c0_i32, %c0_i32_0 : i32, i32
  }
  func.func @transform_7(%arg0: i32) -> (i32, i32, i32) {
    %c0_i32 = arith.constant 0 : i32
    %c0_i32_0 = arith.constant 0 : i32
    %c0_i32_1 = arith.constant 0 : i32
    return %arg0, %c0_i32, %c0_i32_0 : i32, i32, i32
  }
}

module attributes {stable_mosaic.version = 11 : i64} {
  func.func @kernel(%arg0: i32, %arg1: memref<1x64x72xbf16, #tpu.memory_space<vmem>>, %arg2: memref<1x64x8xbf16, #tpu.memory_space<vmem>>, %arg3: memref<72x16xbf16, #tpu.memory_space<vmem>>, %arg4: memref<1x16xf32, #tpu.memory_space<vmem>>, %arg5: memref<1x16xf32, #tpu.memory_space<vmem>>, %arg6: memref<144x16xbf16, #tpu.memory_space<vmem>>, %arg7: memref<1x16xf32, #tpu.memory_space<vmem>>, %arg8: memref<1x16xf32, #tpu.memory_space<vmem>>, %arg9: memref<8x16xbf16, #tpu.memory_space<vmem>>, %arg10: memref<1x16xf32, #tpu.memory_space<vmem>>, %arg11: memref<1x16xf32, #tpu.memory_space<vmem>>, %arg12: memref<16x10xf32, #tpu.memory_space<vmem>>, %arg13: memref<1x10xf32, #tpu.memory_space<vmem>>, %arg14: memref<1x1x10xf32, #tpu.memory_space<vmem>>) attributes {dimension_semantics = [#tpu.dimension_semantics<parallel>], iteration_bounds = array<i64: 2>, scalar_prefetch = 0 : i64, scratch_operands = 0 : i64, tpu.core_type = #tpu.core_type<tc>, window_params = [{transform_indices = @transform_0, window_bounds = array<i64: 1, 64, 72>}, {transform_indices = @transform_1, window_bounds = array<i64: 1, 64, 8>}, {pipeline_mode = #tpu.pipeline_mode<synchronous>, transform_indices = @transform_2, window_bounds = array<i64: 72, 16>}, {pipeline_mode = #tpu.pipeline_mode<synchronous>, transform_indices = @transform_3, window_bounds = array<i64: 1, 16>}, {pipeline_mode = #tpu.pipeline_mode<synchronous>, transform_indices = @transform_4, window_bounds = array<i64: 1, 16>}, {pipeline_mode = #tpu.pipeline_mode<synchronous>, transform_indices = @transform_5, window_bounds = array<i64: 144, 16>}, {pipeline_mode = #tpu.pipeline_mode<synchronous>, transform_indices = @transform_6, window_bounds = array<i64: 1, 16>}, {pipeline_mode = #tpu.pipeline_mode<synchronous>, transform_indices = @transform_7, window_bounds = array<i64: 1, 16>}, {pipeline_mode = #tpu.pipeline_mode<synchronous>, transform_indices = @transform_8, window_bounds = array<i64: 8, 16>}, {pipeline_mode = #tpu.pipeline_mode<synchronous>, transform_indices = @transform_9, window_bounds = array<i64: 1, 16>}, {pipeline_mode = #tpu.pipeline_mode<synchronous>, transform_indices = @transform_10, window_bounds = array<i64: 1, 16>}, {pipeline_mode = #tpu.pipeline_mode<synchronous>, transform_indices = @transform_11, window_bounds = array<i64: 16, 10>}, {pipeline_mode = #tpu.pipeline_mode<synchronous>, transform_indices = @transform_12, window_bounds = array<i64: 1, 10>}, {transform_indices = @transform_13, window_bounds = array<i64: 1, 1, 10>}]} {
    %c0 = arith.constant 0 : index
    %c0_0 = arith.constant 0 : index
    %c0_1 = arith.constant 0 : index
    %0 = vector.load %arg1[%c0, %c0_0, %c0_1] : memref<1x64x72xbf16, #tpu.memory_space<vmem>>, vector<1x64x72xbf16>
    %1 = vector.shape_cast %0 : vector<1x64x72xbf16> to vector<64x72xbf16>
    %c0_2 = arith.constant 0 : index
    %c0_3 = arith.constant 0 : index
    %2 = vector.load %arg3[%c0_2, %c0_3] : memref<72x16xbf16, #tpu.memory_space<vmem>>, vector<72x16xbf16>
    %cst = arith.constant dense<0.000000e+00> : vector<64x16xf32>
    %3 = tpu.matmul %1, %2, %cst {dimension_numbers = #tpu.dot_dimension_numbers<[1], [0], [0], [1], [0, 0, 1, 1], [], []>} : vector<64x72xbf16>, vector<72x16xbf16>, vector<64x16xf32> -> vector<64x16xf32>
    %c0_4 = arith.constant 0 : index
    %c0_5 = arith.constant 0 : index
    %4 = vector.load %arg4[%c0_4, %c0_5] : memref<1x16xf32, #tpu.memory_space<vmem>>, vector<1x16xf32>
    %c0_6 = arith.constant 0 : index
    %c0_7 = arith.constant 0 : index
    %5 = vector.load %arg5[%c0_6, %c0_7] : memref<1x16xf32, #tpu.memory_space<vmem>>, vector<1x16xf32>
    %6 = tpu.iota {dimensions = array<i32: 1>} : vector<1x16xi32>
    %cst_8 = arith.constant 0.000000e+00 : f32
    %7 = vector.broadcast %cst_8 : f32 to vector<1x16xf32>
    %cst_9 = arith.constant 0.000000e+00 : f32
    %8 = vector.broadcast %cst_9 : f32 to vector<1x16xf32>
    %9 = vector.extract_strided_slice %3 {offsets = [0, 0], sizes = [64, 8], strides = [1, 1]} : vector<64x16xf32> to vector<64x8xf32>
    %10 = vector.shape_cast %9 : vector<64x8xf32> to vector<1x64x8xf32>
    %cst_10 = arith.constant dense<0.000000e+00> : vector<1xf32>
    %11 = vector.multi_reduction <add>, %10, %cst_10 [1, 2] : vector<1x64x8xf32> to vector<1xf32>
    %12 = vector.shape_cast %11 : vector<1xf32> to vector<1x1x1xf32>
    %13 = vector.extract %12[0, 0, 0] : f32 from vector<1x1x1xf32>
    %14 = vector.broadcast %13 : f32 to vector<1x1xf32>
    %cst_11 = arith.constant 5.120000e+02 : f32
    %15 = vector.broadcast %cst_11 : f32 to vector<1x1xf32>
    %16 = arith.divf %14, %15 : vector<1x1xf32>
    %17 = arith.mulf %9, %9 : vector<64x8xf32>
    %18 = vector.shape_cast %17 : vector<64x8xf32> to vector<1x64x8xf32>
    %cst_12 = arith.constant dense<0.000000e+00> : vector<1xf32>
    %19 = vector.multi_reduction <add>, %18, %cst_12 [1, 2] : vector<1x64x8xf32> to vector<1xf32>
    %20 = vector.shape_cast %19 : vector<1xf32> to vector<1x1x1xf32>
    %21 = vector.extract %20[0, 0, 0] : f32 from vector<1x1x1xf32>
    %22 = vector.broadcast %21 : f32 to vector<1x1xf32>
    %cst_13 = arith.constant 5.120000e+02 : f32
    %23 = vector.broadcast %cst_13 : f32 to vector<1x1xf32>
    %24 = arith.divf %22, %23 : vector<1x1xf32>
    %25 = arith.mulf %16, %16 : vector<1x1xf32>
    %26 = arith.subf %24, %25 : vector<1x1xf32>
    %c0_i32 = arith.constant 0 : i32
    %27 = vector.broadcast %c0_i32 : i32 to vector<1x16xi32>
    %28 = arith.cmpi sge, %6, %27 : vector<1x16xi32>
    %c8_i32 = arith.constant 8 : i32
    %29 = vector.broadcast %c8_i32 : i32 to vector<1x16xi32>
    %30 = arith.cmpi slt, %6, %29 : vector<1x16xi32>
    %31 = arith.andi %28, %30 : vector<1x16xi1>
    %32 = vector.shape_cast %16 : vector<1x1xf32> to vector<1x1xf32>
    %33 = vector.broadcast %32 : vector<1x1xf32> to vector<1x16xf32>
    %34 = arith.select %31, %33, %7 : vector<1x16xi1>, vector<1x16xf32>
    %35 = vector.shape_cast %26 : vector<1x1xf32> to vector<1x1xf32>
    %36 = vector.broadcast %35 : vector<1x1xf32> to vector<1x16xf32>
    %37 = arith.select %31, %36, %8 : vector<1x16xi1>, vector<1x16xf32>
    %38 = vector.extract_strided_slice %3 {offsets = [0, 8], sizes = [64, 8], strides = [1, 1]} : vector<64x16xf32> to vector<64x8xf32>
    %39 = vector.shape_cast %38 : vector<64x8xf32> to vector<1x64x8xf32>
    %cst_14 = arith.constant dense<0.000000e+00> : vector<1xf32>
    %40 = vector.multi_reduction <add>, %39, %cst_14 [1, 2] : vector<1x64x8xf32> to vector<1xf32>
    %41 = vector.shape_cast %40 : vector<1xf32> to vector<1x1x1xf32>
    %42 = vector.extract %41[0, 0, 0] : f32 from vector<1x1x1xf32>
    %43 = vector.broadcast %42 : f32 to vector<1x1xf32>
    %cst_15 = arith.constant 5.120000e+02 : f32
    %44 = vector.broadcast %cst_15 : f32 to vector<1x1xf32>
    %45 = arith.divf %43, %44 : vector<1x1xf32>
    %46 = arith.mulf %38, %38 : vector<64x8xf32>
    %47 = vector.shape_cast %46 : vector<64x8xf32> to vector<1x64x8xf32>
    %cst_16 = arith.constant dense<0.000000e+00> : vector<1xf32>
    %48 = vector.multi_reduction <add>, %47, %cst_16 [1, 2] : vector<1x64x8xf32> to vector<1xf32>
    %49 = vector.shape_cast %48 : vector<1xf32> to vector<1x1x1xf32>
    %50 = vector.extract %49[0, 0, 0] : f32 from vector<1x1x1xf32>
    %51 = vector.broadcast %50 : f32 to vector<1x1xf32>
    %cst_17 = arith.constant 5.120000e+02 : f32
    %52 = vector.broadcast %cst_17 : f32 to vector<1x1xf32>
    %53 = arith.divf %51, %52 : vector<1x1xf32>
    %54 = arith.mulf %45, %45 : vector<1x1xf32>
    %55 = arith.subf %53, %54 : vector<1x1xf32>
    %c8_i32_18 = arith.constant 8 : i32
    %56 = vector.broadcast %c8_i32_18 : i32 to vector<1x16xi32>
    %57 = arith.cmpi sge, %6, %56 : vector<1x16xi32>
    %c16_i32 = arith.constant 16 : i32
    %58 = vector.broadcast %c16_i32 : i32 to vector<1x16xi32>
    %59 = arith.cmpi slt, %6, %58 : vector<1x16xi32>
    %60 = arith.andi %57, %59 : vector<1x16xi1>
    %61 = vector.shape_cast %45 : vector<1x1xf32> to vector<1x1xf32>
    %62 = vector.broadcast %61 : vector<1x1xf32> to vector<1x16xf32>
    %63 = arith.select %60, %62, %34 : vector<1x16xi1>, vector<1x16xf32>
    %64 = vector.shape_cast %55 : vector<1x1xf32> to vector<1x1xf32>
    %65 = vector.broadcast %64 : vector<1x1xf32> to vector<1x16xf32>
    %66 = arith.select %60, %65, %37 : vector<1x16xi1>, vector<1x16xf32>
    %cst_19 = arith.constant 9.99999974E-6 : f32
    %67 = vector.broadcast %cst_19 : f32 to vector<1x16xf32>
    %68 = arith.addf %66, %67 : vector<1x16xf32>
    %69 = math.rsqrt %68 : vector<1x16xf32>
    %70 = arith.mulf %4, %69 : vector<1x16xf32>
    %71 = arith.mulf %63, %70 : vector<1x16xf32>
    %72 = arith.subf %5, %71 : vector<1x16xf32>
    %73 = vector.broadcast %70 : vector<1x16xf32> to vector<64x16xf32>
    %74 = arith.mulf %3, %73 : vector<64x16xf32>
    %75 = vector.broadcast %72 : vector<1x16xf32> to vector<64x16xf32>
    %76 = arith.addf %74, %75 : vector<64x16xf32>
    %cst_20 = arith.constant 0.000000e+00 : f32
    %77 = vector.broadcast %cst_20 : f32 to vector<64x16xf32>
    %78 = arith.maximumf %76, %77 : vector<64x16xf32>
    %79 = vector.shape_cast %78 : vector<64x16xf32> to vector<1x8x8x16xf32>
    %cst_21 = arith.constant 0.000000e+00 : f32
    %80 = vector.broadcast %cst_21 : f32 to vector<1x1x8x16xf32>
    %81 = tpu.concatenate %80, %79, %80 in 1 : vector<1x1x8x16xf32>, vector<1x8x8x16xf32>, vector<1x1x8x16xf32> -> vector<1x10x8x16xf32>
    %cst_22 = arith.constant 0.000000e+00 : f32
    %82 = vector.broadcast %cst_22 : f32 to vector<1x10x1x16xf32>
    %83 = tpu.concatenate %82, %81, %82 in 2 : vector<1x10x1x16xf32>, vector<1x10x8x16xf32>, vector<1x10x1x16xf32> -> vector<1x10x10x16xf32>
    %84 = vector.extract_strided_slice %83 {offsets = [0, 0, 0, 0], sizes = [1, 8, 8, 16], strides = [1, 1, 1, 1]} : vector<1x10x10x16xf32> to vector<1x8x8x16xf32>
    %85 = vector.extract_strided_slice %83 {offsets = [0, 0, 1, 0], sizes = [1, 8, 8, 16], strides = [1, 1, 1, 1]} : vector<1x10x10x16xf32> to vector<1x8x8x16xf32>
    %86 = vector.extract_strided_slice %83 {offsets = [0, 0, 2, 0], sizes = [1, 8, 8, 16], strides = [1, 1, 1, 1]} : vector<1x10x10x16xf32> to vector<1x8x8x16xf32>
    %87 = vector.extract_strided_slice %83 {offsets = [0, 1, 0, 0], sizes = [1, 8, 8, 16], strides = [1, 1, 1, 1]} : vector<1x10x10x16xf32> to vector<1x8x8x16xf32>
    %88 = vector.extract_strided_slice %83 {offsets = [0, 1, 1, 0], sizes = [1, 8, 8, 16], strides = [1, 1, 1, 1]} : vector<1x10x10x16xf32> to vector<1x8x8x16xf32>
    %89 = vector.extract_strided_slice %83 {offsets = [0, 1, 2, 0], sizes = [1, 8, 8, 16], strides = [1, 1, 1, 1]} : vector<1x10x10x16xf32> to vector<1x8x8x16xf32>
    %90 = vector.extract_strided_slice %83 {offsets = [0, 2, 0, 0], sizes = [1, 8, 8, 16], strides = [1, 1, 1, 1]} : vector<1x10x10x16xf32> to vector<1x8x8x16xf32>
    %91 = vector.extract_strided_slice %83 {offsets = [0, 2, 1, 0], sizes = [1, 8, 8, 16], strides = [1, 1, 1, 1]} : vector<1x10x10x16xf32> to vector<1x8x8x16xf32>
    %92 = vector.extract_strided_slice %83 {offsets = [0, 2, 2, 0], sizes = [1, 8, 8, 16], strides = [1, 1, 1, 1]} : vector<1x10x10x16xf32> to vector<1x8x8x16xf32>
    %93 = tpu.concatenate %84, %85, %86, %87, %88, %89, %90, %91, %92 in 3 : vector<1x8x8x16xf32>, vector<1x8x8x16xf32>, vector<1x8x8x16xf32>, vector<1x8x8x16xf32>, vector<1x8x8x16xf32>, vector<1x8x8x16xf32>, vector<1x8x8x16xf32>, vector<1x8x8x16xf32>, vector<1x8x8x16xf32> -> vector<1x8x8x144xf32>
    %94 = vector.shape_cast %93 : vector<1x8x8x144xf32> to vector<64x144xf32>
    %95 = arith.truncf %94 : vector<64x144xf32> to vector<64x144xbf16>
    %c0_23 = arith.constant 0 : index
    %c0_24 = arith.constant 0 : index
    %96 = vector.load %arg6[%c0_23, %c0_24] : memref<144x16xbf16, #tpu.memory_space<vmem>>, vector<144x16xbf16>
    %cst_25 = arith.constant dense<0.000000e+00> : vector<64x16xf32>
    %97 = tpu.matmul %95, %96, %cst_25 {dimension_numbers = #tpu.dot_dimension_numbers<[1], [0], [0], [1], [0, 0, 1, 1], [], []>} : vector<64x144xbf16>, vector<144x16xbf16>, vector<64x16xf32> -> vector<64x16xf32>
    %c0_26 = arith.constant 0 : index
    %c0_27 = arith.constant 0 : index
    %98 = vector.load %arg7[%c0_26, %c0_27] : memref<1x16xf32, #tpu.memory_space<vmem>>, vector<1x16xf32>
    %c0_28 = arith.constant 0 : index
    %c0_29 = arith.constant 0 : index
    %99 = vector.load %arg8[%c0_28, %c0_29] : memref<1x16xf32, #tpu.memory_space<vmem>>, vector<1x16xf32>
    %100 = tpu.iota {dimensions = array<i32: 1>} : vector<1x16xi32>
    %cst_30 = arith.constant 0.000000e+00 : f32
    %101 = vector.broadcast %cst_30 : f32 to vector<1x16xf32>
    %cst_31 = arith.constant 0.000000e+00 : f32
    %102 = vector.broadcast %cst_31 : f32 to vector<1x16xf32>
    %103 = vector.extract_strided_slice %97 {offsets = [0, 0], sizes = [64, 8], strides = [1, 1]} : vector<64x16xf32> to vector<64x8xf32>
    %104 = vector.shape_cast %103 : vector<64x8xf32> to vector<1x64x8xf32>
    %cst_32 = arith.constant dense<0.000000e+00> : vector<1xf32>
    %105 = vector.multi_reduction <add>, %104, %cst_32 [1, 2] : vector<1x64x8xf32> to vector<1xf32>
    %106 = vector.shape_cast %105 : vector<1xf32> to vector<1x1x1xf32>
    %107 = vector.extract %106[0, 0, 0] : f32 from vector<1x1x1xf32>
    %108 = vector.broadcast %107 : f32 to vector<1x1xf32>
    %cst_33 = arith.constant 5.120000e+02 : f32
    %109 = vector.broadcast %cst_33 : f32 to vector<1x1xf32>
    %110 = arith.divf %108, %109 : vector<1x1xf32>
    %111 = arith.mulf %103, %103 : vector<64x8xf32>
    %112 = vector.shape_cast %111 : vector<64x8xf32> to vector<1x64x8xf32>
    %cst_34 = arith.constant dense<0.000000e+00> : vector<1xf32>
    %113 = vector.multi_reduction <add>, %112, %cst_34 [1, 2] : vector<1x64x8xf32> to vector<1xf32>
    %114 = vector.shape_cast %113 : vector<1xf32> to vector<1x1x1xf32>
    %115 = vector.extract %114[0, 0, 0] : f32 from vector<1x1x1xf32>
    %116 = vector.broadcast %115 : f32 to vector<1x1xf32>
    %cst_35 = arith.constant 5.120000e+02 : f32
    %117 = vector.broadcast %cst_35 : f32 to vector<1x1xf32>
    %118 = arith.divf %116, %117 : vector<1x1xf32>
    %119 = arith.mulf %110, %110 : vector<1x1xf32>
    %120 = arith.subf %118, %119 : vector<1x1xf32>
    %c0_i32_36 = arith.constant 0 : i32
    %121 = vector.broadcast %c0_i32_36 : i32 to vector<1x16xi32>
    %122 = arith.cmpi sge, %100, %121 : vector<1x16xi32>
    %c8_i32_37 = arith.constant 8 : i32
    %123 = vector.broadcast %c8_i32_37 : i32 to vector<1x16xi32>
    %124 = arith.cmpi slt, %100, %123 : vector<1x16xi32>
    %125 = arith.andi %122, %124 : vector<1x16xi1>
    %126 = vector.shape_cast %110 : vector<1x1xf32> to vector<1x1xf32>
    %127 = vector.broadcast %126 : vector<1x1xf32> to vector<1x16xf32>
    %128 = arith.select %125, %127, %101 : vector<1x16xi1>, vector<1x16xf32>
    %129 = vector.shape_cast %120 : vector<1x1xf32> to vector<1x1xf32>
    %130 = vector.broadcast %129 : vector<1x1xf32> to vector<1x16xf32>
    %131 = arith.select %125, %130, %102 : vector<1x16xi1>, vector<1x16xf32>
    %132 = vector.extract_strided_slice %97 {offsets = [0, 8], sizes = [64, 8], strides = [1, 1]} : vector<64x16xf32> to vector<64x8xf32>
    %133 = vector.shape_cast %132 : vector<64x8xf32> to vector<1x64x8xf32>
    %cst_38 = arith.constant dense<0.000000e+00> : vector<1xf32>
    %134 = vector.multi_reduction <add>, %133, %cst_38 [1, 2] : vector<1x64x8xf32> to vector<1xf32>
    %135 = vector.shape_cast %134 : vector<1xf32> to vector<1x1x1xf32>
    %136 = vector.extract %135[0, 0, 0] : f32 from vector<1x1x1xf32>
    %137 = vector.broadcast %136 : f32 to vector<1x1xf32>
    %cst_39 = arith.constant 5.120000e+02 : f32
    %138 = vector.broadcast %cst_39 : f32 to vector<1x1xf32>
    %139 = arith.divf %137, %138 : vector<1x1xf32>
    %140 = arith.mulf %132, %132 : vector<64x8xf32>
    %141 = vector.shape_cast %140 : vector<64x8xf32> to vector<1x64x8xf32>
    %cst_40 = arith.constant dense<0.000000e+00> : vector<1xf32>
    %142 = vector.multi_reduction <add>, %141, %cst_40 [1, 2] : vector<1x64x8xf32> to vector<1xf32>
    %143 = vector.shape_cast %142 : vector<1xf32> to vector<1x1x1xf32>
    %144 = vector.extract %143[0, 0, 0] : f32 from vector<1x1x1xf32>
    %145 = vector.broadcast %144 : f32 to vector<1x1xf32>
    %cst_41 = arith.constant 5.120000e+02 : f32
    %146 = vector.broadcast %cst_41 : f32 to vector<1x1xf32>
    %147 = arith.divf %145, %146 : vector<1x1xf32>
    %148 = arith.mulf %139, %139 : vector<1x1xf32>
    %149 = arith.subf %147, %148 : vector<1x1xf32>
    %c8_i32_42 = arith.constant 8 : i32
    %150 = vector.broadcast %c8_i32_42 : i32 to vector<1x16xi32>
    %151 = arith.cmpi sge, %100, %150 : vector<1x16xi32>
    %c16_i32_43 = arith.constant 16 : i32
    %152 = vector.broadcast %c16_i32_43 : i32 to vector<1x16xi32>
    %153 = arith.cmpi slt, %100, %152 : vector<1x16xi32>
    %154 = arith.andi %151, %153 : vector<1x16xi1>
    %155 = vector.shape_cast %139 : vector<1x1xf32> to vector<1x1xf32>
    %156 = vector.broadcast %155 : vector<1x1xf32> to vector<1x16xf32>
    %157 = arith.select %154, %156, %128 : vector<1x16xi1>, vector<1x16xf32>
    %158 = vector.shape_cast %149 : vector<1x1xf32> to vector<1x1xf32>
    %159 = vector.broadcast %158 : vector<1x1xf32> to vector<1x16xf32>
    %160 = arith.select %154, %159, %131 : vector<1x16xi1>, vector<1x16xf32>
    %cst_44 = arith.constant 9.99999974E-6 : f32
    %161 = vector.broadcast %cst_44 : f32 to vector<1x16xf32>
    %162 = arith.addf %160, %161 : vector<1x16xf32>
    %163 = math.rsqrt %162 : vector<1x16xf32>
    %164 = arith.mulf %98, %163 : vector<1x16xf32>
    %165 = arith.mulf %157, %164 : vector<1x16xf32>
    %166 = arith.subf %99, %165 : vector<1x16xf32>
    %167 = vector.broadcast %164 : vector<1x16xf32> to vector<64x16xf32>
    %168 = arith.mulf %97, %167 : vector<64x16xf32>
    %169 = vector.broadcast %166 : vector<1x16xf32> to vector<64x16xf32>
    %170 = arith.addf %168, %169 : vector<64x16xf32>
    %c0_45 = arith.constant 0 : index
    %c0_46 = arith.constant 0 : index
    %c0_47 = arith.constant 0 : index
    %171 = vector.load %arg2[%c0_45, %c0_46, %c0_47] : memref<1x64x8xbf16, #tpu.memory_space<vmem>>, vector<1x64x8xbf16>
    %172 = vector.shape_cast %171 : vector<1x64x8xbf16> to vector<64x8xbf16>
    %c0_48 = arith.constant 0 : index
    %c0_49 = arith.constant 0 : index
    %173 = vector.load %arg9[%c0_48, %c0_49] : memref<8x16xbf16, #tpu.memory_space<vmem>>, vector<8x16xbf16>
    %cst_50 = arith.constant dense<0.000000e+00> : vector<64x16xf32>
    %174 = tpu.matmul %172, %173, %cst_50 {dimension_numbers = #tpu.dot_dimension_numbers<[1], [0], [0], [1], [0, 0, 1, 1], [], []>} : vector<64x8xbf16>, vector<8x16xbf16>, vector<64x16xf32> -> vector<64x16xf32>
    %c0_51 = arith.constant 0 : index
    %c0_52 = arith.constant 0 : index
    %175 = vector.load %arg10[%c0_51, %c0_52] : memref<1x16xf32, #tpu.memory_space<vmem>>, vector<1x16xf32>
    %c0_53 = arith.constant 0 : index
    %c0_54 = arith.constant 0 : index
    %176 = vector.load %arg11[%c0_53, %c0_54] : memref<1x16xf32, #tpu.memory_space<vmem>>, vector<1x16xf32>
    %177 = tpu.iota {dimensions = array<i32: 1>} : vector<1x16xi32>
    %cst_55 = arith.constant 0.000000e+00 : f32
    %178 = vector.broadcast %cst_55 : f32 to vector<1x16xf32>
    %cst_56 = arith.constant 0.000000e+00 : f32
    %179 = vector.broadcast %cst_56 : f32 to vector<1x16xf32>
    %180 = vector.extract_strided_slice %174 {offsets = [0, 0], sizes = [64, 8], strides = [1, 1]} : vector<64x16xf32> to vector<64x8xf32>
    %181 = vector.shape_cast %180 : vector<64x8xf32> to vector<1x64x8xf32>
    %cst_57 = arith.constant dense<0.000000e+00> : vector<1xf32>
    %182 = vector.multi_reduction <add>, %181, %cst_57 [1, 2] : vector<1x64x8xf32> to vector<1xf32>
    %183 = vector.shape_cast %182 : vector<1xf32> to vector<1x1x1xf32>
    %184 = vector.extract %183[0, 0, 0] : f32 from vector<1x1x1xf32>
    %185 = vector.broadcast %184 : f32 to vector<1x1xf32>
    %cst_58 = arith.constant 5.120000e+02 : f32
    %186 = vector.broadcast %cst_58 : f32 to vector<1x1xf32>
    %187 = arith.divf %185, %186 : vector<1x1xf32>
    %188 = arith.mulf %180, %180 : vector<64x8xf32>
    %189 = vector.shape_cast %188 : vector<64x8xf32> to vector<1x64x8xf32>
    %cst_59 = arith.constant dense<0.000000e+00> : vector<1xf32>
    %190 = vector.multi_reduction <add>, %189, %cst_59 [1, 2] : vector<1x64x8xf32> to vector<1xf32>
    %191 = vector.shape_cast %190 : vector<1xf32> to vector<1x1x1xf32>
    %192 = vector.extract %191[0, 0, 0] : f32 from vector<1x1x1xf32>
    %193 = vector.broadcast %192 : f32 to vector<1x1xf32>
    %cst_60 = arith.constant 5.120000e+02 : f32
    %194 = vector.broadcast %cst_60 : f32 to vector<1x1xf32>
    %195 = arith.divf %193, %194 : vector<1x1xf32>
    %196 = arith.mulf %187, %187 : vector<1x1xf32>
    %197 = arith.subf %195, %196 : vector<1x1xf32>
    %c0_i32_61 = arith.constant 0 : i32
    %198 = vector.broadcast %c0_i32_61 : i32 to vector<1x16xi32>
    %199 = arith.cmpi sge, %177, %198 : vector<1x16xi32>
    %c8_i32_62 = arith.constant 8 : i32
    %200 = vector.broadcast %c8_i32_62 : i32 to vector<1x16xi32>
    %201 = arith.cmpi slt, %177, %200 : vector<1x16xi32>
    %202 = arith.andi %199, %201 : vector<1x16xi1>
    %203 = vector.shape_cast %187 : vector<1x1xf32> to vector<1x1xf32>
    %204 = vector.broadcast %203 : vector<1x1xf32> to vector<1x16xf32>
    %205 = arith.select %202, %204, %178 : vector<1x16xi1>, vector<1x16xf32>
    %206 = vector.shape_cast %197 : vector<1x1xf32> to vector<1x1xf32>
    %207 = vector.broadcast %206 : vector<1x1xf32> to vector<1x16xf32>
    %208 = arith.select %202, %207, %179 : vector<1x16xi1>, vector<1x16xf32>
    %209 = vector.extract_strided_slice %174 {offsets = [0, 8], sizes = [64, 8], strides = [1, 1]} : vector<64x16xf32> to vector<64x8xf32>
    %210 = vector.shape_cast %209 : vector<64x8xf32> to vector<1x64x8xf32>
    %cst_63 = arith.constant dense<0.000000e+00> : vector<1xf32>
    %211 = vector.multi_reduction <add>, %210, %cst_63 [1, 2] : vector<1x64x8xf32> to vector<1xf32>
    %212 = vector.shape_cast %211 : vector<1xf32> to vector<1x1x1xf32>
    %213 = vector.extract %212[0, 0, 0] : f32 from vector<1x1x1xf32>
    %214 = vector.broadcast %213 : f32 to vector<1x1xf32>
    %cst_64 = arith.constant 5.120000e+02 : f32
    %215 = vector.broadcast %cst_64 : f32 to vector<1x1xf32>
    %216 = arith.divf %214, %215 : vector<1x1xf32>
    %217 = arith.mulf %209, %209 : vector<64x8xf32>
    %218 = vector.shape_cast %217 : vector<64x8xf32> to vector<1x64x8xf32>
    %cst_65 = arith.constant dense<0.000000e+00> : vector<1xf32>
    %219 = vector.multi_reduction <add>, %218, %cst_65 [1, 2] : vector<1x64x8xf32> to vector<1xf32>
    %220 = vector.shape_cast %219 : vector<1xf32> to vector<1x1x1xf32>
    %221 = vector.extract %220[0, 0, 0] : f32 from vector<1x1x1xf32>
    %222 = vector.broadcast %221 : f32 to vector<1x1xf32>
    %cst_66 = arith.constant 5.120000e+02 : f32
    %223 = vector.broadcast %cst_66 : f32 to vector<1x1xf32>
    %224 = arith.divf %222, %223 : vector<1x1xf32>
    %225 = arith.mulf %216, %216 : vector<1x1xf32>
    %226 = arith.subf %224, %225 : vector<1x1xf32>
    %c8_i32_67 = arith.constant 8 : i32
    %227 = vector.broadcast %c8_i32_67 : i32 to vector<1x16xi32>
    %228 = arith.cmpi sge, %177, %227 : vector<1x16xi32>
    %c16_i32_68 = arith.constant 16 : i32
    %229 = vector.broadcast %c16_i32_68 : i32 to vector<1x16xi32>
    %230 = arith.cmpi slt, %177, %229 : vector<1x16xi32>
    %231 = arith.andi %228, %230 : vector<1x16xi1>
    %232 = vector.shape_cast %216 : vector<1x1xf32> to vector<1x1xf32>
    %233 = vector.broadcast %232 : vector<1x1xf32> to vector<1x16xf32>
    %234 = arith.select %231, %233, %205 : vector<1x16xi1>, vector<1x16xf32>
    %235 = vector.shape_cast %226 : vector<1x1xf32> to vector<1x1xf32>
    %236 = vector.broadcast %235 : vector<1x1xf32> to vector<1x16xf32>
    %237 = arith.select %231, %236, %208 : vector<1x16xi1>, vector<1x16xf32>
    %cst_69 = arith.constant 9.99999974E-6 : f32
    %238 = vector.broadcast %cst_69 : f32 to vector<1x16xf32>
    %239 = arith.addf %237, %238 : vector<1x16xf32>
    %240 = math.rsqrt %239 : vector<1x16xf32>
    %241 = arith.mulf %175, %240 : vector<1x16xf32>
    %242 = arith.mulf %234, %241 : vector<1x16xf32>
    %243 = arith.subf %176, %242 : vector<1x16xf32>
    %244 = vector.broadcast %241 : vector<1x16xf32> to vector<64x16xf32>
    %245 = arith.mulf %174, %244 : vector<64x16xf32>
    %246 = vector.broadcast %243 : vector<1x16xf32> to vector<64x16xf32>
    %247 = arith.addf %245, %246 : vector<64x16xf32>
    %248 = arith.addf %170, %247 : vector<64x16xf32>
    %cst_70 = arith.constant 0.000000e+00 : f32
    %249 = vector.broadcast %cst_70 : f32 to vector<64x16xf32>
    %250 = arith.maximumf %248, %249 : vector<64x16xf32>
    %cst_71 = arith.constant dense<0.000000e+00> : vector<16xf32>
    %251 = vector.multi_reduction <add>, %250, %cst_71 [0] : vector<64x16xf32> to vector<16xf32>
    %252 = vector.shape_cast %251 : vector<16xf32> to vector<1x16xf32>
    %cst_72 = arith.constant 6.400000e+01 : f32
    %253 = vector.broadcast %cst_72 : f32 to vector<1x16xf32>
    %254 = arith.divf %252, %253 : vector<1x16xf32>
    %c0_73 = arith.constant 0 : index
    %c0_74 = arith.constant 0 : index
    %255 = vector.load %arg12[%c0_73, %c0_74] : memref<16x10xf32, #tpu.memory_space<vmem>>, vector<16x10xf32>
    %cst_75 = arith.constant dense<0.000000e+00> : vector<1x10xf32>
    %256 = tpu.matmul %254, %255, %cst_75 {dimension_numbers = #tpu.dot_dimension_numbers<[1], [0], [0], [1], [0, 0, 1, 1], [], []>} : vector<1x16xf32>, vector<16x10xf32>, vector<1x10xf32> -> vector<1x10xf32>
    %c0_76 = arith.constant 0 : index
    %c0_77 = arith.constant 0 : index
    %257 = vector.load %arg13[%c0_76, %c0_77] : memref<1x10xf32, #tpu.memory_space<vmem>>, vector<1x10xf32>
    %258 = arith.addf %256, %257 : vector<1x10xf32>
    %259 = vector.shape_cast %258 : vector<1x10xf32> to vector<1x1x10xf32>
    %c0_78 = arith.constant 0 : index
    %c0_79 = arith.constant 0 : index
    %c0_80 = arith.constant 0 : index
    %260 = vector.load %arg14[%c0_78, %c0_79, %c0_80] : memref<1x1x10xf32, #tpu.memory_space<vmem>>, vector<1x1x10xf32>
    tpu.vector_store %arg14[%c0_78, %c0_79, %c0_80], %259 {strides = array<i32>} : memref<1x1x10xf32, #tpu.memory_space<vmem>>, vector<1x1x10xf32>,
    return
  }
  func.func @transform_0(%arg0: i32) -> (i32, i32, i32) {
    %c0_i32 = arith.constant 0 : i32
    %c0_i32_0 = arith.constant 0 : i32
    %c0_i32_1 = arith.constant 0 : i32
    return %arg0, %c0_i32, %c0_i32_0 : i32, i32, i32
  }
  func.func @transform_1(%arg0: i32) -> (i32, i32, i32) {
    %c0_i32 = arith.constant 0 : i32
    %c0_i32_0 = arith.constant 0 : i32
    %c0_i32_1 = arith.constant 0 : i32
    return %arg0, %c0_i32, %c0_i32_0 : i32, i32, i32
  }
  func.func @transform_2(%arg0: i32) -> (i32, i32) {
    %c0_i32 = arith.constant 0 : i32
    %c0_i32_0 = arith.constant 0 : i32
    %c0_i32_1 = arith.constant 0 : i32
    return %c0_i32, %c0_i32_0 : i32, i32
  }
  func.func @transform_3(%arg0: i32) -> (i32, i32) {
    %c0_i32 = arith.constant 0 : i32
    %c0_i32_0 = arith.constant 0 : i32
    %c0_i32_1 = arith.constant 0 : i32
    return %c0_i32, %c0_i32_0 : i32, i32
  }
  func.func @transform_4(%arg0: i32) -> (i32, i32) {
    %c0_i32 = arith.constant 0 : i32
    %c0_i32_0 = arith.constant 0 : i32
    %c0_i32_1 = arith.constant 0 : i32
    return %c0_i32, %c0_i32_0 : i32, i32
  }
  func.func @transform_5(%arg0: i32) -> (i32, i32) {
    %c0_i32 = arith.constant 0 : i32
    %c0_i32_0 = arith.constant 0 : i32
    %c0_i32_1 = arith.constant 0 : i32
    return %c0_i32, %c0_i32_0 : i32, i32
  }
  func.func @transform_6(%arg0: i32) -> (i32, i32) {
    %c0_i32 = arith.constant 0 : i32
    %c0_i32_0 = arith.constant 0 : i32
    %c0_i32_1 = arith.constant 0 : i32
    return %c0_i32, %c0_i32_0 : i32, i32
  }
  func.func @transform_7(%arg0: i32) -> (i32, i32) {
    %c0_i32 = arith.constant 0 : i32
    %c0_i32_0 = arith.constant 0 : i32
    %c0_i32_1 = arith.constant 0 : i32
    return %c0_i32, %c0_i32_0 : i32, i32
  }
  func.func @transform_8(%arg0: i32) -> (i32, i32) {
    %c0_i32 = arith.constant 0 : i32
    %c0_i32_0 = arith.constant 0 : i32
    %c0_i32_1 = arith.constant 0 : i32
    return %c0_i32, %c0_i32_0 : i32, i32
  }
  func.func @transform_9(%arg0: i32) -> (i32, i32) {
    %c0_i32 = arith.constant 0 : i32
    %c0_i32_0 = arith.constant 0 : i32
    %c0_i32_1 = arith.constant 0 : i32
    return %c0_i32, %c0_i32_0 : i32, i32
  }
  func.func @transform_10(%arg0: i32) -> (i32, i32) {
    %c0_i32 = arith.constant 0 : i32
    %c0_i32_0 = arith.constant 0 : i32
    %c0_i32_1 = arith.constant 0 : i32
    return %c0_i32, %c0_i32_0 : i32, i32
  }
  func.func @transform_11(%arg0: i32) -> (i32, i32) {
    %c0_i32 = arith.constant 0 : i32
    %c0_i32_0 = arith.constant 0 : i32
    %c0_i32_1 = arith.constant 0 : i32
    return %c0_i32, %c0_i32_0 : i32, i32
  }
  func.func @transform_12(%arg0: i32) -> (i32, i32) {
    %c0_i32 = arith.constant 0 : i32
    %c0_i32_0 = arith.constant 0 : i32
    %c0_i32_1 = arith.constant 0 : i32
    return %c0_i32, %c0_i32_0 : i32, i32
  }
  func.func @transform_13(%arg0: i32) -> (i32, i32, i32) {
    %c0_i32 = arith.constant 0 : i32
    %c0_i32_0 = arith.constant 0 : i32
    %c0_i32_1 = arith.constant 0 : i32
    return %arg0, %c0_i32, %c0_i32_0 : i32, i32, i32
  }
}

</mosaic_0001>

<llo_original>
// kernel: resnet_forward.3
$region0: #{resnet_forward.3}
  #allocation0 [shape = 'u32[]', space=smem, size = 0x4, offset = 0x4, fixed_abs, tag = 'smem constant byte address 0x4 - core index']
  #allocation1 [shape = 'u32[72,128]{1,0:T(1,128)}', space=vmem, size = 0x9000, scoped, tag = 'internal scratch']
  %s0 = inlined_call_operand.vmem [shape: f32[2,256,4], index: 0, kind: input, shape index: {}]
  %s1 = inlined_call_operand.vmem [shape: bf16[36,8], index: 1, kind: input, shape index: {}]
  %s2 = inlined_call_operand.vmem [shape: f32[1,8], index: 2, kind: input, shape index: {}]
  %s3 = inlined_call_operand.vmem [shape: f32[1,8], index: 3, kind: input, shape index: {}]
  %s4 = inlined_call_operand.vmem [shape: f32[2,256,8], index: 4, kind: output, shape index: {}]
  %s5 = sld [smem:[#allocation0]]
  $region49: #{resnet_forward.3} parent=0
    _
  %s7 = ssub.s32 1, %s5
  %s8 = scalar_select 0, %s7, %s5
  loop: start=0, step=1, limit=4
  $region2: #{resnet_forward.3} parent=0 // loop_pre_header
    _
  $region3: #{resnet_forward.3} parent=0 // loop_header
    %s10 = sphi 0, %s14
    %p11 = scmp.ge.s32.totalorder %s10, 4
    %s20 = sphi 0, %s22
    %s23 = sphi 0, %s20
    %s24 = sphi 0, %s23
    %s40 = sphi 0, %s24
    %s44 = sphi 0, %s44
    %s46 = sphi 0, %s44
    %s47 = sphi 0, %s46
    %s61 = sphi 0, %s47
    %s65 = sphi 0, %s65
    %s67 = sphi 0, %s65
    %s68 = sphi 0, %s67
    %s82 = sphi 0, %s68
    %s86 = sphi 0, %s86
    %s88 = sphi 0, %s86
    %s89 = sphi 0, %s88
    %s103 = sphi 0, %s89
    %s109 = sphi 0, %s111
    %s112 = sphi 0, %s109
    %s113 = sphi 0, %s112
    %s129 = sphi 0, %s113
  $region4: #{resnet_forward.3} parent=0 // loop_header_branch
    %13 = sbr.rel (%p11) target = $region8
  $region5: #{resnet_forward.3} parent=0 // loop_body
    %s15 = ssub.s32 %s10, 1
    %s16 = ssub.s32 %s10, 2
    %s17 = sadd.s32 %s10, 1
    %s18 = ssub.s32 %s10, %s17
    %p19 = scmp.eq.s32.totalorder %s18, 0
    %s21 = sadd.s32 %s20, 1
    %s22 = scalar_select %p19, %s20, %s21
    %p25 = pneg %p19
    %p26 = scmp.eq.s32.totalorder %s10, 1
    %p27 = por %p25, %p26
    %p28 = scmp.ne.s32.totalorder %s20, %s23
    %p29 = scmp.eq.s32.totalorder %s10, 0
    %p30 = por %p28, %p29
    %p31 = scmp.ne.s32.totalorder %s20, %s23
    %p32 = scmp.eq.s32.totalorder %s15, 1
    %p33 = por %p31, %p32
    %p34 = scmp.ne.s32.totalorder %s23, %s24
    %p35 = scmp.eq.s32.totalorder %s15, 0
    %p36 = por %p34, %p35
    %p37 = scmp.ne.s32.totalorder %s23, %s24
    %p38 = scmp.eq.s32.totalorder %s16, 1
    %p39 = por %p37, %p38
    %p41 = scmp.ne.s32.totalorder %s24, %s40
    %p42 = scmp.eq.s32.totalorder %s16, 0
    %p43 = por %p41, %p42
    %s45 = sadd.s32 %s44, 1
    %p48 = scmp.eq.s32.totalorder %s10, 1
    %p49 = scmp.ne.s32.totalorder %s44, %s46
    %p50 = scmp.eq.s32.totalorder %s10, 0
    %p51 = por %p49, %p50
    %p52 = scmp.ne.s32.totalorder %s44, %s46
    %p53 = scmp.eq.s32.totalorder %s15, 1
    %p54 = por %p52, %p53
    %p55 = scmp.ne.s32.totalorder %s46, %s47
    %p56 = scmp.eq.s32.totalorder %s15, 0
    %p57 = por %p55, %p56
    %p58 = scmp.ne.s32.totalorder %s46, %s47
    %p59 = scmp.eq.s32.totalorder %s16, 1
    %p60 = por %p58, %p59
    %p62 = scmp.ne.s32.totalorder %s47, %s61
    %p63 = scmp.eq.s32.totalorder %s16, 0
    %p64 = por %p62, %p63
    %s66 = sadd.s32 %s65, 1
    %p69 = scmp.eq.s32.totalorder %s10, 1
    %p70 = scmp.ne.s32.totalorder %s65, %s67
    %p71 = scmp.eq.s32.totalorder %s10, 0
    %p72 = por %p70, %p71
    %p73 = scmp.ne.s32.totalorder %s65, %s67
    %p74 = scmp.eq.s32.totalorder %s15, 1
    %p75 = por %p73, %p74
    %p76 = scmp.ne.s32.totalorder %s67, %s68
    %p77 = scmp.eq.s32.totalorder %s15, 0
    %p78 = por %p76, %p77
    %p79 = scmp.ne.s32.totalorder %s67, %s68
    %p80 = scmp.eq.s32.totalorder %s16, 1
    %p81 = por %p79, %p80
    %p83 = scmp.ne.s32.totalorder %s68, %s82
    %p84 = scmp.eq.s32.totalorder %s16, 0
    %p85 = por %p83, %p84
    %s87 = sadd.s32 %s86, 1
    %p90 = scmp.eq.s32.totalorder %s10, 1
    %p91 = scmp.ne.s32.totalorder %s86, %s88
    %p92 = scmp.eq.s32.totalorder %s10, 0
    %p93 = por %p91, %p92
    %p94 = scmp.ne.s32.totalorder %s86, %s88
    %p95 = scmp.eq.s32.totalorder %s15, 1
    %p96 = por %p94, %p95
    %p97 = scmp.ne.s32.totalorder %s88, %s89
    %p98 = scmp.eq.s32.totalorder %s15, 0
    %p99 = por %p97, %p98
    %p100 = scmp.ne.s32.totalorder %s88, %s89
    %p101 = scmp.eq.s32.totalorder %s16, 1
    %p102 = por %p100, %p101
    %p104 = scmp.ne.s32.totalorder %s89, %s103
    %p105 = scmp.eq.s32.totalorder %s16, 0
    %p106 = por %p104, %p105
    %s107 = ssub.s32 %s10, %s17
    %p108 = scmp.eq.s32.totalorder %s107, 0
    %s110 = sadd.s32 %s109, 1
    %s111 = scalar_select %p108, %s109, %s110
    %p114 = pneg %p108
    %p115 = scmp.eq.s32.totalorder %s10, 1
    %p116 = por %p114, %p115
    %p117 = scmp.ne.s32.totalorder %s109, %s112
    %p118 = scmp.eq.s32.totalorder %s10, 0
    %p119 = por %p117, %p118
    %p120 = scmp.ne.s32.totalorder %s109, %s112
    %p121 = scmp.eq.s32.totalorder %s15, 1
    %p122 = por %p120, %p121
    %p123 = scmp.ne.s32.totalorder %s112, %s113
    %p124 = scmp.eq.s32.totalorder %s15, 0
    %p125 = por %p123, %p124
    %p126 = scmp.ne.s32.totalorder %s112, %s113
    %p127 = scmp.eq.s32.totalorder %s16, 1
    %p128 = por %p126, %p127
    %p130 = scmp.ne.s32.totalorder %s113, %s129
    %p131 = scmp.eq.s32.totalorder %s16, 0
    %p132 = por %p130, %p131
    %p133 = scmp.le.s32.totalorder 1, %s10
    %p134 = scmp.lt.s32.totalorder %s10, 3
    %p135 = pnand %p133, %p134
    %p136 = pneg %p135
    // Predicated region
    $region9: #{resnet_forward.3} parent=5 // pred_check
      _
    $region10: #{resnet_forward.3} parent=5 // pred_check_branch
      %138 = sbr.rel (%p135) target = $region12
    $region11: #{resnet_forward.3} parent=5 // pred_region
      %s139 = ssub.s32 %s10, 1
      // Predicated region
      $region13: #{resnet_forward.3} parent=11 // pred_check
        %p140 = pneg %p57
      $region14: #{resnet_forward.3} parent=11 // pred_check_branch
        %142 = sbr.rel (%p140) target = $region16
      $region15: #{resnet_forward.3} parent=11 // pred_region
        _
      $region16: #{resnet_forward.3} parent=11 // pred_fallthru
        _
      // Predicated region
      $region17: #{resnet_forward.3} parent=11 // pred_check
        %p143 = pneg %p78
      $region18: #{resnet_forward.3} parent=11 // pred_check_branch
        %145 = sbr.rel (%p143) target = $region20
      $region19: #{resnet_forward.3} parent=11 // pred_region
        _
      $region20: #{resnet_forward.3} parent=11 // pred_fallthru
        _
      // Predicated region
      $region21: #{resnet_forward.3} parent=11 // pred_check
        %p146 = pneg %p99
      $region22: #{resnet_forward.3} parent=11 // pred_check_branch
        %148 = sbr.rel (%p146) target = $region24
      $region23: #{resnet_forward.3} parent=11 // pred_region
        _
      $region24: #{resnet_forward.3} parent=11 // pred_fallthru
        _
    $region12: #{resnet_forward.3} parent=5 // pred_fallthru
      _
    %p149 = scmp.lt.s32.totalorder %s10, 2
    // Predicated region
    $region25: #{resnet_forward.3} parent=5 // pred_check
      %p150 = pneg %p149
    $region26: #{resnet_forward.3} parent=5 // pred_check_branch
      %152 = sbr.rel (%p150) target = $region28
    $region27: #{resnet_forward.3} parent=5 // pred_region
      // Predicated region
      $region29: #{resnet_forward.3} parent=27 // pred_check
        %p153 = pneg %p30
      $region30: #{resnet_forward.3} parent=27 // pred_check_branch
        %155 = sbr.rel (%p153) target = $region32
      $region31: #{resnet_forward.3} parent=27 // pred_region
        %p156 = scmp.lt.s32.totalorder %s10, 1
        %s157 = scalar_select %p156, %s10, 1
        %s158 = smul.addr %s157, 32
        %s159 = smul.addr %s158, 8
        %s160 = scalar_lea.vmem %s0, %s159
      $region32: #{resnet_forward.3} parent=27 // pred_fallthru
        _
    $region28: #{resnet_forward.3} parent=5 // pred_fallthru
      _
    %p161 = scmp.le.s32.totalorder 1, %s10
    %p162 = scmp.lt.s32.totalorder %s10, 3
    %p163 = pnand %p161, %p162
    %p164 = pneg %p163
    // Predicated region
    $region33: #{resnet_forward.3} parent=5 // pred_check
      _
    $region34: #{resnet_forward.3} parent=5 // pred_check_branch
      %166 = sbr.rel (%p163) target = $region36
    $region35: #{resnet_forward.3} parent=5 // pred_region
      %s167 = ssub.s32 %s10, 1
      %p168 = scmp.lt.s32.totalorder %s15, 1
      %s169 = scalar_select %p168, %s15, 1
      %s170 = smul.addr %s169, 32
      %s171 = smul.addr %s170, 8
      %s172 = scalar_lea.vmem %s0, %s171
      %p173 = pneg %p36
      %p174 = pneg %p33
      %p175 = pneg %p57
      %p176 = pneg %p54
      %p177 = pneg %p78
      %p178 = pneg %p75
      %p179 = pneg %p99
      %p180 = pneg %p96
      %p181 = pneg %p125
      %p182 = pneg %p122
      %p183 = scmp.lt.s32.totalorder %s15, 1
      %s184 = scalar_select %p183, %s15, 1
      %s185 = smul.addr %s184, 32
      %s186 = smul.addr %s185, 8
      %s187 = scalar_lea.vmem %s4, %s186
      %p188 = scmp.lt.s32.totalorder %s15, 1
      %s189 = scalar_select %p188, %s15, 1
      %s190 = smul.addr %s189, 32
      %s191 = smul.addr %s190, 8
      %s192 = scalar_lea.vmem %s0, %s191
      %p193 = scmp.lt.s32.totalorder %s15, 1
      %s194 = scalar_select %p193, %s15, 1
      %s195 = smul.addr %s194, 32
      %s196 = smul.addr %s195, 8
      %s197 = scalar_lea.vmem %s4, %s196
      %v199 = vld [vmem:[%s192] sm:$0xff]
      %v200 = vld [vmem:[%s192 + $0x8] sm:$0xff]
      %v201 = vld [vmem:[%s192 + $0x10] sm:$0xff]
      %v202 = vld [vmem:[%s192 + $0x18] sm:$0xff]
      %v203 = vld [vmem:[%s192 + $0x20] sm:$0xff]
      %v204 = vld [vmem:[%s192 + $0x28] sm:$0xff]
      %v205 = vld [vmem:[%s192 + $0x30] sm:$0xff]
      %v206 = vld [vmem:[%s192 + $0x38] sm:$0xff]
      %v207 = vld [vmem:[%s192 + $0x40] sm:$0xff]
      %v208 = vld [vmem:[%s192 + $0x48] sm:$0xff]
      %v209 = vld [vmem:[%s192 + $0x50] sm:$0xff]
      %v210 = vld [vmem:[%s192 + $0x58] sm:$0xff]
      %v211 = vld [vmem:[%s192 + $0x60] sm:$0xff]
      %v212 = vld [vmem:[%s192 + $0x68] sm:$0xff]
      %v213 = vld [vmem:[%s192 + $0x70] sm:$0xff]
      %v214 = vld [vmem:[%s192 + $0x78] sm:$0xff]
      %v215 = vld [vmem:[%s192 + $0x80] sm:$0xff]
      %v216 = vld [vmem:[%s192 + $0x88] sm:$0xff]
      %v217 = vld [vmem:[%s192 + $0x90] sm:$0xff]
      %v218 = vld [vmem:[%s192 + $0x98] sm:$0xff]
      %v219 = vld [vmem:[%s192 + $0xa0] sm:$0xff]
      %v220 = vld [vmem:[%s192 + $0xa8] sm:$0xff]
      %v221 = vld [vmem:[%s192 + $0xb0] sm:$0xff]
      %v222 = vld [vmem:[%s192 + $0xb8] sm:$0xff]
      %v223 = vld [vmem:[%s192 + $0xc0] sm:$0xff]
      %v224 = vld [vmem:[%s192 + $0xc8] sm:$0xff]
      %v225 = vld [vmem:[%s192 + $0xd0] sm:$0xff]
      %v226 = vld [vmem:[%s192 + $0xd8] sm:$0xff]
      %v227 = vld [vmem:[%s192 + $0xe0] sm:$0xff]
      %v228 = vld [vmem:[%s192 + $0xe8] sm:$0xff]
      %v229 = vld [vmem:[%s192 + $0xf0] sm:$0xff]
      %v230 = vld [vmem:[%s192 + $0xf8] sm:$0xff]
      %vm264 = vcmask 1040384
      %v265 = vrot.slane 0.0, 7
      %v266 = vsel %vm264, %v265, %v265
      %v267 = vrot.slane %v199, 7
      %v268 = vrot.slane %v200, 7
      %v269 = vsel %vm264, %v267, %v268
      %v270 = vrot.slane %v201, 7
      %v271 = vrot.slane %v202, 7
      %v272 = vsel %vm264, %v270, %v271
      %v273 = vrot.slane %v203, 7
      %v274 = vrot.slane %v204, 7
      %v275 = vsel %vm264, %v273, %v274
      %v276 = vrot.slane %v205, 7
      %v277 = vrot.slane %v206, 7
      %v278 = vsel %vm264, %v276, %v277
      %v279 = vrot.slane %v207, 7
      %v280 = vrot.slane %v208, 7
      %v281 = vsel %vm264, %v279, %v280
      %v282 = vrot.slane %v209, 7
      %v283 = vrot.slane %v210, 7
      %v284 = vsel %vm264, %v282, %v283
      %v285 = vrot.slane %v211, 7
      %v286 = vrot.slane %v212, 7
      %v287 = vsel %vm264, %v285, %v286
      %v288 = vrot.slane %v213, 7
      %v289 = vrot.slane %v214, 7
      %v290 = vsel %vm264, %v288, %v289
      %v291 = vrot.slane %v215, 7
      %v292 = vrot.slane %v216, 7
      %v293 = vsel %vm264, %v291, %v292
      %v294 = vrot.slane %v217, 7
      %v295 = vrot.slane %v218, 7
      %v296 = vsel %vm264, %v294, %v295
      %v297 = vrot.slane %v219, 7
      %v298 = vrot.slane %v220, 7
      %v299 = vsel %vm264, %v297, %v298
      %v300 = vrot.slane %v221, 7
      %v301 = vrot.slane %v222, 7
      %v302 = vsel %vm264, %v300, %v301
      %v303 = vrot.slane %v223, 7
      %v304 = vrot.slane %v224, 7
      %v305 = vsel %vm264, %v303, %v304
      %v306 = vrot.slane %v225, 7
      %v307 = vrot.slane %v226, 7
      %v308 = vsel %vm264, %v306, %v307
      %v309 = vrot.slane %v227, 7
      %v310 = vrot.slane %v228, 7
      %v311 = vsel %vm264, %v309, %v310
      %v312 = vrot.slane %v229, 7
      %v313 = vrot.slane %v230, 7
      %v314 = vsel %vm264, %v312, %v313
      %v364 = vsel %vm264, 0.0, %v265
      %v365 = vsel %vm264, 0.0, %v267
      %v366 = vsel %vm264, 0.0, %v270
      %v367 = vsel %vm264, 0.0, %v273
      %v368 = vsel %vm264, 0.0, %v276
      %v369 = vsel %vm264, 0.0, %v279
      %v370 = vsel %vm264, 0.0, %v282
      %v371 = vsel %vm264, 0.0, %v285
      %v372 = vsel %vm264, 0.0, %v288
      %v373 = vsel %vm264, 0.0, %v291
      %v374 = vsel %vm264, 0.0, %v294
      %v375 = vsel %vm264, 0.0, %v297
      %v376 = vsel %vm264, 0.0, %v300
      %v377 = vsel %vm264, 0.0, %v303
      %v378 = vsel %vm264, 0.0, %v306
      %v379 = vsel %vm264, 0.0, %v309
      %v380 = vsel %vm264, 0.0, %v312
      %v381 = vsel %vm264, %v265, 0.0
      %v382 = vsel %vm264, %v268, 0.0
      %v383 = vsel %vm264, %v271, 0.0
      %v384 = vsel %vm264, %v274, 0.0
      %v385 = vsel %vm264, %v277, 0.0
      %v386 = vsel %vm264, %v280, 0.0
      %v387 = vsel %vm264, %v283, 0.0
      %v388 = vsel %vm264, %v286, 0.0
      %v389 = vsel %vm264, %v289, 0.0
      %v390 = vsel %vm264, %v292, 0.0
      %v391 = vsel %vm264, %v295, 0.0
      %v392 = vsel %vm264, %v298, 0.0
      %v393 = vsel %vm264, %v301, 0.0
      %v394 = vsel %vm264, %v304, 0.0
      %v395 = vsel %vm264, %v307, 0.0
      %v396 = vsel %vm264, %v310, 0.0
      %v397 = vsel %vm264, %v313, 0.0
      %vm430 = vcmask 1046528
      %v431 = vrot.slane %v364, 1
      %v432 = vrot.slane %v266, 1
      %v433 = vsel %vm430, %v431, %v432
      %v434 = vrot.slane %v381, 1
      %v435 = vsel %vm430, %v432, %v434
      %v436 = vrot.slane %v365, 1
      %v437 = vrot.slane %v269, 1
      %v438 = vsel %vm430, %v436, %v437
      %v439 = vrot.slane %v382, 1
      %v440 = vsel %vm430, %v437, %v439
      %v441 = vrot.slane %v366, 1
      %v442 = vrot.slane %v272, 1
      %v443 = vsel %vm430, %v441, %v442
      %v444 = vrot.slane %v383, 1
      %v445 = vsel %vm430, %v442, %v444
      %v446 = vrot.slane %v367, 1
      %v447 = vrot.slane %v275, 1
      %v448 = vsel %vm430, %v446, %v447
      %v449 = vrot.slane %v384, 1
      %v450 = vsel %vm430, %v447, %v449
      %v451 = vrot.slane %v368, 1
      %v452 = vrot.slane %v278, 1
      %v453 = vsel %vm430, %v451, %v452
      %v454 = vrot.slane %v385, 1
      %v455 = vsel %vm430, %v452, %v454
      %v456 = vrot.slane %v369, 1
      %v457 = vrot.slane %v281, 1
      %v458 = vsel %vm430, %v456, %v457
      %v459 = vrot.slane %v386, 1
      %v460 = vsel %vm430, %v457, %v459
      %v461 = vrot.slane %v370, 1
      %v462 = vrot.slane %v284, 1
      %v463 = vsel %vm430, %v461, %v462
      %v464 = vrot.slane %v387, 1
      %v465 = vsel %vm430, %v462, %v464
      %v466 = vrot.slane %v371, 1
      %v467 = vrot.slane %v287, 1
      %v468 = vsel %vm430, %v466, %v467
      %v469 = vrot.slane %v388, 1
      %v470 = vsel %vm430, %v467, %v469
      %v471 = vrot.slane %v372, 1
      %v472 = vrot.slane %v290, 1
      %v473 = vsel %vm430, %v471, %v472
      %v474 = vrot.slane %v389, 1
      %v475 = vsel %vm430, %v472, %v474
      %v476 = vrot.slane %v373, 1
      %v477 = vrot.slane %v293, 1
      %v478 = vsel %vm430, %v476, %v477
      %v479 = vrot.slane %v390, 1
      %v480 = vsel %vm430, %v477, %v479
      %v481 = vrot.slane %v374, 1
      %v482 = vrot.slane %v296, 1
      %v483 = vsel %vm430, %v481, %v482
      %v484 = vrot.slane %v391, 1
      %v485 = vsel %vm430, %v482, %v484
      %v486 = vrot.slane %v375, 1
      %v487 = vrot.slane %v299, 1
      %v488 = vsel %vm430, %v486, %v487
      %v489 = vrot.slane %v392, 1
      %v490 = vsel %vm430, %v487, %v489
      %v491 = vrot.slane %v376, 1
      %v492 = vrot.slane %v302, 1
      %v493 = vsel %vm430, %v491, %v492
      %v494 = vrot.slane %v393, 1
      %v495 = vsel %vm430, %v492, %v494
      %v496 = vrot.slane %v377, 1
      %v497 = vrot.slane %v305, 1
      %v498 = vsel %vm430, %v496, %v497
      %v499 = vrot.slane %v394, 1
      %v500 = vsel %vm430, %v497, %v499
      %v501 = vrot.slane %v378, 1
      %v502 = vrot.slane %v308, 1
      %v503 = vsel %vm430, %v501, %v502
      %v504 = vrot.slane %v395, 1
      %v505 = vsel %vm430, %v502, %v504
      %v506 = vrot.slane %v379, 1
      %v507 = vrot.slane %v311, 1
      %v508 = vsel %vm430, %v506, %v507
      %v509 = vrot.slane %v396, 1
      %v510 = vsel %vm430, %v507, %v509
      %511 = vrot.lane.b32.xlu0 %v433, 4
      %v512 = vpop.permute.xlu0 %511
      %513 = vrot.lane.b32.xlu0 %v435, 4
      %v514 = vpop.permute.xlu0 %513
      %515 = vrot.lane.b32.xlu0 %v438, 4
      %v516 = vpop.permute.xlu0 %515
      %517 = vrot.lane.b32.xlu0 %v440, 4
      %v518 = vpop.permute.xlu0 %517
      %519 = vrot.lane.b32.xlu0 %v443, 4
      %v520 = vpop.permute.xlu0 %519
      %521 = vrot.lane.b32.xlu0 %v445, 4
      %v522 = vpop.permute.xlu0 %521
      %523 = vrot.lane.b32.xlu0 %v448, 4
      %v524 = vpop.permute.xlu0 %523
      %525 = vrot.lane.b32.xlu0 %v450, 4
      %v526 = vpop.permute.xlu0 %525
      %527 = vrot.lane.b32.xlu0 %v453, 4
      %v528 = vpop.permute.xlu0 %527
      %529 = vrot.lane.b32.xlu0 %v455, 4
      %v530 = vpop.permute.xlu0 %529
      %531 = vrot.lane.b32.xlu0 %v458, 4
      %v532 = vpop.permute.xlu0 %531
      %533 = vrot.lane.b32.xlu0 %v460, 4
      %v534 = vpop.permute.xlu0 %533
      %535 = vrot.lane.b32.xlu0 %v463, 4
      %v536 = vpop.permute.xlu0 %535
      %537 = vrot.lane.b32.xlu0 %v465, 4
      %v538 = vpop.permute.xlu0 %537
      %539 = vrot.lane.b32.xlu0 %v468, 4
      %v540 = vpop.permute.xlu0 %539
      %541 = vrot.lane.b32.xlu0 %v470, 4
      %v542 = vpop.permute.xlu0 %541
      %543 = vrot.lane.b32.xlu0 %v473, 4
      %v544 = vpop.permute.xlu0 %543
      %545 = vrot.lane.b32.xlu0 %v475, 4
      %v546 = vpop.permute.xlu0 %545
      %547 = vrot.lane.b32.xlu0 %v478, 4
      %v548 = vpop.permute.xlu0 %547
      %549 = vrot.lane.b32.xlu0 %v480, 4
      %v550 = vpop.permute.xlu0 %549
      %551 = vrot.lane.b32.xlu0 %v483, 4
      %v552 = vpop.permute.xlu0 %551
      %553 = vrot.lane.b32.xlu0 %v485, 4
      %v554 = vpop.permute.xlu0 %553
      %555 = vrot.lane.b32.xlu0 %v488, 4
      %v556 = vpop.permute.xlu0 %555
      %557 = vrot.lane.b32.xlu0 %v490, 4
      %v558 = vpop.permute.xlu0 %557
      %559 = vrot.lane.b32.xlu0 %v493, 4
      %v560 = vpop.permute.xlu0 %559
      %561 = vrot.lane.b32.xlu0 %v495, 4
      %v562 = vpop.permute.xlu0 %561
      %563 = vrot.lane.b32.xlu0 %v498, 4
      %v564 = vpop.permute.xlu0 %563
      %565 = vrot.lane.b32.xlu0 %v500, 4
      %v566 = vpop.permute.xlu0 %565
      %567 = vrot.lane.b32.xlu0 %v503, 4
      %v568 = vpop.permute.xlu0 %567
      %569 = vrot.lane.b32.xlu0 %v505, 4
      %v570 = vpop.permute.xlu0 %569
      %571 = vrot.lane.b32.xlu0 %v508, 4
      %v572 = vpop.permute.xlu0 %571
      %573 = vrot.lane.b32.xlu0 %v510, 4
      %v574 = vpop.permute.xlu0 %573
      %vm607 = vcmask 1045504
      %v608 = vrot.slane %v364, 2
      %v609 = vrot.slane %v266, 2
      %v610 = vsel %vm607, %v608, %v609
      %v611 = vrot.slane %v381, 2
      %v612 = vsel %vm607, %v609, %v611
      %v613 = vrot.slane %v365, 2
      %v614 = vrot.slane %v269, 2
      %v615 = vsel %vm607, %v613, %v614
      %v616 = vrot.slane %v382, 2
      %v617 = vsel %vm607, %v614, %v616
      %v618 = vrot.slane %v366, 2
      %v619 = vrot.slane %v272, 2
      %v620 = vsel %vm607, %v618, %v619
      %v621 = vrot.slane %v383, 2
      %v622 = vsel %vm607, %v619, %v621
      %v623 = vrot.slane %v367, 2
      %v624 = vrot.slane %v275, 2
      %v625 = vsel %vm607, %v623, %v624
      %v626 = vrot.slane %v384, 2
      %v627 = vsel %vm607, %v624, %v626
      %v628 = vrot.slane %v368, 2
      %v629 = vrot.slane %v278, 2
      %v630 = vsel %vm607, %v628, %v629
      %v631 = vrot.slane %v385, 2
      %v632 = vsel %vm607, %v629, %v631
      %v633 = vrot.slane %v369, 2
      %v634 = vrot.slane %v281, 2
      %v635 = vsel %vm607, %v633, %v634
      %v636 = vrot.slane %v386, 2
      %v637 = vsel %vm607, %v634, %v636
      %v638 = vrot.slane %v370, 2
      %v639 = vrot.slane %v284, 2
      %v640 = vsel %vm607, %v638, %v639
      %v641 = vrot.slane %v387, 2
      %v642 = vsel %vm607, %v639, %v641
      %v643 = vrot.slane %v371, 2
      %v644 = vrot.slane %v287, 2
      %v645 = vsel %vm607, %v643, %v644
      %v646 = vrot.slane %v388, 2
      %v647 = vsel %vm607, %v644, %v646
      %v648 = vrot.slane %v372, 2
      %v649 = vrot.slane %v290, 2
      %v650 = vsel %vm607, %v648, %v649
      %v651 = vrot.slane %v389, 2
      %v652 = vsel %vm607, %v649, %v651
      %v653 = vrot.slane %v373, 2
      %v654 = vrot.slane %v293, 2
      %v655 = vsel %vm607, %v653, %v654
      %v656 = vrot.slane %v390, 2
      %v657 = vsel %vm607, %v654, %v656
      %v658 = vrot.slane %v374, 2
      %v659 = vrot.slane %v296, 2
      %v660 = vsel %vm607, %v658, %v659
      %v661 = vrot.slane %v391, 2
      %v662 = vsel %vm607, %v659, %v661
      %v663 = vrot.slane %v375, 2
      %v664 = vrot.slane %v299, 2
      %v665 = vsel %vm607, %v663, %v664
      %v666 = vrot.slane %v392, 2
      %v667 = vsel %vm607, %v664, %v666
      %v668 = vrot.slane %v376, 2
      %v669 = vrot.slane %v302, 2
      %v670 = vsel %vm607, %v668, %v669
      %v671 = vrot.slane %v393, 2
      %v672 = vsel %vm607, %v669, %v671
      %v673 = vrot.slane %v377, 2
      %v674 = vrot.slane %v305, 2
      %v675 = vsel %vm607, %v673, %v674
      %v676 = vrot.slane %v394, 2
      %v677 = vsel %vm607, %v674, %v676
      %v678 = vrot.slane %v378, 2
      %v679 = vrot.slane %v308, 2
      %v680 = vsel %vm607, %v678, %v679
      %v681 = vrot.slane %v395, 2
      %v682 = vsel %vm607, %v679, %v681
      %v683 = vrot.slane %v379, 2
      %v684 = vrot.slane %v311, 2
      %v685 = vsel %vm607, %v683, %v684
      %v686 = vrot.slane %v396, 2
      %v687 = vsel %vm607, %v684, %v686
      %688 = vrot.lane.b32.xlu0 %v610, 8
      %v689 = vpop.permute.xlu0 %688
      %690 = vrot.lane.b32.xlu0 %v612, 8
      %v691 = vpop.permute.xlu0 %690
      %692 = vrot.lane.b32.xlu0 %v615, 8
      %v693 = vpop.permute.xlu0 %692
      %694 = vrot.lane.b32.xlu0 %v617, 8
      %v695 = vpop.permute.xlu0 %694
      %696 = vrot.lane.b32.xlu0 %v620, 8
      %v697 = vpop.permute.xlu0 %696
      %698 = vrot.lane.b32.xlu0 %v622, 8
      %v699 = vpop.permute.xlu0 %698
      %700 = vrot.lane.b32.xlu0 %v625, 8
      %v701 = vpop.permute.xlu0 %700
      %702 = vrot.lane.b32.xlu0 %v627, 8
      %v703 = vpop.permute.xlu0 %702
      %704 = vrot.lane.b32.xlu0 %v630, 8
      %v705 = vpop.permute.xlu0 %704
      %706 = vrot.lane.b32.xlu0 %v632, 8
      %v707 = vpop.permute.xlu0 %706
      %708 = vrot.lane.b32.xlu0 %v635, 8
      %v709 = vpop.permute.xlu0 %708
      %710 = vrot.lane.b32.xlu0 %v637, 8
      %v711 = vpop.permute.xlu0 %710
      %712 = vrot.lane.b32.xlu0 %v640, 8
      %v713 = vpop.permute.xlu0 %712
      %714 = vrot.lane.b32.xlu0 %v642, 8
      %v715 = vpop.permute.xlu0 %714
      %716 = vrot.lane.b32.xlu0 %v645, 8
      %v717 = vpop.permute.xlu0 %716
      %718 = vrot.lane.b32.xlu0 %v647, 8
      %v719 = vpop.permute.xlu0 %718
      %720 = vrot.lane.b32.xlu0 %v650, 8
      %v721 = vpop.permute.xlu0 %720
      %722 = vrot.lane.b32.xlu0 %v652, 8
      %v723 = vpop.permute.xlu0 %722
      %724 = vrot.lane.b32.xlu0 %v655, 8
      %v725 = vpop.permute.xlu0 %724
      %726 = vrot.lane.b32.xlu0 %v657, 8
      %v727 = vpop.permute.xlu0 %726
      %728 = vrot.lane.b32.xlu0 %v660, 8
      %v729 = vpop.permute.xlu0 %728
      %730 = vrot.lane.b32.xlu0 %v662, 8
      %v731 = vpop.permute.xlu0 %730
      %732 = vrot.lane.b32.xlu0 %v665, 8
      %v733 = vpop.permute.xlu0 %732
      %734 = vrot.lane.b32.xlu0 %v667, 8
      %v735 = vpop.permute.xlu0 %734
      %736 = vrot.lane.b32.xlu0 %v670, 8
      %v737 = vpop.permute.xlu0 %736
      %738 = vrot.lane.b32.xlu0 %v672, 8
      %v739 = vpop.permute.xlu0 %738
      %740 = vrot.lane.b32.xlu0 %v675, 8
      %v741 = vpop.permute.xlu0 %740
      %742 = vrot.lane.b32.xlu0 %v677, 8
      %v743 = vpop.permute.xlu0 %742
      %744 = vrot.lane.b32.xlu0 %v680, 8
      %v745 = vpop.permute.xlu0 %744
      %746 = vrot.lane.b32.xlu0 %v682, 8
      %v747 = vpop.permute.xlu0 %746
      %748 = vrot.lane.b32.xlu0 %v685, 8
      %v749 = vpop.permute.xlu0 %748
      %750 = vrot.lane.b32.xlu0 %v687, 8
      %v751 = vpop.permute.xlu0 %750
      %785 = vrot.lane.b32.xlu0 %v365, 12
      %v786 = vpop.permute.xlu0 %785
      %787 = vrot.lane.b32.xlu0 %v269, 12
      %v788 = vpop.permute.xlu0 %787
      %789 = vrot.lane.b32.xlu0 %v366, 12
      %v790 = vpop.permute.xlu0 %789
      %791 = vrot.lane.b32.xlu0 %v272, 12
      %v792 = vpop.permute.xlu0 %791
      %793 = vrot.lane.b32.xlu0 %v367, 12
      %v794 = vpop.permute.xlu0 %793
      %795 = vrot.lane.b32.xlu0 %v275, 12
      %v796 = vpop.permute.xlu0 %795
      %797 = vrot.lane.b32.xlu0 %v368, 12
      %v798 = vpop.permute.xlu0 %797
      %799 = vrot.lane.b32.xlu0 %v278, 12
      %v800 = vpop.permute.xlu0 %799
      %801 = vrot.lane.b32.xlu0 %v369, 12
      %v802 = vpop.permute.xlu0 %801
      %803 = vrot.lane.b32.xlu0 %v281, 12
      %v804 = vpop.permute.xlu0 %803
      %805 = vrot.lane.b32.xlu0 %v370, 12
      %v806 = vpop.permute.xlu0 %805
      %807 = vrot.lane.b32.xlu0 %v284, 12
      %v808 = vpop.permute.xlu0 %807
      %809 = vrot.lane.b32.xlu0 %v371, 12
      %v810 = vpop.permute.xlu0 %809
      %811 = vrot.lane.b32.xlu0 %v287, 12
      %v812 = vpop.permute.xlu0 %811
      %813 = vrot.lane.b32.xlu0 %v372, 12
      %v814 = vpop.permute.xlu0 %813
      %815 = vrot.lane.b32.xlu0 %v290, 12
      %v816 = vpop.permute.xlu0 %815
      %817 = vrot.lane.b32.xlu0 %v373, 12
      %v818 = vpop.permute.xlu0 %817
      %819 = vrot.lane.b32.xlu0 %v293, 12
      %v820 = vpop.permute.xlu0 %819
      %821 = vrot.lane.b32.xlu0 %v374, 12
      %v822 = vpop.permute.xlu0 %821
      %823 = vrot.lane.b32.xlu0 %v296, 12
      %v824 = vpop.permute.xlu0 %823
      %825 = vrot.lane.b32.xlu0 %v375, 12
      %v826 = vpop.permute.xlu0 %825
      %827 = vrot.lane.b32.xlu0 %v299, 12
      %v828 = vpop.permute.xlu0 %827
      %829 = vrot.lane.b32.xlu0 %v376, 12
      %v830 = vpop.permute.xlu0 %829
      %831 = vrot.lane.b32.xlu0 %v302, 12
      %v832 = vpop.permute.xlu0 %831
      %833 = vrot.lane.b32.xlu0 %v377, 12
      %v834 = vpop.permute.xlu0 %833
      %835 = vrot.lane.b32.xlu0 %v305, 12
      %v836 = vpop.permute.xlu0 %835
      %837 = vrot.lane.b32.xlu0 %v378, 12
      %v838 = vpop.permute.xlu0 %837
      %839 = vrot.lane.b32.xlu0 %v308, 12
      %v840 = vpop.permute.xlu0 %839
      %841 = vrot.lane.b32.xlu0 %v379, 12
      %v842 = vpop.permute.xlu0 %841
      %843 = vrot.lane.b32.xlu0 %v311, 12
      %v844 = vpop.permute.xlu0 %843
      %845 = vrot.lane.b32.xlu0 %v380, 12
      %v846 = vpop.permute.xlu0 %845
      %847 = vrot.lane.b32.xlu0 %v314, 12
      %v848 = vpop.permute.xlu0 %847
      %v882 = vrot.slane %v380, 1
      %v883 = vrot.slane %v314, 1
      %v884 = vsel %vm430, %v882, %v883
      %v885 = vrot.slane %v397, 1
      %v886 = vsel %vm430, %v883, %v885
      %887 = vrot.lane.b32.xlu0 %v438, 16
      %v888 = vpop.permute.xlu0 %887
      %889 = vrot.lane.b32.xlu0 %v440, 16
      %v890 = vpop.permute.xlu0 %889
      %891 = vrot.lane.b32.xlu0 %v443, 16
      %v892 = vpop.permute.xlu0 %891
      %893 = vrot.lane.b32.xlu0 %v445, 16
      %v894 = vpop.permute.xlu0 %893
      %895 = vrot.lane.b32.xlu0 %v448, 16
      %v896 = vpop.permute.xlu0 %895
      %897 = vrot.lane.b32.xlu0 %v450, 16
      %v898 = vpop.permute.xlu0 %897
      %899 = vrot.lane.b32.xlu0 %v453, 16
      %v900 = vpop.permute.xlu0 %899
      %901 = vrot.lane.b32.xlu0 %v455, 16
      %v902 = vpop.permute.xlu0 %901
      %903 = vrot.lane.b32.xlu0 %v458, 16
      %v904 = vpop.permute.xlu0 %903
      %905 = vrot.lane.b32.xlu0 %v460, 16
      %v906 = vpop.permute.xlu0 %905
      %907 = vrot.lane.b32.xlu0 %v463, 16
      %v908 = vpop.permute.xlu0 %907
      %909 = vrot.lane.b32.xlu0 %v465, 16
      %v910 = vpop.permute.xlu0 %909
      %911 = vrot.lane.b32.xlu0 %v468, 16
      %v912 = vpop.permute.xlu0 %911
      %913 = vrot.lane.b32.xlu0 %v470, 16
      %v914 = vpop.permute.xlu0 %913
      %915 = vrot.lane.b32.xlu0 %v473, 16
      %v916 = vpop.permute.xlu0 %915
      %917 = vrot.lane.b32.xlu0 %v475, 16
      %v918 = vpop.permute.xlu0 %917
      %919 = vrot.lane.b32.xlu0 %v478, 16
      %v920 = vpop.permute.xlu0 %919
      %921 = vrot.lane.b32.xlu0 %v480, 16
      %v922 = vpop.permute.xlu0 %921
      %923 = vrot.lane.b32.xlu0 %v483, 16
      %v924 = vpop.permute.xlu0 %923
      %925 = vrot.lane.b32.xlu0 %v485, 16
      %v926 = vpop.permute.xlu0 %925
      %927 = vrot.lane.b32.xlu0 %v488, 16
      %v928 = vpop.permute.xlu0 %927
      %929 = vrot.lane.b32.xlu0 %v490, 16
      %v930 = vpop.permute.xlu0 %929
      %931 = vrot.lane.b32.xlu0 %v493, 16
      %v932 = vpop.permute.xlu0 %931
      %933 = vrot.lane.b32.xlu0 %v495, 16
      %v934 = vpop.permute.xlu0 %933
      %935 = vrot.lane.b32.xlu0 %v498, 16
      %v936 = vpop.permute.xlu0 %935
      %937 = vrot.lane.b32.xlu0 %v500, 16
      %v938 = vpop.permute.xlu0 %937
      %939 = vrot.lane.b32.xlu0 %v503, 16
      %v940 = vpop.permute.xlu0 %939
      %941 = vrot.lane.b32.xlu0 %v505, 16
      %v942 = vpop.permute.xlu0 %941
      %943 = vrot.lane.b32.xlu0 %v508, 16
      %v944 = vpop.permute.xlu0 %943
      %945 = vrot.lane.b32.xlu0 %v510, 16
      %v946 = vpop.permute.xlu0 %945
      %947 = vrot.lane.b32.xlu0 %v884, 16
      %v948 = vpop.permute.xlu0 %947
      %949 = vrot.lane.b32.xlu0 %v886, 16
      %v950 = vpop.permute.xlu0 %949
      %v983 = vrot.slane %v380, 2
      %v984 = vrot.slane %v314, 2
      %v985 = vsel %vm607, %v983, %v984
      %v986 = vrot.slane %v397, 2
      %v987 = vsel %vm607, %v984, %v986
      %988 = vrot.lane.b32.xlu0 %v615, 20
      %v989 = vpop.permute.xlu0 %988
      %990 = vrot.lane.b32.xlu0 %v617, 20
      %v991 = vpop.permute.xlu0 %990
      %992 = vrot.lane.b32.xlu0 %v620, 20
      %v993 = vpop.permute.xlu0 %992
      %994 = vrot.lane.b32.xlu0 %v622, 20
      %v995 = vpop.permute.xlu0 %994
      %996 = vrot.lane.b32.xlu0 %v625, 20
      %v997 = vpop.permute.xlu0 %996
      %998 = vrot.lane.b32.xlu0 %v627, 20
      %v999 = vpop.permute.xlu0 %998
      %1000 = vrot.lane.b32.xlu0 %v630, 20
      %v1001 = vpop.permute.xlu0 %1000
      %1002 = vrot.lane.b32.xlu0 %v632, 20
      %v1003 = vpop.permute.xlu0 %1002
      %1004 = vrot.lane.b32.xlu0 %v635, 20
      %v1005 = vpop.permute.xlu0 %1004
      %1006 = vrot.lane.b32.xlu0 %v637, 20
      %v1007 = vpop.permute.xlu0 %1006
      %1008 = vrot.lane.b32.xlu0 %v640, 20
      %v1009 = vpop.permute.xlu0 %1008
      %1010 = vrot.lane.b32.xlu0 %v642, 20
      %v1011 = vpop.permute.xlu0 %1010
      %1012 = vrot.lane.b32.xlu0 %v645, 20
      %v1013 = vpop.permute.xlu0 %1012
      %1014 = vrot.lane.b32.xlu0 %v647, 20
      %v1015 = vpop.permute.xlu0 %1014
      %1016 = vrot.lane.b32.xlu0 %v650, 20
      %v1017 = vpop.permute.xlu0 %1016
      %1018 = vrot.lane.b32.xlu0 %v652, 20
      %v1019 = vpop.permute.xlu0 %1018
      %1020 = vrot.lane.b32.xlu0 %v655, 20
      %v1021 = vpop.permute.xlu0 %1020
      %1022 = vrot.lane.b32.xlu0 %v657, 20
      %v1023 = vpop.permute.xlu0 %1022
      %1024 = vrot.lane.b32.xlu0 %v660, 20
      %v1025 = vpop.permute.xlu0 %1024
      %1026 = vrot.lane.b32.xlu0 %v662, 20
      %v1027 = vpop.permute.xlu0 %1026
      %1028 = vrot.lane.b32.xlu0 %v665, 20
      %v1029 = vpop.permute.xlu0 %1028
      %1030 = vrot.lane.b32.xlu0 %v667, 20
      %v1031 = vpop.permute.xlu0 %1030
      %1032 = vrot.lane.b32.xlu0 %v670, 20
      %v1033 = vpop.permute.xlu0 %1032
      %1034 = vrot.lane.b32.xlu0 %v672, 20
      %v1035 = vpop.permute.xlu0 %1034
      %1036 = vrot.lane.b32.xlu0 %v675, 20
      %v1037 = vpop.permute.xlu0 %1036
      %1038 = vrot.lane.b32.xlu0 %v677, 20
      %v1039 = vpop.permute.xlu0 %1038
      %1040 = vrot.lane.b32.xlu0 %v680, 20
      %v1041 = vpop.permute.xlu0 %1040
      %1042 = vrot.lane.b32.xlu0 %v682, 20
      %v1043 = vpop.permute.xlu0 %1042
      %1044 = vrot.lane.b32.xlu0 %v685, 20
      %v1045 = vpop.permute.xlu0 %1044
      %1046 = vrot.lane.b32.xlu0 %v687, 20
      %v1047 = vpop.permute.xlu0 %1046
      %1048 = vrot.lane.b32.xlu0 %v985, 20
      %v1049 = vpop.permute.xlu0 %1048
      %1050 = vrot.lane.b32.xlu0 %v987, 20
      %v1051 = vpop.permute.xlu0 %1050
      %1084 = vrot.lane.b32.xlu0 %v366, 24
      %v1085 = vpop.permute.xlu0 %1084
      %1086 = vrot.lane.b32.xlu0 %v272, 24
      %v1087 = vpop.permute.xlu0 %1086
      %1088 = vrot.lane.b32.xlu0 %v367, 24
      %v1089 = vpop.permute.xlu0 %1088
      %1090 = vrot.lane.b32.xlu0 %v275, 24
      %v1091 = vpop.permute.xlu0 %1090
      %1092 = vrot.lane.b32.xlu0 %v368, 24
      %v1093 = vpop.permute.xlu0 %1092
      %1094 = vrot.lane.b32.xlu0 %v278, 24
      %v1095 = vpop.permute.xlu0 %1094
      %1096 = vrot.lane.b32.xlu0 %v369, 24
      %v1097 = vpop.permute.xlu0 %1096
      %1098 = vrot.lane.b32.xlu0 %v281, 24
      %v1099 = vpop.permute.xlu0 %1098
      %1100 = vrot.lane.b32.xlu0 %v370, 24
      %v1101 = vpop.permute.xlu0 %1100
      %1102 = vrot.lane.b32.xlu0 %v284, 24
      %v1103 = vpop.permute.xlu0 %1102
      %1104 = vrot.lane.b32.xlu0 %v371, 24
      %v1105 = vpop.permute.xlu0 %1104
      %1106 = vrot.lane.b32.xlu0 %v287, 24
      %v1107 = vpop.permute.xlu0 %1106
      %1108 = vrot.lane.b32.xlu0 %v372, 24
      %v1109 = vpop.permute.xlu0 %1108
      %1110 = vrot.lane.b32.xlu0 %v290, 24
      %v1111 = vpop.permute.xlu0 %1110
      %1112 = vrot.lane.b32.xlu0 %v373, 24
      %v1113 = vpop.permute.xlu0 %1112
      %1114 = vrot.lane.b32.xlu0 %v293, 24
      %v1115 = vpop.permute.xlu0 %1114
      %1116 = vrot.lane.b32.xlu0 %v374, 24
      %v1117 = vpop.permute.xlu0 %1116
      %1118 = vrot.lane.b32.xlu0 %v296, 24
      %v1119 = vpop.permute.xlu0 %1118
      %1120 = vrot.lane.b32.xlu0 %v375, 24
      %v1121 = vpop.permute.xlu0 %1120
      %1122 = vrot.lane.b32.xlu0 %v299, 24
      %v1123 = vpop.permute.xlu0 %1122
      %1124 = vrot.lane.b32.xlu0 %v376, 24
      %v1125 = vpop.permute.xlu0 %1124
      %1126 = vrot.lane.b32.xlu0 %v302, 24
      %v1127 = vpop.permute.xlu0 %1126
      %1128 = vrot.lane.b32.xlu0 %v377, 24
      %v1129 = vpop.permute.xlu0 %1128
      %1130 = vrot.lane.b32.xlu0 %v305, 24
      %v1131 = vpop.permute.xlu0 %1130
      %1132 = vrot.lane.b32.xlu0 %v378, 24
      %v1133 = vpop.permute.xlu0 %1132
      %1134 = vrot.lane.b32.xlu0 %v308, 24
      %v1135 = vpop.permute.xlu0 %1134
      %1136 = vrot.lane.b32.xlu0 %v379, 24
      %v1137 = vpop.permute.xlu0 %1136
      %1138 = vrot.lane.b32.xlu0 %v311, 24
      %v1139 = vpop.permute.xlu0 %1138
      %1140 = vrot.lane.b32.xlu0 %v380, 24
      %v1141 = vpop.permute.xlu0 %1140
      %1142 = vrot.lane.b32.xlu0 %v314, 24
      %v1143 = vpop.permute.xlu0 %1142
      %1144 = vrot.lane.b32.xlu0 %v364, 24
      %v1145 = vpop.permute.xlu0 %1144
      %1146 = vrot.lane.b32.xlu0 %v266, 24
      %v1147 = vpop.permute.xlu0 %1146
      %1180 = vrot.lane.b32.xlu0 %v443, 28
      %v1181 = vpop.permute.xlu0 %1180
      %1182 = vrot.lane.b32.xlu0 %v445, 28
      %v1183 = vpop.permute.xlu0 %1182
      %1184 = vrot.lane.b32.xlu0 %v448, 28
      %v1185 = vpop.permute.xlu0 %1184
      %1186 = vrot.lane.b32.xlu0 %v450, 28
      %v1187 = vpop.permute.xlu0 %1186
      %1188 = vrot.lane.b32.xlu0 %v453, 28
      %v1189 = vpop.permute.xlu0 %1188
      %1190 = vrot.lane.b32.xlu0 %v455, 28
      %v1191 = vpop.permute.xlu0 %1190
      %1192 = vrot.lane.b32.xlu0 %v458, 28
      %v1193 = vpop.permute.xlu0 %1192
      %1194 = vrot.lane.b32.xlu0 %v460, 28
      %v1195 = vpop.permute.xlu0 %1194
      %1196 = vrot.lane.b32.xlu0 %v463, 28
      %v1197 = vpop.permute.xlu0 %1196
      %1198 = vrot.lane.b32.xlu0 %v465, 28
      %v1199 = vpop.permute.xlu0 %1198
      %1200 = vrot.lane.b32.xlu0 %v468, 28
      %v1201 = vpop.permute.xlu0 %1200
      %1202 = vrot.lane.b32.xlu0 %v470, 28
      %v1203 = vpop.permute.xlu0 %1202
      %1204 = vrot.lane.b32.xlu0 %v473, 28
      %v1205 = vpop.permute.xlu0 %1204
      %1206 = vrot.lane.b32.xlu0 %v475, 28
      %v1207 = vpop.permute.xlu0 %1206
      %1208 = vrot.lane.b32.xlu0 %v478, 28
      %v1209 = vpop.permute.xlu0 %1208
      %1210 = vrot.lane.b32.xlu0 %v480, 28
      %v1211 = vpop.permute.xlu0 %1210
      %1212 = vrot.lane.b32.xlu0 %v483, 28
      %v1213 = vpop.permute.xlu0 %1212
      %1214 = vrot.lane.b32.xlu0 %v485, 28
      %v1215 = vpop.permute.xlu0 %1214
      %1216 = vrot.lane.b32.xlu0 %v488, 28
      %v1217 = vpop.permute.xlu0 %1216
      %1218 = vrot.lane.b32.xlu0 %v490, 28
      %v1219 = vpop.permute.xlu0 %1218
      %1220 = vrot.lane.b32.xlu0 %v493, 28
      %v1221 = vpop.permute.xlu0 %1220
      %1222 = vrot.lane.b32.xlu0 %v495, 28
      %v1223 = vpop.permute.xlu0 %1222
      %1224 = vrot.lane.b32.xlu0 %v498, 28
      %v1225 = vpop.permute.xlu0 %1224
      %1226 = vrot.lane.b32.xlu0 %v500, 28
      %v1227 = vpop.permute.xlu0 %1226
      %1228 = vrot.lane.b32.xlu0 %v503, 28
      %v1229 = vpop.permute.xlu0 %1228
      %1230 = vrot.lane.b32.xlu0 %v505, 28
      %v1231 = vpop.permute.xlu0 %1230
      %1232 = vrot.lane.b32.xlu0 %v508, 28
      %v1233 = vpop.permute.xlu0 %1232
      %1234 = vrot.lane.b32.xlu0 %v510, 28
      %v1235 = vpop.permute.xlu0 %1234
      %1236 = vrot.lane.b32.xlu0 %v884, 28
      %v1237 = vpop.permute.xlu0 %1236
      %1238 = vrot.lane.b32.xlu0 %v886, 28
      %v1239 = vpop.permute.xlu0 %1238
      %1240 = vrot.lane.b32.xlu0 %v433, 28
      %v1241 = vpop.permute.xlu0 %1240
      %1242 = vrot.lane.b32.xlu0 %v435, 28
      %v1243 = vpop.permute.xlu0 %1242
      %1276 = vrot.lane.b32.xlu0 %v620, 32
      %v1277 = vpop.permute.xlu0 %1276
      %1278 = vrot.lane.b32.xlu0 %v622, 32
      %v1279 = vpop.permute.xlu0 %1278
      %1280 = vrot.lane.b32.xlu0 %v625, 32
      %v1281 = vpop.permute.xlu0 %1280
      %1282 = vrot.lane.b32.xlu0 %v627, 32
      %v1283 = vpop.permute.xlu0 %1282
      %1284 = vrot.lane.b32.xlu0 %v630, 32
      %v1285 = vpop.permute.xlu0 %1284
      %1286 = vrot.lane.b32.xlu0 %v632, 32
      %v1287 = vpop.permute.xlu0 %1286
      %1288 = vrot.lane.b32.xlu0 %v635, 32
      %v1289 = vpop.permute.xlu0 %1288
      %1290 = vrot.lane.b32.xlu0 %v637, 32
      %v1291 = vpop.permute.xlu0 %1290
      %1292 = vrot.lane.b32.xlu0 %v640, 32
      %v1293 = vpop.permute.xlu0 %1292
      %1294 = vrot.lane.b32.xlu0 %v642, 32
      %v1295 = vpop.permute.xlu0 %1294
      %1296 = vrot.lane.b32.xlu0 %v645, 32
      %v1297 = vpop.permute.xlu0 %1296
      %1298 = vrot.lane.b32.xlu0 %v647, 32
      %v1299 = vpop.permute.xlu0 %1298
      %1300 = vrot.lane.b32.xlu0 %v650, 32
      %v1301 = vpop.permute.xlu0 %1300
      %1302 = vrot.lane.b32.xlu0 %v652, 32
      %v1303 = vpop.permute.xlu0 %1302
      %1304 = vrot.lane.b32.xlu0 %v655, 32
      %v1305 = vpop.permute.xlu0 %1304
      %1306 = vrot.lane.b32.xlu0 %v657, 32
      %v1307 = vpop.permute.xlu0 %1306
      %1308 = vrot.lane.b32.xlu0 %v660, 32
      %v1309 = vpop.permute.xlu0 %1308
      %1310 = vrot.lane.b32.xlu0 %v662, 32
      %v1311 = vpop.permute.xlu0 %1310
      %1312 = vrot.lane.b32.xlu0 %v665, 32
      %v1313 = vpop.permute.xlu0 %1312
      %1314 = vrot.lane.b32.xlu0 %v667, 32
      %v1315 = vpop.permute.xlu0 %1314
      %1316 = vrot.lane.b32.xlu0 %v670, 32
      %v1317 = vpop.permute.xlu0 %1316
      %1318 = vrot.lane.b32.xlu0 %v672, 32
      %v1319 = vpop.permute.xlu0 %1318
      %1320 = vrot.lane.b32.xlu0 %v675, 32
      %v1321 = vpop.permute.xlu0 %1320
      %1322 = vrot.lane.b32.xlu0 %v677, 32
      %v1323 = vpop.permute.xlu0 %1322
      %1324 = vrot.lane.b32.xlu0 %v680, 32
      %v1325 = vpop.permute.xlu0 %1324
      %1326 = vrot.lane.b32.xlu0 %v682, 32
      %v1327 = vpop.permute.xlu0 %1326
      %1328 = vrot.lane.b32.xlu0 %v685, 32
      %v1329 = vpop.permute.xlu0 %1328
      %1330 = vrot.lane.b32.xlu0 %v687, 32
      %v1331 = vpop.permute.xlu0 %1330
      %1332 = vrot.lane.b32.xlu0 %v985, 32
      %v1333 = vpop.permute.xlu0 %1332
      %1334 = vrot.lane.b32.xlu0 %v987, 32
      %v1335 = vpop.permute.xlu0 %1334
      %1336 = vrot.lane.b32.xlu0 %v610, 32
      %v1337 = vpop.permute.xlu0 %1336
      %1338 = vrot.lane.b32.xlu0 %v612, 32
      %v1339 = vpop.permute.xlu0 %1338
      %vm1372 = vcmask 31744
      %v1373 = vsel %vm1372, %v364, %v512
      %v1374 = vsel %vm1372, %v266, %v514
      %v1375 = vsel %vm1372, %v365, %v516
      %v1376 = vsel %vm1372, %v269, %v518
      %v1377 = vsel %vm1372, %v366, %v520
      %v1378 = vsel %vm1372, %v272, %v522
      %v1379 = vsel %vm1372, %v367, %v524
      %v1380 = vsel %vm1372, %v275, %v526
      %v1381 = vsel %vm1372, %v368, %v528
      %v1382 = vsel %vm1372, %v278, %v530
      %v1383 = vsel %vm1372, %v369, %v532
      %v1384 = vsel %vm1372, %v281, %v534
      %v1385 = vsel %vm1372, %v370, %v536
      %v1386 = vsel %vm1372, %v284, %v538
      %v1387 = vsel %vm1372, %v371, %v540
      %v1388 = vsel %vm1372, %v287, %v542
      %v1389 = vsel %vm1372, %v372, %v544
      %v1390 = vsel %vm1372, %v290, %v546
      %v1391 = vsel %vm1372, %v373, %v548
      %v1392 = vsel %vm1372, %v293, %v550
      %v1393 = vsel %vm1372, %v374, %v552
      %v1394 = vsel %vm1372, %v296, %v554
      %v1395 = vsel %vm1372, %v375, %v556
      %v1396 = vsel %vm1372, %v299, %v558
      %v1397 = vsel %vm1372, %v376, %v560
      %v1398 = vsel %vm1372, %v302, %v562
      %v1399 = vsel %vm1372, %v377, %v564
      %v1400 = vsel %vm1372, %v305, %v566
      %v1401 = vsel %vm1372, %v378, %v568
      %v1402 = vsel %vm1372, %v308, %v570
      %v1403 = vsel %vm1372, %v379, %v572
      %v1404 = vsel %vm1372, %v311, %v574
      %vm1405 = vcmask 64512
      %v1406 = vsel %vm1405, %v1373, %v689
      %v1407 = vsel %vm1405, %v1374, %v691
      %v1408 = vsel %vm1405, %v1375, %v693
      %v1409 = vsel %vm1405, %v1376, %v695
      %v1410 = vsel %vm1405, %v1377, %v697
      %v1411 = vsel %vm1405, %v1378, %v699
      %v1412 = vsel %vm1405, %v1379, %v701
      %v1413 = vsel %vm1405, %v1380, %v703
      %v1414 = vsel %vm1405, %v1381, %v705
      %v1415 = vsel %vm1405, %v1382, %v707
      %v1416 = vsel %vm1405, %v1383, %v709
      %v1417 = vsel %vm1405, %v1384, %v711
      %v1418 = vsel %vm1405, %v1385, %v713
      %v1419 = vsel %vm1405, %v1386, %v715
      %v1420 = vsel %vm1405, %v1387, %v717
      %v1421 = vsel %vm1405, %v1388, %v719
      %v1422 = vsel %vm1405, %v1389, %v721
      %v1423 = vsel %vm1405, %v1390, %v723
      %v1424 = vsel %vm1405, %v1391, %v725
      %v1425 = vsel %vm1405, %v1392, %v727
      %v1426 = vsel %vm1405, %v1393, %v729
      %v1427 = vsel %vm1405, %v1394, %v731
      %v1428 = vsel %vm1405, %v1395, %v733
      %v1429 = vsel %vm1405, %v1396, %v735
      %v1430 = vsel %vm1405, %v1397, %v737
      %v1431 = vsel %vm1405, %v1398, %v739
      %v1432 = vsel %vm1405, %v1399, %v741
      %v1433 = vsel %vm1405, %v1400, %v743
      %v1434 = vsel %vm1405, %v1401, %v745
      %v1435 = vsel %vm1405, %v1402, %v747
      %v1436 = vsel %vm1405, %v1403, %v749
      %v1437 = vsel %vm1405, %v1404, %v751
      %vm1438 = vcmask 97280
      %v1439 = vsel %vm1438, %v1406, %v786
      %v1440 = vsel %vm1438, %v1407, %v788
      %v1441 = vsel %vm1438, %v1408, %v790
      %v1442 = vsel %vm1438, %v1409, %v792
      %v1443 = vsel %vm1438, %v1410, %v794
      %v1444 = vsel %vm1438, %v1411, %v796
      %v1445 = vsel %vm1438, %v1412, %v798
      %v1446 = vsel %vm1438, %v1413, %v800
      %v1447 = vsel %vm1438, %v1414, %v802
      %v1448 = vsel %vm1438, %v1415, %v804
      %v1449 = vsel %vm1438, %v1416, %v806
      %v1450 = vsel %vm1438, %v1417, %v808
      %v1451 = vsel %vm1438, %v1418, %v810
      %v1452 = vsel %vm1438, %v1419, %v812
      %v1453 = vsel %vm1438, %v1420, %v814
      %v1454 = vsel %vm1438, %v1421, %v816
      %v1455 = vsel %vm1438, %v1422, %v818
      %v1456 = vsel %vm1438, %v1423, %v820
      %v1457 = vsel %vm1438, %v1424, %v822
      %v1458 = vsel %vm1438, %v1425, %v824
      %v1459 = vsel %vm1438, %v1426, %v826
      %v1460 = vsel %vm1438, %v1427, %v828
      %v1461 = vsel %vm1438, %v1428, %v830
      %v1462 = vsel %vm1438, %v1429, %v832
      %v1463 = vsel %vm1438, %v1430, %v834
      %v1464 = vsel %vm1438, %v1431, %v836
      %v1465 = vsel %vm1438, %v1432, %v838
      %v1466 = vsel %vm1438, %v1433, %v840
      %v1467 = vsel %vm1438, %v1434, %v842
      %v1468 = vsel %vm1438, %v1435, %v844
      %v1469 = vsel %vm1438, %v1436, %v846
      %v1470 = vsel %vm1438, %v1437, %v848
      %vm1471 = vcmask 130048
      %v1472 = vsel %vm1471, %v1439, %v888
      %v1473 = vsel %vm1471, %v1440, %v890
      %v1474 = vsel %vm1471, %v1441, %v892
      %v1475 = vsel %vm1471, %v1442, %v894
      %v1476 = vsel %vm1471, %v1443, %v896
      %v1477 = vsel %vm1471, %v1444, %v898
      %v1478 = vsel %vm1471, %v1445, %v900
      %v1479 = vsel %vm1471, %v1446, %v902
      %v1480 = vsel %vm1471, %v1447, %v904
      %v1481 = vsel %vm1471, %v1448, %v906
      %v1482 = vsel %vm1471, %v1449, %v908
      %v1483 = vsel %vm1471, %v1450, %v910
      %v1484 = vsel %vm1471, %v1451, %v912
      %v1485 = vsel %vm1471, %v1452, %v914
      %v1486 = vsel %vm1471, %v1453, %v916
      %v1487 = vsel %vm1471, %v1454, %v918
      %v1488 = vsel %vm1471, %v1455, %v920
      %v1489 = vsel %vm1471, %v1456, %v922
      %v1490 = vsel %vm1471, %v1457, %v924
      %v1491 = vsel %vm1471, %v1458, %v926
      %v1492 = vsel %vm1471, %v1459, %v928
      %v1493 = vsel %vm1471, %v1460, %v930
      %v1494 = vsel %vm1471, %v1461, %v932
      %v1495 = vsel %vm1471, %v1462, %v934
      %v1496 = vsel %vm1471, %v1463, %v936
      %v1497 = vsel %vm1471, %v1464, %v938
      %v1498 = vsel %vm1471, %v1465, %v940
      %v1499 = vsel %vm1471, %v1466, %v942
      %v1500 = vsel %vm1471, %v1467, %v944
      %v1501 = vsel %vm1471, %v1468, %v946
      %v1502 = vsel %vm1471, %v1469, %v948
      %v1503 = vsel %vm1471, %v1470, %v950
      %vm1504 = vcmask 162816
      %v1505 = vsel %vm1504, %v1472, %v989
      %v1506 = vsel %vm1504, %v1473, %v991
      %v1507 = vsel %vm1504, %v1474, %v993
      %v1508 = vsel %vm1504, %v1475, %v995
      %v1509 = vsel %vm1504, %v1476, %v997
      %v1510 = vsel %vm1504, %v1477, %v999
      %v1511 = vsel %vm1504, %v1478, %v1001
      %v1512 = vsel %vm1504, %v1479, %v1003
      %v1513 = vsel %vm1504, %v1480, %v1005
      %v1514 = vsel %vm1504, %v1481, %v1007
      %v1515 = vsel %vm1504, %v1482, %v1009
      %v1516 = vsel %vm1504, %v1483, %v1011
      %v1517 = vsel %vm1504, %v1484, %v1013
      %v1518 = vsel %vm1504, %v1485, %v1015
      %v1519 = vsel %vm1504, %v1486, %v1017
      %v1520 = vsel %vm1504, %v1487, %v1019
      %v1521 = vsel %vm1504, %v1488, %v1021
      %v1522 = vsel %vm1504, %v1489, %v1023
      %v1523 = vsel %vm1504, %v1490, %v1025
      %v1524 = vsel %vm1504, %v1491, %v1027
      %v1525 = vsel %vm1504, %v1492, %v1029
      %v1526 = vsel %vm1504, %v1493, %v1031
      %v1527 = vsel %vm1504, %v1494, %v1033
      %v1528 = vsel %vm1504, %v1495, %v1035
      %v1529 = vsel %vm1504, %v1496, %v1037
      %v1530 = vsel %vm1504, %v1497, %v1039
      %v1531 = vsel %vm1504, %v1498, %v1041
      %v1532 = vsel %vm1504, %v1499, %v1043
      %v1533 = vsel %vm1504, %v1500, %v1045
      %v1534 = vsel %vm1504, %v1501, %v1047
      %v1535 = vsel %vm1504, %v1502, %v1049
      %v1536 = vsel %vm1504, %v1503, %v1051
      %vm1537 = vcmask 195584
      %v1538 = vsel %vm1537, %v1505, %v1085
      %v1539 = vsel %vm1537, %v1506, %v1087
      %v1540 = vsel %vm1537, %v1507, %v1089
      %v1541 = vsel %vm1537, %v1508, %v1091
      %v1542 = vsel %vm1537, %v1509, %v1093
      %v1543 = vsel %vm1537, %v1510, %v1095
      %v1544 = vsel %vm1537, %v1511, %v1097
      %v1545 = vsel %vm1537, %v1512, %v1099
      %v1546 = vsel %vm1537, %v1513, %v1101
      %v1547 = vsel %vm1537, %v1514, %v1103
      %v1548 = vsel %vm1537, %v1515, %v1105
      %v1549 = vsel %vm1537, %v1516, %v1107
      %v1550 = vsel %vm1537, %v1517, %v1109
      %v1551 = vsel %vm1537, %v1518, %v1111
      %v1552 = vsel %vm1537, %v1519, %v1113
      %v1553 = vsel %vm1537, %v1520, %v1115
      %v1554 = vsel %vm1537, %v1521, %v1117
      %v1555 = vsel %vm1537, %v1522, %v1119
      %v1556 = vsel %vm1537, %v1523, %v1121
      %v1557 = vsel %vm1537, %v1524, %v1123
      %v1558 = vsel %vm1537, %v1525, %v1125
      %v1559 = vsel %vm1537, %v1526, %v1127
      %v1560 = vsel %vm1537, %v1527, %v1129
      %v1561 = vsel %vm1537, %v1528, %v1131
      %v1562 = vsel %vm1537, %v1529, %v1133
      %v1563 = vsel %vm1537, %v1530, %v1135
      %v1564 = vsel %vm1537, %v1531, %v1137
      %v1565 = vsel %vm1537, %v1532, %v1139
      %v1566 = vsel %vm1537, %v1533, %v1141
      %v1567 = vsel %vm1537, %v1534, %v1143
      %v1568 = vsel %vm1537, %v1535, %v1145
      %v1569 = vsel %vm1537, %v1536, %v1147
      %vm1570 = vcmask 228352
      %v1571 = vsel %vm1570, %v1538, %v1181
      %v1572 = vsel %vm1570, %v1539, %v1183
      %v1573 = vsel %vm1570, %v1540, %v1185
      %v1574 = vsel %vm1570, %v1541, %v1187
      %v1575 = vsel %vm1570, %v1542, %v1189
      %v1576 = vsel %vm1570, %v1543, %v1191
      %v1577 = vsel %vm1570, %v1544, %v1193
      %v1578 = vsel %vm1570, %v1545, %v1195
      %v1579 = vsel %vm1570, %v1546, %v1197
      %v1580 = vsel %vm1570, %v1547, %v1199
      %v1581 = vsel %vm1570, %v1548, %v1201
      %v1582 = vsel %vm1570, %v1549, %v1203
      %v1583 = vsel %vm1570, %v1550, %v1205
      %v1584 = vsel %vm1570, %v1551, %v1207
      %v1585 = vsel %vm1570, %v1552, %v1209
      %v1586 = vsel %vm1570, %v1553, %v1211
      %v1587 = vsel %vm1570, %v1554, %v1213
      %v1588 = vsel %vm1570, %v1555, %v1215
      %v1589 = vsel %vm1570, %v1556, %v1217
      %v1590 = vsel %vm1570, %v1557, %v1219
      %v1591 = vsel %vm1570, %v1558, %v1221
      %v1592 = vsel %vm1570, %v1559, %v1223
      %v1593 = vsel %vm1570, %v1560, %v1225
      %v1594 = vsel %vm1570, %v1561, %v1227
      %v1595 = vsel %vm1570, %v1562, %v1229
      %v1596 = vsel %vm1570, %v1563, %v1231
      %v1597 = vsel %vm1570, %v1564, %v1233
      %v1598 = vsel %vm1570, %v1565, %v1235
      %v1599 = vsel %vm1570, %v1566, %v1237
      %v1600 = vsel %vm1570, %v1567, %v1239
      %v1601 = vsel %vm1570, %v1568, %v1241
      %v1602 = vsel %vm1570, %v1569, %v1243
      %vm1603 = vcmask 261120
      %v1604 = vsel %vm1603, %v1571, %v1277
      %v1605 = vsel %vm1603, %v1572, %v1279
      %v1606 = vsel %vm1603, %v1573, %v1281
      %v1607 = vsel %vm1603, %v1574, %v1283
      %v1608 = vsel %vm1603, %v1575, %v1285
      %v1609 = vsel %vm1603, %v1576, %v1287
      %v1610 = vsel %vm1603, %v1577, %v1289
      %v1611 = vsel %vm1603, %v1578, %v1291
      %v1612 = vsel %vm1603, %v1579, %v1293
      %v1613 = vsel %vm1603, %v1580, %v1295
      %v1614 = vsel %vm1603, %v1581, %v1297
      %v1615 = vsel %vm1603, %v1582, %v1299
      %v1616 = vsel %vm1603, %v1583, %v1301
      %v1617 = vsel %vm1603, %v1584, %v1303
      %v1618 = vsel %vm1603, %v1585, %v1305
      %v1619 = vsel %vm1603, %v1586, %v1307
      %v1620 = vsel %vm1603, %v1587, %v1309
      %v1621 = vsel %vm1603, %v1588, %v1311
      %v1622 = vsel %vm1603, %v1589, %v1313
      %v1623 = vsel %vm1603, %v1590, %v1315
      %v1624 = vsel %vm1603, %v1591, %v1317
      %v1625 = vsel %vm1603, %v1592, %v1319
      %v1626 = vsel %vm1603, %v1593, %v1321
      %v1627 = vsel %vm1603, %v1594, %v1323
      %v1628 = vsel %vm1603, %v1595, %v1325
      %v1629 = vsel %vm1603, %v1596, %v1327
      %v1630 = vsel %vm1603, %v1597, %v1329
      %v1631 = vsel %vm1603, %v1598, %v1331
      %v1632 = vsel %vm1603, %v1599, %v1333
      %v1633 = vsel %vm1603, %v1600, %v1335
      %v1634 = vsel %vm1603, %v1601, %v1337
      %v1635 = vsel %vm1603, %v1602, %v1339
      %v1636 = vpack.c.bf16 %v1605, %v1604
      %v1637 = vpack.c.bf16 %v1607, %v1606
      %v1638 = vpack.c.bf16 %v1609, %v1608
      %v1639 = vpack.c.bf16 %v1611, %v1610
      %v1640 = vpack.c.bf16 %v1613, %v1612
      %v1641 = vpack.c.bf16 %v1615, %v1614
      %v1642 = vpack.c.bf16 %v1617, %v1616
      %v1643 = vpack.c.bf16 %v1619, %v1618
      %v1644 = vpack.c.bf16 %v1621, %v1620
      %v1645 = vpack.c.bf16 %v1623, %v1622
      %v1646 = vpack.c.bf16 %v1625, %v1624
      %v1647 = vpack.c.bf16 %v1627, %v1626
      %v1648 = vpack.c.bf16 %v1629, %v1628
      %v1649 = vpack.c.bf16 %v1631, %v1630
      %v1650 = vpack.c.bf16 %v1633, %v1632
      %v1651 = vpack.c.bf16 %v1635, %v1634
      %v1652 = vld [vmem:[%s1] sm:$0xf]
      %v1653 = vld [vmem:[%s1 + $0x4] sm:$0xf]
      %v1654 = vld [vmem:[%s1 + $0x8] sm:$0xf]
      %v1655 = vld [vmem:[%s1 + $0xc] sm:$0xf]
      %v1656 = vld [vmem:[%s1 + $0x10] sm:$0x3]
      %v1662 = vunpack.c.l.b16 %v1652
      %v1663 = vunpack.c.l.b16 %v1653
      %v1664 = vunpack.c.l.b16 %v1654
      %v1665 = vunpack.c.l.b16 %v1655
      %v1666 = vunpack.c.l.b16 %v1656
      %v1667 = vpack.c.b16 %v1663, %v1662
      %v1668 = vpack.c.b16 %v1665, %v1664
      %v1669 = vpack.c.b16 %v1666, %v1666
      %vm1672 = vcmask 293888
      %v1674 = vsel %vm1672, %v1636, 0
      %v1677 = vsel %vm1672, %v1637, 0
      %v1680 = vsel %vm1672, %v1638, 0
      %v1683 = vsel %vm1672, %v1639, 0
      %v1686 = vsel %vm1672, %v1640, 0
      %v1689 = vsel %vm1672, %v1641, 0
      %v1692 = vsel %vm1672, %v1642, 0
      %v1695 = vsel %vm1672, %v1643, 0
      %v1698 = vsel %vm1672, %v1644, 0
      %v1701 = vsel %vm1672, %v1645, 0
      %v1704 = vsel %vm1672, %v1646, 0
      %v1707 = vsel %vm1672, %v1647, 0
      %v1710 = vsel %vm1672, %v1648, 0
      %v1713 = vsel %vm1672, %v1649, 0
      %v1716 = vsel %vm1672, %v1650, 0
      %v1719 = vsel %vm1672, %v1651, 0
      %vm1721 = vcmask 1041408
      %v1723 = vsel %vm1721, %v1669, 0
      %1725 = vmatpush.bf16.msra.mxu0 0
      %1726 = vmatpush.bf16.msra.mxu0 0
      %1727 = vmatpush.bf16.msra.mxu0 0
      %1728 = vmatpush.bf16.msra.mxu0 0
      %1729 = vmatpush.bf16.msra.mxu0 0
      %1730 = vmatpush.bf16.msra.mxu0 %v1723
      %1731 = vmatpush.bf16.msra.mxu0 %v1668
      %1732 = vmatpush.bf16.msra.mxu0 %v1667
      %1733 = vmatmul.bf16.gmra.mxu0 %v1674
      %v1734 = vpop.f32.mrf.mxu0
      %v1735 = vadd.f32 0.0, %v1734
      %v1736 = vpop.f32.mrf.mxu0
      %v1737 = vadd.f32 0.0, %v1736
      %1738 = vmatmul.bf16.gmra.mxu0 %v1677
      %v1739 = vpop.f32.mrf.mxu0
      %v1740 = vadd.f32 0.0, %v1739
      %v1741 = vpop.f32.mrf.mxu0
      %v1742 = vadd.f32 0.0, %v1741
      %1743 = vmatmul.bf16.gmra.mxu0 %v1680
      %v1744 = vpop.f32.mrf.mxu0
      %v1745 = vadd.f32 0.0, %v1744
      %v1746 = vpop.f32.mrf.mxu0
      %v1747 = vadd.f32 0.0, %v1746
      %1748 = vmatmul.bf16.gmra.mxu0 %v1683
      %v1749 = vpop.f32.mrf.mxu0
      %v1750 = vadd.f32 0.0, %v1749
      %v1751 = vpop.f32.mrf.mxu0
      %v1752 = vadd.f32 0.0, %v1751
      %1753 = vmatmul.bf16.gmra.mxu0 %v1686
      %v1754 = vpop.f32.mrf.mxu0
      %v1755 = vadd.f32 0.0, %v1754
      %v1756 = vpop.f32.mrf.mxu0
      %v1757 = vadd.f32 0.0, %v1756
      %1758 = vmatmul.bf16.gmra.mxu0 %v1689
      %v1759 = vpop.f32.mrf.mxu0
      %v1760 = vadd.f32 0.0, %v1759
      %v1761 = vpop.f32.mrf.mxu0
      %v1762 = vadd.f32 0.0, %v1761
      %1763 = vmatmul.bf16.gmra.mxu0 %v1692
      %v1764 = vpop.f32.mrf.mxu0
      %v1765 = vadd.f32 0.0, %v1764
      %v1766 = vpop.f32.mrf.mxu0
      %v1767 = vadd.f32 0.0, %v1766
      %1768 = vmatmul.bf16.gmra.mxu0 %v1695
      %v1769 = vpop.f32.mrf.mxu0
      %v1770 = vadd.f32 0.0, %v1769
      %v1771 = vpop.f32.mrf.mxu0
      %v1772 = vadd.f32 0.0, %v1771
      %1773 = vmatmul.bf16.gmra.mxu0 %v1698
      %v1774 = vpop.f32.mrf.mxu0
      %v1775 = vadd.f32 0.0, %v1774
      %v1776 = vpop.f32.mrf.mxu0
      %v1777 = vadd.f32 0.0, %v1776
      %1778 = vmatmul.bf16.gmra.mxu0 %v1701
      %v1779 = vpop.f32.mrf.mxu0
      %v1780 = vadd.f32 0.0, %v1779
      %v1781 = vpop.f32.mrf.mxu0
      %v1782 = vadd.f32 0.0, %v1781
      %1783 = vmatmul.bf16.gmra.mxu0 %v1704
      %v1784 = vpop.f32.mrf.mxu0
      %v1785 = vadd.f32 0.0, %v1784
      %v1786 = vpop.f32.mrf.mxu0
      %v1787 = vadd.f32 0.0, %v1786
      %1788 = vmatmul.bf16.gmra.mxu0 %v1707
      %v1789 = vpop.f32.mrf.mxu0
      %v1790 = vadd.f32 0.0, %v1789
      %v1791 = vpop.f32.mrf.mxu0
      %v1792 = vadd.f32 0.0, %v1791
      %1793 = vmatmul.bf16.gmra.mxu0 %v1710
      %v1794 = vpop.f32.mrf.mxu0
      %v1795 = vadd.f32 0.0, %v1794
      %v1796 = vpop.f32.mrf.mxu0
      %v1797 = vadd.f32 0.0, %v1796
      %1798 = vmatmul.bf16.gmra.mxu0 %v1713
      %v1799 = vpop.f32.mrf.mxu0
      %v1800 = vadd.f32 0.0, %v1799
      %v1801 = vpop.f32.mrf.mxu0
      %v1802 = vadd.f32 0.0, %v1801
      %1803 = vmatmul.bf16.gmra.mxu0 %v1716
      %v1804 = vpop.f32.mrf.mxu0
      %v1805 = vadd.f32 0.0, %v1804
      %v1806 = vpop.f32.mrf.mxu0
      %v1807 = vadd.f32 0.0, %v1806
      %1808 = vmatmul.bf16.gmra.mxu0 %v1719
      %v1809 = vpop.f32.mrf.mxu0
      %v1810 = vadd.f32 0.0, %v1809
      %v1811 = vpop.f32.mrf.mxu0
      %v1812 = vadd.f32 0.0, %v1811
      %1813 = vdwg.mxu0
      %v1814 = vld [vmem:[%s2] sm:$0x1]
      %v1815 = vld [vmem:[%s3] sm:$0x1]
      %v1816 = vlaneseq
      %v1817 = vand.u32 %v1816, 127
      %v1818 = vsel %vm1372, %v1735, 0.0
      %v1819 = vsel %vm1372, %v1737, 0.0
      %v1820 = vadd.f32 %v1818, %v1819
      %v1821 = vsel %vm1372, %v1740, 0.0
      %v1822 = vadd.f32 %v1820, %v1821
      %v1823 = vsel %vm1372, %v1742, 0.0
      %v1824 = vadd.f32 %v1822, %v1823
      %v1825 = vsel %vm1372, %v1745, 0.0
      %v1826 = vadd.f32 %v1824, %v1825
      %v1827 = vsel %vm1372, %v1747, 0.0
      %v1828 = vadd.f32 %v1826, %v1827
      %v1829 = vsel %vm1372, %v1750, 0.0
      %v1830 = vadd.f32 %v1828, %v1829
      %v1831 = vsel %vm1372, %v1752, 0.0
      %v1832 = vadd.f32 %v1830, %v1831
      %v1833 = vsel %vm1372, %v1755, 0.0
      %v1834 = vadd.f32 %v1832, %v1833
      %v1835 = vsel %vm1372, %v1757, 0.0
      %v1836 = vadd.f32 %v1834, %v1835
      %v1837 = vsel %vm1372, %v1760, 0.0
      %v1838 = vadd.f32 %v1836, %v1837
      %v1839 = vsel %vm1372, %v1762, 0.0
      %v1840 = vadd.f32 %v1838, %v1839
      %v1841 = vsel %vm1372, %v1765, 0.0
      %v1842 = vadd.f32 %v1840, %v1841
      %v1843 = vsel %vm1372, %v1767, 0.0
      %v1844 = vadd.f32 %v1842, %v1843
      %v1845 = vsel %vm1372, %v1770, 0.0
      %v1846 = vadd.f32 %v1844, %v1845
      %v1847 = vsel %vm1372, %v1772, 0.0
      %v1848 = vadd.f32 %v1846, %v1847
      %v1849 = vsel %vm1372, %v1775, 0.0
      %v1850 = vadd.f32 %v1848, %v1849
      %v1851 = vsel %vm1372, %v1777, 0.0
      %v1852 = vadd.f32 %v1850, %v1851
      %v1853 = vsel %vm1372, %v1780, 0.0
      %v1854 = vadd.f32 %v1852, %v1853
      %v1855 = vsel %vm1372, %v1782, 0.0
      %v1856 = vadd.f32 %v1854, %v1855
      %v1857 = vsel %vm1372, %v1785, 0.0
      %v1858 = vadd.f32 %v1856, %v1857
      %v1859 = vsel %vm1372, %v1787, 0.0
      %v1860 = vadd.f32 %v1858, %v1859
      %v1861 = vsel %vm1372, %v1790, 0.0
      %v1862 = vadd.f32 %v1860, %v1861
      %v1863 = vsel %vm1372, %v1792, 0.0
      %v1864 = vadd.f32 %v1862, %v1863
      %v1865 = vsel %vm1372, %v1795, 0.0
      %v1866 = vadd.f32 %v1864, %v1865
      %v1867 = vsel %vm1372, %v1797, 0.0
      %v1868 = vadd.f32 %v1866, %v1867
      %v1869 = vsel %vm1372, %v1800, 0.0
      %v1870 = vadd.f32 %v1868, %v1869
      %v1871 = vsel %vm1372, %v1802, 0.0
      %v1872 = vadd.f32 %v1870, %v1871
      %v1873 = vsel %vm1372, %v1805, 0.0
      %v1874 = vadd.f32 %v1872, %v1873
      %v1875 = vsel %vm1372, %v1807, 0.0
      %v1876 = vadd.f32 %v1874, %v1875
      %v1877 = vsel %vm1372, %v1810, 0.0
      %v1878 = vadd.f32 %v1876, %v1877
      %v1879 = vsel %vm1372, %v1812, 0.0
      %v1880 = vadd.f32 %v1878, %v1879
      %1881 = vadd.xlane.f32.xlu0 %v1880
      %v1882 = vpop.xlane.xlu0 %1881
      %v1883 = vrot.slane %v1882, 4
      %v1884 = vadd.f32 %v1882, %v1883
      %v1885 = vrot.slane %v1884, 2
      %v1886 = vadd.f32 %v1884, %v1885
      %v1887 = vrot.slane %v1886, 1
      %v1888 = vadd.f32 %v1886, %v1887
      %s1889 = vtos %v1888
      %v1890 = vstv %s1889
      %v1891 = vrcp.pop 1024.0
      %v1892 = vmul.f32 1024.0, %v1891
      %v1893 = vsub.f32 1.0, %v1892
      %v1894 = vmul.f32 %v1891, %v1893
      %v1895 = vadd.f32 %v1891, %v1894
      %vm1896 = vweird.f32 %v1891
      %v1897 = vsel %vm1896, %v1891, %v1895
      %v1898 = vmul.f32 %v1890, %v1897
      %v1899 = vmul.f32 %v1735, %v1735
      %v1900 = vmul.f32 %v1737, %v1737
      %v1901 = vmul.f32 %v1740, %v1740
      %v1902 = vmul.f32 %v1742, %v1742
      %v1903 = vmul.f32 %v1745, %v1745
      %v1904 = vmul.f32 %v1747, %v1747
      %v1905 = vmul.f32 %v1750, %v1750
      %v1906 = vmul.f32 %v1752, %v1752
      %v1907 = vmul.f32 %v1755, %v1755
      %v1908 = vmul.f32 %v1757, %v1757
      %v1909 = vmul.f32 %v1760, %v1760
      %v1910 = vmul.f32 %v1762, %v1762
      %v1911 = vmul.f32 %v1765, %v1765
      %v1912 = vmul.f32 %v1767, %v1767
      %v1913 = vmul.f32 %v1770, %v1770
      %v1914 = vmul.f32 %v1772, %v1772
      %v1915 = vmul.f32 %v1775, %v1775
      %v1916 = vmul.f32 %v1777, %v1777
      %v1917 = vmul.f32 %v1780, %v1780
      %v1918 = vmul.f32 %v1782, %v1782
      %v1919 = vmul.f32 %v1785, %v1785
      %v1920 = vmul.f32 %v1787, %v1787
      %v1921 = vmul.f32 %v1790, %v1790
      %v1922 = vmul.f32 %v1792, %v1792
      %v1923 = vmul.f32 %v1795, %v1795
      %v1924 = vmul.f32 %v1797, %v1797
      %v1925 = vmul.f32 %v1800, %v1800
      %v1926 = vmul.f32 %v1802, %v1802
      %v1927 = vmul.f32 %v1805, %v1805
      %v1928 = vmul.f32 %v1807, %v1807
      %v1929 = vmul.f32 %v1810, %v1810
      %v1930 = vmul.f32 %v1812, %v1812
      %v1931 = vsel %vm1372, %v1899, 0.0
      %v1932 = vsel %vm1372, %v1900, 0.0
      %v1933 = vadd.f32 %v1931, %v1932
      %v1934 = vsel %vm1372, %v1901, 0.0
      %v1935 = vadd.f32 %v1933, %v1934
      %v1936 = vsel %vm1372, %v1902, 0.0
      %v1937 = vadd.f32 %v1935, %v1936
      %v1938 = vsel %vm1372, %v1903, 0.0
      %v1939 = vadd.f32 %v1937, %v1938
      %v1940 = vsel %vm1372, %v1904, 0.0
      %v1941 = vadd.f32 %v1939, %v1940
      %v1942 = vsel %vm1372, %v1905, 0.0
      %v1943 = vadd.f32 %v1941, %v1942
      %v1944 = vsel %vm1372, %v1906, 0.0
      %v1945 = vadd.f32 %v1943, %v1944
      %v1946 = vsel %vm1372, %v1907, 0.0
      %v1947 = vadd.f32 %v1945, %v1946
      %v1948 = vsel %vm1372, %v1908, 0.0
      %v1949 = vadd.f32 %v1947, %v1948
      %v1950 = vsel %vm1372, %v1909, 0.0
      %v1951 = vadd.f32 %v1949, %v1950
      %v1952 = vsel %vm1372, %v1910, 0.0
      %v1953 = vadd.f32 %v1951, %v1952
      %v1954 = vsel %vm1372, %v1911, 0.0
      %v1955 = vadd.f32 %v1953, %v1954
      %v1956 = vsel %vm1372, %v1912, 0.0
      %v1957 = vadd.f32 %v1955, %v1956
      %v1958 = vsel %vm1372, %v1913, 0.0
      %v1959 = vadd.f32 %v1957, %v1958
      %v1960 = vsel %vm1372, %v1914, 0.0
      %v1961 = vadd.f32 %v1959, %v1960
      %v1962 = vsel %vm1372, %v1915, 0.0
      %v1963 = vadd.f32 %v1961, %v1962
      %v1964 = vsel %vm1372, %v1916, 0.0
      %v1965 = vadd.f32 %v1963, %v1964
      %v1966 = vsel %vm1372, %v1917, 0.0
      %v1967 = vadd.f32 %v1965, %v1966
      %v1968 = vsel %vm1372, %v1918, 0.0
      %v1969 = vadd.f32 %v1967, %v1968
      %v1970 = vsel %vm1372, %v1919, 0.0
      %v1971 = vadd.f32 %v1969, %v1970
      %v1972 = vsel %vm1372, %v1920, 0.0
      %v1973 = vadd.f32 %v1971, %v1972
      %v1974 = vsel %vm1372, %v1921, 0.0
      %v1975 = vadd.f32 %v1973, %v1974
      %v1976 = vsel %vm1372, %v1922, 0.0
      %v1977 = vadd.f32 %v1975, %v1976
      %v1978 = vsel %vm1372, %v1923, 0.0
      %v1979 = vadd.f32 %v1977, %v1978
      %v1980 = vsel %vm1372, %v1924, 0.0
      %v1981 = vadd.f32 %v1979, %v1980
      %v1982 = vsel %vm1372, %v1925, 0.0
      %v1983 = vadd.f32 %v1981, %v1982
      %v1984 = vsel %vm1372, %v1926, 0.0
      %v1985 = vadd.f32 %v1983, %v1984
      %v1986 = vsel %vm1372, %v1927, 0.0
      %v1987 = vadd.f32 %v1985, %v1986
      %v1988 = vsel %vm1372, %v1928, 0.0
      %v1989 = vadd.f32 %v1987, %v1988
      %v1990 = vsel %vm1372, %v1929, 0.0
      %v1991 = vadd.f32 %v1989, %v1990
      %v1992 = vsel %vm1372, %v1930, 0.0
      %v1993 = vadd.f32 %v1991, %v1992
      %1994 = vadd.xlane.f32.xlu0 %v1993
      %v1995 = vpop.xlane.xlu0 %1994
      %v1996 = vrot.slane %v1995, 4
      %v1997 = vadd.f32 %v1995, %v1996
      %v1998 = vrot.slane %v1997, 2
      %v1999 = vadd.f32 %v1997, %v1998
      %v2000 = vrot.slane %v1999, 1
      %v2001 = vadd.f32 %v1999, %v2000
      %s2002 = vtos %v2001
      %v2003 = vstv %s2002
      %v2004 = vmul.f32 %v2003, %v1897
      %v2005 = vmul.f32 %v1898, %v1898
      %v2006 = vsub.f32 %v2004, %v2005
      %vm2007 = vcmp.ge.s32.totalorder %v1817, 0
      %vm2008 = vcmp.lt.s32.totalorder %v1817, 4
      %vm2009 = vmand %vm2007, %vm2008
      %v2010 = vsel %vm2009, %v1898, 0.0
      %v2011 = vsel %vm2009, %v2006, 0.0
      %2044 = vrot.lane.b32.xlu0 %v1735, 124
      %v2045 = vpop.permute.xlu0 %2044
      %2046 = vrot.lane.b32.xlu0 %v1737, 124
      %v2047 = vpop.permute.xlu0 %2046
      %2048 = vrot.lane.b32.xlu0 %v1740, 124
      %v2049 = vpop.permute.xlu0 %2048
      %2050 = vrot.lane.b32.xlu0 %v1742, 124
      %v2051 = vpop.permute.xlu0 %2050
      %2052 = vrot.lane.b32.xlu0 %v1745, 124
      %v2053 = vpop.permute.xlu0 %2052
      %2054 = vrot.lane.b32.xlu0 %v1747, 124
      %v2055 = vpop.permute.xlu0 %2054
      %2056 = vrot.lane.b32.xlu0 %v1750, 124
      %v2057 = vpop.permute.xlu0 %2056
      %2058 = vrot.lane.b32.xlu0 %v1752, 124
      %v2059 = vpop.permute.xlu0 %2058
      %2060 = vrot.lane.b32.xlu0 %v1755, 124
      %v2061 = vpop.permute.xlu0 %2060
      %2062 = vrot.lane.b32.xlu0 %v1757, 124
      %v2063 = vpop.permute.xlu0 %2062
      %2064 = vrot.lane.b32.xlu0 %v1760, 124
      %v2065 = vpop.permute.xlu0 %2064
      %2066 = vrot.lane.b32.xlu0 %v1762, 124
      %v2067 = vpop.permute.xlu0 %2066
      %2068 = vrot.lane.b32.xlu0 %v1765, 124
      %v2069 = vpop.permute.xlu0 %2068
      %2070 = vrot.lane.b32.xlu0 %v1767, 124
      %v2071 = vpop.permute.xlu0 %2070
      %2072 = vrot.lane.b32.xlu0 %v1770, 124
      %v2073 = vpop.permute.xlu0 %2072
      %2074 = vrot.lane.b32.xlu0 %v1772, 124
      %v2075 = vpop.permute.xlu0 %2074
      %2076 = vrot.lane.b32.xlu0 %v1775, 124
      %v2077 = vpop.permute.xlu0 %2076
      %2078 = vrot.lane.b32.xlu0 %v1777, 124
      %v2079 = vpop.permute.xlu0 %2078
      %2080 = vrot.lane.b32.xlu0 %v1780, 124
      %v2081 = vpop.permute.xlu0 %2080
      %2082 = vrot.lane.b32.xlu0 %v1782, 124
      %v2083 = vpop.permute.xlu0 %2082
      %2084 = vrot.lane.b32.xlu0 %v1785, 124
      %v2085 = vpop.permute.xlu0 %2084
      %2086 = vrot.lane.b32.xlu0 %v1787, 124
      %v2087 = vpop.permute.xlu0 %2086
      %2088 = vrot.lane.b32.xlu0 %v1790, 124
      %v2089 = vpop.permute.xlu0 %2088
      %2090 = vrot.lane.b32.xlu0 %v1792, 124
      %v2091 = vpop.permute.xlu0 %2090
      %2092 = vrot.lane.b32.xlu0 %v1795, 124
      %v2093 = vpop.permute.xlu0 %2092
      %2094 = vrot.lane.b32.xlu0 %v1797, 124
      %v2095 = vpop.permute.xlu0 %2094
      %2096 = vrot.lane.b32.xlu0 %v1800, 124
      %v2097 = vpop.permute.xlu0 %2096
      %2098 = vrot.lane.b32.xlu0 %v1802, 124
      %v2099 = vpop.permute.xlu0 %2098
      %2100 = vrot.lane.b32.xlu0 %v1805, 124
      %v2101 = vpop.permute.xlu0 %2100
      %2102 = vrot.lane.b32.xlu0 %v1807, 124
      %v2103 = vpop.permute.xlu0 %2102
      %2104 = vrot.lane.b32.xlu0 %v1810, 124
      %v2105 = vpop.permute.xlu0 %2104
      %2106 = vrot.lane.b32.xlu0 %v1812, 124
      %v2107 = vpop.permute.xlu0 %2106
      %v2140 = vsel %vm1372, %v2045, 0.0
      %v2141 = vsel %vm1372, %v2047, 0.0
      %v2142 = vadd.f32 %v2140, %v2141
      %v2143 = vsel %vm1372, %v2049, 0.0
      %v2144 = vadd.f32 %v2142, %v2143
      %v2145 = vsel %vm1372, %v2051, 0.0
      %v2146 = vadd.f32 %v2144, %v2145
      %v2147 = vsel %vm1372, %v2053, 0.0
      %v2148 = vadd.f32 %v2146, %v2147
      %v2149 = vsel %vm1372, %v2055, 0.0
      %v2150 = vadd.f32 %v2148, %v2149
      %v2151 = vsel %vm1372, %v2057, 0.0
      %v2152 = vadd.f32 %v2150, %v2151
      %v2153 = vsel %vm1372, %v2059, 0.0
      %v2154 = vadd.f32 %v2152, %v2153
      %v2155 = vsel %vm1372, %v2061, 0.0
      %v2156 = vadd.f32 %v2154, %v2155
      %v2157 = vsel %vm1372, %v2063, 0.0
      %v2158 = vadd.f32 %v2156, %v2157
      %v2159 = vsel %vm1372, %v2065, 0.0
      %v2160 = vadd.f32 %v2158, %v2159
      %v2161 = vsel %vm1372, %v2067, 0.0
      %v2162 = vadd.f32 %v2160, %v2161
      %v2163 = vsel %vm1372, %v2069, 0.0
      %v2164 = vadd.f32 %v2162, %v2163
      %v2165 = vsel %vm1372, %v2071, 0.0
      %v2166 = vadd.f32 %v2164, %v2165
      %v2167 = vsel %vm1372, %v2073, 0.0
      %v2168 = vadd.f32 %v2166, %v2167
      %v2169 = vsel %vm1372, %v2075, 0.0
      %v2170 = vadd.f32 %v2168, %v2169
      %v2171 = vsel %vm1372, %v2077, 0.0
      %v2172 = vadd.f32 %v2170, %v2171
      %v2173 = vsel %vm1372, %v2079, 0.0
      %v2174 = vadd.f32 %v2172, %v2173
      %v2175 = vsel %vm1372, %v2081, 0.0
      %v2176 = vadd.f32 %v2174, %v2175
      %v2177 = vsel %vm1372, %v2083, 0.0
      %v2178 = vadd.f32 %v2176, %v2177
      %v2179 = vsel %vm1372, %v2085, 0.0
      %v2180 = vadd.f32 %v2178, %v2179
      %v2181 = vsel %vm1372, %v2087, 0.0
      %v2182 = vadd.f32 %v2180, %v2181
      %v2183 = vsel %vm1372, %v2089, 0.0
      %v2184 = vadd.f32 %v2182, %v2183
      %v2185 = vsel %vm1372, %v2091, 0.0
      %v2186 = vadd.f32 %v2184, %v2185
      %v2187 = vsel %vm1372, %v2093, 0.0
      %v2188 = vadd.f32 %v2186, %v2187
      %v2189 = vsel %vm1372, %v2095, 0.0
      %v2190 = vadd.f32 %v2188, %v2189
      %v2191 = vsel %vm1372, %v2097, 0.0
      %v2192 = vadd.f32 %v2190, %v2191
      %v2193 = vsel %vm1372, %v2099, 0.0
      %v2194 = vadd.f32 %v2192, %v2193
      %v2195 = vsel %vm1372, %v2101, 0.0
      %v2196 = vadd.f32 %v2194, %v2195
      %v2197 = vsel %vm1372, %v2103, 0.0
      %v2198 = vadd.f32 %v2196, %v2197
      %v2199 = vsel %vm1372, %v2105, 0.0
      %v2200 = vadd.f32 %v2198, %v2199
      %v2201 = vsel %vm1372, %v2107, 0.0
      %v2202 = vadd.f32 %v2200, %v2201
      %2203 = vadd.xlane.f32.xlu0 %v2202
      %v2204 = vpop.xlane.xlu0 %2203
      %v2205 = vrot.slane %v2204, 4
      %v2206 = vadd.f32 %v2204, %v2205
      %v2207 = vrot.slane %v2206, 2
      %v2208 = vadd.f32 %v2206, %v2207
      %v2209 = vrot.slane %v2208, 1
      %v2210 = vadd.f32 %v2208, %v2209
      %s2211 = vtos %v2210
      %v2212 = vstv %s2211
      %v2213 = vmul.f32 %v2212, %v1897
      %2246 = vrot.lane.b32.xlu0 %v1899, 124
      %v2247 = vpop.permute.xlu0 %2246
      %2248 = vrot.lane.b32.xlu0 %v1900, 124
      %v2249 = vpop.permute.xlu0 %2248
      %2250 = vrot.lane.b32.xlu0 %v1901, 124
      %v2251 = vpop.permute.xlu0 %2250
      %2252 = vrot.lane.b32.xlu0 %v1902, 124
      %v2253 = vpop.permute.xlu0 %2252
      %2254 = vrot.lane.b32.xlu0 %v1903, 124
      %v2255 = vpop.permute.xlu0 %2254
      %2256 = vrot.lane.b32.xlu0 %v1904, 124
      %v2257 = vpop.permute.xlu0 %2256
      %2258 = vrot.lane.b32.xlu0 %v1905, 124
      %v2259 = vpop.permute.xlu0 %2258
      %2260 = vrot.lane.b32.xlu0 %v1906, 124
      %v2261 = vpop.permute.xlu0 %2260
      %2262 = vrot.lane.b32.xlu0 %v1907, 124
      %v2263 = vpop.permute.xlu0 %2262
      %2264 = vrot.lane.b32.xlu0 %v1908, 124
      %v2265 = vpop.permute.xlu0 %2264
      %2266 = vrot.lane.b32.xlu0 %v1909, 124
      %v2267 = vpop.permute.xlu0 %2266
      %2268 = vrot.lane.b32.xlu0 %v1910, 124
      %v2269 = vpop.permute.xlu0 %2268
      %2270 = vrot.lane.b32.xlu0 %v1911, 124
      %v2271 = vpop.permute.xlu0 %2270
      %2272 = vrot.lane.b32.xlu0 %v1912, 124
      %v2273 = vpop.permute.xlu0 %2272
      %2274 = vrot.lane.b32.xlu0 %v1913, 124
      %v2275 = vpop.permute.xlu0 %2274
      %2276 = vrot.lane.b32.xlu0 %v1914, 124
      %v2277 = vpop.permute.xlu0 %2276
      %2278 = vrot.lane.b32.xlu0 %v1915, 124
      %v2279 = vpop.permute.xlu0 %2278
      %2280 = vrot.lane.b32.xlu0 %v1916, 124
      %v2281 = vpop.permute.xlu0 %2280
      %2282 = vrot.lane.b32.xlu0 %v1917, 124
      %v2283 = vpop.permute.xlu0 %2282
      %2284 = vrot.lane.b32.xlu0 %v1918, 124
      %v2285 = vpop.permute.xlu0 %2284
      %2286 = vrot.lane.b32.xlu0 %v1919, 124
      %v2287 = vpop.permute.xlu0 %2286
      %2288 = vrot.lane.b32.xlu0 %v1920, 124
      %v2289 = vpop.permute.xlu0 %2288
      %2290 = vrot.lane.b32.xlu0 %v1921, 124
      %v2291 = vpop.permute.xlu0 %2290
      %2292 = vrot.lane.b32.xlu0 %v1922, 124
      %v2293 = vpop.permute.xlu0 %2292
      %2294 = vrot.lane.b32.xlu0 %v1923, 124
      %v2295 = vpop.permute.xlu0 %2294
      %2296 = vrot.lane.b32.xlu0 %v1924, 124
      %v2297 = vpop.permute.xlu0 %2296
      %2298 = vrot.lane.b32.xlu0 %v1925, 124
      %v2299 = vpop.permute.xlu0 %2298
      %2300 = vrot.lane.b32.xlu0 %v1926, 124
      %v2301 = vpop.permute.xlu0 %2300
      %2302 = vrot.lane.b32.xlu0 %v1927, 124
      %v2303 = vpop.permute.xlu0 %2302
      %2304 = vrot.lane.b32.xlu0 %v1928, 124
      %v2305 = vpop.permute.xlu0 %2304
      %2306 = vrot.lane.b32.xlu0 %v1929, 124
      %v2307 = vpop.permute.xlu0 %2306
      %2308 = vrot.lane.b32.xlu0 %v1930, 124
      %v2309 = vpop.permute.xlu0 %2308
      %v2342 = vsel %vm1372, %v2247, 0.0
      %v2343 = vsel %vm1372, %v2249, 0.0
      %v2344 = vadd.f32 %v2342, %v2343
      %v2345 = vsel %vm1372, %v2251, 0.0
      %v2346 = vadd.f32 %v2344, %v2345
      %v2347 = vsel %vm1372, %v2253, 0.0
      %v2348 = vadd.f32 %v2346, %v2347
      %v2349 = vsel %vm1372, %v2255, 0.0
      %v2350 = vadd.f32 %v2348, %v2349
      %v2351 = vsel %vm1372, %v2257, 0.0
      %v2352 = vadd.f32 %v2350, %v2351
      %v2353 = vsel %vm1372, %v2259, 0.0
      %v2354 = vadd.f32 %v2352, %v2353
      %v2355 = vsel %vm1372, %v2261, 0.0
      %v2356 = vadd.f32 %v2354, %v2355
      %v2357 = vsel %vm1372, %v2263, 0.0
      %v2358 = vadd.f32 %v2356, %v2357
      %v2359 = vsel %vm1372, %v2265, 0.0
      %v2360 = vadd.f32 %v2358, %v2359
      %v2361 = vsel %vm1372, %v2267, 0.0
      %v2362 = vadd.f32 %v2360, %v2361
      %v2363 = vsel %vm1372, %v2269, 0.0
      %v2364 = vadd.f32 %v2362, %v2363
      %v2365 = vsel %vm1372, %v2271, 0.0
      %v2366 = vadd.f32 %v2364, %v2365
      %v2367 = vsel %vm1372, %v2273, 0.0
      %v2368 = vadd.f32 %v2366, %v2367
      %v2369 = vsel %vm1372, %v2275, 0.0
      %v2370 = vadd.f32 %v2368, %v2369
      %v2371 = vsel %vm1372, %v2277, 0.0
      %v2372 = vadd.f32 %v2370, %v2371
      %v2373 = vsel %vm1372, %v2279, 0.0
      %v2374 = vadd.f32 %v2372, %v2373
      %v2375 = vsel %vm1372, %v2281, 0.0
      %v2376 = vadd.f32 %v2374, %v2375
      %v2377 = vsel %vm1372, %v2283, 0.0
      %v2378 = vadd.f32 %v2376, %v2377
      %v2379 = vsel %vm1372, %v2285, 0.0
      %v2380 = vadd.f32 %v2378, %v2379
      %v2381 = vsel %vm1372, %v2287, 0.0
      %v2382 = vadd.f32 %v2380, %v2381
      %v2383 = vsel %vm1372, %v2289, 0.0
      %v2384 = vadd.f32 %v2382, %v2383
      %v2385 = vsel %vm1372, %v2291, 0.0
      %v2386 = vadd.f32 %v2384, %v2385
      %v2387 = vsel %vm1372, %v2293, 0.0
      %v2388 = vadd.f32 %v2386, %v2387
      %v2389 = vsel %vm1372, %v2295, 0.0
      %v2390 = vadd.f32 %v2388, %v2389
      %v2391 = vsel %vm1372, %v2297, 0.0
      %v2392 = vadd.f32 %v2390, %v2391
      %v2393 = vsel %vm1372, %v2299, 0.0
      %v2394 = vadd.f32 %v2392, %v2393
      %v2395 = vsel %vm1372, %v2301, 0.0
      %v2396 = vadd.f32 %v2394, %v2395
      %v2397 = vsel %vm1372, %v2303, 0.0
      %v2398 = vadd.f32 %v2396, %v2397
      %v2399 = vsel %vm1372, %v2305, 0.0
      %v2400 = vadd.f32 %v2398, %v2399
      %v2401 = vsel %vm1372, %v2307, 0.0
      %v2402 = vadd.f32 %v2400, %v2401
      %v2403 = vsel %vm1372, %v2309, 0.0
      %v2404 = vadd.f32 %v2402, %v2403
      %2405 = vadd.xlane.f32.xlu0 %v2404
      %v2406 = vpop.xlane.xlu0 %2405
      %v2407 = vrot.slane %v2406, 4
      %v2408 = vadd.f32 %v2406, %v2407
      %v2409 = vrot.slane %v2408, 2
      %v2410 = vadd.f32 %v2408, %v2409
      %v2411 = vrot.slane %v2410, 1
      %v2412 = vadd.f32 %v2410, %v2411
      %s2413 = vtos %v2412
      %v2414 = vstv %s2413
      %v2415 = vmul.f32 %v2414, %v1897
      %v2416 = vmul.f32 %v2213, %v2213
      %v2417 = vsub.f32 %v2415, %v2416
      %vm2418 = vcmp.ge.s32.totalorder %v1817, 4
      %vm2419 = vcmp.lt.s32.totalorder %v1817, 8
      %vm2420 = vmand %vm2418, %vm2419
      %v2421 = vsel %vm2420, %v2213, %v2010
      %v2422 = vsel %vm2420, %v2417, %v2011
      %v2423 = vadd.f32 %v2422, 1e-05
      %v2424 = vrsqrt.pop %v2423
      %v2425 = vmul.f32 %v2424, %v2423
      %v2426 = vmul.f32 %v2425, %v2424
      %v2427 = vmul.f32 0.5, %v2426
      %v2428 = vsub.f32 1.5, %v2427
      %v2429 = vmul.f32 %v2424, %v2428
      %vm2430 = vweird.f32 %v2423
      %vm2431 = vweird.f32 %v2424
      %vm2432 = vmor %vm2430, %vm2431
      %v2433 = vsel %vm2432, %v2424, %v2429
      %v2434 = vmul.f32 %v1814, %v2433
      %v2435 = vmul.f32 %v2421, %v2434
      %v2436 = vsub.f32 %v1815, %v2435
      %v2438 = vperm.slane %v2434, 0
      %v2440 = vmul.f32 %v1735, %v2438
      %v2441 = vmul.f32 %v1737, %v2438
      %v2442 = vmul.f32 %v1740, %v2438
      %v2443 = vmul.f32 %v1742, %v2438
      %v2444 = vmul.f32 %v1745, %v2438
      %v2445 = vmul.f32 %v1747, %v2438
      %v2446 = vmul.f32 %v1750, %v2438
      %v2447 = vmul.f32 %v1752, %v2438
      %v2448 = vmul.f32 %v1755, %v2438
      %v2449 = vmul.f32 %v1757, %v2438
      %v2450 = vmul.f32 %v1760, %v2438
      %v2451 = vmul.f32 %v1762, %v2438
      %v2452 = vmul.f32 %v1765, %v2438
      %v2453 = vmul.f32 %v1767, %v2438
      %v2454 = vmul.f32 %v1770, %v2438
      %v2455 = vmul.f32 %v1772, %v2438
      %v2456 = vmul.f32 %v1775, %v2438
      %v2457 = vmul.f32 %v1777, %v2438
      %v2458 = vmul.f32 %v1780, %v2438
      %v2459 = vmul.f32 %v1782, %v2438
      %v2460 = vmul.f32 %v1785, %v2438
      %v2461 = vmul.f32 %v1787, %v2438
      %v2462 = vmul.f32 %v1790, %v2438
      %v2463 = vmul.f32 %v1792, %v2438
      %v2464 = vmul.f32 %v1795, %v2438
      %v2465 = vmul.f32 %v1797, %v2438
      %v2466 = vmul.f32 %v1800, %v2438
      %v2467 = vmul.f32 %v1802, %v2438
      %v2468 = vmul.f32 %v1805, %v2438
      %v2469 = vmul.f32 %v1807, %v2438
      %v2470 = vmul.f32 %v1810, %v2438
      %v2471 = vmul.f32 %v1812, %v2438
      %v2473 = vperm.slane %v2436, 0
      %v2475 = vadd.f32 %v2440, %v2473
      %v2476 = vadd.f32 %v2441, %v2473
      %v2477 = vadd.f32 %v2442, %v2473
      %v2478 = vadd.f32 %v2443, %v2473
      %v2479 = vadd.f32 %v2444, %v2473
      %v2480 = vadd.f32 %v2445, %v2473
      %v2481 = vadd.f32 %v2446, %v2473
      %v2482 = vadd.f32 %v2447, %v2473
      %v2483 = vadd.f32 %v2448, %v2473
      %v2484 = vadd.f32 %v2449, %v2473
      %v2485 = vadd.f32 %v2450, %v2473
      %v2486 = vadd.f32 %v2451, %v2473
      %v2487 = vadd.f32 %v2452, %v2473
      %v2488 = vadd.f32 %v2453, %v2473
      %v2489 = vadd.f32 %v2454, %v2473
      %v2490 = vadd.f32 %v2455, %v2473
      %v2491 = vadd.f32 %v2456, %v2473
      %v2492 = vadd.f32 %v2457, %v2473
      %v2493 = vadd.f32 %v2458, %v2473
      %v2494 = vadd.f32 %v2459, %v2473
      %v2495 = vadd.f32 %v2460, %v2473
      %v2496 = vadd.f32 %v2461, %v2473
      %v2497 = vadd.f32 %v2462, %v2473
      %v2498 = vadd.f32 %v2463, %v2473
      %v2499 = vadd.f32 %v2464, %v2473
      %v2500 = vadd.f32 %v2465, %v2473
      %v2501 = vadd.f32 %v2466, %v2473
      %v2502 = vadd.f32 %v2467, %v2473
      %v2503 = vadd.f32 %v2468, %v2473
      %v2504 = vadd.f32 %v2469, %v2473
      %v2505 = vadd.f32 %v2470, %v2473
      %v2506 = vadd.f32 %v2471, %v2473
      %v2507 = vmax.f32 %v2475, 0.0
      %v2508 = vmax.f32 %v2476, 0.0
      %v2509 = vmax.f32 %v2477, 0.0
      %v2510 = vmax.f32 %v2478, 0.0
      %v2511 = vmax.f32 %v2479, 0.0
      %v2512 = vmax.f32 %v2480, 0.0
      %v2513 = vmax.f32 %v2481, 0.0
      %v2514 = vmax.f32 %v2482, 0.0
      %v2515 = vmax.f32 %v2483, 0.0
      %v2516 = vmax.f32 %v2484, 0.0
      %v2517 = vmax.f32 %v2485, 0.0
      %v2518 = vmax.f32 %v2486, 0.0
      %v2519 = vmax.f32 %v2487, 0.0
      %v2520 = vmax.f32 %v2488, 0.0
      %v2521 = vmax.f32 %v2489, 0.0
      %v2522 = vmax.f32 %v2490, 0.0
      %v2523 = vmax.f32 %v2491, 0.0
      %v2524 = vmax.f32 %v2492, 0.0
      %v2525 = vmax.f32 %v2493, 0.0
      %v2526 = vmax.f32 %v2494, 0.0
      %v2527 = vmax.f32 %v2495, 0.0
      %v2528 = vmax.f32 %v2496, 0.0
      %v2529 = vmax.f32 %v2497, 0.0
      %v2530 = vmax.f32 %v2498, 0.0
      %v2531 = vmax.f32 %v2499, 0.0
      %v2532 = vmax.f32 %v2500, 0.0
      %v2533 = vmax.f32 %v2501, 0.0
      %v2534 = vmax.f32 %v2502, 0.0
      %v2535 = vmax.f32 %v2503, 0.0
      %v2536 = vmax.f32 %v2504, 0.0
      %v2537 = vmax.f32 %v2505, 0.0
      %v2538 = vmax.f32 %v2506, 0.0
      %2539 = vst.msk [vmem:[%s197] sm:$0xff] %vm1405, %v2507
      %2540 = vst.msk [vmem:[%s197 + $0x8] sm:$0xff] %vm1405, %v2508
      %2541 = vst.msk [vmem:[%s197 + $0x10] sm:$0xff] %vm1405, %v2509
      %2542 = vst.msk [vmem:[%s197 + $0x18] sm:$0xff] %vm1405, %v2510
      %2543 = vst.msk [vmem:[%s197 + $0x20] sm:$0xff] %vm1405, %v2511
      %2544 = vst.msk [vmem:[%s197 + $0x28] sm:$0xff] %vm1405, %v2512
      %2545 = vst.msk [vmem:[%s197 + $0x30] sm:$0xff] %vm1405, %v2513
      %2546 = vst.msk [vmem:[%s197 + $0x38] sm:$0xff] %vm1405, %v2514
      %2547 = vst.msk [vmem:[%s197 + $0x40] sm:$0xff] %vm1405, %v2515
      %2548 = vst.msk [vmem:[%s197 + $0x48] sm:$0xff] %vm1405, %v2516
      %2549 = vst.msk [vmem:[%s197 + $0x50] sm:$0xff] %vm1405, %v2517
      %2550 = vst.msk [vmem:[%s197 + $0x58] sm:$0xff] %vm1405, %v2518
      %2551 = vst.msk [vmem:[%s197 + $0x60] sm:$0xff] %vm1405, %v2519
      %2552 = vst.msk [vmem:[%s197 + $0x68] sm:$0xff] %vm1405, %v2520
      %2553 = vst.msk [vmem:[%s197 + $0x70] sm:$0xff] %vm1405, %v2521
      %2554 = vst.msk [vmem:[%s197 + $0x78] sm:$0xff] %vm1405, %v2522
      %2555 = vst.msk [vmem:[%s197 + $0x80] sm:$0xff] %vm1405, %v2523
      %2556 = vst.msk [vmem:[%s197 + $0x88] sm:$0xff] %vm1405, %v2524
      %2557 = vst.msk [vmem:[%s197 + $0x90] sm:$0xff] %vm1405, %v2525
      %2558 = vst.msk [vmem:[%s197 + $0x98] sm:$0xff] %vm1405, %v2526
      %2559 = vst.msk [vmem:[%s197 + $0xa0] sm:$0xff] %vm1405, %v2527
      %2560 = vst.msk [vmem:[%s197 + $0xa8] sm:$0xff] %vm1405, %v2528
      %2561 = vst.msk [vmem:[%s197 + $0xb0] sm:$0xff] %vm1405, %v2529
      %2562 = vst.msk [vmem:[%s197 + $0xb8] sm:$0xff] %vm1405, %v2530
      %2563 = vst.msk [vmem:[%s197 + $0xc0] sm:$0xff] %vm1405, %v2531
      %2564 = vst.msk [vmem:[%s197 + $0xc8] sm:$0xff] %vm1405, %v2532
      %2565 = vst.msk [vmem:[%s197 + $0xd0] sm:$0xff] %vm1405, %v2533
      %2566 = vst.msk [vmem:[%s197 + $0xd8] sm:$0xff] %vm1405, %v2534
      %2567 = vst.msk [vmem:[%s197 + $0xe0] sm:$0xff] %vm1405, %v2535
      %2568 = vst.msk [vmem:[%s197 + $0xe8] sm:$0xff] %vm1405, %v2536
      %2569 = vst.msk [vmem:[%s197 + $0xf0] sm:$0xff] %vm1405, %v2537
      %2570 = vst.msk [vmem:[%s197 + $0xf8] sm:$0xff] %vm1405, %v2538
      %p2571 = scmp.lt.s32.totalorder %s15, 1
      %s2572 = scalar_select %p2571, %s15, 1
      %s2573 = smul.addr %s2572, 32
      %s2574 = smul.addr %s2573, 8
      %s2575 = scalar_lea.vmem %s4, %s2574
      // Predicated region
      $region37: #{resnet_forward.3} parent=35 // pred_check
        %p2576 = pneg %p122
      $region38: #{resnet_forward.3} parent=35 // pred_check_branch
        %2578 = sbr.rel (%p2576) target = $region40
      $region39: #{resnet_forward.3} parent=35 // pred_region
        _
      $region40: #{resnet_forward.3} parent=35 // pred_fallthru
        _
    $region36: #{resnet_forward.3} parent=5 // pred_fallthru
      _
    %p2579 = scmp.le.s32.totalorder 2, %s10
    // Predicated region
    $region41: #{resnet_forward.3} parent=5 // pred_check
      %p2580 = pneg %p2579
    $region42: #{resnet_forward.3} parent=5 // pred_check_branch
      %2582 = sbr.rel (%p2580) target = $region44
    $region43: #{resnet_forward.3} parent=5 // pred_region
      %s2583 = ssub.s32 %s10, 2
      // Predicated region
      $region45: #{resnet_forward.3} parent=43 // pred_check
        %p2584 = pneg %p128
      $region46: #{resnet_forward.3} parent=43 // pred_check_branch
        %2586 = sbr.rel (%p2584) target = $region48
      $region47: #{resnet_forward.3} parent=43 // pred_region
        %p2587 = scmp.lt.s32.totalorder %s16, 1
        %s2588 = scalar_select %p2587, %s16, 1
        %s2589 = smul.addr %s2588, 32
        %s2590 = smul.addr %s2589, 8
        %s2591 = scalar_lea.vmem %s4, %s2590
      $region48: #{resnet_forward.3} parent=43 // pred_fallthru
        _
    $region44: #{resnet_forward.3} parent=5 // pred_fallthru
      _
  $region6: #{resnet_forward.3} parent=0 // loop_footer
    %s14 = sadd.s32 1, %s10
  $region7: #{resnet_forward.3} parent=0 // loop_footer_branch
    %9 = sbr.rel target = $region3
  $region8: #{resnet_forward.3} parent=0 // loop_exit
    _

// kernel: resnet_forward.4
$region0: #{resnet_forward.4}
  #allocation0 [shape = 'u32[]', space=smem, size = 0x4, offset = 0x4, fixed_abs, tag = 'smem constant byte address 0x4 - core index']
  #allocation1 [shape = 'u32[72,128]{1,0:T(1,128)}', space=vmem, size = 0x9000, scoped, tag = 'internal scratch']
  %s0 = inlined_call_operand.vmem [shape: f32[2,256,8], index: 0, kind: input, shape index: {}]
  %s1 = inlined_call_operand.vmem [shape: bf16[72,8], index: 1, kind: input, shape index: {}]
  %s2 = inlined_call_operand.vmem [shape: f32[1,8], index: 2, kind: input, shape index: {}, may-alias: {2,5}]
  %s3 = inlined_call_operand.vmem [shape: f32[1,8], index: 3, kind: input, shape index: {}, may-alias: {3,6}]
  %s4 = inlined_call_operand.vmem [shape: bf16[72,8], index: 4, kind: input, shape index: {}]
  %s5 = inlined_call_operand.vmem [shape: f32[1,8], index: 5, kind: input, shape index: {}, may-alias: {2,5}]
  %s6 = inlined_call_operand.vmem [shape: f32[1,8], index: 6, kind: input, shape index: {}, may-alias: {3,6}]
  %s7 = inlined_call_operand.vmem [shape: f32[2,256,8], index: 7, kind: output, shape index: {}]
  %s8 = sld [smem:[#allocation0]]
  $region61: #{resnet_forward.4} parent=0
    _
  %s10 = ssub.s32 1, %s8
  %s11 = scalar_select 0, %s10, %s8
  loop: start=0, step=1, limit=4
  $region2: #{resnet_forward.4} parent=0 // loop_pre_header
    _
  $region3: #{resnet_forward.4} parent=0 // loop_header
    %s13 = sphi 0, %s17
    %p14 = scmp.ge.s32.totalorder %s13, 4
    %s23 = sphi 0, %s25
    %s26 = sphi 0, %s23
    %s27 = sphi 0, %s26
    %s43 = sphi 0, %s27
    %s47 = sphi 0, %s47
    %s49 = sphi 0, %s47
    %s50 = sphi 0, %s49
    %s64 = sphi 0, %s50
    %s68 = sphi 0, %s68
    %s70 = sphi 0, %s68
    %s71 = sphi 0, %s70
    %s85 = sphi 0, %s71
    %s89 = sphi 0, %s89
    %s91 = sphi 0, %s89
    %s92 = sphi 0, %s91
    %s106 = sphi 0, %s92
    %s110 = sphi 0, %s110
    %s112 = sphi 0, %s110
    %s113 = sphi 0, %s112
    %s127 = sphi 0, %s113
    %s131 = sphi 0, %s131
    %s133 = sphi 0, %s131
    %s134 = sphi 0, %s133
    %s148 = sphi 0, %s134
    %s152 = sphi 0, %s152
    %s154 = sphi 0, %s152
    %s155 = sphi 0, %s154
    %s169 = sphi 0, %s155
    %s175 = sphi 0, %s177
    %s178 = sphi 0, %s175
    %s179 = sphi 0, %s178
    %s195 = sphi 0, %s179
  $region4: #{resnet_forward.4} parent=0 // loop_header_branch
    %16 = sbr.rel (%p14) target = $region8
  $region5: #{resnet_forward.4} parent=0 // loop_body
    %s18 = ssub.s32 %s13, 1
    %s19 = ssub.s32 %s13, 2
    %s20 = sadd.s32 %s13, 1
    %s21 = ssub.s32 %s13, %s20
    %p22 = scmp.eq.s32.totalorder %s21, 0
    %s24 = sadd.s32 %s23, 1
    %s25 = scalar_select %p22, %s23, %s24
    %p28 = pneg %p22
    %p29 = scmp.eq.s32.totalorder %s13, 1
    %p30 = por %p28, %p29
    %p31 = scmp.ne.s32.totalorder %s23, %s26
    %p32 = scmp.eq.s32.totalorder %s13, 0
    %p33 = por %p31, %p32
    %p34 = scmp.ne.s32.totalorder %s23, %s26
    %p35 = scmp.eq.s32.totalorder %s18, 1
    %p36 = por %p34, %p35
    %p37 = scmp.ne.s32.totalorder %s26, %s27
    %p38 = scmp.eq.s32.totalorder %s18, 0
    %p39 = por %p37, %p38
    %p40 = scmp.ne.s32.totalorder %s26, %s27
    %p41 = scmp.eq.s32.totalorder %s19, 1
    %p42 = por %p40, %p41
    %p44 = scmp.ne.s32.totalorder %s27, %s43
    %p45 = scmp.eq.s32.totalorder %s19, 0
    %p46 = por %p44, %p45
    %s48 = sadd.s32 %s47, 1
    %p51 = scmp.eq.s32.totalorder %s13, 1
    %p52 = scmp.ne.s32.totalorder %s47, %s49
    %p53 = scmp.eq.s32.totalorder %s13, 0
    %p54 = por %p52, %p53
    %p55 = scmp.ne.s32.totalorder %s47, %s49
    %p56 = scmp.eq.s32.totalorder %s18, 1
    %p57 = por %p55, %p56
    %p58 = scmp.ne.s32.totalorder %s49, %s50
    %p59 = scmp.eq.s32.totalorder %s18, 0
    %p60 = por %p58, %p59
    %p61 = scmp.ne.s32.totalorder %s49, %s50
    %p62 = scmp.eq.s32.totalorder %s19, 1
    %p63 = por %p61, %p62
    %p65 = scmp.ne.s32.totalorder %s50, %s64
    %p66 = scmp.eq.s32.totalorder %s19, 0
    %p67 = por %p65, %p66
    %s69 = sadd.s32 %s68, 1
    %p72 = scmp.eq.s32.totalorder %s13, 1
    %p73 = scmp.ne.s32.totalorder %s68, %s70
    %p74 = scmp.eq.s32.totalorder %s13, 0
    %p75 = por %p73, %p74
    %p76 = scmp.ne.s32.totalorder %s68, %s70
    %p77 = scmp.eq.s32.totalorder %s18, 1
    %p78 = por %p76, %p77
    %p79 = scmp.ne.s32.totalorder %s70, %s71
    %p80 = scmp.eq.s32.totalorder %s18, 0
    %p81 = por %p79, %p80
    %p82 = scmp.ne.s32.totalorder %s70, %s71
    %p83 = scmp.eq.s32.totalorder %s19, 1
    %p84 = por %p82, %p83
    %p86 = scmp.ne.s32.totalorder %s71, %s85
    %p87 = scmp.eq.s32.totalorder %s19, 0
    %p88 = por %p86, %p87
    %s90 = sadd.s32 %s89, 1
    %p93 = scmp.eq.s32.totalorder %s13, 1
    %p94 = scmp.ne.s32.totalorder %s89, %s91
    %p95 = scmp.eq.s32.totalorder %s13, 0
    %p96 = por %p94, %p95
    %p97 = scmp.ne.s32.totalorder %s89, %s91
    %p98 = scmp.eq.s32.totalorder %s18, 1
    %p99 = por %p97, %p98
    %p100 = scmp.ne.s32.totalorder %s91, %s92
    %p101 = scmp.eq.s32.totalorder %s18, 0
    %p102 = por %p100, %p101
    %p103 = scmp.ne.s32.totalorder %s91, %s92
    %p104 = scmp.eq.s32.totalorder %s19, 1
    %p105 = por %p103, %p104
    %p107 = scmp.ne.s32.totalorder %s92, %s106
    %p108 = scmp.eq.s32.totalorder %s19, 0
    %p109 = por %p107, %p108
    %s111 = sadd.s32 %s110, 1
    %p114 = scmp.eq.s32.totalorder %s13, 1
    %p115 = scmp.ne.s32.totalorder %s110, %s112
    %p116 = scmp.eq.s32.totalorder %s13, 0
    %p117 = por %p115, %p116
    %p118 = scmp.ne.s32.totalorder %s110, %s112
    %p119 = scmp.eq.s32.totalorder %s18, 1
    %p120 = por %p118, %p119
    %p121 = scmp.ne.s32.totalorder %s112, %s113
    %p122 = scmp.eq.s32.totalorder %s18, 0
    %p123 = por %p121, %p122
    %p124 = scmp.ne.s32.totalorder %s112, %s113
    %p125 = scmp.eq.s32.totalorder %s19, 1
    %p126 = por %p124, %p125
    %p128 = scmp.ne.s32.totalorder %s113, %s127
    %p129 = scmp.eq.s32.totalorder %s19, 0
    %p130 = por %p128, %p129
    %s132 = sadd.s32 %s131, 1
    %p135 = scmp.eq.s32.totalorder %s13, 1
    %p136 = scmp.ne.s32.totalorder %s131, %s133
    %p137 = scmp.eq.s32.totalorder %s13, 0
    %p138 = por %p136, %p137
    %p139 = scmp.ne.s32.totalorder %s131, %s133
    %p140 = scmp.eq.s32.totalorder %s18, 1
    %p141 = por %p139, %p140
    %p142 = scmp.ne.s32.totalorder %s133, %s134
    %p143 = scmp.eq.s32.totalorder %s18, 0
    %p144 = por %p142, %p143
    %p145 = scmp.ne.s32.totalorder %s133, %s134
    %p146 = scmp.eq.s32.totalorder %s19, 1
    %p147 = por %p145, %p146
    %p149 = scmp.ne.s32.totalorder %s134, %s148
    %p150 = scmp.eq.s32.totalorder %s19, 0
    %p151 = por %p149, %p150
    %s153 = sadd.s32 %s152, 1
    %p156 = scmp.eq.s32.totalorder %s13, 1
    %p157 = scmp.ne.s32.totalorder %s152, %s154
    %p158 = scmp.eq.s32.totalorder %s13, 0
    %p159 = por %p157, %p158
    %p160 = scmp.ne.s32.totalorder %s152, %s154
    %p161 = scmp.eq.s32.totalorder %s18, 1
    %p162 = por %p160, %p161
    %p163 = scmp.ne.s32.totalorder %s154, %s155
    %p164 = scmp.eq.s32.totalorder %s18, 0
    %p165 = por %p163, %p164
    %p166 = scmp.ne.s32.totalorder %s154, %s155
    %p167 = scmp.eq.s32.totalorder %s19, 1
    %p168 = por %p166, %p167
    %p170 = scmp.ne.s32.totalorder %s155, %s169
    %p171 = scmp.eq.s32.totalorder %s19, 0
    %p172 = por %p170, %p171
    %s173 = ssub.s32 %s13, %s20
    %p174 = scmp.eq.s32.totalorder %s173, 0
    %s176 = sadd.s32 %s175, 1
    %s177 = scalar_select %p174, %s175, %s176
    %p180 = pneg %p174
    %p181 = scmp.eq.s32.totalorder %s13, 1
    %p182 = por %p180, %p181
    %p183 = scmp.ne.s32.totalorder %s175, %s178
    %p184 = scmp.eq.s32.totalorder %s13, 0
    %p185 = por %p183, %p184
    %p186 = scmp.ne.s32.totalorder %s175, %s178
    %p187 = scmp.eq.s32.totalorder %s18, 1
    %p188 = por %p186, %p187
    %p189 = scmp.ne.s32.totalorder %s178, %s179
    %p190 = scmp.eq.s32.totalorder %s18, 0
    %p191 = por %p189, %p190
    %p192 = scmp.ne.s32.totalorder %s178, %s179
    %p193 = scmp.eq.s32.totalorder %s19, 1
    %p194 = por %p192, %p193
    %p196 = scmp.ne.s32.totalorder %s179, %s195
    %p197 = scmp.eq.s32.totalorder %s19, 0
    %p198 = por %p196, %p197
    %p199 = scmp.le.s32.totalorder 1, %s13
    %p200 = scmp.lt.s32.totalorder %s13, 3
    %p201 = pnand %p199, %p200
    %p202 = pneg %p201
    // Predicated region
    $region9: #{resnet_forward.4} parent=5 // pred_check
      _
    $region10: #{resnet_forward.4} parent=5 // pred_check_branch
      %204 = sbr.rel (%p201) target = $region12
    $region11: #{resnet_forward.4} parent=5 // pred_region
      %s205 = ssub.s32 %s13, 1
      // Predicated region
      $region13: #{resnet_forward.4} parent=11 // pred_check
        %p206 = pneg %p60
      $region14: #{resnet_forward.4} parent=11 // pred_check_branch
        %208 = sbr.rel (%p206) target = $region16
      $region15: #{resnet_forward.4} parent=11 // pred_region
        _
      $region16: #{resnet_forward.4} parent=11 // pred_fallthru
        _
      // Predicated region
      $region17: #{resnet_forward.4} parent=11 // pred_check
        %p209 = pneg %p81
      $region18: #{resnet_forward.4} parent=11 // pred_check_branch
        %211 = sbr.rel (%p209) target = $region20
      $region19: #{resnet_forward.4} parent=11 // pred_region
        _
      $region20: #{resnet_forward.4} parent=11 // pred_fallthru
        _
      // Predicated region
      $region21: #{resnet_forward.4} parent=11 // pred_check
        %p212 = pneg %p102
      $region22: #{resnet_forward.4} parent=11 // pred_check_branch
        %214 = sbr.rel (%p212) target = $region24
      $region23: #{resnet_forward.4} parent=11 // pred_region
        _
      $region24: #{resnet_forward.4} parent=11 // pred_fallthru
        _
      // Predicated region
      $region25: #{resnet_forward.4} parent=11 // pred_check
        %p215 = pneg %p123
      $region26: #{resnet_forward.4} parent=11 // pred_check_branch
        %217 = sbr.rel (%p215) target = $region28
      $region27: #{resnet_forward.4} parent=11 // pred_region
        _
      $region28: #{resnet_forward.4} parent=11 // pred_fallthru
        _
      // Predicated region
      $region29: #{resnet_forward.4} parent=11 // pred_check
        %p218 = pneg %p144
      $region30: #{resnet_forward.4} parent=11 // pred_check_branch
        %220 = sbr.rel (%p218) target = $region32
      $region31: #{resnet_forward.4} parent=11 // pred_region
        _
      $region32: #{resnet_forward.4} parent=11 // pred_fallthru
        _
      // Predicated region
      $region33: #{resnet_forward.4} parent=11 // pred_check
        %p221 = pneg %p165
      $region34: #{resnet_forward.4} parent=11 // pred_check_branch
        %223 = sbr.rel (%p221) target = $region36
      $region35: #{resnet_forward.4} parent=11 // pred_region
        _
      $region36: #{resnet_forward.4} parent=11 // pred_fallthru
        _
    $region12: #{resnet_forward.4} parent=5 // pred_fallthru
      _
    %p224 = scmp.lt.s32.totalorder %s13, 2
    // Predicated region
    $region37: #{resnet_forward.4} parent=5 // pred_check
      %p225 = pneg %p224
    $region38: #{resnet_forward.4} parent=5 // pred_check_branch
      %227 = sbr.rel (%p225) target = $region40
    $region39: #{resnet_forward.4} parent=5 // pred_region
      // Predicated region
      $region41: #{resnet_forward.4} parent=39 // pred_check
        %p228 = pneg %p33
      $region42: #{resnet_forward.4} parent=39 // pred_check_branch
        %230 = sbr.rel (%p228) target = $region44
      $region43: #{resnet_forward.4} parent=39 // pred_region
        %p231 = scmp.lt.s32.totalorder %s13, 1
        %s232 = scalar_select %p231, %s13, 1
        %s233 = smul.addr %s232, 32
        %s234 = smul.addr %s233, 8
        %s235 = scalar_lea.vmem %s0, %s234
      $region44: #{resnet_forward.4} parent=39 // pred_fallthru
        _
    $region40: #{resnet_forward.4} parent=5 // pred_fallthru
      _
    %p236 = scmp.le.s32.totalorder 1, %s13
    %p237 = scmp.lt.s32.totalorder %s13, 3
    %p238 = pnand %p236, %p237
    %p239 = pneg %p238
    // Predicated region
    $region45: #{resnet_forward.4} parent=5 // pred_check
      _
    $region46: #{resnet_forward.4} parent=5 // pred_check_branch
      %241 = sbr.rel (%p238) target = $region48
    $region47: #{resnet_forward.4} parent=5 // pred_region
      %s242 = ssub.s32 %s13, 1
      %p243 = scmp.lt.s32.totalorder %s18, 1
      %s244 = scalar_select %p243, %s18, 1
      %s245 = smul.addr %s244, 32
      %s246 = smul.addr %s245, 8
      %s247 = scalar_lea.vmem %s0, %s246
      %p248 = pneg %p39
      %p249 = pneg %p36
      %p250 = pneg %p60
      %p251 = pneg %p57
      %p252 = pneg %p81
      %p253 = pneg %p78
      %p254 = pneg %p102
      %p255 = pneg %p99
      %p256 = pneg %p123
      %p257 = pneg %p120
      %p258 = pneg %p144
      %p259 = pneg %p141
      %p260 = pneg %p165
      %p261 = pneg %p162
      %p262 = pneg %p191
      %p263 = pneg %p188
      %p264 = scmp.lt.s32.totalorder %s18, 1
      %s265 = scalar_select %p264, %s18, 1
      %s266 = smul.addr %s265, 32
      %s267 = smul.addr %s266, 8
      %s268 = scalar_lea.vmem %s7, %s267
      %p269 = scmp.lt.s32.totalorder %s18, 1
      %s270 = scalar_select %p269, %s18, 1
      %s271 = smul.addr %s270, 32
      %s272 = smul.addr %s271, 8
      %s273 = scalar_lea.vmem %s0, %s272
      %p274 = scmp.lt.s32.totalorder %s18, 1
      %s275 = scalar_select %p274, %s18, 1
      %s276 = smul.addr %s275, 32
      %s277 = smul.addr %s276, 8
      %s278 = scalar_lea.vmem %s7, %s277
      %v280 = vld [vmem:[%s273] sm:$0xff]
      %v281 = vld [vmem:[%s273 + $0x8] sm:$0xff]
      %v282 = vld [vmem:[%s273 + $0x10] sm:$0xff]
      %v283 = vld [vmem:[%s273 + $0x18] sm:$0xff]
      %v284 = vld [vmem:[%s273 + $0x20] sm:$0xff]
      %v285 = vld [vmem:[%s273 + $0x28] sm:$0xff]
      %v286 = vld [vmem:[%s273 + $0x30] sm:$0xff]
      %v287 = vld [vmem:[%s273 + $0x38] sm:$0xff]
      %v288 = vld [vmem:[%s273 + $0x40] sm:$0xff]
      %v289 = vld [vmem:[%s273 + $0x48] sm:$0xff]
      %v290 = vld [vmem:[%s273 + $0x50] sm:$0xff]
      %v291 = vld [vmem:[%s273 + $0x58] sm:$0xff]
      %v292 = vld [vmem:[%s273 + $0x60] sm:$0xff]
      %v293 = vld [vmem:[%s273 + $0x68] sm:$0xff]
      %v294 = vld [vmem:[%s273 + $0x70] sm:$0xff]
      %v295 = vld [vmem:[%s273 + $0x78] sm:$0xff]
      %v296 = vld [vmem:[%s273 + $0x80] sm:$0xff]
      %v297 = vld [vmem:[%s273 + $0x88] sm:$0xff]
      %v298 = vld [vmem:[%s273 + $0x90] sm:$0xff]
      %v299 = vld [vmem:[%s273 + $0x98] sm:$0xff]
      %v300 = vld [vmem:[%s273 + $0xa0] sm:$0xff]
      %v301 = vld [vmem:[%s273 + $0xa8] sm:$0xff]
      %v302 = vld [vmem:[%s273 + $0xb0] sm:$0xff]
      %v303 = vld [vmem:[%s273 + $0xb8] sm:$0xff]
      %v304 = vld [vmem:[%s273 + $0xc0] sm:$0xff]
      %v305 = vld [vmem:[%s273 + $0xc8] sm:$0xff]
      %v306 = vld [vmem:[%s273 + $0xd0] sm:$0xff]
      %v307 = vld [vmem:[%s273 + $0xd8] sm:$0xff]
      %v308 = vld [vmem:[%s273 + $0xe0] sm:$0xff]
      %v309 = vld [vmem:[%s273 + $0xe8] sm:$0xff]
      %v310 = vld [vmem:[%s273 + $0xf0] sm:$0xff]
      %v311 = vld [vmem:[%s273 + $0xf8] sm:$0xff]
      %vm345 = vcmask 1040384
      %v346 = vrot.slane 0.0, 7
      %v347 = vsel %vm345, %v346, %v346
      %v348 = vrot.slane %v280, 7
      %v349 = vrot.slane %v281, 7
      %v350 = vsel %vm345, %v348, %v349
      %v351 = vrot.slane %v282, 7
      %v352 = vrot.slane %v283, 7
      %v353 = vsel %vm345, %v351, %v352
      %v354 = vrot.slane %v284, 7
      %v355 = vrot.slane %v285, 7
      %v356 = vsel %vm345, %v354, %v355
      %v357 = vrot.slane %v286, 7
      %v358 = vrot.slane %v287, 7
      %v359 = vsel %vm345, %v357, %v358
      %v360 = vrot.slane %v288, 7
      %v361 = vrot.slane %v289, 7
      %v362 = vsel %vm345, %v360, %v361
      %v363 = vrot.slane %v290, 7
      %v364 = vrot.slane %v291, 7
      %v365 = vsel %vm345, %v363, %v364
      %v366 = vrot.slane %v292, 7
      %v367 = vrot.slane %v293, 7
      %v368 = vsel %vm345, %v366, %v367
      %v369 = vrot.slane %v294, 7
      %v370 = vrot.slane %v295, 7
      %v371 = vsel %vm345, %v369, %v370
      %v372 = vrot.slane %v296, 7
      %v373 = vrot.slane %v297, 7
      %v374 = vsel %vm345, %v372, %v373
      %v375 = vrot.slane %v298, 7
      %v376 = vrot.slane %v299, 7
      %v377 = vsel %vm345, %v375, %v376
      %v378 = vrot.slane %v300, 7
      %v379 = vrot.slane %v301, 7
      %v380 = vsel %vm345, %v378, %v379
      %v381 = vrot.slane %v302, 7
      %v382 = vrot.slane %v303, 7
      %v383 = vsel %vm345, %v381, %v382
      %v384 = vrot.slane %v304, 7
      %v385 = vrot.slane %v305, 7
      %v386 = vsel %vm345, %v384, %v385
      %v387 = vrot.slane %v306, 7
      %v388 = vrot.slane %v307, 7
      %v389 = vsel %vm345, %v387, %v388
      %v390 = vrot.slane %v308, 7
      %v391 = vrot.slane %v309, 7
      %v392 = vsel %vm345, %v390, %v391
      %v393 = vrot.slane %v310, 7
      %v394 = vrot.slane %v311, 7
      %v395 = vsel %vm345, %v393, %v394
      %v445 = vsel %vm345, 0.0, %v346
      %v446 = vsel %vm345, 0.0, %v348
      %v447 = vsel %vm345, 0.0, %v351
      %v448 = vsel %vm345, 0.0, %v354
      %v449 = vsel %vm345, 0.0, %v357
      %v450 = vsel %vm345, 0.0, %v360
      %v451 = vsel %vm345, 0.0, %v363
      %v452 = vsel %vm345, 0.0, %v366
      %v453 = vsel %vm345, 0.0, %v369
      %v454 = vsel %vm345, 0.0, %v372
      %v455 = vsel %vm345, 0.0, %v375
      %v456 = vsel %vm345, 0.0, %v378
      %v457 = vsel %vm345, 0.0, %v381
      %v458 = vsel %vm345, 0.0, %v384
      %v459 = vsel %vm345, 0.0, %v387
      %v460 = vsel %vm345, 0.0, %v390
      %v461 = vsel %vm345, 0.0, %v393
      %v462 = vsel %vm345, %v346, 0.0
      %v463 = vsel %vm345, %v349, 0.0
      %v464 = vsel %vm345, %v352, 0.0
      %v465 = vsel %vm345, %v355, 0.0
      %v466 = vsel %vm345, %v358, 0.0
      %v467 = vsel %vm345, %v361, 0.0
      %v468 = vsel %vm345, %v364, 0.0
      %v469 = vsel %vm345, %v367, 0.0
      %v470 = vsel %vm345, %v370, 0.0
      %v471 = vsel %vm345, %v373, 0.0
      %v472 = vsel %vm345, %v376, 0.0
      %v473 = vsel %vm345, %v379, 0.0
      %v474 = vsel %vm345, %v382, 0.0
      %v475 = vsel %vm345, %v385, 0.0
      %v476 = vsel %vm345, %v388, 0.0
      %v477 = vsel %vm345, %v391, 0.0
      %v478 = vsel %vm345, %v394, 0.0
      %vm511 = vcmask 1046528
      %v512 = vrot.slane %v445, 1
      %v513 = vrot.slane %v347, 1
      %v514 = vsel %vm511, %v512, %v513
      %v515 = vrot.slane %v462, 1
      %v516 = vsel %vm511, %v513, %v515
      %v517 = vrot.slane %v446, 1
      %v518 = vrot.slane %v350, 1
      %v519 = vsel %vm511, %v517, %v518
      %v520 = vrot.slane %v463, 1
      %v521 = vsel %vm511, %v518, %v520
      %v522 = vrot.slane %v447, 1
      %v523 = vrot.slane %v353, 1
      %v524 = vsel %vm511, %v522, %v523
      %v525 = vrot.slane %v464, 1
      %v526 = vsel %vm511, %v523, %v525
      %v527 = vrot.slane %v448, 1
      %v528 = vrot.slane %v356, 1
      %v529 = vsel %vm511, %v527, %v528
      %v530 = vrot.slane %v465, 1
      %v531 = vsel %vm511, %v528, %v530
      %v532 = vrot.slane %v449, 1
      %v533 = vrot.slane %v359, 1
      %v534 = vsel %vm511, %v532, %v533
      %v535 = vrot.slane %v466, 1
      %v536 = vsel %vm511, %v533, %v535
      %v537 = vrot.slane %v450, 1
      %v538 = vrot.slane %v362, 1
      %v539 = vsel %vm511, %v537, %v538
      %v540 = vrot.slane %v467, 1
      %v541 = vsel %vm511, %v538, %v540
      %v542 = vrot.slane %v451, 1
      %v543 = vrot.slane %v365, 1
      %v544 = vsel %vm511, %v542, %v543
      %v545 = vrot.slane %v468, 1
      %v546 = vsel %vm511, %v543, %v545
      %v547 = vrot.slane %v452, 1
      %v548 = vrot.slane %v368, 1
      %v549 = vsel %vm511, %v547, %v548
      %v550 = vrot.slane %v469, 1
      %v551 = vsel %vm511, %v548, %v550
      %v552 = vrot.slane %v453, 1
      %v553 = vrot.slane %v371, 1
      %v554 = vsel %vm511, %v552, %v553
      %v555 = vrot.slane %v470, 1
      %v556 = vsel %vm511, %v553, %v555
      %v557 = vrot.slane %v454, 1
      %v558 = vrot.slane %v374, 1
      %v559 = vsel %vm511, %v557, %v558
      %v560 = vrot.slane %v471, 1
      %v561 = vsel %vm511, %v558, %v560
      %v562 = vrot.slane %v455, 1
      %v563 = vrot.slane %v377, 1
      %v564 = vsel %vm511, %v562, %v563
      %v565 = vrot.slane %v472, 1
      %v566 = vsel %vm511, %v563, %v565
      %v567 = vrot.slane %v456, 1
      %v568 = vrot.slane %v380, 1
      %v569 = vsel %vm511, %v567, %v568
      %v570 = vrot.slane %v473, 1
      %v571 = vsel %vm511, %v568, %v570
      %v572 = vrot.slane %v457, 1
      %v573 = vrot.slane %v383, 1
      %v574 = vsel %vm511, %v572, %v573
      %v575 = vrot.slane %v474, 1
      %v576 = vsel %vm511, %v573, %v575
      %v577 = vrot.slane %v458, 1
      %v578 = vrot.slane %v386, 1
      %v579 = vsel %vm511, %v577, %v578
      %v580 = vrot.slane %v475, 1
      %v581 = vsel %vm511, %v578, %v580
      %v582 = vrot.slane %v459, 1
      %v583 = vrot.slane %v389, 1
      %v584 = vsel %vm511, %v582, %v583
      %v585 = vrot.slane %v476, 1
      %v586 = vsel %vm511, %v583, %v585
      %v587 = vrot.slane %v460, 1
      %v588 = vrot.slane %v392, 1
      %v589 = vsel %vm511, %v587, %v588
      %v590 = vrot.slane %v477, 1
      %v591 = vsel %vm511, %v588, %v590
      %592 = vrot.lane.b32.xlu0 %v514, 8
      %v593 = vpop.permute.xlu0 %592
      %594 = vrot.lane.b32.xlu0 %v516, 8
      %v595 = vpop.permute.xlu0 %594
      %596 = vrot.lane.b32.xlu0 %v519, 8
      %v597 = vpop.permute.xlu0 %596
      %598 = vrot.lane.b32.xlu0 %v521, 8
      %v599 = vpop.permute.xlu0 %598
      %600 = vrot.lane.b32.xlu0 %v524, 8
      %v601 = vpop.permute.xlu0 %600
      %602 = vrot.lane.b32.xlu0 %v526, 8
      %v603 = vpop.permute.xlu0 %602
      %604 = vrot.lane.b32.xlu0 %v529, 8
      %v605 = vpop.permute.xlu0 %604
      %606 = vrot.lane.b32.xlu0 %v531, 8
      %v607 = vpop.permute.xlu0 %606
      %608 = vrot.lane.b32.xlu0 %v534, 8
      %v609 = vpop.permute.xlu0 %608
      %610 = vrot.lane.b32.xlu0 %v536, 8
      %v611 = vpop.permute.xlu0 %610
      %612 = vrot.lane.b32.xlu0 %v539, 8
      %v613 = vpop.permute.xlu0 %612
      %614 = vrot.lane.b32.xlu0 %v541, 8
      %v615 = vpop.permute.xlu0 %614
      %616 = vrot.lane.b32.xlu0 %v544, 8
      %v617 = vpop.permute.xlu0 %616
      %618 = vrot.lane.b32.xlu0 %v546, 8
      %v619 = vpop.permute.xlu0 %618
      %620 = vrot.lane.b32.xlu0 %v549, 8
      %v621 = vpop.permute.xlu0 %620
      %622 = vrot.lane.b32.xlu0 %v551, 8
      %v623 = vpop.permute.xlu0 %622
      %624 = vrot.lane.b32.xlu0 %v554, 8
      %v625 = vpop.permute.xlu0 %624
      %626 = vrot.lane.b32.xlu0 %v556, 8
      %v627 = vpop.permute.xlu0 %626
      %628 = vrot.lane.b32.xlu0 %v559, 8
      %v629 = vpop.permute.xlu0 %628
      %630 = vrot.lane.b32.xlu0 %v561, 8
      %v631 = vpop.permute.xlu0 %630
      %632 = vrot.lane.b32.xlu0 %v564, 8
      %v633 = vpop.permute.xlu0 %632
      %634 = vrot.lane.b32.xlu0 %v566, 8
      %v635 = vpop.permute.xlu0 %634
      %636 = vrot.lane.b32.xlu0 %v569, 8
      %v637 = vpop.permute.xlu0 %636
      %638 = vrot.lane.b32.xlu0 %v571, 8
      %v639 = vpop.permute.xlu0 %638
      %640 = vrot.lane.b32.xlu0 %v574, 8
      %v641 = vpop.permute.xlu0 %640
      %642 = vrot.lane.b32.xlu0 %v576, 8
      %v643 = vpop.permute.xlu0 %642
      %644 = vrot.lane.b32.xlu0 %v579, 8
      %v645 = vpop.permute.xlu0 %644
      %646 = vrot.lane.b32.xlu0 %v581, 8
      %v647 = vpop.permute.xlu0 %646
      %648 = vrot.lane.b32.xlu0 %v584, 8
      %v649 = vpop.permute.xlu0 %648
      %650 = vrot.lane.b32.xlu0 %v586, 8
      %v651 = vpop.permute.xlu0 %650
      %652 = vrot.lane.b32.xlu0 %v589, 8
      %v653 = vpop.permute.xlu0 %652
      %654 = vrot.lane.b32.xlu0 %v591, 8
      %v655 = vpop.permute.xlu0 %654
      %vm688 = vcmask 1045504
      %v689 = vrot.slane %v445, 2
      %v690 = vrot.slane %v347, 2
      %v691 = vsel %vm688, %v689, %v690
      %v692 = vrot.slane %v462, 2
      %v693 = vsel %vm688, %v690, %v692
      %v694 = vrot.slane %v446, 2
      %v695 = vrot.slane %v350, 2
      %v696 = vsel %vm688, %v694, %v695
      %v697 = vrot.slane %v463, 2
      %v698 = vsel %vm688, %v695, %v697
      %v699 = vrot.slane %v447, 2
      %v700 = vrot.slane %v353, 2
      %v701 = vsel %vm688, %v699, %v700
      %v702 = vrot.slane %v464, 2
      %v703 = vsel %vm688, %v700, %v702
      %v704 = vrot.slane %v448, 2
      %v705 = vrot.slane %v356, 2
      %v706 = vsel %vm688, %v704, %v705
      %v707 = vrot.slane %v465, 2
      %v708 = vsel %vm688, %v705, %v707
      %v709 = vrot.slane %v449, 2
      %v710 = vrot.slane %v359, 2
      %v711 = vsel %vm688, %v709, %v710
      %v712 = vrot.slane %v466, 2
      %v713 = vsel %vm688, %v710, %v712
      %v714 = vrot.slane %v450, 2
      %v715 = vrot.slane %v362, 2
      %v716 = vsel %vm688, %v714, %v715
      %v717 = vrot.slane %v467, 2
      %v718 = vsel %vm688, %v715, %v717
      %v719 = vrot.slane %v451, 2
      %v720 = vrot.slane %v365, 2
      %v721 = vsel %vm688, %v719, %v720
      %v722 = vrot.slane %v468, 2
      %v723 = vsel %vm688, %v720, %v722
      %v724 = vrot.slane %v452, 2
      %v725 = vrot.slane %v368, 2
      %v726 = vsel %vm688, %v724, %v725
      %v727 = vrot.slane %v469, 2
      %v728 = vsel %vm688, %v725, %v727
      %v729 = vrot.slane %v453, 2
      %v730 = vrot.slane %v371, 2
      %v731 = vsel %vm688, %v729, %v730
      %v732 = vrot.slane %v470, 2
      %v733 = vsel %vm688, %v730, %v732
      %v734 = vrot.slane %v454, 2
      %v735 = vrot.slane %v374, 2
      %v736 = vsel %vm688, %v734, %v735
      %v737 = vrot.slane %v471, 2
      %v738 = vsel %vm688, %v735, %v737
      %v739 = vrot.slane %v455, 2
      %v740 = vrot.slane %v377, 2
      %v741 = vsel %vm688, %v739, %v740
      %v742 = vrot.slane %v472, 2
      %v743 = vsel %vm688, %v740, %v742
      %v744 = vrot.slane %v456, 2
      %v745 = vrot.slane %v380, 2
      %v746 = vsel %vm688, %v744, %v745
      %v747 = vrot.slane %v473, 2
      %v748 = vsel %vm688, %v745, %v747
      %v749 = vrot.slane %v457, 2
      %v750 = vrot.slane %v383, 2
      %v751 = vsel %vm688, %v749, %v750
      %v752 = vrot.slane %v474, 2
      %v753 = vsel %vm688, %v750, %v752
      %v754 = vrot.slane %v458, 2
      %v755 = vrot.slane %v386, 2
      %v756 = vsel %vm688, %v754, %v755
      %v757 = vrot.slane %v475, 2
      %v758 = vsel %vm688, %v755, %v757
      %v759 = vrot.slane %v459, 2
      %v760 = vrot.slane %v389, 2
      %v761 = vsel %vm688, %v759, %v760
      %v762 = vrot.slane %v476, 2
      %v763 = vsel %vm688, %v760, %v762
      %v764 = vrot.slane %v460, 2
      %v765 = vrot.slane %v392, 2
      %v766 = vsel %vm688, %v764, %v765
      %v767 = vrot.slane %v477, 2
      %v768 = vsel %vm688, %v765, %v767
      %769 = vrot.lane.b32.xlu0 %v691, 16
      %v770 = vpop.permute.xlu0 %769
      %771 = vrot.lane.b32.xlu0 %v693, 16
      %v772 = vpop.permute.xlu0 %771
      %773 = vrot.lane.b32.xlu0 %v696, 16
      %v774 = vpop.permute.xlu0 %773
      %775 = vrot.lane.b32.xlu0 %v698, 16
      %v776 = vpop.permute.xlu0 %775
      %777 = vrot.lane.b32.xlu0 %v701, 16
      %v778 = vpop.permute.xlu0 %777
      %779 = vrot.lane.b32.xlu0 %v703, 16
      %v780 = vpop.permute.xlu0 %779
      %781 = vrot.lane.b32.xlu0 %v706, 16
      %v782 = vpop.permute.xlu0 %781
      %783 = vrot.lane.b32.xlu0 %v708, 16
      %v784 = vpop.permute.xlu0 %783
      %785 = vrot.lane.b32.xlu0 %v711, 16
      %v786 = vpop.permute.xlu0 %785
      %787 = vrot.lane.b32.xlu0 %v713, 16
      %v788 = vpop.permute.xlu0 %787
      %789 = vrot.lane.b32.xlu0 %v716, 16
      %v790 = vpop.permute.xlu0 %789
      %791 = vrot.lane.b32.xlu0 %v718, 16
      %v792 = vpop.permute.xlu0 %791
      %793 = vrot.lane.b32.xlu0 %v721, 16
      %v794 = vpop.permute.xlu0 %793
      %795 = vrot.lane.b32.xlu0 %v723, 16
      %v796 = vpop.permute.xlu0 %795
      %797 = vrot.lane.b32.xlu0 %v726, 16
      %v798 = vpop.permute.xlu0 %797
      %799 = vrot.lane.b32.xlu0 %v728, 16
      %v800 = vpop.permute.xlu0 %799
      %801 = vrot.lane.b32.xlu0 %v731, 16
      %v802 = vpop.permute.xlu0 %801
      %803 = vrot.lane.b32.xlu0 %v733, 16
      %v804 = vpop.permute.xlu0 %803
      %805 = vrot.lane.b32.xlu0 %v736, 16
      %v806 = vpop.permute.xlu0 %805
      %807 = vrot.lane.b32.xlu0 %v738, 16
      %v808 = vpop.permute.xlu0 %807
      %809 = vrot.lane.b32.xlu0 %v741, 16
      %v810 = vpop.permute.xlu0 %809
      %811 = vrot.lane.b32.xlu0 %v743, 16
      %v812 = vpop.permute.xlu0 %811
      %813 = vrot.lane.b32.xlu0 %v746, 16
      %v814 = vpop.permute.xlu0 %813
      %815 = vrot.lane.b32.xlu0 %v748, 16
      %v816 = vpop.permute.xlu0 %815
      %817 = vrot.lane.b32.xlu0 %v751, 16
      %v818 = vpop.permute.xlu0 %817
      %819 = vrot.lane.b32.xlu0 %v753, 16
      %v820 = vpop.permute.xlu0 %819
      %821 = vrot.lane.b32.xlu0 %v756, 16
      %v822 = vpop.permute.xlu0 %821
      %823 = vrot.lane.b32.xlu0 %v758, 16
      %v824 = vpop.permute.xlu0 %823
      %825 = vrot.lane.b32.xlu0 %v761, 16
      %v826 = vpop.permute.xlu0 %825
      %827 = vrot.lane.b32.xlu0 %v763, 16
      %v828 = vpop.permute.xlu0 %827
      %829 = vrot.lane.b32.xlu0 %v766, 16
      %v830 = vpop.permute.xlu0 %829
      %831 = vrot.lane.b32.xlu0 %v768, 16
      %v832 = vpop.permute.xlu0 %831
      %866 = vrot.lane.b32.xlu0 %v446, 24
      %v867 = vpop.permute.xlu0 %866
      %868 = vrot.lane.b32.xlu0 %v350, 24
      %v869 = vpop.permute.xlu0 %868
      %870 = vrot.lane.b32.xlu0 %v447, 24
      %v871 = vpop.permute.xlu0 %870
      %872 = vrot.lane.b32.xlu0 %v353, 24
      %v873 = vpop.permute.xlu0 %872
      %874 = vrot.lane.b32.xlu0 %v448, 24
      %v875 = vpop.permute.xlu0 %874
      %876 = vrot.lane.b32.xlu0 %v356, 24
      %v877 = vpop.permute.xlu0 %876
      %878 = vrot.lane.b32.xlu0 %v449, 24
      %v879 = vpop.permute.xlu0 %878
      %880 = vrot.lane.b32.xlu0 %v359, 24
      %v881 = vpop.permute.xlu0 %880
      %882 = vrot.lane.b32.xlu0 %v450, 24
      %v883 = vpop.permute.xlu0 %882
      %884 = vrot.lane.b32.xlu0 %v362, 24
      %v885 = vpop.permute.xlu0 %884
      %886 = vrot.lane.b32.xlu0 %v451, 24
      %v887 = vpop.permute.xlu0 %886
      %888 = vrot.lane.b32.xlu0 %v365, 24
      %v889 = vpop.permute.xlu0 %888
      %890 = vrot.lane.b32.xlu0 %v452, 24
      %v891 = vpop.permute.xlu0 %890
      %892 = vrot.lane.b32.xlu0 %v368, 24
      %v893 = vpop.permute.xlu0 %892
      %894 = vrot.lane.b32.xlu0 %v453, 24
      %v895 = vpop.permute.xlu0 %894
      %896 = vrot.lane.b32.xlu0 %v371, 24
      %v897 = vpop.permute.xlu0 %896
      %898 = vrot.lane.b32.xlu0 %v454, 24
      %v899 = vpop.permute.xlu0 %898
      %900 = vrot.lane.b32.xlu0 %v374, 24
      %v901 = vpop.permute.xlu0 %900
      %902 = vrot.lane.b32.xlu0 %v455, 24
      %v903 = vpop.permute.xlu0 %902
      %904 = vrot.lane.b32.xlu0 %v377, 24
      %v905 = vpop.permute.xlu0 %904
      %906 = vrot.lane.b32.xlu0 %v456, 24
      %v907 = vpop.permute.xlu0 %906
      %908 = vrot.lane.b32.xlu0 %v380, 24
      %v909 = vpop.permute.xlu0 %908
      %910 = vrot.lane.b32.xlu0 %v457, 24
      %v911 = vpop.permute.xlu0 %910
      %912 = vrot.lane.b32.xlu0 %v383, 24
      %v913 = vpop.permute.xlu0 %912
      %914 = vrot.lane.b32.xlu0 %v458, 24
      %v915 = vpop.permute.xlu0 %914
      %916 = vrot.lane.b32.xlu0 %v386, 24
      %v917 = vpop.permute.xlu0 %916
      %918 = vrot.lane.b32.xlu0 %v459, 24
      %v919 = vpop.permute.xlu0 %918
      %920 = vrot.lane.b32.xlu0 %v389, 24
      %v921 = vpop.permute.xlu0 %920
      %922 = vrot.lane.b32.xlu0 %v460, 24
      %v923 = vpop.permute.xlu0 %922
      %924 = vrot.lane.b32.xlu0 %v392, 24
      %v925 = vpop.permute.xlu0 %924
      %926 = vrot.lane.b32.xlu0 %v461, 24
      %v927 = vpop.permute.xlu0 %926
      %928 = vrot.lane.b32.xlu0 %v395, 24
      %v929 = vpop.permute.xlu0 %928
      %v963 = vrot.slane %v461, 1
      %v964 = vrot.slane %v395, 1
      %v965 = vsel %vm511, %v963, %v964
      %v966 = vrot.slane %v478, 1
      %v967 = vsel %vm511, %v964, %v966
      %968 = vrot.lane.b32.xlu0 %v519, 32
      %v969 = vpop.permute.xlu0 %968
      %970 = vrot.lane.b32.xlu0 %v521, 32
      %v971 = vpop.permute.xlu0 %970
      %972 = vrot.lane.b32.xlu0 %v524, 32
      %v973 = vpop.permute.xlu0 %972
      %974 = vrot.lane.b32.xlu0 %v526, 32
      %v975 = vpop.permute.xlu0 %974
      %976 = vrot.lane.b32.xlu0 %v529, 32
      %v977 = vpop.permute.xlu0 %976
      %978 = vrot.lane.b32.xlu0 %v531, 32
      %v979 = vpop.permute.xlu0 %978
      %980 = vrot.lane.b32.xlu0 %v534, 32
      %v981 = vpop.permute.xlu0 %980
      %982 = vrot.lane.b32.xlu0 %v536, 32
      %v983 = vpop.permute.xlu0 %982
      %984 = vrot.lane.b32.xlu0 %v539, 32
      %v985 = vpop.permute.xlu0 %984
      %986 = vrot.lane.b32.xlu0 %v541, 32
      %v987 = vpop.permute.xlu0 %986
      %988 = vrot.lane.b32.xlu0 %v544, 32
      %v989 = vpop.permute.xlu0 %988
      %990 = vrot.lane.b32.xlu0 %v546, 32
      %v991 = vpop.permute.xlu0 %990
      %992 = vrot.lane.b32.xlu0 %v549, 32
      %v993 = vpop.permute.xlu0 %992
      %994 = vrot.lane.b32.xlu0 %v551, 32
      %v995 = vpop.permute.xlu0 %994
      %996 = vrot.lane.b32.xlu0 %v554, 32
      %v997 = vpop.permute.xlu0 %996
      %998 = vrot.lane.b32.xlu0 %v556, 32
      %v999 = vpop.permute.xlu0 %998
      %1000 = vrot.lane.b32.xlu0 %v559, 32
      %v1001 = vpop.permute.xlu0 %1000
      %1002 = vrot.lane.b32.xlu0 %v561, 32
      %v1003 = vpop.permute.xlu0 %1002
      %1004 = vrot.lane.b32.xlu0 %v564, 32
      %v1005 = vpop.permute.xlu0 %1004
      %1006 = vrot.lane.b32.xlu0 %v566, 32
      %v1007 = vpop.permute.xlu0 %1006
      %1008 = vrot.lane.b32.xlu0 %v569, 32
      %v1009 = vpop.permute.xlu0 %1008
      %1010 = vrot.lane.b32.xlu0 %v571, 32
      %v1011 = vpop.permute.xlu0 %1010
      %1012 = vrot.lane.b32.xlu0 %v574, 32
      %v1013 = vpop.permute.xlu0 %1012
      %1014 = vrot.lane.b32.xlu0 %v576, 32
      %v1015 = vpop.permute.xlu0 %1014
      %1016 = vrot.lane.b32.xlu0 %v579, 32
      %v1017 = vpop.permute.xlu0 %1016
      %1018 = vrot.lane.b32.xlu0 %v581, 32
      %v1019 = vpop.permute.xlu0 %1018
      %1020 = vrot.lane.b32.xlu0 %v584, 32
      %v1021 = vpop.permute.xlu0 %1020
      %1022 = vrot.lane.b32.xlu0 %v586, 32
      %v1023 = vpop.permute.xlu0 %1022
      %1024 = vrot.lane.b32.xlu0 %v589, 32
      %v1025 = vpop.permute.xlu0 %1024
      %1026 = vrot.lane.b32.xlu0 %v591, 32
      %v1027 = vpop.permute.xlu0 %1026
      %1028 = vrot.lane.b32.xlu0 %v965, 32
      %v1029 = vpop.permute.xlu0 %1028
      %1030 = vrot.lane.b32.xlu0 %v967, 32
      %v1031 = vpop.permute.xlu0 %1030
      %v1064 = vrot.slane %v461, 2
      %v1065 = vrot.slane %v395, 2
      %v1066 = vsel %vm688, %v1064, %v1065
      %v1067 = vrot.slane %v478, 2
      %v1068 = vsel %vm688, %v1065, %v1067
      %1069 = vrot.lane.b32.xlu0 %v696, 40
      %v1070 = vpop.permute.xlu0 %1069
      %1071 = vrot.lane.b32.xlu0 %v698, 40
      %v1072 = vpop.permute.xlu0 %1071
      %1073 = vrot.lane.b32.xlu0 %v701, 40
      %v1074 = vpop.permute.xlu0 %1073
      %1075 = vrot.lane.b32.xlu0 %v703, 40
      %v1076 = vpop.permute.xlu0 %1075
      %1077 = vrot.lane.b32.xlu0 %v706, 40
      %v1078 = vpop.permute.xlu0 %1077
      %1079 = vrot.lane.b32.xlu0 %v708, 40
      %v1080 = vpop.permute.xlu0 %1079
      %1081 = vrot.lane.b32.xlu0 %v711, 40
      %v1082 = vpop.permute.xlu0 %1081
      %1083 = vrot.lane.b32.xlu0 %v713, 40
      %v1084 = vpop.permute.xlu0 %1083
      %1085 = vrot.lane.b32.xlu0 %v716, 40
      %v1086 = vpop.permute.xlu0 %1085
      %1087 = vrot.lane.b32.xlu0 %v718, 40
      %v1088 = vpop.permute.xlu0 %1087
      %1089 = vrot.lane.b32.xlu0 %v721, 40
      %v1090 = vpop.permute.xlu0 %1089
      %1091 = vrot.lane.b32.xlu0 %v723, 40
      %v1092 = vpop.permute.xlu0 %1091
      %1093 = vrot.lane.b32.xlu0 %v726, 40
      %v1094 = vpop.permute.xlu0 %1093
      %1095 = vrot.lane.b32.xlu0 %v728, 40
      %v1096 = vpop.permute.xlu0 %1095
      %1097 = vrot.lane.b32.xlu0 %v731, 40
      %v1098 = vpop.permute.xlu0 %1097
      %1099 = vrot.lane.b32.xlu0 %v733, 40
      %v1100 = vpop.permute.xlu0 %1099
      %1101 = vrot.lane.b32.xlu0 %v736, 40
      %v1102 = vpop.permute.xlu0 %1101
      %1103 = vrot.lane.b32.xlu0 %v738, 40
      %v1104 = vpop.permute.xlu0 %1103
      %1105 = vrot.lane.b32.xlu0 %v741, 40
      %v1106 = vpop.permute.xlu0 %1105
      %1107 = vrot.lane.b32.xlu0 %v743, 40
      %v1108 = vpop.permute.xlu0 %1107
      %1109 = vrot.lane.b32.xlu0 %v746, 40
      %v1110 = vpop.permute.xlu0 %1109
      %1111 = vrot.lane.b32.xlu0 %v748, 40
      %v1112 = vpop.permute.xlu0 %1111
      %1113 = vrot.lane.b32.xlu0 %v751, 40
      %v1114 = vpop.permute.xlu0 %1113
      %1115 = vrot.lane.b32.xlu0 %v753, 40
      %v1116 = vpop.permute.xlu0 %1115
      %1117 = vrot.lane.b32.xlu0 %v756, 40
      %v1118 = vpop.permute.xlu0 %1117
      %1119 = vrot.lane.b32.xlu0 %v758, 40
      %v1120 = vpop.permute.xlu0 %1119
      %1121 = vrot.lane.b32.xlu0 %v761, 40
      %v1122 = vpop.permute.xlu0 %1121
      %1123 = vrot.lane.b32.xlu0 %v763, 40
      %v1124 = vpop.permute.xlu0 %1123
      %1125 = vrot.lane.b32.xlu0 %v766, 40
      %v1126 = vpop.permute.xlu0 %1125
      %1127 = vrot.lane.b32.xlu0 %v768, 40
      %v1128 = vpop.permute.xlu0 %1127
      %1129 = vrot.lane.b32.xlu0 %v1066, 40
      %v1130 = vpop.permute.xlu0 %1129
      %1131 = vrot.lane.b32.xlu0 %v1068, 40
      %v1132 = vpop.permute.xlu0 %1131
      %1165 = vrot.lane.b32.xlu0 %v447, 48
      %v1166 = vpop.permute.xlu0 %1165
      %1167 = vrot.lane.b32.xlu0 %v353, 48
      %v1168 = vpop.permute.xlu0 %1167
      %1169 = vrot.lane.b32.xlu0 %v448, 48
      %v1170 = vpop.permute.xlu0 %1169
      %1171 = vrot.lane.b32.xlu0 %v356, 48
      %v1172 = vpop.permute.xlu0 %1171
      %1173 = vrot.lane.b32.xlu0 %v449, 48
      %v1174 = vpop.permute.xlu0 %1173
      %1175 = vrot.lane.b32.xlu0 %v359, 48
      %v1176 = vpop.permute.xlu0 %1175
      %1177 = vrot.lane.b32.xlu0 %v450, 48
      %v1178 = vpop.permute.xlu0 %1177
      %1179 = vrot.lane.b32.xlu0 %v362, 48
      %v1180 = vpop.permute.xlu0 %1179
      %1181 = vrot.lane.b32.xlu0 %v451, 48
      %v1182 = vpop.permute.xlu0 %1181
      %1183 = vrot.lane.b32.xlu0 %v365, 48
      %v1184 = vpop.permute.xlu0 %1183
      %1185 = vrot.lane.b32.xlu0 %v452, 48
      %v1186 = vpop.permute.xlu0 %1185
      %1187 = vrot.lane.b32.xlu0 %v368, 48
      %v1188 = vpop.permute.xlu0 %1187
      %1189 = vrot.lane.b32.xlu0 %v453, 48
      %v1190 = vpop.permute.xlu0 %1189
      %1191 = vrot.lane.b32.xlu0 %v371, 48
      %v1192 = vpop.permute.xlu0 %1191
      %1193 = vrot.lane.b32.xlu0 %v454, 48
      %v1194 = vpop.permute.xlu0 %1193
      %1195 = vrot.lane.b32.xlu0 %v374, 48
      %v1196 = vpop.permute.xlu0 %1195
      %1197 = vrot.lane.b32.xlu0 %v455, 48
      %v1198 = vpop.permute.xlu0 %1197
      %1199 = vrot.lane.b32.xlu0 %v377, 48
      %v1200 = vpop.permute.xlu0 %1199
      %1201 = vrot.lane.b32.xlu0 %v456, 48
      %v1202 = vpop.permute.xlu0 %1201
      %1203 = vrot.lane.b32.xlu0 %v380, 48
      %v1204 = vpop.permute.xlu0 %1203
      %1205 = vrot.lane.b32.xlu0 %v457, 48
      %v1206 = vpop.permute.xlu0 %1205
      %1207 = vrot.lane.b32.xlu0 %v383, 48
      %v1208 = vpop.permute.xlu0 %1207
      %1209 = vrot.lane.b32.xlu0 %v458, 48
      %v1210 = vpop.permute.xlu0 %1209
      %1211 = vrot.lane.b32.xlu0 %v386, 48
      %v1212 = vpop.permute.xlu0 %1211
      %1213 = vrot.lane.b32.xlu0 %v459, 48
      %v1214 = vpop.permute.xlu0 %1213
      %1215 = vrot.lane.b32.xlu0 %v389, 48
      %v1216 = vpop.permute.xlu0 %1215
      %1217 = vrot.lane.b32.xlu0 %v460, 48
      %v1218 = vpop.permute.xlu0 %1217
      %1219 = vrot.lane.b32.xlu0 %v392, 48
      %v1220 = vpop.permute.xlu0 %1219
      %1221 = vrot.lane.b32.xlu0 %v461, 48
      %v1222 = vpop.permute.xlu0 %1221
      %1223 = vrot.lane.b32.xlu0 %v395, 48
      %v1224 = vpop.permute.xlu0 %1223
      %1225 = vrot.lane.b32.xlu0 %v445, 48
      %v1226 = vpop.permute.xlu0 %1225
      %1227 = vrot.lane.b32.xlu0 %v347, 48
      %v1228 = vpop.permute.xlu0 %1227
      %1261 = vrot.lane.b32.xlu0 %v524, 56
      %v1262 = vpop.permute.xlu0 %1261
      %1263 = vrot.lane.b32.xlu0 %v526, 56
      %v1264 = vpop.permute.xlu0 %1263
      %1265 = vrot.lane.b32.xlu0 %v529, 56
      %v1266 = vpop.permute.xlu0 %1265
      %1267 = vrot.lane.b32.xlu0 %v531, 56
      %v1268 = vpop.permute.xlu0 %1267
      %1269 = vrot.lane.b32.xlu0 %v534, 56
      %v1270 = vpop.permute.xlu0 %1269
      %1271 = vrot.lane.b32.xlu0 %v536, 56
      %v1272 = vpop.permute.xlu0 %1271
      %1273 = vrot.lane.b32.xlu0 %v539, 56
      %v1274 = vpop.permute.xlu0 %1273
      %1275 = vrot.lane.b32.xlu0 %v541, 56
      %v1276 = vpop.permute.xlu0 %1275
      %1277 = vrot.lane.b32.xlu0 %v544, 56
      %v1278 = vpop.permute.xlu0 %1277
      %1279 = vrot.lane.b32.xlu0 %v546, 56
      %v1280 = vpop.permute.xlu0 %1279
      %1281 = vrot.lane.b32.xlu0 %v549, 56
      %v1282 = vpop.permute.xlu0 %1281
      %1283 = vrot.lane.b32.xlu0 %v551, 56
      %v1284 = vpop.permute.xlu0 %1283
      %1285 = vrot.lane.b32.xlu0 %v554, 56
      %v1286 = vpop.permute.xlu0 %1285
      %1287 = vrot.lane.b32.xlu0 %v556, 56
      %v1288 = vpop.permute.xlu0 %1287
      %1289 = vrot.lane.b32.xlu0 %v559, 56
      %v1290 = vpop.permute.xlu0 %1289
      %1291 = vrot.lane.b32.xlu0 %v561, 56
      %v1292 = vpop.permute.xlu0 %1291
      %1293 = vrot.lane.b32.xlu0 %v564, 56
      %v1294 = vpop.permute.xlu0 %1293
      %1295 = vrot.lane.b32.xlu0 %v566, 56
      %v1296 = vpop.permute.xlu0 %1295
      %1297 = vrot.lane.b32.xlu0 %v569, 56
      %v1298 = vpop.permute.xlu0 %1297
      %1299 = vrot.lane.b32.xlu0 %v571, 56
      %v1300 = vpop.permute.xlu0 %1299
      %1301 = vrot.lane.b32.xlu0 %v574, 56
      %v1302 = vpop.permute.xlu0 %1301
      %1303 = vrot.lane.b32.xlu0 %v576, 56
      %v1304 = vpop.permute.xlu0 %1303
      %1305 = vrot.lane.b32.xlu0 %v579, 56
      %v1306 = vpop.permute.xlu0 %1305
      %1307 = vrot.lane.b32.xlu0 %v581, 56
      %v1308 = vpop.permute.xlu0 %1307
      %1309 = vrot.lane.b32.xlu0 %v584, 56
      %v1310 = vpop.permute.xlu0 %1309
      %1311 = vrot.lane.b32.xlu0 %v586, 56
      %v1312 = vpop.permute.xlu0 %1311
      %1313 = vrot.lane.b32.xlu0 %v589, 56
      %v1314 = vpop.permute.xlu0 %1313
      %1315 = vrot.lane.b32.xlu0 %v591, 56
      %v1316 = vpop.permute.xlu0 %1315
      %1317 = vrot.lane.b32.xlu0 %v965, 56
      %v1318 = vpop.permute.xlu0 %1317
      %1319 = vrot.lane.b32.xlu0 %v967, 56
      %v1320 = vpop.permute.xlu0 %1319
      %1321 = vrot.lane.b32.xlu0 %v514, 56
      %v1322 = vpop.permute.xlu0 %1321
      %1323 = vrot.lane.b32.xlu0 %v516, 56
      %v1324 = vpop.permute.xlu0 %1323
      %1357 = vrot.lane.b32.xlu0 %v701, 64
      %v1358 = vpop.permute.xlu0 %1357
      %1359 = vrot.lane.b32.xlu0 %v703, 64
      %v1360 = vpop.permute.xlu0 %1359
      %1361 = vrot.lane.b32.xlu0 %v706, 64
      %v1362 = vpop.permute.xlu0 %1361
      %1363 = vrot.lane.b32.xlu0 %v708, 64
      %v1364 = vpop.permute.xlu0 %1363
      %1365 = vrot.lane.b32.xlu0 %v711, 64
      %v1366 = vpop.permute.xlu0 %1365
      %1367 = vrot.lane.b32.xlu0 %v713, 64
      %v1368 = vpop.permute.xlu0 %1367
      %1369 = vrot.lane.b32.xlu0 %v716, 64
      %v1370 = vpop.permute.xlu0 %1369
      %1371 = vrot.lane.b32.xlu0 %v718, 64
      %v1372 = vpop.permute.xlu0 %1371
      %1373 = vrot.lane.b32.xlu0 %v721, 64
      %v1374 = vpop.permute.xlu0 %1373
      %1375 = vrot.lane.b32.xlu0 %v723, 64
      %v1376 = vpop.permute.xlu0 %1375
      %1377 = vrot.lane.b32.xlu0 %v726, 64
      %v1378 = vpop.permute.xlu0 %1377
      %1379 = vrot.lane.b32.xlu0 %v728, 64
      %v1380 = vpop.permute.xlu0 %1379
      %1381 = vrot.lane.b32.xlu0 %v731, 64
      %v1382 = vpop.permute.xlu0 %1381
      %1383 = vrot.lane.b32.xlu0 %v733, 64
      %v1384 = vpop.permute.xlu0 %1383
      %1385 = vrot.lane.b32.xlu0 %v736, 64
      %v1386 = vpop.permute.xlu0 %1385
      %1387 = vrot.lane.b32.xlu0 %v738, 64
      %v1388 = vpop.permute.xlu0 %1387
      %1389 = vrot.lane.b32.xlu0 %v741, 64
      %v1390 = vpop.permute.xlu0 %1389
      %1391 = vrot.lane.b32.xlu0 %v743, 64
      %v1392 = vpop.permute.xlu0 %1391
      %1393 = vrot.lane.b32.xlu0 %v746, 64
      %v1394 = vpop.permute.xlu0 %1393
      %1395 = vrot.lane.b32.xlu0 %v748, 64
      %v1396 = vpop.permute.xlu0 %1395
      %1397 = vrot.lane.b32.xlu0 %v751, 64
      %v1398 = vpop.permute.xlu0 %1397
      %1399 = vrot.lane.b32.xlu0 %v753, 64
      %v1400 = vpop.permute.xlu0 %1399
      %1401 = vrot.lane.b32.xlu0 %v756, 64
      %v1402 = vpop.permute.xlu0 %1401
      %1403 = vrot.lane.b32.xlu0 %v758, 64
      %v1404 = vpop.permute.xlu0 %1403
      %1405 = vrot.lane.b32.xlu0 %v761, 64
      %v1406 = vpop.permute.xlu0 %1405
      %1407 = vrot.lane.b32.xlu0 %v763, 64
      %v1408 = vpop.permute.xlu0 %1407
      %1409 = vrot.lane.b32.xlu0 %v766, 64
      %v1410 = vpop.permute.xlu0 %1409
      %1411 = vrot.lane.b32.xlu0 %v768, 64
      %v1412 = vpop.permute.xlu0 %1411
      %1413 = vrot.lane.b32.xlu0 %v1066, 64
      %v1414 = vpop.permute.xlu0 %1413
      %1415 = vrot.lane.b32.xlu0 %v1068, 64
      %v1416 = vpop.permute.xlu0 %1415
      %1417 = vrot.lane.b32.xlu0 %v691, 64
      %v1418 = vpop.permute.xlu0 %1417
      %1419 = vrot.lane.b32.xlu0 %v693, 64
      %v1420 = vpop.permute.xlu0 %1419
      %vm1453 = vcmask 64512
      %v1454 = vsel %vm1453, %v445, %v593
      %v1455 = vsel %vm1453, %v347, %v595
      %v1456 = vsel %vm1453, %v446, %v597
      %v1457 = vsel %vm1453, %v350, %v599
      %v1458 = vsel %vm1453, %v447, %v601
      %v1459 = vsel %vm1453, %v353, %v603
      %v1460 = vsel %vm1453, %v448, %v605
      %v1461 = vsel %vm1453, %v356, %v607
      %v1462 = vsel %vm1453, %v449, %v609
      %v1463 = vsel %vm1453, %v359, %v611
      %v1464 = vsel %vm1453, %v450, %v613
      %v1465 = vsel %vm1453, %v362, %v615
      %v1466 = vsel %vm1453, %v451, %v617
      %v1467 = vsel %vm1453, %v365, %v619
      %v1468 = vsel %vm1453, %v452, %v621
      %v1469 = vsel %vm1453, %v368, %v623
      %v1470 = vsel %vm1453, %v453, %v625
      %v1471 = vsel %vm1453, %v371, %v627
      %v1472 = vsel %vm1453, %v454, %v629
      %v1473 = vsel %vm1453, %v374, %v631
      %v1474 = vsel %vm1453, %v455, %v633
      %v1475 = vsel %vm1453, %v377, %v635
      %v1476 = vsel %vm1453, %v456, %v637
      %v1477 = vsel %vm1453, %v380, %v639
      %v1478 = vsel %vm1453, %v457, %v641
      %v1479 = vsel %vm1453, %v383, %v643
      %v1480 = vsel %vm1453, %v458, %v645
      %v1481 = vsel %vm1453, %v386, %v647
      %v1482 = vsel %vm1453, %v459, %v649
      %v1483 = vsel %vm1453, %v389, %v651
      %v1484 = vsel %vm1453, %v460, %v653
      %v1485 = vsel %vm1453, %v392, %v655
      %vm1486 = vcmask 130048
      %v1487 = vsel %vm1486, %v1454, %v770
      %v1488 = vsel %vm1486, %v1455, %v772
      %v1489 = vsel %vm1486, %v1456, %v774
      %v1490 = vsel %vm1486, %v1457, %v776
      %v1491 = vsel %vm1486, %v1458, %v778
      %v1492 = vsel %vm1486, %v1459, %v780
      %v1493 = vsel %vm1486, %v1460, %v782
      %v1494 = vsel %vm1486, %v1461, %v784
      %v1495 = vsel %vm1486, %v1462, %v786
      %v1496 = vsel %vm1486, %v1463, %v788
      %v1497 = vsel %vm1486, %v1464, %v790
      %v1498 = vsel %vm1486, %v1465, %v792
      %v1499 = vsel %vm1486, %v1466, %v794
      %v1500 = vsel %vm1486, %v1467, %v796
      %v1501 = vsel %vm1486, %v1468, %v798
      %v1502 = vsel %vm1486, %v1469, %v800
      %v1503 = vsel %vm1486, %v1470, %v802
      %v1504 = vsel %vm1486, %v1471, %v804
      %v1505 = vsel %vm1486, %v1472, %v806
      %v1506 = vsel %vm1486, %v1473, %v808
      %v1507 = vsel %vm1486, %v1474, %v810
      %v1508 = vsel %vm1486, %v1475, %v812
      %v1509 = vsel %vm1486, %v1476, %v814
      %v1510 = vsel %vm1486, %v1477, %v816
      %v1511 = vsel %vm1486, %v1478, %v818
      %v1512 = vsel %vm1486, %v1479, %v820
      %v1513 = vsel %vm1486, %v1480, %v822
      %v1514 = vsel %vm1486, %v1481, %v824
      %v1515 = vsel %vm1486, %v1482, %v826
      %v1516 = vsel %vm1486, %v1483, %v828
      %v1517 = vsel %vm1486, %v1484, %v830
      %v1518 = vsel %vm1486, %v1485, %v832
      %vm1519 = vcmask 195584
      %v1520 = vsel %vm1519, %v1487, %v867
      %v1521 = vsel %vm1519, %v1488, %v869
      %v1522 = vsel %vm1519, %v1489, %v871
      %v1523 = vsel %vm1519, %v1490, %v873
      %v1524 = vsel %vm1519, %v1491, %v875
      %v1525 = vsel %vm1519, %v1492, %v877
      %v1526 = vsel %vm1519, %v1493, %v879
      %v1527 = vsel %vm1519, %v1494, %v881
      %v1528 = vsel %vm1519, %v1495, %v883
      %v1529 = vsel %vm1519, %v1496, %v885
      %v1530 = vsel %vm1519, %v1497, %v887
      %v1531 = vsel %vm1519, %v1498, %v889
      %v1532 = vsel %vm1519, %v1499, %v891
      %v1533 = vsel %vm1519, %v1500, %v893
      %v1534 = vsel %vm1519, %v1501, %v895
      %v1535 = vsel %vm1519, %v1502, %v897
      %v1536 = vsel %vm1519, %v1503, %v899
      %v1537 = vsel %vm1519, %v1504, %v901
      %v1538 = vsel %vm1519, %v1505, %v903
      %v1539 = vsel %vm1519, %v1506, %v905
      %v1540 = vsel %vm1519, %v1507, %v907
      %v1541 = vsel %vm1519, %v1508, %v909
      %v1542 = vsel %vm1519, %v1509, %v911
      %v1543 = vsel %vm1519, %v1510, %v913
      %v1544 = vsel %vm1519, %v1511, %v915
      %v1545 = vsel %vm1519, %v1512, %v917
      %v1546 = vsel %vm1519, %v1513, %v919
      %v1547 = vsel %vm1519, %v1514, %v921
      %v1548 = vsel %vm1519, %v1515, %v923
      %v1549 = vsel %vm1519, %v1516, %v925
      %v1550 = vsel %vm1519, %v1517, %v927
      %v1551 = vsel %vm1519, %v1518, %v929
      %vm1552 = vcmask 261120
      %v1553 = vsel %vm1552, %v1520, %v969
      %v1554 = vsel %vm1552, %v1521, %v971
      %v1555 = vsel %vm1552, %v1522, %v973
      %v1556 = vsel %vm1552, %v1523, %v975
      %v1557 = vsel %vm1552, %v1524, %v977
      %v1558 = vsel %vm1552, %v1525, %v979
      %v1559 = vsel %vm1552, %v1526, %v981
      %v1560 = vsel %vm1552, %v1527, %v983
      %v1561 = vsel %vm1552, %v1528, %v985
      %v1562 = vsel %vm1552, %v1529, %v987
      %v1563 = vsel %vm1552, %v1530, %v989
      %v1564 = vsel %vm1552, %v1531, %v991
      %v1565 = vsel %vm1552, %v1532, %v993
      %v1566 = vsel %vm1552, %v1533, %v995
      %v1567 = vsel %vm1552, %v1534, %v997
      %v1568 = vsel %vm1552, %v1535, %v999
      %v1569 = vsel %vm1552, %v1536, %v1001
      %v1570 = vsel %vm1552, %v1537, %v1003
      %v1571 = vsel %vm1552, %v1538, %v1005
      %v1572 = vsel %vm1552, %v1539, %v1007
      %v1573 = vsel %vm1552, %v1540, %v1009
      %v1574 = vsel %vm1552, %v1541, %v1011
      %v1575 = vsel %vm1552, %v1542, %v1013
      %v1576 = vsel %vm1552, %v1543, %v1015
      %v1577 = vsel %vm1552, %v1544, %v1017
      %v1578 = vsel %vm1552, %v1545, %v1019
      %v1579 = vsel %vm1552, %v1546, %v1021
      %v1580 = vsel %vm1552, %v1547, %v1023
      %v1581 = vsel %vm1552, %v1548, %v1025
      %v1582 = vsel %vm1552, %v1549, %v1027
      %v1583 = vsel %vm1552, %v1550, %v1029
      %v1584 = vsel %vm1552, %v1551, %v1031
      %vm1585 = vcmask 326656
      %v1586 = vsel %vm1585, %v1553, %v1070
      %v1587 = vsel %vm1585, %v1554, %v1072
      %v1588 = vsel %vm1585, %v1555, %v1074
      %v1589 = vsel %vm1585, %v1556, %v1076
      %v1590 = vsel %vm1585, %v1557, %v1078
      %v1591 = vsel %vm1585, %v1558, %v1080
      %v1592 = vsel %vm1585, %v1559, %v1082
      %v1593 = vsel %vm1585, %v1560, %v1084
      %v1594 = vsel %vm1585, %v1561, %v1086
      %v1595 = vsel %vm1585, %v1562, %v1088
      %v1596 = vsel %vm1585, %v1563, %v1090
      %v1597 = vsel %vm1585, %v1564, %v1092
      %v1598 = vsel %vm1585, %v1565, %v1094
      %v1599 = vsel %vm1585, %v1566, %v1096
      %v1600 = vsel %vm1585, %v1567, %v1098
      %v1601 = vsel %vm1585, %v1568, %v1100
      %v1602 = vsel %vm1585, %v1569, %v1102
      %v1603 = vsel %vm1585, %v1570, %v1104
      %v1604 = vsel %vm1585, %v1571, %v1106
      %v1605 = vsel %vm1585, %v1572, %v1108
      %v1606 = vsel %vm1585, %v1573, %v1110
      %v1607 = vsel %vm1585, %v1574, %v1112
      %v1608 = vsel %vm1585, %v1575, %v1114
      %v1609 = vsel %vm1585, %v1576, %v1116
      %v1610 = vsel %vm1585, %v1577, %v1118
      %v1611 = vsel %vm1585, %v1578, %v1120
      %v1612 = vsel %vm1585, %v1579, %v1122
      %v1613 = vsel %vm1585, %v1580, %v1124
      %v1614 = vsel %vm1585, %v1581, %v1126
      %v1615 = vsel %vm1585, %v1582, %v1128
      %v1616 = vsel %vm1585, %v1583, %v1130
      %v1617 = vsel %vm1585, %v1584, %v1132
      %vm1618 = vcmask 392192
      %v1619 = vsel %vm1618, %v1586, %v1166
      %v1620 = vsel %vm1618, %v1587, %v1168
      %v1621 = vsel %vm1618, %v1588, %v1170
      %v1622 = vsel %vm1618, %v1589, %v1172
      %v1623 = vsel %vm1618, %v1590, %v1174
      %v1624 = vsel %vm1618, %v1591, %v1176
      %v1625 = vsel %vm1618, %v1592, %v1178
      %v1626 = vsel %vm1618, %v1593, %v1180
      %v1627 = vsel %vm1618, %v1594, %v1182
      %v1628 = vsel %vm1618, %v1595, %v1184
      %v1629 = vsel %vm1618, %v1596, %v1186
      %v1630 = vsel %vm1618, %v1597, %v1188
      %v1631 = vsel %vm1618, %v1598, %v1190
      %v1632 = vsel %vm1618, %v1599, %v1192
      %v1633 = vsel %vm1618, %v1600, %v1194
      %v1634 = vsel %vm1618, %v1601, %v1196
      %v1635 = vsel %vm1618, %v1602, %v1198
      %v1636 = vsel %vm1618, %v1603, %v1200
      %v1637 = vsel %vm1618, %v1604, %v1202
      %v1638 = vsel %vm1618, %v1605, %v1204
      %v1639 = vsel %vm1618, %v1606, %v1206
      %v1640 = vsel %vm1618, %v1607, %v1208
      %v1641 = vsel %vm1618, %v1608, %v1210
      %v1642 = vsel %vm1618, %v1609, %v1212
      %v1643 = vsel %vm1618, %v1610, %v1214
      %v1644 = vsel %vm1618, %v1611, %v1216
      %v1645 = vsel %vm1618, %v1612, %v1218
      %v1646 = vsel %vm1618, %v1613, %v1220
      %v1647 = vsel %vm1618, %v1614, %v1222
      %v1648 = vsel %vm1618, %v1615, %v1224
      %v1649 = vsel %vm1618, %v1616, %v1226
      %v1650 = vsel %vm1618, %v1617, %v1228
      %vm1651 = vcmask 457728
      %v1652 = vsel %vm1651, %v1619, %v1262
      %v1653 = vsel %vm1651, %v1620, %v1264
      %v1654 = vsel %vm1651, %v1621, %v1266
      %v1655 = vsel %vm1651, %v1622, %v1268
      %v1656 = vsel %vm1651, %v1623, %v1270
      %v1657 = vsel %vm1651, %v1624, %v1272
      %v1658 = vsel %vm1651, %v1625, %v1274
      %v1659 = vsel %vm1651, %v1626, %v1276
      %v1660 = vsel %vm1651, %v1627, %v1278
      %v1661 = vsel %vm1651, %v1628, %v1280
      %v1662 = vsel %vm1651, %v1629, %v1282
      %v1663 = vsel %vm1651, %v1630, %v1284
      %v1664 = vsel %vm1651, %v1631, %v1286
      %v1665 = vsel %vm1651, %v1632, %v1288
      %v1666 = vsel %vm1651, %v1633, %v1290
      %v1667 = vsel %vm1651, %v1634, %v1292
      %v1668 = vsel %vm1651, %v1635, %v1294
      %v1669 = vsel %vm1651, %v1636, %v1296
      %v1670 = vsel %vm1651, %v1637, %v1298
      %v1671 = vsel %vm1651, %v1638, %v1300
      %v1672 = vsel %vm1651, %v1639, %v1302
      %v1673 = vsel %vm1651, %v1640, %v1304
      %v1674 = vsel %vm1651, %v1641, %v1306
      %v1675 = vsel %vm1651, %v1642, %v1308
      %v1676 = vsel %vm1651, %v1643, %v1310
      %v1677 = vsel %vm1651, %v1644, %v1312
      %v1678 = vsel %vm1651, %v1645, %v1314
      %v1679 = vsel %vm1651, %v1646, %v1316
      %v1680 = vsel %vm1651, %v1647, %v1318
      %v1681 = vsel %vm1651, %v1648, %v1320
      %v1682 = vsel %vm1651, %v1649, %v1322
      %v1683 = vsel %vm1651, %v1650, %v1324
      %vm1684 = vcmask 523264
      %v1685 = vsel %vm1684, %v1652, %v1358
      %v1686 = vsel %vm1684, %v1653, %v1360
      %v1687 = vsel %vm1684, %v1654, %v1362
      %v1688 = vsel %vm1684, %v1655, %v1364
      %v1689 = vsel %vm1684, %v1656, %v1366
      %v1690 = vsel %vm1684, %v1657, %v1368
      %v1691 = vsel %vm1684, %v1658, %v1370
      %v1692 = vsel %vm1684, %v1659, %v1372
      %v1693 = vsel %vm1684, %v1660, %v1374
      %v1694 = vsel %vm1684, %v1661, %v1376
      %v1695 = vsel %vm1684, %v1662, %v1378
      %v1696 = vsel %vm1684, %v1663, %v1380
      %v1697 = vsel %vm1684, %v1664, %v1382
      %v1698 = vsel %vm1684, %v1665, %v1384
      %v1699 = vsel %vm1684, %v1666, %v1386
      %v1700 = vsel %vm1684, %v1667, %v1388
      %v1701 = vsel %vm1684, %v1668, %v1390
      %v1702 = vsel %vm1684, %v1669, %v1392
      %v1703 = vsel %vm1684, %v1670, %v1394
      %v1704 = vsel %vm1684, %v1671, %v1396
      %v1705 = vsel %vm1684, %v1672, %v1398
      %v1706 = vsel %vm1684, %v1673, %v1400
      %v1707 = vsel %vm1684, %v1674, %v1402
      %v1708 = vsel %vm1684, %v1675, %v1404
      %v1709 = vsel %vm1684, %v1676, %v1406
      %v1710 = vsel %vm1684, %v1677, %v1408
      %v1711 = vsel %vm1684, %v1678, %v1410
      %v1712 = vsel %vm1684, %v1679, %v1412
      %v1713 = vsel %vm1684, %v1680, %v1414
      %v1714 = vsel %vm1684, %v1681, %v1416
      %v1715 = vsel %vm1684, %v1682, %v1418
      %v1716 = vsel %vm1684, %v1683, %v1420
      %v1717 = vpack.c.bf16 %v1686, %v1685
      %v1718 = vpack.c.bf16 %v1688, %v1687
      %v1719 = vpack.c.bf16 %v1690, %v1689
      %v1720 = vpack.c.bf16 %v1692, %v1691
      %v1721 = vpack.c.bf16 %v1694, %v1693
      %v1722 = vpack.c.bf16 %v1696, %v1695
      %v1723 = vpack.c.bf16 %v1698, %v1697
      %v1724 = vpack.c.bf16 %v1700, %v1699
      %v1725 = vpack.c.bf16 %v1702, %v1701
      %v1726 = vpack.c.bf16 %v1704, %v1703
      %v1727 = vpack.c.bf16 %v1706, %v1705
      %v1728 = vpack.c.bf16 %v1708, %v1707
      %v1729 = vpack.c.bf16 %v1710, %v1709
      %v1730 = vpack.c.bf16 %v1712, %v1711
      %v1731 = vpack.c.bf16 %v1714, %v1713
      %v1732 = vpack.c.bf16 %v1716, %v1715
      %v1733 = vld [vmem:[%s1] sm:$0xf]
      %v1734 = vld [vmem:[%s1 + $0x4] sm:$0xf]
      %v1735 = vld [vmem:[%s1 + $0x8] sm:$0xf]
      %v1736 = vld [vmem:[%s1 + $0xc] sm:$0xf]
      %v1737 = vld [vmem:[%s1 + $0x10] sm:$0xf]
      %v1738 = vld [vmem:[%s1 + $0x14] sm:$0xf]
      %v1739 = vld [vmem:[%s1 + $0x18] sm:$0xf]
      %v1740 = vld [vmem:[%s1 + $0x1c] sm:$0xf]
      %v1741 = vld [vmem:[%s1 + $0x20] sm:$0xf]
      %v1751 = vunpack.c.l.b16 %v1733
      %v1752 = vunpack.c.l.b16 %v1734
      %v1753 = vunpack.c.l.b16 %v1735
      %v1754 = vunpack.c.l.b16 %v1736
      %v1755 = vunpack.c.l.b16 %v1737
      %v1756 = vunpack.c.l.b16 %v1738
      %v1757 = vunpack.c.l.b16 %v1739
      %v1758 = vunpack.c.l.b16 %v1740
      %v1759 = vunpack.c.l.b16 %v1741
      %v1760 = vpack.c.b16 %v1752, %v1751
      %v1761 = vpack.c.b16 %v1754, %v1753
      %v1762 = vpack.c.b16 %v1756, %v1755
      %v1763 = vpack.c.b16 %v1758, %v1757
      %v1764 = vpack.c.b16 %v1759, %v1759
      %vm1769 = vcmask 588800
      %v1771 = vsel %vm1769, %v1717, 0
      %v1774 = vsel %vm1769, %v1718, 0
      %v1777 = vsel %vm1769, %v1719, 0
      %v1780 = vsel %vm1769, %v1720, 0
      %v1783 = vsel %vm1769, %v1721, 0
      %v1786 = vsel %vm1769, %v1722, 0
      %v1789 = vsel %vm1769, %v1723, 0
      %v1792 = vsel %vm1769, %v1724, 0
      %v1795 = vsel %vm1769, %v1725, 0
      %v1798 = vsel %vm1769, %v1726, 0
      %v1801 = vsel %vm1769, %v1727, 0
      %v1804 = vsel %vm1769, %v1728, 0
      %v1807 = vsel %vm1769, %v1729, 0
      %v1810 = vsel %vm1769, %v1730, 0
      %v1813 = vsel %vm1769, %v1731, 0
      %v1816 = vsel %vm1769, %v1732, 0
      %vm1818 = vcmask 1043456
      %v1820 = vsel %vm1818, %v1764, 0
      %1822 = vmatpush.bf16.msra.mxu0 0
      %1823 = vmatpush.bf16.msra.mxu0 0
      %1824 = vmatpush.bf16.msra.mxu0 0
      %1825 = vmatpush.bf16.msra.mxu0 %v1820
      %1826 = vmatpush.bf16.msra.mxu0 %v1763
      %1827 = vmatpush.bf16.msra.mxu0 %v1762
      %1828 = vmatpush.bf16.msra.mxu0 %v1761
      %1829 = vmatpush.bf16.msra.mxu0 %v1760
      %1830 = vmatmul.bf16.gmra.mxu0 %v1771
      %v1831 = vpop.f32.mrf.mxu0
      %v1832 = vadd.f32 0.0, %v1831
      %v1833 = vpop.f32.mrf.mxu0
      %v1834 = vadd.f32 0.0, %v1833
      %1835 = vmatmul.bf16.gmra.mxu0 %v1774
      %v1836 = vpop.f32.mrf.mxu0
      %v1837 = vadd.f32 0.0, %v1836
      %v1838 = vpop.f32.mrf.mxu0
      %v1839 = vadd.f32 0.0, %v1838
      %1840 = vmatmul.bf16.gmra.mxu0 %v1777
      %v1841 = vpop.f32.mrf.mxu0
      %v1842 = vadd.f32 0.0, %v1841
      %v1843 = vpop.f32.mrf.mxu0
      %v1844 = vadd.f32 0.0, %v1843
      %1845 = vmatmul.bf16.gmra.mxu0 %v1780
      %v1846 = vpop.f32.mrf.mxu0
      %v1847 = vadd.f32 0.0, %v1846
      %v1848 = vpop.f32.mrf.mxu0
      %v1849 = vadd.f32 0.0, %v1848
      %1850 = vmatmul.bf16.gmra.mxu0 %v1783
      %v1851 = vpop.f32.mrf.mxu0
      %v1852 = vadd.f32 0.0, %v1851
      %v1853 = vpop.f32.mrf.mxu0
      %v1854 = vadd.f32 0.0, %v1853
      %1855 = vmatmul.bf16.gmra.mxu0 %v1786
      %v1856 = vpop.f32.mrf.mxu0
      %v1857 = vadd.f32 0.0, %v1856
      %v1858 = vpop.f32.mrf.mxu0
      %v1859 = vadd.f32 0.0, %v1858
      %1860 = vmatmul.bf16.gmra.mxu0 %v1789
      %v1861 = vpop.f32.mrf.mxu0
      %v1862 = vadd.f32 0.0, %v1861
      %v1863 = vpop.f32.mrf.mxu0
      %v1864 = vadd.f32 0.0, %v1863
      %1865 = vmatmul.bf16.gmra.mxu0 %v1792
      %v1866 = vpop.f32.mrf.mxu0
      %v1867 = vadd.f32 0.0, %v1866
      %v1868 = vpop.f32.mrf.mxu0
      %v1869 = vadd.f32 0.0, %v1868
      %1870 = vmatmul.bf16.gmra.mxu0 %v1795
      %v1871 = vpop.f32.mrf.mxu0
      %v1872 = vadd.f32 0.0, %v1871
      %v1873 = vpop.f32.mrf.mxu0
      %v1874 = vadd.f32 0.0, %v1873
      %1875 = vmatmul.bf16.gmra.mxu0 %v1798
      %v1876 = vpop.f32.mrf.mxu0
      %v1877 = vadd.f32 0.0, %v1876
      %v1878 = vpop.f32.mrf.mxu0
      %v1879 = vadd.f32 0.0, %v1878
      %1880 = vmatmul.bf16.gmra.mxu0 %v1801
      %v1881 = vpop.f32.mrf.mxu0
      %v1882 = vadd.f32 0.0, %v1881
      %v1883 = vpop.f32.mrf.mxu0
      %v1884 = vadd.f32 0.0, %v1883
      %1885 = vmatmul.bf16.gmra.mxu0 %v1804
      %v1886 = vpop.f32.mrf.mxu0
      %v1887 = vadd.f32 0.0, %v1886
      %v1888 = vpop.f32.mrf.mxu0
      %v1889 = vadd.f32 0.0, %v1888
      %1890 = vmatmul.bf16.gmra.mxu0 %v1807
      %v1891 = vpop.f32.mrf.mxu0
      %v1892 = vadd.f32 0.0, %v1891
      %v1893 = vpop.f32.mrf.mxu0
      %v1894 = vadd.f32 0.0, %v1893
      %1895 = vmatmul.bf16.gmra.mxu0 %v1810
      %v1896 = vpop.f32.mrf.mxu0
      %v1897 = vadd.f32 0.0, %v1896
      %v1898 = vpop.f32.mrf.mxu0
      %v1899 = vadd.f32 0.0, %v1898
      %1900 = vmatmul.bf16.gmra.mxu0 %v1813
      %v1901 = vpop.f32.mrf.mxu0
      %v1902 = vadd.f32 0.0, %v1901
      %v1903 = vpop.f32.mrf.mxu0
      %v1904 = vadd.f32 0.0, %v1903
      %1905 = vmatmul.bf16.gmra.mxu0 %v1816
      %v1906 = vpop.f32.mrf.mxu0
      %v1907 = vadd.f32 0.0, %v1906
      %v1908 = vpop.f32.mrf.mxu0
      %v1909 = vadd.f32 0.0, %v1908
      %1910 = vdwg.mxu0
      %v1911 = vld [vmem:[%s2] sm:$0x1]
      %v1912 = vld [vmem:[%s3] sm:$0x1]
      %v1913 = vlaneseq
      %v1914 = vand.u32 %v1913, 127
      %vm1915 = vcmask 31744
      %v1916 = vsel %vm1915, %v1832, 0.0
      %v1917 = vsel %vm1915, %v1834, 0.0
      %v1918 = vadd.f32 %v1916, %v1917
      %v1919 = vsel %vm1915, %v1837, 0.0
      %v1920 = vadd.f32 %v1918, %v1919
      %v1921 = vsel %vm1915, %v1839, 0.0
      %v1922 = vadd.f32 %v1920, %v1921
      %v1923 = vsel %vm1915, %v1842, 0.0
      %v1924 = vadd.f32 %v1922, %v1923
      %v1925 = vsel %vm1915, %v1844, 0.0
      %v1926 = vadd.f32 %v1924, %v1925
      %v1927 = vsel %vm1915, %v1847, 0.0
      %v1928 = vadd.f32 %v1926, %v1927
      %v1929 = vsel %vm1915, %v1849, 0.0
      %v1930 = vadd.f32 %v1928, %v1929
      %v1931 = vsel %vm1915, %v1852, 0.0
      %v1932 = vadd.f32 %v1930, %v1931
      %v1933 = vsel %vm1915, %v1854, 0.0
      %v1934 = vadd.f32 %v1932, %v1933
      %v1935 = vsel %vm1915, %v1857, 0.0
      %v1936 = vadd.f32 %v1934, %v1935
      %v1937 = vsel %vm1915, %v1859, 0.0
      %v1938 = vadd.f32 %v1936, %v1937
      %v1939 = vsel %vm1915, %v1862, 0.0
      %v1940 = vadd.f32 %v1938, %v1939
      %v1941 = vsel %vm1915, %v1864, 0.0
      %v1942 = vadd.f32 %v1940, %v1941
      %v1943 = vsel %vm1915, %v1867, 0.0
      %v1944 = vadd.f32 %v1942, %v1943
      %v1945 = vsel %vm1915, %v1869, 0.0
      %v1946 = vadd.f32 %v1944, %v1945
      %v1947 = vsel %vm1915, %v1872, 0.0
      %v1948 = vadd.f32 %v1946, %v1947
      %v1949 = vsel %vm1915, %v1874, 0.0
      %v1950 = vadd.f32 %v1948, %v1949
      %v1951 = vsel %vm1915, %v1877, 0.0
      %v1952 = vadd.f32 %v1950, %v1951
      %v1953 = vsel %vm1915, %v1879, 0.0
      %v1954 = vadd.f32 %v1952, %v1953
      %v1955 = vsel %vm1915, %v1882, 0.0
      %v1956 = vadd.f32 %v1954, %v1955
      %v1957 = vsel %vm1915, %v1884, 0.0
      %v1958 = vadd.f32 %v1956, %v1957
      %v1959 = vsel %vm1915, %v1887, 0.0
      %v1960 = vadd.f32 %v1958, %v1959
      %v1961 = vsel %vm1915, %v1889, 0.0
      %v1962 = vadd.f32 %v1960, %v1961
      %v1963 = vsel %vm1915, %v1892, 0.0
      %v1964 = vadd.f32 %v1962, %v1963
      %v1965 = vsel %vm1915, %v1894, 0.0
      %v1966 = vadd.f32 %v1964, %v1965
      %v1967 = vsel %vm1915, %v1897, 0.0
      %v1968 = vadd.f32 %v1966, %v1967
      %v1969 = vsel %vm1915, %v1899, 0.0
      %v1970 = vadd.f32 %v1968, %v1969
      %v1971 = vsel %vm1915, %v1902, 0.0
      %v1972 = vadd.f32 %v1970, %v1971
      %v1973 = vsel %vm1915, %v1904, 0.0
      %v1974 = vadd.f32 %v1972, %v1973
      %v1975 = vsel %vm1915, %v1907, 0.0
      %v1976 = vadd.f32 %v1974, %v1975
      %v1977 = vsel %vm1915, %v1909, 0.0
      %v1978 = vadd.f32 %v1976, %v1977
      %1979 = vadd.xlane.f32.xlu0 %v1978
      %v1980 = vpop.xlane.xlu0 %1979
      %v1981 = vrot.slane %v1980, 4
      %v1982 = vadd.f32 %v1980, %v1981
      %v1983 = vrot.slane %v1982, 2
      %v1984 = vadd.f32 %v1982, %v1983
      %v1985 = vrot.slane %v1984, 1
      %v1986 = vadd.f32 %v1984, %v1985
      %s1987 = vtos %v1986
      %v1988 = vstv %s1987
      %v1989 = vrcp.pop 1024.0
      %v1990 = vmul.f32 1024.0, %v1989
      %v1991 = vsub.f32 1.0, %v1990
      %v1992 = vmul.f32 %v1989, %v1991
      %v1993 = vadd.f32 %v1989, %v1992
      %vm1994 = vweird.f32 %v1989
      %v1995 = vsel %vm1994, %v1989, %v1993
      %v1996 = vmul.f32 %v1988, %v1995
      %v1997 = vmul.f32 %v1832, %v1832
      %v1998 = vmul.f32 %v1834, %v1834
      %v1999 = vmul.f32 %v1837, %v1837
      %v2000 = vmul.f32 %v1839, %v1839
      %v2001 = vmul.f32 %v1842, %v1842
      %v2002 = vmul.f32 %v1844, %v1844
      %v2003 = vmul.f32 %v1847, %v1847
      %v2004 = vmul.f32 %v1849, %v1849
      %v2005 = vmul.f32 %v1852, %v1852
      %v2006 = vmul.f32 %v1854, %v1854
      %v2007 = vmul.f32 %v1857, %v1857
      %v2008 = vmul.f32 %v1859, %v1859
      %v2009 = vmul.f32 %v1862, %v1862
      %v2010 = vmul.f32 %v1864, %v1864
      %v2011 = vmul.f32 %v1867, %v1867
      %v2012 = vmul.f32 %v1869, %v1869
      %v2013 = vmul.f32 %v1872, %v1872
      %v2014 = vmul.f32 %v1874, %v1874
      %v2015 = vmul.f32 %v1877, %v1877
      %v2016 = vmul.f32 %v1879, %v1879
      %v2017 = vmul.f32 %v1882, %v1882
      %v2018 = vmul.f32 %v1884, %v1884
      %v2019 = vmul.f32 %v1887, %v1887
      %v2020 = vmul.f32 %v1889, %v1889
      %v2021 = vmul.f32 %v1892, %v1892
      %v2022 = vmul.f32 %v1894, %v1894
      %v2023 = vmul.f32 %v1897, %v1897
      %v2024 = vmul.f32 %v1899, %v1899
      %v2025 = vmul.f32 %v1902, %v1902
      %v2026 = vmul.f32 %v1904, %v1904
      %v2027 = vmul.f32 %v1907, %v1907
      %v2028 = vmul.f32 %v1909, %v1909
      %v2029 = vsel %vm1915, %v1997, 0.0
      %v2030 = vsel %vm1915, %v1998, 0.0
      %v2031 = vadd.f32 %v2029, %v2030
      %v2032 = vsel %vm1915, %v1999, 0.0
      %v2033 = vadd.f32 %v2031, %v2032
      %v2034 = vsel %vm1915, %v2000, 0.0
      %v2035 = vadd.f32 %v2033, %v2034
      %v2036 = vsel %vm1915, %v2001, 0.0
      %v2037 = vadd.f32 %v2035, %v2036
      %v2038 = vsel %vm1915, %v2002, 0.0
      %v2039 = vadd.f32 %v2037, %v2038
      %v2040 = vsel %vm1915, %v2003, 0.0
      %v2041 = vadd.f32 %v2039, %v2040
      %v2042 = vsel %vm1915, %v2004, 0.0
      %v2043 = vadd.f32 %v2041, %v2042
      %v2044 = vsel %vm1915, %v2005, 0.0
      %v2045 = vadd.f32 %v2043, %v2044
      %v2046 = vsel %vm1915, %v2006, 0.0
      %v2047 = vadd.f32 %v2045, %v2046
      %v2048 = vsel %vm1915, %v2007, 0.0
      %v2049 = vadd.f32 %v2047, %v2048
      %v2050 = vsel %vm1915, %v2008, 0.0
      %v2051 = vadd.f32 %v2049, %v2050
      %v2052 = vsel %vm1915, %v2009, 0.0
      %v2053 = vadd.f32 %v2051, %v2052
      %v2054 = vsel %vm1915, %v2010, 0.0
      %v2055 = vadd.f32 %v2053, %v2054
      %v2056 = vsel %vm1915, %v2011, 0.0
      %v2057 = vadd.f32 %v2055, %v2056
      %v2058 = vsel %vm1915, %v2012, 0.0
      %v2059 = vadd.f32 %v2057, %v2058
      %v2060 = vsel %vm1915, %v2013, 0.0
      %v2061 = vadd.f32 %v2059, %v2060
      %v2062 = vsel %vm1915, %v2014, 0.0
      %v2063 = vadd.f32 %v2061, %v2062
      %v2064 = vsel %vm1915, %v2015, 0.0
      %v2065 = vadd.f32 %v2063, %v2064
      %v2066 = vsel %vm1915, %v2016, 0.0
      %v2067 = vadd.f32 %v2065, %v2066
      %v2068 = vsel %vm1915, %v2017, 0.0
      %v2069 = vadd.f32 %v2067, %v2068
      %v2070 = vsel %vm1915, %v2018, 0.0
      %v2071 = vadd.f32 %v2069, %v2070
      %v2072 = vsel %vm1915, %v2019, 0.0
      %v2073 = vadd.f32 %v2071, %v2072
      %v2074 = vsel %vm1915, %v2020, 0.0
      %v2075 = vadd.f32 %v2073, %v2074
      %v2076 = vsel %vm1915, %v2021, 0.0
      %v2077 = vadd.f32 %v2075, %v2076
      %v2078 = vsel %vm1915, %v2022, 0.0
      %v2079 = vadd.f32 %v2077, %v2078
      %v2080 = vsel %vm1915, %v2023, 0.0
      %v2081 = vadd.f32 %v2079, %v2080
      %v2082 = vsel %vm1915, %v2024, 0.0
      %v2083 = vadd.f32 %v2081, %v2082
      %v2084 = vsel %vm1915, %v2025, 0.0
      %v2085 = vadd.f32 %v2083, %v2084
      %v2086 = vsel %vm1915, %v2026, 0.0
      %v2087 = vadd.f32 %v2085, %v2086
      %v2088 = vsel %vm1915, %v2027, 0.0
      %v2089 = vadd.f32 %v2087, %v2088
      %v2090 = vsel %vm1915, %v2028, 0.0
      %v2091 = vadd.f32 %v2089, %v2090
      %2092 = vadd.xlane.f32.xlu0 %v2091
      %v2093 = vpop.xlane.xlu0 %2092
      %v2094 = vrot.slane %v2093, 4
      %v2095 = vadd.f32 %v2093, %v2094
      %v2096 = vrot.slane %v2095, 2
      %v2097 = vadd.f32 %v2095, %v2096
      %v2098 = vrot.slane %v2097, 1
      %v2099 = vadd.f32 %v2097, %v2098
      %s2100 = vtos %v2099
      %v2101 = vstv %s2100
      %v2102 = vmul.f32 %v2101, %v1995
      %v2103 = vmul.f32 %v1996, %v1996
      %v2104 = vsub.f32 %v2102, %v2103
      %vm2105 = vcmp.ge.s32.totalorder %v1914, 0
      %vm2106 = vcmp.lt.s32.totalorder %v1914, 4
      %vm2107 = vmand %vm2105, %vm2106
      %v2108 = vsel %vm2107, %v1996, 0.0
      %v2109 = vsel %vm2107, %v2104, 0.0
      %2142 = vrot.lane.b32.xlu0 %v1832, 124
      %v2143 = vpop.permute.xlu0 %2142
      %2144 = vrot.lane.b32.xlu0 %v1834, 124
      %v2145 = vpop.permute.xlu0 %2144
      %2146 = vrot.lane.b32.xlu0 %v1837, 124
      %v2147 = vpop.permute.xlu0 %2146
      %2148 = vrot.lane.b32.xlu0 %v1839, 124
      %v2149 = vpop.permute.xlu0 %2148
      %2150 = vrot.lane.b32.xlu0 %v1842, 124
      %v2151 = vpop.permute.xlu0 %2150
      %2152 = vrot.lane.b32.xlu0 %v1844, 124
      %v2153 = vpop.permute.xlu0 %2152
      %2154 = vrot.lane.b32.xlu0 %v1847, 124
      %v2155 = vpop.permute.xlu0 %2154
      %2156 = vrot.lane.b32.xlu0 %v1849, 124
      %v2157 = vpop.permute.xlu0 %2156
      %2158 = vrot.lane.b32.xlu0 %v1852, 124
      %v2159 = vpop.permute.xlu0 %2158
      %2160 = vrot.lane.b32.xlu0 %v1854, 124
      %v2161 = vpop.permute.xlu0 %2160
      %2162 = vrot.lane.b32.xlu0 %v1857, 124
      %v2163 = vpop.permute.xlu0 %2162
      %2164 = vrot.lane.b32.xlu0 %v1859, 124
      %v2165 = vpop.permute.xlu0 %2164
      %2166 = vrot.lane.b32.xlu0 %v1862, 124
      %v2167 = vpop.permute.xlu0 %2166
      %2168 = vrot.lane.b32.xlu0 %v1864, 124
      %v2169 = vpop.permute.xlu0 %2168
      %2170 = vrot.lane.b32.xlu0 %v1867, 124
      %v2171 = vpop.permute.xlu0 %2170
      %2172 = vrot.lane.b32.xlu0 %v1869, 124
      %v2173 = vpop.permute.xlu0 %2172
      %2174 = vrot.lane.b32.xlu0 %v1872, 124
      %v2175 = vpop.permute.xlu0 %2174
      %2176 = vrot.lane.b32.xlu0 %v1874, 124
      %v2177 = vpop.permute.xlu0 %2176
      %2178 = vrot.lane.b32.xlu0 %v1877, 124
      %v2179 = vpop.permute.xlu0 %2178
      %2180 = vrot.lane.b32.xlu0 %v1879, 124
      %v2181 = vpop.permute.xlu0 %2180
      %2182 = vrot.lane.b32.xlu0 %v1882, 124
      %v2183 = vpop.permute.xlu0 %2182
      %2184 = vrot.lane.b32.xlu0 %v1884, 124
      %v2185 = vpop.permute.xlu0 %2184
      %2186 = vrot.lane.b32.xlu0 %v1887, 124
      %v2187 = vpop.permute.xlu0 %2186
      %2188 = vrot.lane.b32.xlu0 %v1889, 124
      %v2189 = vpop.permute.xlu0 %2188
      %2190 = vrot.lane.b32.xlu0 %v1892, 124
      %v2191 = vpop.permute.xlu0 %2190
      %2192 = vrot.lane.b32.xlu0 %v1894, 124
      %v2193 = vpop.permute.xlu0 %2192
      %2194 = vrot.lane.b32.xlu0 %v1897, 124
      %v2195 = vpop.permute.xlu0 %2194
      %2196 = vrot.lane.b32.xlu0 %v1899, 124
      %v2197 = vpop.permute.xlu0 %2196
      %2198 = vrot.lane.b32.xlu0 %v1902, 124
      %v2199 = vpop.permute.xlu0 %2198
      %2200 = vrot.lane.b32.xlu0 %v1904, 124
      %v2201 = vpop.permute.xlu0 %2200
      %2202 = vrot.lane.b32.xlu0 %v1907, 124
      %v2203 = vpop.permute.xlu0 %2202
      %2204 = vrot.lane.b32.xlu0 %v1909, 124
      %v2205 = vpop.permute.xlu0 %2204
      %v2238 = vsel %vm1915, %v2143, 0.0
      %v2239 = vsel %vm1915, %v2145, 0.0
      %v2240 = vadd.f32 %v2238, %v2239
      %v2241 = vsel %vm1915, %v2147, 0.0
      %v2242 = vadd.f32 %v2240, %v2241
      %v2243 = vsel %vm1915, %v2149, 0.0
      %v2244 = vadd.f32 %v2242, %v2243
      %v2245 = vsel %vm1915, %v2151, 0.0
      %v2246 = vadd.f32 %v2244, %v2245
      %v2247 = vsel %vm1915, %v2153, 0.0
      %v2248 = vadd.f32 %v2246, %v2247
      %v2249 = vsel %vm1915, %v2155, 0.0
      %v2250 = vadd.f32 %v2248, %v2249
      %v2251 = vsel %vm1915, %v2157, 0.0
      %v2252 = vadd.f32 %v2250, %v2251
      %v2253 = vsel %vm1915, %v2159, 0.0
      %v2254 = vadd.f32 %v2252, %v2253
      %v2255 = vsel %vm1915, %v2161, 0.0
      %v2256 = vadd.f32 %v2254, %v2255
      %v2257 = vsel %vm1915, %v2163, 0.0
      %v2258 = vadd.f32 %v2256, %v2257
      %v2259 = vsel %vm1915, %v2165, 0.0
      %v2260 = vadd.f32 %v2258, %v2259
      %v2261 = vsel %vm1915, %v2167, 0.0
      %v2262 = vadd.f32 %v2260, %v2261
      %v2263 = vsel %vm1915, %v2169, 0.0
      %v2264 = vadd.f32 %v2262, %v2263
      %v2265 = vsel %vm1915, %v2171, 0.0
      %v2266 = vadd.f32 %v2264, %v2265
      %v2267 = vsel %vm1915, %v2173, 0.0
      %v2268 = vadd.f32 %v2266, %v2267
      %v2269 = vsel %vm1915, %v2175, 0.0
      %v2270 = vadd.f32 %v2268, %v2269
      %v2271 = vsel %vm1915, %v2177, 0.0
      %v2272 = vadd.f32 %v2270, %v2271
      %v2273 = vsel %vm1915, %v2179, 0.0
      %v2274 = vadd.f32 %v2272, %v2273
      %v2275 = vsel %vm1915, %v2181, 0.0
      %v2276 = vadd.f32 %v2274, %v2275
      %v2277 = vsel %vm1915, %v2183, 0.0
      %v2278 = vadd.f32 %v2276, %v2277
      %v2279 = vsel %vm1915, %v2185, 0.0
      %v2280 = vadd.f32 %v2278, %v2279
      %v2281 = vsel %vm1915, %v2187, 0.0
      %v2282 = vadd.f32 %v2280, %v2281
      %v2283 = vsel %vm1915, %v2189, 0.0
      %v2284 = vadd.f32 %v2282, %v2283
      %v2285 = vsel %vm1915, %v2191, 0.0
      %v2286 = vadd.f32 %v2284, %v2285
      %v2287 = vsel %vm1915, %v2193, 0.0
      %v2288 = vadd.f32 %v2286, %v2287
      %v2289 = vsel %vm1915, %v2195, 0.0
      %v2290 = vadd.f32 %v2288, %v2289
      %v2291 = vsel %vm1915, %v2197, 0.0
      %v2292 = vadd.f32 %v2290, %v2291
      %v2293 = vsel %vm1915, %v2199, 0.0
      %v2294 = vadd.f32 %v2292, %v2293
      %v2295 = vsel %vm1915, %v2201, 0.0
      %v2296 = vadd.f32 %v2294, %v2295
      %v2297 = vsel %vm1915, %v2203, 0.0
      %v2298 = vadd.f32 %v2296, %v2297
      %v2299 = vsel %vm1915, %v2205, 0.0
      %v2300 = vadd.f32 %v2298, %v2299
      %2301 = vadd.xlane.f32.xlu0 %v2300
      %v2302 = vpop.xlane.xlu0 %2301
      %v2303 = vrot.slane %v2302, 4
      %v2304 = vadd.f32 %v2302, %v2303
      %v2305 = vrot.slane %v2304, 2
      %v2306 = vadd.f32 %v2304, %v2305
      %v2307 = vrot.slane %v2306, 1
      %v2308 = vadd.f32 %v2306, %v2307
      %s2309 = vtos %v2308
      %v2310 = vstv %s2309
      %v2311 = vmul.f32 %v2310, %v1995
      %2344 = vrot.lane.b32.xlu0 %v1997, 124
      %v2345 = vpop.permute.xlu0 %2344
      %2346 = vrot.lane.b32.xlu0 %v1998, 124
      %v2347 = vpop.permute.xlu0 %2346
      %2348 = vrot.lane.b32.xlu0 %v1999, 124
      %v2349 = vpop.permute.xlu0 %2348
      %2350 = vrot.lane.b32.xlu0 %v2000, 124
      %v2351 = vpop.permute.xlu0 %2350
      %2352 = vrot.lane.b32.xlu0 %v2001, 124
      %v2353 = vpop.permute.xlu0 %2352
      %2354 = vrot.lane.b32.xlu0 %v2002, 124
      %v2355 = vpop.permute.xlu0 %2354
      %2356 = vrot.lane.b32.xlu0 %v2003, 124
      %v2357 = vpop.permute.xlu0 %2356
      %2358 = vrot.lane.b32.xlu0 %v2004, 124
      %v2359 = vpop.permute.xlu0 %2358
      %2360 = vrot.lane.b32.xlu0 %v2005, 124
      %v2361 = vpop.permute.xlu0 %2360
      %2362 = vrot.lane.b32.xlu0 %v2006, 124
      %v2363 = vpop.permute.xlu0 %2362
      %2364 = vrot.lane.b32.xlu0 %v2007, 124
      %v2365 = vpop.permute.xlu0 %2364
      %2366 = vrot.lane.b32.xlu0 %v2008, 124
      %v2367 = vpop.permute.xlu0 %2366
      %2368 = vrot.lane.b32.xlu0 %v2009, 124
      %v2369 = vpop.permute.xlu0 %2368
      %2370 = vrot.lane.b32.xlu0 %v2010, 124
      %v2371 = vpop.permute.xlu0 %2370
      %2372 = vrot.lane.b32.xlu0 %v2011, 124
      %v2373 = vpop.permute.xlu0 %2372
      %2374 = vrot.lane.b32.xlu0 %v2012, 124
      %v2375 = vpop.permute.xlu0 %2374
      %2376 = vrot.lane.b32.xlu0 %v2013, 124
      %v2377 = vpop.permute.xlu0 %2376
      %2378 = vrot.lane.b32.xlu0 %v2014, 124
      %v2379 = vpop.permute.xlu0 %2378
      %2380 = vrot.lane.b32.xlu0 %v2015, 124
      %v2381 = vpop.permute.xlu0 %2380
      %2382 = vrot.lane.b32.xlu0 %v2016, 124
      %v2383 = vpop.permute.xlu0 %2382
      %2384 = vrot.lane.b32.xlu0 %v2017, 124
      %v2385 = vpop.permute.xlu0 %2384
      %2386 = vrot.lane.b32.xlu0 %v2018, 124
      %v2387 = vpop.permute.xlu0 %2386
      %2388 = vrot.lane.b32.xlu0 %v2019, 124
      %v2389 = vpop.permute.xlu0 %2388
      %2390 = vrot.lane.b32.xlu0 %v2020, 124
      %v2391 = vpop.permute.xlu0 %2390
      %2392 = vrot.lane.b32.xlu0 %v2021, 124
      %v2393 = vpop.permute.xlu0 %2392
      %2394 = vrot.lane.b32.xlu0 %v2022, 124
      %v2395 = vpop.permute.xlu0 %2394
      %2396 = vrot.lane.b32.xlu0 %v2023, 124
      %v2397 = vpop.permute.xlu0 %2396
      %2398 = vrot.lane.b32.xlu0 %v2024, 124
      %v2399 = vpop.permute.xlu0 %2398
      %2400 = vrot.lane.b32.xlu0 %v2025, 124
      %v2401 = vpop.permute.xlu0 %2400
      %2402 = vrot.lane.b32.xlu0 %v2026, 124
      %v2403 = vpop.permute.xlu0 %2402
      %2404 = vrot.lane.b32.xlu0 %v2027, 124
      %v2405 = vpop.permute.xlu0 %2404
      %2406 = vrot.lane.b32.xlu0 %v2028, 124
      %v2407 = vpop.permute.xlu0 %2406
      %v2440 = vsel %vm1915, %v2345, 0.0
      %v2441 = vsel %vm1915, %v2347, 0.0
      %v2442 = vadd.f32 %v2440, %v2441
      %v2443 = vsel %vm1915, %v2349, 0.0
      %v2444 = vadd.f32 %v2442, %v2443
      %v2445 = vsel %vm1915, %v2351, 0.0
      %v2446 = vadd.f32 %v2444, %v2445
      %v2447 = vsel %vm1915, %v2353, 0.0
      %v2448 = vadd.f32 %v2446, %v2447
      %v2449 = vsel %vm1915, %v2355, 0.0
      %v2450 = vadd.f32 %v2448, %v2449
      %v2451 = vsel %vm1915, %v2357, 0.0
      %v2452 = vadd.f32 %v2450, %v2451
      %v2453 = vsel %vm1915, %v2359, 0.0
      %v2454 = vadd.f32 %v2452, %v2453
      %v2455 = vsel %vm1915, %v2361, 0.0
      %v2456 = vadd.f32 %v2454, %v2455
      %v2457 = vsel %vm1915, %v2363, 0.0
      %v2458 = vadd.f32 %v2456, %v2457
      %v2459 = vsel %vm1915, %v2365, 0.0
      %v2460 = vadd.f32 %v2458, %v2459
      %v2461 = vsel %vm1915, %v2367, 0.0
      %v2462 = vadd.f32 %v2460, %v2461
      %v2463 = vsel %vm1915, %v2369, 0.0
      %v2464 = vadd.f32 %v2462, %v2463
      %v2465 = vsel %vm1915, %v2371, 0.0
      %v2466 = vadd.f32 %v2464, %v2465
      %v2467 = vsel %vm1915, %v2373, 0.0
      %v2468 = vadd.f32 %v2466, %v2467
      %v2469 = vsel %vm1915, %v2375, 0.0
      %v2470 = vadd.f32 %v2468, %v2469
      %v2471 = vsel %vm1915, %v2377, 0.0
      %v2472 = vadd.f32 %v2470, %v2471
      %v2473 = vsel %vm1915, %v2379, 0.0
      %v2474 = vadd.f32 %v2472, %v2473
      %v2475 = vsel %vm1915, %v2381, 0.0
      %v2476 = vadd.f32 %v2474, %v2475
      %v2477 = vsel %vm1915, %v2383, 0.0
      %v2478 = vadd.f32 %v2476, %v2477
      %v2479 = vsel %vm1915, %v2385, 0.0
      %v2480 = vadd.f32 %v2478, %v2479
      %v2481 = vsel %vm1915, %v2387, 0.0
      %v2482 = vadd.f32 %v2480, %v2481
      %v2483 = vsel %vm1915, %v2389, 0.0
      %v2484 = vadd.f32 %v2482, %v2483
      %v2485 = vsel %vm1915, %v2391, 0.0
      %v2486 = vadd.f32 %v2484, %v2485
      %v2487 = vsel %vm1915, %v2393, 0.0
      %v2488 = vadd.f32 %v2486, %v2487
      %v2489 = vsel %vm1915, %v2395, 0.0
      %v2490 = vadd.f32 %v2488, %v2489
      %v2491 = vsel %vm1915, %v2397, 0.0
      %v2492 = vadd.f32 %v2490, %v2491
      %v2493 = vsel %vm1915, %v2399, 0.0
      %v2494 = vadd.f32 %v2492, %v2493
      %v2495 = vsel %vm1915, %v2401, 0.0
      %v2496 = vadd.f32 %v2494, %v2495
      %v2497 = vsel %vm1915, %v2403, 0.0
      %v2498 = vadd.f32 %v2496, %v2497
      %v2499 = vsel %vm1915, %v2405, 0.0
      %v2500 = vadd.f32 %v2498, %v2499
      %v2501 = vsel %vm1915, %v2407, 0.0
      %v2502 = vadd.f32 %v2500, %v2501
      %2503 = vadd.xlane.f32.xlu0 %v2502
      %v2504 = vpop.xlane.xlu0 %2503
      %v2505 = vrot.slane %v2504, 4
      %v2506 = vadd.f32 %v2504, %v2505
      %v2507 = vrot.slane %v2506, 2
      %v2508 = vadd.f32 %v2506, %v2507
      %v2509 = vrot.slane %v2508, 1
      %v2510 = vadd.f32 %v2508, %v2509
      %s2511 = vtos %v2510
      %v2512 = vstv %s2511
      %v2513 = vmul.f32 %v2512, %v1995
      %v2514 = vmul.f32 %v2311, %v2311
      %v2515 = vsub.f32 %v2513, %v2514
      %vm2516 = vcmp.ge.s32.totalorder %v1914, 4
      %vm2517 = vcmp.lt.s32.totalorder %v1914, 8
      %vm2518 = vmand %vm2516, %vm2517
      %v2519 = vsel %vm2518, %v2311, %v2108
      %v2520 = vsel %vm2518, %v2515, %v2109
      %v2521 = vadd.f32 %v2520, 1e-05
      %v2522 = vrsqrt.pop %v2521
      %v2523 = vmul.f32 %v2522, %v2521
      %v2524 = vmul.f32 %v2523, %v2522
      %v2525 = vmul.f32 0.5, %v2524
      %v2526 = vsub.f32 1.5, %v2525
      %v2527 = vmul.f32 %v2522, %v2526
      %vm2528 = vweird.f32 %v2521
      %vm2529 = vweird.f32 %v2522
      %vm2530 = vmor %vm2528, %vm2529
      %v2531 = vsel %vm2530, %v2522, %v2527
      %v2532 = vmul.f32 %v1911, %v2531
      %v2533 = vmul.f32 %v2519, %v2532
      %v2534 = vsub.f32 %v1912, %v2533
      %v2536 = vperm.slane %v2532, 0
      %v2538 = vmul.f32 %v1832, %v2536
      %v2539 = vmul.f32 %v1834, %v2536
      %v2540 = vmul.f32 %v1837, %v2536
      %v2541 = vmul.f32 %v1839, %v2536
      %v2542 = vmul.f32 %v1842, %v2536
      %v2543 = vmul.f32 %v1844, %v2536
      %v2544 = vmul.f32 %v1847, %v2536
      %v2545 = vmul.f32 %v1849, %v2536
      %v2546 = vmul.f32 %v1852, %v2536
      %v2547 = vmul.f32 %v1854, %v2536
      %v2548 = vmul.f32 %v1857, %v2536
      %v2549 = vmul.f32 %v1859, %v2536
      %v2550 = vmul.f32 %v1862, %v2536
      %v2551 = vmul.f32 %v1864, %v2536
      %v2552 = vmul.f32 %v1867, %v2536
      %v2553 = vmul.f32 %v1869, %v2536
      %v2554 = vmul.f32 %v1872, %v2536
      %v2555 = vmul.f32 %v1874, %v2536
      %v2556 = vmul.f32 %v1877, %v2536
      %v2557 = vmul.f32 %v1879, %v2536
      %v2558 = vmul.f32 %v1882, %v2536
      %v2559 = vmul.f32 %v1884, %v2536
      %v2560 = vmul.f32 %v1887, %v2536
      %v2561 = vmul.f32 %v1889, %v2536
      %v2562 = vmul.f32 %v1892, %v2536
      %v2563 = vmul.f32 %v1894, %v2536
      %v2564 = vmul.f32 %v1897, %v2536
      %v2565 = vmul.f32 %v1899, %v2536
      %v2566 = vmul.f32 %v1902, %v2536
      %v2567 = vmul.f32 %v1904, %v2536
      %v2568 = vmul.f32 %v1907, %v2536
      %v2569 = vmul.f32 %v1909, %v2536
      %v2571 = vperm.slane %v2534, 0
      %v2573 = vadd.f32 %v2538, %v2571
      %v2574 = vadd.f32 %v2539, %v2571
      %v2575 = vadd.f32 %v2540, %v2571
      %v2576 = vadd.f32 %v2541, %v2571
      %v2577 = vadd.f32 %v2542, %v2571
      %v2578 = vadd.f32 %v2543, %v2571
      %v2579 = vadd.f32 %v2544, %v2571
      %v2580 = vadd.f32 %v2545, %v2571
      %v2581 = vadd.f32 %v2546, %v2571
      %v2582 = vadd.f32 %v2547, %v2571
      %v2583 = vadd.f32 %v2548, %v2571
      %v2584 = vadd.f32 %v2549, %v2571
      %v2585 = vadd.f32 %v2550, %v2571
      %v2586 = vadd.f32 %v2551, %v2571
      %v2587 = vadd.f32 %v2552, %v2571
      %v2588 = vadd.f32 %v2553, %v2571
      %v2589 = vadd.f32 %v2554, %v2571
      %v2590 = vadd.f32 %v2555, %v2571
      %v2591 = vadd.f32 %v2556, %v2571
      %v2592 = vadd.f32 %v2557, %v2571
      %v2593 = vadd.f32 %v2558, %v2571
      %v2594 = vadd.f32 %v2559, %v2571
      %v2595 = vadd.f32 %v2560, %v2571
      %v2596 = vadd.f32 %v2561, %v2571
      %v2597 = vadd.f32 %v2562, %v2571
      %v2598 = vadd.f32 %v2563, %v2571
      %v2599 = vadd.f32 %v2564, %v2571
      %v2600 = vadd.f32 %v2565, %v2571
      %v2601 = vadd.f32 %v2566, %v2571
      %v2602 = vadd.f32 %v2567, %v2571
      %v2603 = vadd.f32 %v2568, %v2571
      %v2604 = vadd.f32 %v2569, %v2571
      %v2605 = vmax.f32 %v2573, 0.0
      %v2606 = vmax.f32 %v2574, 0.0
      %v2607 = vmax.f32 %v2575, 0.0
      %v2608 = vmax.f32 %v2576, 0.0
      %v2609 = vmax.f32 %v2577, 0.0
      %v2610 = vmax.f32 %v2578, 0.0
      %v2611 = vmax.f32 %v2579, 0.0
      %v2612 = vmax.f32 %v2580, 0.0
      %v2613 = vmax.f32 %v2581, 0.0
      %v2614 = vmax.f32 %v2582, 0.0
      %v2615 = vmax.f32 %v2583, 0.0
      %v2616 = vmax.f32 %v2584, 0.0
      %v2617 = vmax.f32 %v2585, 0.0
      %v2618 = vmax.f32 %v2586, 0.0
      %v2619 = vmax.f32 %v2587, 0.0
      %v2620 = vmax.f32 %v2588, 0.0
      %v2621 = vmax.f32 %v2589, 0.0
      %v2622 = vmax.f32 %v2590, 0.0
      %v2623 = vmax.f32 %v2591, 0.0
      %v2624 = vmax.f32 %v2592, 0.0
      %v2625 = vmax.f32 %v2593, 0.0
      %v2626 = vmax.f32 %v2594, 0.0
      %v2627 = vmax.f32 %v2595, 0.0
      %v2628 = vmax.f32 %v2596, 0.0
      %v2629 = vmax.f32 %v2597, 0.0
      %v2630 = vmax.f32 %v2598, 0.0
      %v2631 = vmax.f32 %v2599, 0.0
      %v2632 = vmax.f32 %v2600, 0.0
      %v2633 = vmax.f32 %v2601, 0.0
      %v2634 = vmax.f32 %v2602, 0.0
      %v2635 = vmax.f32 %v2603, 0.0
      %v2636 = vmax.f32 %v2604, 0.0
      %v2669 = vrot.slane %v2605, 7
      %v2670 = vrot.slane %v2606, 7
      %v2671 = vsel %vm345, %v2669, %v2670
      %v2672 = vrot.slane %v2607, 7
      %v2673 = vrot.slane %v2608, 7
      %v2674 = vsel %vm345, %v2672, %v2673
      %v2675 = vrot.slane %v2609, 7
      %v2676 = vrot.slane %v2610, 7
      %v2677 = vsel %vm345, %v2675, %v2676
      %v2678 = vrot.slane %v2611, 7
      %v2679 = vrot.slane %v2612, 7
      %v2680 = vsel %vm345, %v2678, %v2679
      %v2681 = vrot.slane %v2613, 7
      %v2682 = vrot.slane %v2614, 7
      %v2683 = vsel %vm345, %v2681, %v2682
      %v2684 = vrot.slane %v2615, 7
      %v2685 = vrot.slane %v2616, 7
      %v2686 = vsel %vm345, %v2684, %v2685
      %v2687 = vrot.slane %v2617, 7
      %v2688 = vrot.slane %v2618, 7
      %v2689 = vsel %vm345, %v2687, %v2688
      %v2690 = vrot.slane %v2619, 7
      %v2691 = vrot.slane %v2620, 7
      %v2692 = vsel %vm345, %v2690, %v2691
      %v2693 = vrot.slane %v2621, 7
      %v2694 = vrot.slane %v2622, 7
      %v2695 = vsel %vm345, %v2693, %v2694
      %v2696 = vrot.slane %v2623, 7
      %v2697 = vrot.slane %v2624, 7
      %v2698 = vsel %vm345, %v2696, %v2697
      %v2699 = vrot.slane %v2625, 7
      %v2700 = vrot.slane %v2626, 7
      %v2701 = vsel %vm345, %v2699, %v2700
      %v2702 = vrot.slane %v2627, 7
      %v2703 = vrot.slane %v2628, 7
      %v2704 = vsel %vm345, %v2702, %v2703
      %v2705 = vrot.slane %v2629, 7
      %v2706 = vrot.slane %v2630, 7
      %v2707 = vsel %vm345, %v2705, %v2706
      %v2708 = vrot.slane %v2631, 7
      %v2709 = vrot.slane %v2632, 7
      %v2710 = vsel %vm345, %v2708, %v2709
      %v2711 = vrot.slane %v2633, 7
      %v2712 = vrot.slane %v2634, 7
      %v2713 = vsel %vm345, %v2711, %v2712
      %v2714 = vrot.slane %v2635, 7
      %v2715 = vrot.slane %v2636, 7
      %v2716 = vsel %vm345, %v2714, %v2715
      %v2764 = vsel %vm345, 0.0, %v2669
      %v2765 = vsel %vm345, 0.0, %v2672
      %v2766 = vsel %vm345, 0.0, %v2675
      %v2767 = vsel %vm345, 0.0, %v2678
      %v2768 = vsel %vm345, 0.0, %v2681
      %v2769 = vsel %vm345, 0.0, %v2684
      %v2770 = vsel %vm345, 0.0, %v2687
      %v2771 = vsel %vm345, 0.0, %v2690
      %v2772 = vsel %vm345, 0.0, %v2693
      %v2773 = vsel %vm345, 0.0, %v2696
      %v2774 = vsel %vm345, 0.0, %v2699
      %v2775 = vsel %vm345, 0.0, %v2702
      %v2776 = vsel %vm345, 0.0, %v2705
      %v2777 = vsel %vm345, 0.0, %v2708
      %v2778 = vsel %vm345, 0.0, %v2711
      %v2779 = vsel %vm345, 0.0, %v2714
      %v2780 = vsel %vm345, %v2670, 0.0
      %v2781 = vsel %vm345, %v2673, 0.0
      %v2782 = vsel %vm345, %v2676, 0.0
      %v2783 = vsel %vm345, %v2679, 0.0
      %v2784 = vsel %vm345, %v2682, 0.0
      %v2785 = vsel %vm345, %v2685, 0.0
      %v2786 = vsel %vm345, %v2688, 0.0
      %v2787 = vsel %vm345, %v2691, 0.0
      %v2788 = vsel %vm345, %v2694, 0.0
      %v2789 = vsel %vm345, %v2697, 0.0
      %v2790 = vsel %vm345, %v2700, 0.0
      %v2791 = vsel %vm345, %v2703, 0.0
      %v2792 = vsel %vm345, %v2706, 0.0
      %v2793 = vsel %vm345, %v2709, 0.0
      %v2794 = vsel %vm345, %v2712, 0.0
      %v2795 = vsel %vm345, %v2715, 0.0
      %v2826 = vrot.slane %v2764, 1
      %v2827 = vrot.slane %v2671, 1
      %v2828 = vsel %vm511, %v2826, %v2827
      %v2829 = vrot.slane %v2780, 1
      %v2830 = vsel %vm511, %v2827, %v2829
      %v2831 = vrot.slane %v2765, 1
      %v2832 = vrot.slane %v2674, 1
      %v2833 = vsel %vm511, %v2831, %v2832
      %v2834 = vrot.slane %v2781, 1
      %v2835 = vsel %vm511, %v2832, %v2834
      %v2836 = vrot.slane %v2766, 1
      %v2837 = vrot.slane %v2677, 1
      %v2838 = vsel %vm511, %v2836, %v2837
      %v2839 = vrot.slane %v2782, 1
      %v2840 = vsel %vm511, %v2837, %v2839
      %v2841 = vrot.slane %v2767, 1
      %v2842 = vrot.slane %v2680, 1
      %v2843 = vsel %vm511, %v2841, %v2842
      %v2844 = vrot.slane %v2783, 1
      %v2845 = vsel %vm511, %v2842, %v2844
      %v2846 = vrot.slane %v2768, 1
      %v2847 = vrot.slane %v2683, 1
      %v2848 = vsel %vm511, %v2846, %v2847
      %v2849 = vrot.slane %v2784, 1
      %v2850 = vsel %vm511, %v2847, %v2849
      %v2851 = vrot.slane %v2769, 1
      %v2852 = vrot.slane %v2686, 1
      %v2853 = vsel %vm511, %v2851, %v2852
      %v2854 = vrot.slane %v2785, 1
      %v2855 = vsel %vm511, %v2852, %v2854
      %v2856 = vrot.slane %v2770, 1
      %v2857 = vrot.slane %v2689, 1
      %v2858 = vsel %vm511, %v2856, %v2857
      %v2859 = vrot.slane %v2786, 1
      %v2860 = vsel %vm511, %v2857, %v2859
      %v2861 = vrot.slane %v2771, 1
      %v2862 = vrot.slane %v2692, 1
      %v2863 = vsel %vm511, %v2861, %v2862
      %v2864 = vrot.slane %v2787, 1
      %v2865 = vsel %vm511, %v2862, %v2864
      %v2866 = vrot.slane %v2772, 1
      %v2867 = vrot.slane %v2695, 1
      %v2868 = vsel %vm511, %v2866, %v2867
      %v2869 = vrot.slane %v2788, 1
      %v2870 = vsel %vm511, %v2867, %v2869
      %v2871 = vrot.slane %v2773, 1
      %v2872 = vrot.slane %v2698, 1
      %v2873 = vsel %vm511, %v2871, %v2872
      %v2874 = vrot.slane %v2789, 1
      %v2875 = vsel %vm511, %v2872, %v2874
      %v2876 = vrot.slane %v2774, 1
      %v2877 = vrot.slane %v2701, 1
      %v2878 = vsel %vm511, %v2876, %v2877
      %v2879 = vrot.slane %v2790, 1
      %v2880 = vsel %vm511, %v2877, %v2879
      %v2881 = vrot.slane %v2775, 1
      %v2882 = vrot.slane %v2704, 1
      %v2883 = vsel %vm511, %v2881, %v2882
      %v2884 = vrot.slane %v2791, 1
      %v2885 = vsel %vm511, %v2882, %v2884
      %v2886 = vrot.slane %v2776, 1
      %v2887 = vrot.slane %v2707, 1
      %v2888 = vsel %vm511, %v2886, %v2887
      %v2889 = vrot.slane %v2792, 1
      %v2890 = vsel %vm511, %v2887, %v2889
      %v2891 = vrot.slane %v2777, 1
      %v2892 = vrot.slane %v2710, 1
      %v2893 = vsel %vm511, %v2891, %v2892
      %v2894 = vrot.slane %v2793, 1
      %v2895 = vsel %vm511, %v2892, %v2894
      %v2896 = vrot.slane %v2778, 1
      %v2897 = vrot.slane %v2713, 1
      %v2898 = vsel %vm511, %v2896, %v2897
      %v2899 = vrot.slane %v2794, 1
      %v2900 = vsel %vm511, %v2897, %v2899
      %2901 = vrot.lane.b32.xlu0 %v2828, 8
      %v2902 = vpop.permute.xlu0 %2901
      %2903 = vrot.lane.b32.xlu0 %v2830, 8
      %v2904 = vpop.permute.xlu0 %2903
      %2905 = vrot.lane.b32.xlu0 %v2833, 8
      %v2906 = vpop.permute.xlu0 %2905
      %2907 = vrot.lane.b32.xlu0 %v2835, 8
      %v2908 = vpop.permute.xlu0 %2907
      %2909 = vrot.lane.b32.xlu0 %v2838, 8
      %v2910 = vpop.permute.xlu0 %2909
      %2911 = vrot.lane.b32.xlu0 %v2840, 8
      %v2912 = vpop.permute.xlu0 %2911
      %2913 = vrot.lane.b32.xlu0 %v2843, 8
      %v2914 = vpop.permute.xlu0 %2913
      %2915 = vrot.lane.b32.xlu0 %v2845, 8
      %v2916 = vpop.permute.xlu0 %2915
      %2917 = vrot.lane.b32.xlu0 %v2848, 8
      %v2918 = vpop.permute.xlu0 %2917
      %2919 = vrot.lane.b32.xlu0 %v2850, 8
      %v2920 = vpop.permute.xlu0 %2919
      %2921 = vrot.lane.b32.xlu0 %v2853, 8
      %v2922 = vpop.permute.xlu0 %2921
      %2923 = vrot.lane.b32.xlu0 %v2855, 8
      %v2924 = vpop.permute.xlu0 %2923
      %2925 = vrot.lane.b32.xlu0 %v2858, 8
      %v2926 = vpop.permute.xlu0 %2925
      %2927 = vrot.lane.b32.xlu0 %v2860, 8
      %v2928 = vpop.permute.xlu0 %2927
      %2929 = vrot.lane.b32.xlu0 %v2863, 8
      %v2930 = vpop.permute.xlu0 %2929
      %2931 = vrot.lane.b32.xlu0 %v2865, 8
      %v2932 = vpop.permute.xlu0 %2931
      %2933 = vrot.lane.b32.xlu0 %v2868, 8
      %v2934 = vpop.permute.xlu0 %2933
      %2935 = vrot.lane.b32.xlu0 %v2870, 8
      %v2936 = vpop.permute.xlu0 %2935
      %2937 = vrot.lane.b32.xlu0 %v2873, 8
      %v2938 = vpop.permute.xlu0 %2937
      %2939 = vrot.lane.b32.xlu0 %v2875, 8
      %v2940 = vpop.permute.xlu0 %2939
      %2941 = vrot.lane.b32.xlu0 %v2878, 8
      %v2942 = vpop.permute.xlu0 %2941
      %2943 = vrot.lane.b32.xlu0 %v2880, 8
      %v2944 = vpop.permute.xlu0 %2943
      %2945 = vrot.lane.b32.xlu0 %v2883, 8
      %v2946 = vpop.permute.xlu0 %2945
      %2947 = vrot.lane.b32.xlu0 %v2885, 8
      %v2948 = vpop.permute.xlu0 %2947
      %2949 = vrot.lane.b32.xlu0 %v2888, 8
      %v2950 = vpop.permute.xlu0 %2949
      %2951 = vrot.lane.b32.xlu0 %v2890, 8
      %v2952 = vpop.permute.xlu0 %2951
      %2953 = vrot.lane.b32.xlu0 %v2893, 8
      %v2954 = vpop.permute.xlu0 %2953
      %2955 = vrot.lane.b32.xlu0 %v2895, 8
      %v2956 = vpop.permute.xlu0 %2955
      %2957 = vrot.lane.b32.xlu0 %v2898, 8
      %v2958 = vpop.permute.xlu0 %2957
      %2959 = vrot.lane.b32.xlu0 %v2900, 8
      %v2960 = vpop.permute.xlu0 %2959
      %v2991 = vrot.slane %v2764, 2
      %v2992 = vrot.slane %v2671, 2
      %v2993 = vsel %vm688, %v2991, %v2992
      %v2994 = vrot.slane %v2780, 2
      %v2995 = vsel %vm688, %v2992, %v2994
      %v2996 = vrot.slane %v2765, 2
      %v2997 = vrot.slane %v2674, 2
      %v2998 = vsel %vm688, %v2996, %v2997
      %v2999 = vrot.slane %v2781, 2
      %v3000 = vsel %vm688, %v2997, %v2999
      %v3001 = vrot.slane %v2766, 2
      %v3002 = vrot.slane %v2677, 2
      %v3003 = vsel %vm688, %v3001, %v3002
      %v3004 = vrot.slane %v2782, 2
      %v3005 = vsel %vm688, %v3002, %v3004
      %v3006 = vrot.slane %v2767, 2
      %v3007 = vrot.slane %v2680, 2
      %v3008 = vsel %vm688, %v3006, %v3007
      %v3009 = vrot.slane %v2783, 2
      %v3010 = vsel %vm688, %v3007, %v3009
      %v3011 = vrot.slane %v2768, 2
      %v3012 = vrot.slane %v2683, 2
      %v3013 = vsel %vm688, %v3011, %v3012
      %v3014 = vrot.slane %v2784, 2
      %v3015 = vsel %vm688, %v3012, %v3014
      %v3016 = vrot.slane %v2769, 2
      %v3017 = vrot.slane %v2686, 2
      %v3018 = vsel %vm688, %v3016, %v3017
      %v3019 = vrot.slane %v2785, 2
      %v3020 = vsel %vm688, %v3017, %v3019
      %v3021 = vrot.slane %v2770, 2
      %v3022 = vrot.slane %v2689, 2
      %v3023 = vsel %vm688, %v3021, %v3022
      %v3024 = vrot.slane %v2786, 2
      %v3025 = vsel %vm688, %v3022, %v3024
      %v3026 = vrot.slane %v2771, 2
      %v3027 = vrot.slane %v2692, 2
      %v3028 = vsel %vm688, %v3026, %v3027
      %v3029 = vrot.slane %v2787, 2
      %v3030 = vsel %vm688, %v3027, %v3029
      %v3031 = vrot.slane %v2772, 2
      %v3032 = vrot.slane %v2695, 2
      %v3033 = vsel %vm688, %v3031, %v3032
      %v3034 = vrot.slane %v2788, 2
      %v3035 = vsel %vm688, %v3032, %v3034
      %v3036 = vrot.slane %v2773, 2
      %v3037 = vrot.slane %v2698, 2
      %v3038 = vsel %vm688, %v3036, %v3037
      %v3039 = vrot.slane %v2789, 2
      %v3040 = vsel %vm688, %v3037, %v3039
      %v3041 = vrot.slane %v2774, 2
      %v3042 = vrot.slane %v2701, 2
      %v3043 = vsel %vm688, %v3041, %v3042
      %v3044 = vrot.slane %v2790, 2
      %v3045 = vsel %vm688, %v3042, %v3044
      %v3046 = vrot.slane %v2775, 2
      %v3047 = vrot.slane %v2704, 2
      %v3048 = vsel %vm688, %v3046, %v3047
      %v3049 = vrot.slane %v2791, 2
      %v3050 = vsel %vm688, %v3047, %v3049
      %v3051 = vrot.slane %v2776, 2
      %v3052 = vrot.slane %v2707, 2
      %v3053 = vsel %vm688, %v3051, %v3052
      %v3054 = vrot.slane %v2792, 2
      %v3055 = vsel %vm688, %v3052, %v3054
      %v3056 = vrot.slane %v2777, 2
      %v3057 = vrot.slane %v2710, 2
      %v3058 = vsel %vm688, %v3056, %v3057
      %v3059 = vrot.slane %v2793, 2
      %v3060 = vsel %vm688, %v3057, %v3059
      %v3061 = vrot.slane %v2778, 2
      %v3062 = vrot.slane %v2713, 2
      %v3063 = vsel %vm688, %v3061, %v3062
      %v3064 = vrot.slane %v2794, 2
      %v3065 = vsel %vm688, %v3062, %v3064
      %3066 = vrot.lane.b32.xlu0 %v2993, 16
      %v3067 = vpop.permute.xlu0 %3066
      %3068 = vrot.lane.b32.xlu0 %v2995, 16
      %v3069 = vpop.permute.xlu0 %3068
      %3070 = vrot.lane.b32.xlu0 %v2998, 16
      %v3071 = vpop.permute.xlu0 %3070
      %3072 = vrot.lane.b32.xlu0 %v3000, 16
      %v3073 = vpop.permute.xlu0 %3072
      %3074 = vrot.lane.b32.xlu0 %v3003, 16
      %v3075 = vpop.permute.xlu0 %3074
      %3076 = vrot.lane.b32.xlu0 %v3005, 16
      %v3077 = vpop.permute.xlu0 %3076
      %3078 = vrot.lane.b32.xlu0 %v3008, 16
      %v3079 = vpop.permute.xlu0 %3078
      %3080 = vrot.lane.b32.xlu0 %v3010, 16
      %v3081 = vpop.permute.xlu0 %3080
      %3082 = vrot.lane.b32.xlu0 %v3013, 16
      %v3083 = vpop.permute.xlu0 %3082
      %3084 = vrot.lane.b32.xlu0 %v3015, 16
      %v3085 = vpop.permute.xlu0 %3084
      %3086 = vrot.lane.b32.xlu0 %v3018, 16
      %v3087 = vpop.permute.xlu0 %3086
      %3088 = vrot.lane.b32.xlu0 %v3020, 16
      %v3089 = vpop.permute.xlu0 %3088
      %3090 = vrot.lane.b32.xlu0 %v3023, 16
      %v3091 = vpop.permute.xlu0 %3090
      %3092 = vrot.lane.b32.xlu0 %v3025, 16
      %v3093 = vpop.permute.xlu0 %3092
      %3094 = vrot.lane.b32.xlu0 %v3028, 16
      %v3095 = vpop.permute.xlu0 %3094
      %3096 = vrot.lane.b32.xlu0 %v3030, 16
      %v3097 = vpop.permute.xlu0 %3096
      %3098 = vrot.lane.b32.xlu0 %v3033, 16
      %v3099 = vpop.permute.xlu0 %3098
      %3100 = vrot.lane.b32.xlu0 %v3035, 16
      %v3101 = vpop.permute.xlu0 %3100
      %3102 = vrot.lane.b32.xlu0 %v3038, 16
      %v3103 = vpop.permute.xlu0 %3102
      %3104 = vrot.lane.b32.xlu0 %v3040, 16
      %v3105 = vpop.permute.xlu0 %3104
      %3106 = vrot.lane.b32.xlu0 %v3043, 16
      %v3107 = vpop.permute.xlu0 %3106
      %3108 = vrot.lane.b32.xlu0 %v3045, 16
      %v3109 = vpop.permute.xlu0 %3108
      %3110 = vrot.lane.b32.xlu0 %v3048, 16
      %v3111 = vpop.permute.xlu0 %3110
      %3112 = vrot.lane.b32.xlu0 %v3050, 16
      %v3113 = vpop.permute.xlu0 %3112
      %3114 = vrot.lane.b32.xlu0 %v3053, 16
      %v3115 = vpop.permute.xlu0 %3114
      %3116 = vrot.lane.b32.xlu0 %v3055, 16
      %v3117 = vpop.permute.xlu0 %3116
      %3118 = vrot.lane.b32.xlu0 %v3058, 16
      %v3119 = vpop.permute.xlu0 %3118
      %3120 = vrot.lane.b32.xlu0 %v3060, 16
      %v3121 = vpop.permute.xlu0 %3120
      %3122 = vrot.lane.b32.xlu0 %v3063, 16
      %v3123 = vpop.permute.xlu0 %3122
      %3124 = vrot.lane.b32.xlu0 %v3065, 16
      %v3125 = vpop.permute.xlu0 %3124
      %3157 = vrot.lane.b32.xlu0 %v2764, 24
      %v3158 = vpop.permute.xlu0 %3157
      %3159 = vrot.lane.b32.xlu0 %v2671, 24
      %v3160 = vpop.permute.xlu0 %3159
      %3161 = vrot.lane.b32.xlu0 %v2765, 24
      %v3162 = vpop.permute.xlu0 %3161
      %3163 = vrot.lane.b32.xlu0 %v2674, 24
      %v3164 = vpop.permute.xlu0 %3163
      %3165 = vrot.lane.b32.xlu0 %v2766, 24
      %v3166 = vpop.permute.xlu0 %3165
      %3167 = vrot.lane.b32.xlu0 %v2677, 24
      %v3168 = vpop.permute.xlu0 %3167
      %3169 = vrot.lane.b32.xlu0 %v2767, 24
      %v3170 = vpop.permute.xlu0 %3169
      %3171 = vrot.lane.b32.xlu0 %v2680, 24
      %v3172 = vpop.permute.xlu0 %3171
      %3173 = vrot.lane.b32.xlu0 %v2768, 24
      %v3174 = vpop.permute.xlu0 %3173
      %3175 = vrot.lane.b32.xlu0 %v2683, 24
      %v3176 = vpop.permute.xlu0 %3175
      %3177 = vrot.lane.b32.xlu0 %v2769, 24
      %v3178 = vpop.permute.xlu0 %3177
      %3179 = vrot.lane.b32.xlu0 %v2686, 24
      %v3180 = vpop.permute.xlu0 %3179
      %3181 = vrot.lane.b32.xlu0 %v2770, 24
      %v3182 = vpop.permute.xlu0 %3181
      %3183 = vrot.lane.b32.xlu0 %v2689, 24
      %v3184 = vpop.permute.xlu0 %3183
      %3185 = vrot.lane.b32.xlu0 %v2771, 24
      %v3186 = vpop.permute.xlu0 %3185
      %3187 = vrot.lane.b32.xlu0 %v2692, 24
      %v3188 = vpop.permute.xlu0 %3187
      %3189 = vrot.lane.b32.xlu0 %v2772, 24
      %v3190 = vpop.permute.xlu0 %3189
      %3191 = vrot.lane.b32.xlu0 %v2695, 24
      %v3192 = vpop.permute.xlu0 %3191
      %3193 = vrot.lane.b32.xlu0 %v2773, 24
      %v3194 = vpop.permute.xlu0 %3193
      %3195 = vrot.lane.b32.xlu0 %v2698, 24
      %v3196 = vpop.permute.xlu0 %3195
      %3197 = vrot.lane.b32.xlu0 %v2774, 24
      %v3198 = vpop.permute.xlu0 %3197
      %3199 = vrot.lane.b32.xlu0 %v2701, 24
      %v3200 = vpop.permute.xlu0 %3199
      %3201 = vrot.lane.b32.xlu0 %v2775, 24
      %v3202 = vpop.permute.xlu0 %3201
      %3203 = vrot.lane.b32.xlu0 %v2704, 24
      %v3204 = vpop.permute.xlu0 %3203
      %3205 = vrot.lane.b32.xlu0 %v2776, 24
      %v3206 = vpop.permute.xlu0 %3205
      %3207 = vrot.lane.b32.xlu0 %v2707, 24
      %v3208 = vpop.permute.xlu0 %3207
      %3209 = vrot.lane.b32.xlu0 %v2777, 24
      %v3210 = vpop.permute.xlu0 %3209
      %3211 = vrot.lane.b32.xlu0 %v2710, 24
      %v3212 = vpop.permute.xlu0 %3211
      %3213 = vrot.lane.b32.xlu0 %v2778, 24
      %v3214 = vpop.permute.xlu0 %3213
      %3215 = vrot.lane.b32.xlu0 %v2713, 24
      %v3216 = vpop.permute.xlu0 %3215
      %3217 = vrot.lane.b32.xlu0 %v2779, 24
      %v3218 = vpop.permute.xlu0 %3217
      %3219 = vrot.lane.b32.xlu0 %v2716, 24
      %v3220 = vpop.permute.xlu0 %3219
      %v3254 = vrot.slane %v2779, 1
      %v3255 = vrot.slane %v2716, 1
      %v3256 = vsel %vm511, %v3254, %v3255
      %v3257 = vrot.slane %v2795, 1
      %v3258 = vsel %vm511, %v3255, %v3257
      %3259 = vrot.lane.b32.xlu0 %v2828, 32
      %v3260 = vpop.permute.xlu0 %3259
      %3261 = vrot.lane.b32.xlu0 %v2830, 32
      %v3262 = vpop.permute.xlu0 %3261
      %3263 = vrot.lane.b32.xlu0 %v2833, 32
      %v3264 = vpop.permute.xlu0 %3263
      %3265 = vrot.lane.b32.xlu0 %v2835, 32
      %v3266 = vpop.permute.xlu0 %3265
      %3267 = vrot.lane.b32.xlu0 %v2838, 32
      %v3268 = vpop.permute.xlu0 %3267
      %3269 = vrot.lane.b32.xlu0 %v2840, 32
      %v3270 = vpop.permute.xlu0 %3269
      %3271 = vrot.lane.b32.xlu0 %v2843, 32
      %v3272 = vpop.permute.xlu0 %3271
      %3273 = vrot.lane.b32.xlu0 %v2845, 32
      %v3274 = vpop.permute.xlu0 %3273
      %3275 = vrot.lane.b32.xlu0 %v2848, 32
      %v3276 = vpop.permute.xlu0 %3275
      %3277 = vrot.lane.b32.xlu0 %v2850, 32
      %v3278 = vpop.permute.xlu0 %3277
      %3279 = vrot.lane.b32.xlu0 %v2853, 32
      %v3280 = vpop.permute.xlu0 %3279
      %3281 = vrot.lane.b32.xlu0 %v2855, 32
      %v3282 = vpop.permute.xlu0 %3281
      %3283 = vrot.lane.b32.xlu0 %v2858, 32
      %v3284 = vpop.permute.xlu0 %3283
      %3285 = vrot.lane.b32.xlu0 %v2860, 32
      %v3286 = vpop.permute.xlu0 %3285
      %3287 = vrot.lane.b32.xlu0 %v2863, 32
      %v3288 = vpop.permute.xlu0 %3287
      %3289 = vrot.lane.b32.xlu0 %v2865, 32
      %v3290 = vpop.permute.xlu0 %3289
      %3291 = vrot.lane.b32.xlu0 %v2868, 32
      %v3292 = vpop.permute.xlu0 %3291
      %3293 = vrot.lane.b32.xlu0 %v2870, 32
      %v3294 = vpop.permute.xlu0 %3293
      %3295 = vrot.lane.b32.xlu0 %v2873, 32
      %v3296 = vpop.permute.xlu0 %3295
      %3297 = vrot.lane.b32.xlu0 %v2875, 32
      %v3298 = vpop.permute.xlu0 %3297
      %3299 = vrot.lane.b32.xlu0 %v2878, 32
      %v3300 = vpop.permute.xlu0 %3299
      %3301 = vrot.lane.b32.xlu0 %v2880, 32
      %v3302 = vpop.permute.xlu0 %3301
      %3303 = vrot.lane.b32.xlu0 %v2883, 32
      %v3304 = vpop.permute.xlu0 %3303
      %3305 = vrot.lane.b32.xlu0 %v2885, 32
      %v3306 = vpop.permute.xlu0 %3305
      %3307 = vrot.lane.b32.xlu0 %v2888, 32
      %v3308 = vpop.permute.xlu0 %3307
      %3309 = vrot.lane.b32.xlu0 %v2890, 32
      %v3310 = vpop.permute.xlu0 %3309
      %3311 = vrot.lane.b32.xlu0 %v2893, 32
      %v3312 = vpop.permute.xlu0 %3311
      %3313 = vrot.lane.b32.xlu0 %v2895, 32
      %v3314 = vpop.permute.xlu0 %3313
      %3315 = vrot.lane.b32.xlu0 %v2898, 32
      %v3316 = vpop.permute.xlu0 %3315
      %3317 = vrot.lane.b32.xlu0 %v2900, 32
      %v3318 = vpop.permute.xlu0 %3317
      %3319 = vrot.lane.b32.xlu0 %v3256, 32
      %v3320 = vpop.permute.xlu0 %3319
      %3321 = vrot.lane.b32.xlu0 %v3258, 32
      %v3322 = vpop.permute.xlu0 %3321
      %v3355 = vrot.slane %v2779, 2
      %v3356 = vrot.slane %v2716, 2
      %v3357 = vsel %vm688, %v3355, %v3356
      %v3358 = vrot.slane %v2795, 2
      %v3359 = vsel %vm688, %v3356, %v3358
      %3360 = vrot.lane.b32.xlu0 %v2993, 40
      %v3361 = vpop.permute.xlu0 %3360
      %3362 = vrot.lane.b32.xlu0 %v2995, 40
      %v3363 = vpop.permute.xlu0 %3362
      %3364 = vrot.lane.b32.xlu0 %v2998, 40
      %v3365 = vpop.permute.xlu0 %3364
      %3366 = vrot.lane.b32.xlu0 %v3000, 40
      %v3367 = vpop.permute.xlu0 %3366
      %3368 = vrot.lane.b32.xlu0 %v3003, 40
      %v3369 = vpop.permute.xlu0 %3368
      %3370 = vrot.lane.b32.xlu0 %v3005, 40
      %v3371 = vpop.permute.xlu0 %3370
      %3372 = vrot.lane.b32.xlu0 %v3008, 40
      %v3373 = vpop.permute.xlu0 %3372
      %3374 = vrot.lane.b32.xlu0 %v3010, 40
      %v3375 = vpop.permute.xlu0 %3374
      %3376 = vrot.lane.b32.xlu0 %v3013, 40
      %v3377 = vpop.permute.xlu0 %3376
      %3378 = vrot.lane.b32.xlu0 %v3015, 40
      %v3379 = vpop.permute.xlu0 %3378
      %3380 = vrot.lane.b32.xlu0 %v3018, 40
      %v3381 = vpop.permute.xlu0 %3380
      %3382 = vrot.lane.b32.xlu0 %v3020, 40
      %v3383 = vpop.permute.xlu0 %3382
      %3384 = vrot.lane.b32.xlu0 %v3023, 40
      %v3385 = vpop.permute.xlu0 %3384
      %3386 = vrot.lane.b32.xlu0 %v3025, 40
      %v3387 = vpop.permute.xlu0 %3386
      %3388 = vrot.lane.b32.xlu0 %v3028, 40
      %v3389 = vpop.permute.xlu0 %3388
      %3390 = vrot.lane.b32.xlu0 %v3030, 40
      %v3391 = vpop.permute.xlu0 %3390
      %3392 = vrot.lane.b32.xlu0 %v3033, 40
      %v3393 = vpop.permute.xlu0 %3392
      %3394 = vrot.lane.b32.xlu0 %v3035, 40
      %v3395 = vpop.permute.xlu0 %3394
      %3396 = vrot.lane.b32.xlu0 %v3038, 40
      %v3397 = vpop.permute.xlu0 %3396
      %3398 = vrot.lane.b32.xlu0 %v3040, 40
      %v3399 = vpop.permute.xlu0 %3398
      %3400 = vrot.lane.b32.xlu0 %v3043, 40
      %v3401 = vpop.permute.xlu0 %3400
      %3402 = vrot.lane.b32.xlu0 %v3045, 40
      %v3403 = vpop.permute.xlu0 %3402
      %3404 = vrot.lane.b32.xlu0 %v3048, 40
      %v3405 = vpop.permute.xlu0 %3404
      %3406 = vrot.lane.b32.xlu0 %v3050, 40
      %v3407 = vpop.permute.xlu0 %3406
      %3408 = vrot.lane.b32.xlu0 %v3053, 40
      %v3409 = vpop.permute.xlu0 %3408
      %3410 = vrot.lane.b32.xlu0 %v3055, 40
      %v3411 = vpop.permute.xlu0 %3410
      %3412 = vrot.lane.b32.xlu0 %v3058, 40
      %v3413 = vpop.permute.xlu0 %3412
      %3414 = vrot.lane.b32.xlu0 %v3060, 40
      %v3415 = vpop.permute.xlu0 %3414
      %3416 = vrot.lane.b32.xlu0 %v3063, 40
      %v3417 = vpop.permute.xlu0 %3416
      %3418 = vrot.lane.b32.xlu0 %v3065, 40
      %v3419 = vpop.permute.xlu0 %3418
      %3420 = vrot.lane.b32.xlu0 %v3357, 40
      %v3421 = vpop.permute.xlu0 %3420
      %3422 = vrot.lane.b32.xlu0 %v3359, 40
      %v3423 = vpop.permute.xlu0 %3422
      %3456 = vrot.lane.b32.xlu0 %v2765, 48
      %v3457 = vpop.permute.xlu0 %3456
      %3458 = vrot.lane.b32.xlu0 %v2674, 48
      %v3459 = vpop.permute.xlu0 %3458
      %3460 = vrot.lane.b32.xlu0 %v2766, 48
      %v3461 = vpop.permute.xlu0 %3460
      %3462 = vrot.lane.b32.xlu0 %v2677, 48
      %v3463 = vpop.permute.xlu0 %3462
      %3464 = vrot.lane.b32.xlu0 %v2767, 48
      %v3465 = vpop.permute.xlu0 %3464
      %3466 = vrot.lane.b32.xlu0 %v2680, 48
      %v3467 = vpop.permute.xlu0 %3466
      %3468 = vrot.lane.b32.xlu0 %v2768, 48
      %v3469 = vpop.permute.xlu0 %3468
      %3470 = vrot.lane.b32.xlu0 %v2683, 48
      %v3471 = vpop.permute.xlu0 %3470
      %3472 = vrot.lane.b32.xlu0 %v2769, 48
      %v3473 = vpop.permute.xlu0 %3472
      %3474 = vrot.lane.b32.xlu0 %v2686, 48
      %v3475 = vpop.permute.xlu0 %3474
      %3476 = vrot.lane.b32.xlu0 %v2770, 48
      %v3477 = vpop.permute.xlu0 %3476
      %3478 = vrot.lane.b32.xlu0 %v2689, 48
      %v3479 = vpop.permute.xlu0 %3478
      %3480 = vrot.lane.b32.xlu0 %v2771, 48
      %v3481 = vpop.permute.xlu0 %3480
      %3482 = vrot.lane.b32.xlu0 %v2692, 48
      %v3483 = vpop.permute.xlu0 %3482
      %3484 = vrot.lane.b32.xlu0 %v2772, 48
      %v3485 = vpop.permute.xlu0 %3484
      %3486 = vrot.lane.b32.xlu0 %v2695, 48
      %v3487 = vpop.permute.xlu0 %3486
      %3488 = vrot.lane.b32.xlu0 %v2773, 48
      %v3489 = vpop.permute.xlu0 %3488
      %3490 = vrot.lane.b32.xlu0 %v2698, 48
      %v3491 = vpop.permute.xlu0 %3490
      %3492 = vrot.lane.b32.xlu0 %v2774, 48
      %v3493 = vpop.permute.xlu0 %3492
      %3494 = vrot.lane.b32.xlu0 %v2701, 48
      %v3495 = vpop.permute.xlu0 %3494
      %3496 = vrot.lane.b32.xlu0 %v2775, 48
      %v3497 = vpop.permute.xlu0 %3496
      %3498 = vrot.lane.b32.xlu0 %v2704, 48
      %v3499 = vpop.permute.xlu0 %3498
      %3500 = vrot.lane.b32.xlu0 %v2776, 48
      %v3501 = vpop.permute.xlu0 %3500
      %3502 = vrot.lane.b32.xlu0 %v2707, 48
      %v3503 = vpop.permute.xlu0 %3502
      %3504 = vrot.lane.b32.xlu0 %v2777, 48
      %v3505 = vpop.permute.xlu0 %3504
      %3506 = vrot.lane.b32.xlu0 %v2710, 48
      %v3507 = vpop.permute.xlu0 %3506
      %3508 = vrot.lane.b32.xlu0 %v2778, 48
      %v3509 = vpop.permute.xlu0 %3508
      %3510 = vrot.lane.b32.xlu0 %v2713, 48
      %v3511 = vpop.permute.xlu0 %3510
      %3512 = vrot.lane.b32.xlu0 %v2779, 48
      %v3513 = vpop.permute.xlu0 %3512
      %3514 = vrot.lane.b32.xlu0 %v2716, 48
      %v3515 = vpop.permute.xlu0 %3514
      %3546 = vrot.lane.b32.xlu0 %v2833, 56
      %v3547 = vpop.permute.xlu0 %3546
      %3548 = vrot.lane.b32.xlu0 %v2835, 56
      %v3549 = vpop.permute.xlu0 %3548
      %3550 = vrot.lane.b32.xlu0 %v2838, 56
      %v3551 = vpop.permute.xlu0 %3550
      %3552 = vrot.lane.b32.xlu0 %v2840, 56
      %v3553 = vpop.permute.xlu0 %3552
      %3554 = vrot.lane.b32.xlu0 %v2843, 56
      %v3555 = vpop.permute.xlu0 %3554
      %3556 = vrot.lane.b32.xlu0 %v2845, 56
      %v3557 = vpop.permute.xlu0 %3556
      %3558 = vrot.lane.b32.xlu0 %v2848, 56
      %v3559 = vpop.permute.xlu0 %3558
      %3560 = vrot.lane.b32.xlu0 %v2850, 56
      %v3561 = vpop.permute.xlu0 %3560
      %3562 = vrot.lane.b32.xlu0 %v2853, 56
      %v3563 = vpop.permute.xlu0 %3562
      %3564 = vrot.lane.b32.xlu0 %v2855, 56
      %v3565 = vpop.permute.xlu0 %3564
      %3566 = vrot.lane.b32.xlu0 %v2858, 56
      %v3567 = vpop.permute.xlu0 %3566
      %3568 = vrot.lane.b32.xlu0 %v2860, 56
      %v3569 = vpop.permute.xlu0 %3568
      %3570 = vrot.lane.b32.xlu0 %v2863, 56
      %v3571 = vpop.permute.xlu0 %3570
      %3572 = vrot.lane.b32.xlu0 %v2865, 56
      %v3573 = vpop.permute.xlu0 %3572
      %3574 = vrot.lane.b32.xlu0 %v2868, 56
      %v3575 = vpop.permute.xlu0 %3574
      %3576 = vrot.lane.b32.xlu0 %v2870, 56
      %v3577 = vpop.permute.xlu0 %3576
      %3578 = vrot.lane.b32.xlu0 %v2873, 56
      %v3579 = vpop.permute.xlu0 %3578
      %3580 = vrot.lane.b32.xlu0 %v2875, 56
      %v3581 = vpop.permute.xlu0 %3580
      %3582 = vrot.lane.b32.xlu0 %v2878, 56
      %v3583 = vpop.permute.xlu0 %3582
      %3584 = vrot.lane.b32.xlu0 %v2880, 56
      %v3585 = vpop.permute.xlu0 %3584
      %3586 = vrot.lane.b32.xlu0 %v2883, 56
      %v3587 = vpop.permute.xlu0 %3586
      %3588 = vrot.lane.b32.xlu0 %v2885, 56
      %v3589 = vpop.permute.xlu0 %3588
      %3590 = vrot.lane.b32.xlu0 %v2888, 56
      %v3591 = vpop.permute.xlu0 %3590
      %3592 = vrot.lane.b32.xlu0 %v2890, 56
      %v3593 = vpop.permute.xlu0 %3592
      %3594 = vrot.lane.b32.xlu0 %v2893, 56
      %v3595 = vpop.permute.xlu0 %3594
      %3596 = vrot.lane.b32.xlu0 %v2895, 56
      %v3597 = vpop.permute.xlu0 %3596
      %3598 = vrot.lane.b32.xlu0 %v2898, 56
      %v3599 = vpop.permute.xlu0 %3598
      %3600 = vrot.lane.b32.xlu0 %v2900, 56
      %v3601 = vpop.permute.xlu0 %3600
      %3602 = vrot.lane.b32.xlu0 %v3256, 56
      %v3603 = vpop.permute.xlu0 %3602
      %3604 = vrot.lane.b32.xlu0 %v3258, 56
      %v3605 = vpop.permute.xlu0 %3604
      %3636 = vrot.lane.b32.xlu0 %v2998, 64
      %v3637 = vpop.permute.xlu0 %3636
      %3638 = vrot.lane.b32.xlu0 %v3000, 64
      %v3639 = vpop.permute.xlu0 %3638
      %3640 = vrot.lane.b32.xlu0 %v3003, 64
      %v3641 = vpop.permute.xlu0 %3640
      %3642 = vrot.lane.b32.xlu0 %v3005, 64
      %v3643 = vpop.permute.xlu0 %3642
      %3644 = vrot.lane.b32.xlu0 %v3008, 64
      %v3645 = vpop.permute.xlu0 %3644
      %3646 = vrot.lane.b32.xlu0 %v3010, 64
      %v3647 = vpop.permute.xlu0 %3646
      %3648 = vrot.lane.b32.xlu0 %v3013, 64
      %v3649 = vpop.permute.xlu0 %3648
      %3650 = vrot.lane.b32.xlu0 %v3015, 64
      %v3651 = vpop.permute.xlu0 %3650
      %3652 = vrot.lane.b32.xlu0 %v3018, 64
      %v3653 = vpop.permute.xlu0 %3652
      %3654 = vrot.lane.b32.xlu0 %v3020, 64
      %v3655 = vpop.permute.xlu0 %3654
      %3656 = vrot.lane.b32.xlu0 %v3023, 64
      %v3657 = vpop.permute.xlu0 %3656
      %3658 = vrot.lane.b32.xlu0 %v3025, 64
      %v3659 = vpop.permute.xlu0 %3658
      %3660 = vrot.lane.b32.xlu0 %v3028, 64
      %v3661 = vpop.permute.xlu0 %3660
      %3662 = vrot.lane.b32.xlu0 %v3030, 64
      %v3663 = vpop.permute.xlu0 %3662
      %3664 = vrot.lane.b32.xlu0 %v3033, 64
      %v3665 = vpop.permute.xlu0 %3664
      %3666 = vrot.lane.b32.xlu0 %v3035, 64
      %v3667 = vpop.permute.xlu0 %3666
      %3668 = vrot.lane.b32.xlu0 %v3038, 64
      %v3669 = vpop.permute.xlu0 %3668
      %3670 = vrot.lane.b32.xlu0 %v3040, 64
      %v3671 = vpop.permute.xlu0 %3670
      %3672 = vrot.lane.b32.xlu0 %v3043, 64
      %v3673 = vpop.permute.xlu0 %3672
      %3674 = vrot.lane.b32.xlu0 %v3045, 64
      %v3675 = vpop.permute.xlu0 %3674
      %3676 = vrot.lane.b32.xlu0 %v3048, 64
      %v3677 = vpop.permute.xlu0 %3676
      %3678 = vrot.lane.b32.xlu0 %v3050, 64
      %v3679 = vpop.permute.xlu0 %3678
      %3680 = vrot.lane.b32.xlu0 %v3053, 64
      %v3681 = vpop.permute.xlu0 %3680
      %3682 = vrot.lane.b32.xlu0 %v3055, 64
      %v3683 = vpop.permute.xlu0 %3682
      %3684 = vrot.lane.b32.xlu0 %v3058, 64
      %v3685 = vpop.permute.xlu0 %3684
      %3686 = vrot.lane.b32.xlu0 %v3060, 64
      %v3687 = vpop.permute.xlu0 %3686
      %3688 = vrot.lane.b32.xlu0 %v3063, 64
      %v3689 = vpop.permute.xlu0 %3688
      %3690 = vrot.lane.b32.xlu0 %v3065, 64
      %v3691 = vpop.permute.xlu0 %3690
      %3692 = vrot.lane.b32.xlu0 %v3357, 64
      %v3693 = vpop.permute.xlu0 %3692
      %3694 = vrot.lane.b32.xlu0 %v3359, 64
      %v3695 = vpop.permute.xlu0 %3694
      %v3726 = vsel %vm1453, %v2764, %v2902
      %v3727 = vsel %vm1453, %v2671, %v2904
      %v3728 = vsel %vm1453, %v2765, %v2906
      %v3729 = vsel %vm1453, %v2674, %v2908
      %v3730 = vsel %vm1453, %v2766, %v2910
      %v3731 = vsel %vm1453, %v2677, %v2912
      %v3732 = vsel %vm1453, %v2767, %v2914
      %v3733 = vsel %vm1453, %v2680, %v2916
      %v3734 = vsel %vm1453, %v2768, %v2918
      %v3735 = vsel %vm1453, %v2683, %v2920
      %v3736 = vsel %vm1453, %v2769, %v2922
      %v3737 = vsel %vm1453, %v2686, %v2924
      %v3738 = vsel %vm1453, %v2770, %v2926
      %v3739 = vsel %vm1453, %v2689, %v2928
      %v3740 = vsel %vm1453, %v2771, %v2930
      %v3741 = vsel %vm1453, %v2692, %v2932
      %v3742 = vsel %vm1453, %v2772, %v2934
      %v3743 = vsel %vm1453, %v2695, %v2936
      %v3744 = vsel %vm1453, %v2773, %v2938
      %v3745 = vsel %vm1453, %v2698, %v2940
      %v3746 = vsel %vm1453, %v2774, %v2942
      %v3747 = vsel %vm1453, %v2701, %v2944
      %v3748 = vsel %vm1453, %v2775, %v2946
      %v3749 = vsel %vm1453, %v2704, %v2948
      %v3750 = vsel %vm1453, %v2776, %v2950
      %v3751 = vsel %vm1453, %v2707, %v2952
      %v3752 = vsel %vm1453, %v2777, %v2954
      %v3753 = vsel %vm1453, %v2710, %v2956
      %v3754 = vsel %vm1453, %v2778, %v2958
      %v3755 = vsel %vm1453, %v2713, %v2960
      %v3756 = vsel %vm1486, %v3726, %v3067
      %v3757 = vsel %vm1486, %v3727, %v3069
      %v3758 = vsel %vm1486, %v3728, %v3071
      %v3759 = vsel %vm1486, %v3729, %v3073
      %v3760 = vsel %vm1486, %v3730, %v3075
      %v3761 = vsel %vm1486, %v3731, %v3077
      %v3762 = vsel %vm1486, %v3732, %v3079
      %v3763 = vsel %vm1486, %v3733, %v3081
      %v3764 = vsel %vm1486, %v3734, %v3083
      %v3765 = vsel %vm1486, %v3735, %v3085
      %v3766 = vsel %vm1486, %v3736, %v3087
      %v3767 = vsel %vm1486, %v3737, %v3089
      %v3768 = vsel %vm1486, %v3738, %v3091
      %v3769 = vsel %vm1486, %v3739, %v3093
      %v3770 = vsel %vm1486, %v3740, %v3095
      %v3771 = vsel %vm1486, %v3741, %v3097
      %v3772 = vsel %vm1486, %v3742, %v3099
      %v3773 = vsel %vm1486, %v3743, %v3101
      %v3774 = vsel %vm1486, %v3744, %v3103
      %v3775 = vsel %vm1486, %v3745, %v3105
      %v3776 = vsel %vm1486, %v3746, %v3107
      %v3777 = vsel %vm1486, %v3747, %v3109
      %v3778 = vsel %vm1486, %v3748, %v3111
      %v3779 = vsel %vm1486, %v3749, %v3113
      %v3780 = vsel %vm1486, %v3750, %v3115
      %v3781 = vsel %vm1486, %v3751, %v3117
      %v3782 = vsel %vm1486, %v3752, %v3119
      %v3783 = vsel %vm1486, %v3753, %v3121
      %v3784 = vsel %vm1486, %v3754, %v3123
      %v3785 = vsel %vm1486, %v3755, %v3125
      %v3786 = vsel %vm1519, %v1487, %v3158
      %v3787 = vsel %vm1519, %v1488, %v3160
      %v3788 = vsel %vm1519, %v3756, %v3162
      %v3789 = vsel %vm1519, %v3757, %v3164
      %v3790 = vsel %vm1519, %v3758, %v3166
      %v3791 = vsel %vm1519, %v3759, %v3168
      %v3792 = vsel %vm1519, %v3760, %v3170
      %v3793 = vsel %vm1519, %v3761, %v3172
      %v3794 = vsel %vm1519, %v3762, %v3174
      %v3795 = vsel %vm1519, %v3763, %v3176
      %v3796 = vsel %vm1519, %v3764, %v3178
      %v3797 = vsel %vm1519, %v3765, %v3180
      %v3798 = vsel %vm1519, %v3766, %v3182
      %v3799 = vsel %vm1519, %v3767, %v3184
      %v3800 = vsel %vm1519, %v3768, %v3186
      %v3801 = vsel %vm1519, %v3769, %v3188
      %v3802 = vsel %vm1519, %v3770, %v3190
      %v3803 = vsel %vm1519, %v3771, %v3192
      %v3804 = vsel %vm1519, %v3772, %v3194
      %v3805 = vsel %vm1519, %v3773, %v3196
      %v3806 = vsel %vm1519, %v3774, %v3198
      %v3807 = vsel %vm1519, %v3775, %v3200
      %v3808 = vsel %vm1519, %v3776, %v3202
      %v3809 = vsel %vm1519, %v3777, %v3204
      %v3810 = vsel %vm1519, %v3778, %v3206
      %v3811 = vsel %vm1519, %v3779, %v3208
      %v3812 = vsel %vm1519, %v3780, %v3210
      %v3813 = vsel %vm1519, %v3781, %v3212
      %v3814 = vsel %vm1519, %v3782, %v3214
      %v3815 = vsel %vm1519, %v3783, %v3216
      %v3816 = vsel %vm1519, %v3784, %v3218
      %v3817 = vsel %vm1519, %v3785, %v3220
      %v3818 = vsel %vm1552, %v3786, %v3260
      %v3819 = vsel %vm1552, %v3787, %v3262
      %v3820 = vsel %vm1552, %v3788, %v3264
      %v3821 = vsel %vm1552, %v3789, %v3266
      %v3822 = vsel %vm1552, %v3790, %v3268
      %v3823 = vsel %vm1552, %v3791, %v3270
      %v3824 = vsel %vm1552, %v3792, %v3272
      %v3825 = vsel %vm1552, %v3793, %v3274
      %v3826 = vsel %vm1552, %v3794, %v3276
      %v3827 = vsel %vm1552, %v3795, %v3278
      %v3828 = vsel %vm1552, %v3796, %v3280
      %v3829 = vsel %vm1552, %v3797, %v3282
      %v3830 = vsel %vm1552, %v3798, %v3284
      %v3831 = vsel %vm1552, %v3799, %v3286
      %v3832 = vsel %vm1552, %v3800, %v3288
      %v3833 = vsel %vm1552, %v3801, %v3290
      %v3834 = vsel %vm1552, %v3802, %v3292
      %v3835 = vsel %vm1552, %v3803, %v3294
      %v3836 = vsel %vm1552, %v3804, %v3296
      %v3837 = vsel %vm1552, %v3805, %v3298
      %v3838 = vsel %vm1552, %v3806, %v3300
      %v3839 = vsel %vm1552, %v3807, %v3302
      %v3840 = vsel %vm1552, %v3808, %v3304
      %v3841 = vsel %vm1552, %v3809, %v3306
      %v3842 = vsel %vm1552, %v3810, %v3308
      %v3843 = vsel %vm1552, %v3811, %v3310
      %v3844 = vsel %vm1552, %v3812, %v3312
      %v3845 = vsel %vm1552, %v3813, %v3314
      %v3846 = vsel %vm1552, %v3814, %v3316
      %v3847 = vsel %vm1552, %v3815, %v3318
      %v3848 = vsel %vm1552, %v3816, %v3320
      %v3849 = vsel %vm1552, %v3817, %v3322
      %v3850 = vsel %vm1585, %v3818, %v3361
      %v3851 = vsel %vm1585, %v3819, %v3363
      %v3852 = vsel %vm1585, %v3820, %v3365
      %v3853 = vsel %vm1585, %v3821, %v3367
      %v3854 = vsel %vm1585, %v3822, %v3369
      %v3855 = vsel %vm1585, %v3823, %v3371
      %v3856 = vsel %vm1585, %v3824, %v3373
      %v3857 = vsel %vm1585, %v3825, %v3375
      %v3858 = vsel %vm1585, %v3826, %v3377
      %v3859 = vsel %vm1585, %v3827, %v3379
      %v3860 = vsel %vm1585, %v3828, %v3381
      %v3861 = vsel %vm1585, %v3829, %v3383
      %v3862 = vsel %vm1585, %v3830, %v3385
      %v3863 = vsel %vm1585, %v3831, %v3387
      %v3864 = vsel %vm1585, %v3832, %v3389
      %v3865 = vsel %vm1585, %v3833, %v3391
      %v3866 = vsel %vm1585, %v3834, %v3393
      %v3867 = vsel %vm1585, %v3835, %v3395
      %v3868 = vsel %vm1585, %v3836, %v3397
      %v3869 = vsel %vm1585, %v3837, %v3399
      %v3870 = vsel %vm1585, %v3838, %v3401
      %v3871 = vsel %vm1585, %v3839, %v3403
      %v3872 = vsel %vm1585, %v3840, %v3405
      %v3873 = vsel %vm1585, %v3841, %v3407
      %v3874 = vsel %vm1585, %v3842, %v3409
      %v3875 = vsel %vm1585, %v3843, %v3411
      %v3876 = vsel %vm1585, %v3844, %v3413
      %v3877 = vsel %vm1585, %v3845, %v3415
      %v3878 = vsel %vm1585, %v3846, %v3417
      %v3879 = vsel %vm1585, %v3847, %v3419
      %v3880 = vsel %vm1585, %v3848, %v3421
      %v3881 = vsel %vm1585, %v3849, %v3423
      %v3882 = vsel %vm1618, %v3850, %v3457
      %v3883 = vsel %vm1618, %v3851, %v3459
      %v3884 = vsel %vm1618, %v3852, %v3461
      %v3885 = vsel %vm1618, %v3853, %v3463
      %v3886 = vsel %vm1618, %v3854, %v3465
      %v3887 = vsel %vm1618, %v3855, %v3467
      %v3888 = vsel %vm1618, %v3856, %v3469
      %v3889 = vsel %vm1618, %v3857, %v3471
      %v3890 = vsel %vm1618, %v3858, %v3473
      %v3891 = vsel %vm1618, %v3859, %v3475
      %v3892 = vsel %vm1618, %v3860, %v3477
      %v3893 = vsel %vm1618, %v3861, %v3479
      %v3894 = vsel %vm1618, %v3862, %v3481
      %v3895 = vsel %vm1618, %v3863, %v3483
      %v3896 = vsel %vm1618, %v3864, %v3485
      %v3897 = vsel %vm1618, %v3865, %v3487
      %v3898 = vsel %vm1618, %v3866, %v3489
      %v3899 = vsel %vm1618, %v3867, %v3491
      %v3900 = vsel %vm1618, %v3868, %v3493
      %v3901 = vsel %vm1618, %v3869, %v3495
      %v3902 = vsel %vm1618, %v3870, %v3497
      %v3903 = vsel %vm1618, %v3871, %v3499
      %v3904 = vsel %vm1618, %v3872, %v3501
      %v3905 = vsel %vm1618, %v3873, %v3503
      %v3906 = vsel %vm1618, %v3874, %v3505
      %v3907 = vsel %vm1618, %v3875, %v3507
      %v3908 = vsel %vm1618, %v3876, %v3509
      %v3909 = vsel %vm1618, %v3877, %v3511
      %v3910 = vsel %vm1618, %v3878, %v3513
      %v3911 = vsel %vm1618, %v3879, %v3515
      %v3912 = vsel %vm1618, %v3880, %v1226
      %v3913 = vsel %vm1618, %v3881, %v1228
      %v3914 = vsel %vm1651, %v3882, %v3547
      %v3915 = vsel %vm1651, %v3883, %v3549
      %v3916 = vsel %vm1651, %v3884, %v3551
      %v3917 = vsel %vm1651, %v3885, %v3553
      %v3918 = vsel %vm1651, %v3886, %v3555
      %v3919 = vsel %vm1651, %v3887, %v3557
      %v3920 = vsel %vm1651, %v3888, %v3559
      %v3921 = vsel %vm1651, %v3889, %v3561
      %v3922 = vsel %vm1651, %v3890, %v3563
      %v3923 = vsel %vm1651, %v3891, %v3565
      %v3924 = vsel %vm1651, %v3892, %v3567
      %v3925 = vsel %vm1651, %v3893, %v3569
      %v3926 = vsel %vm1651, %v3894, %v3571
      %v3927 = vsel %vm1651, %v3895, %v3573
      %v3928 = vsel %vm1651, %v3896, %v3575
      %v3929 = vsel %vm1651, %v3897, %v3577
      %v3930 = vsel %vm1651, %v3898, %v3579
      %v3931 = vsel %vm1651, %v3899, %v3581
      %v3932 = vsel %vm1651, %v3900, %v3583
      %v3933 = vsel %vm1651, %v3901, %v3585
      %v3934 = vsel %vm1651, %v3902, %v3587
      %v3935 = vsel %vm1651, %v3903, %v3589
      %v3936 = vsel %vm1651, %v3904, %v3591
      %v3937 = vsel %vm1651, %v3905, %v3593
      %v3938 = vsel %vm1651, %v3906, %v3595
      %v3939 = vsel %vm1651, %v3907, %v3597
      %v3940 = vsel %vm1651, %v3908, %v3599
      %v3941 = vsel %vm1651, %v3909, %v3601
      %v3942 = vsel %vm1651, %v3910, %v3603
      %v3943 = vsel %vm1651, %v3911, %v3605
      %v3944 = vsel %vm1651, %v3912, %v1322
      %v3945 = vsel %vm1651, %v3913, %v1324
      %v3946 = vsel %vm1684, %v3914, %v3637
      %v3947 = vsel %vm1684, %v3915, %v3639
      %v3948 = vsel %vm1684, %v3916, %v3641
      %v3949 = vsel %vm1684, %v3917, %v3643
      %v3950 = vsel %vm1684, %v3918, %v3645
      %v3951 = vsel %vm1684, %v3919, %v3647
      %v3952 = vsel %vm1684, %v3920, %v3649
      %v3953 = vsel %vm1684, %v3921, %v3651
      %v3954 = vsel %vm1684, %v3922, %v3653
      %v3955 = vsel %vm1684, %v3923, %v3655
      %v3956 = vsel %vm1684, %v3924, %v3657
      %v3957 = vsel %vm1684, %v3925, %v3659
      %v3958 = vsel %vm1684, %v3926, %v3661
      %v3959 = vsel %vm1684, %v3927, %v3663
      %v3960 = vsel %vm1684, %v3928, %v3665
      %v3961 = vsel %vm1684, %v3929, %v3667
      %v3962 = vsel %vm1684, %v3930, %v3669
      %v3963 = vsel %vm1684, %v3931, %v3671
      %v3964 = vsel %vm1684, %v3932, %v3673
      %v3965 = vsel %vm1684, %v3933, %v3675
      %v3966 = vsel %vm1684, %v3934, %v3677
      %v3967 = vsel %vm1684, %v3935, %v3679
      %v3968 = vsel %vm1684, %v3936, %v3681
      %v3969 = vsel %vm1684, %v3937, %v3683
      %v3970 = vsel %vm1684, %v3938, %v3685
      %v3971 = vsel %vm1684, %v3939, %v3687
      %v3972 = vsel %vm1684, %v3940, %v3689
      %v3973 = vsel %vm1684, %v3941, %v3691
      %v3974 = vsel %vm1684, %v3942, %v3693
      %v3975 = vsel %vm1684, %v3943, %v3695
      %v3976 = vsel %vm1684, %v3944, %v1418
      %v3977 = vsel %vm1684, %v3945, %v1420
      %v3978 = vpack.c.bf16 %v3947, %v3946
      %v3979 = vpack.c.bf16 %v3949, %v3948
      %v3980 = vpack.c.bf16 %v3951, %v3950
      %v3981 = vpack.c.bf16 %v3953, %v3952
      %v3982 = vpack.c.bf16 %v3955, %v3954
      %v3983 = vpack.c.bf16 %v3957, %v3956
      %v3984 = vpack.c.bf16 %v3959, %v3958
      %v3985 = vpack.c.bf16 %v3961, %v3960
      %v3986 = vpack.c.bf16 %v3963, %v3962
      %v3987 = vpack.c.bf16 %v3965, %v3964
      %v3988 = vpack.c.bf16 %v3967, %v3966
      %v3989 = vpack.c.bf16 %v3969, %v3968
      %v3990 = vpack.c.bf16 %v3971, %v3970
      %v3991 = vpack.c.bf16 %v3973, %v3972
      %v3992 = vpack.c.bf16 %v3975, %v3974
      %v3993 = vpack.c.bf16 %v3977, %v3976
      %v3994 = vld [vmem:[%s4] sm:$0xf]
      %v3995 = vld [vmem:[%s4 + $0x4] sm:$0xf]
      %v3996 = vld [vmem:[%s4 + $0x8] sm:$0xf]
      %v3997 = vld [vmem:[%s4 + $0xc] sm:$0xf]
      %v3998 = vld [vmem:[%s4 + $0x10] sm:$0xf]
      %v3999 = vld [vmem:[%s4 + $0x14] sm:$0xf]
      %v4000 = vld [vmem:[%s4 + $0x18] sm:$0xf]
      %v4001 = vld [vmem:[%s4 + $0x1c] sm:$0xf]
      %v4002 = vld [vmem:[%s4 + $0x20] sm:$0xf]
      %v4012 = vunpack.c.l.b16 %v3994
      %v4013 = vunpack.c.l.b16 %v3995
      %v4014 = vunpack.c.l.b16 %v3996
      %v4015 = vunpack.c.l.b16 %v3997
      %v4016 = vunpack.c.l.b16 %v3998
      %v4017 = vunpack.c.l.b16 %v3999
      %v4018 = vunpack.c.l.b16 %v4000
      %v4019 = vunpack.c.l.b16 %v4001
      %v4020 = vunpack.c.l.b16 %v4002
      %v4021 = vpack.c.b16 %v4013, %v4012
      %v4022 = vpack.c.b16 %v4015, %v4014
      %v4023 = vpack.c.b16 %v4017, %v4016
      %v4024 = vpack.c.b16 %v4019, %v4018
      %v4025 = vpack.c.b16 %v4020, %v4020
      %v4031 = vsel %vm1769, %v3978, 0
      %v4034 = vsel %vm1769, %v3979, 0
      %v4037 = vsel %vm1769, %v3980, 0
      %v4040 = vsel %vm1769, %v3981, 0
      %v4043 = vsel %vm1769, %v3982, 0
      %v4046 = vsel %vm1769, %v3983, 0
      %v4049 = vsel %vm1769, %v3984, 0
      %v4052 = vsel %vm1769, %v3985, 0
      %v4055 = vsel %vm1769, %v3986, 0
      %v4058 = vsel %vm1769, %v3987, 0
      %v4061 = vsel %vm1769, %v3988, 0
      %v4064 = vsel %vm1769, %v3989, 0
      %v4067 = vsel %vm1769, %v3990, 0
      %v4070 = vsel %vm1769, %v3991, 0
      %v4073 = vsel %vm1769, %v3992, 0
      %v4076 = vsel %vm1769, %v3993, 0
      %v4079 = vsel %vm1818, %v4025, 0
      %4081 = vmatpush.bf16.msra.mxu0 0
      %4082 = vmatpush.bf16.msra.mxu0 0
      %4083 = vmatpush.bf16.msra.mxu0 0
      %4084 = vmatpush.bf16.msra.mxu0 %v4079
      %4085 = vmatpush.bf16.msra.mxu0 %v4024
      %4086 = vmatpush.bf16.msra.mxu0 %v4023
      %4087 = vmatpush.bf16.msra.mxu0 %v4022
      %4088 = vmatpush.bf16.msra.mxu0 %v4021
      %4089 = vmatmul.bf16.gmra.mxu0 %v4031
      %v4090 = vpop.f32.mrf.mxu0
      %v4091 = vadd.f32 0.0, %v4090
      %v4092 = vpop.f32.mrf.mxu0
      %v4093 = vadd.f32 0.0, %v4092
      %4094 = vmatmul.bf16.gmra.mxu0 %v4034
      %v4095 = vpop.f32.mrf.mxu0
      %v4096 = vadd.f32 0.0, %v4095
      %v4097 = vpop.f32.mrf.mxu0
      %v4098 = vadd.f32 0.0, %v4097
      %4099 = vmatmul.bf16.gmra.mxu0 %v4037
      %v4100 = vpop.f32.mrf.mxu0
      %v4101 = vadd.f32 0.0, %v4100
      %v4102 = vpop.f32.mrf.mxu0
      %v4103 = vadd.f32 0.0, %v4102
      %4104 = vmatmul.bf16.gmra.mxu0 %v4040
      %v4105 = vpop.f32.mrf.mxu0
      %v4106 = vadd.f32 0.0, %v4105
      %v4107 = vpop.f32.mrf.mxu0
      %v4108 = vadd.f32 0.0, %v4107
      %4109 = vmatmul.bf16.gmra.mxu0 %v4043
      %v4110 = vpop.f32.mrf.mxu0
      %v4111 = vadd.f32 0.0, %v4110
      %v4112 = vpop.f32.mrf.mxu0
      %v4113 = vadd.f32 0.0, %v4112
      %4114 = vmatmul.bf16.gmra.mxu0 %v4046
      %v4115 = vpop.f32.mrf.mxu0
      %v4116 = vadd.f32 0.0, %v4115
      %v4117 = vpop.f32.mrf.mxu0
      %v4118 = vadd.f32 0.0, %v4117
      %4119 = vmatmul.bf16.gmra.mxu0 %v4049
      %v4120 = vpop.f32.mrf.mxu0
      %v4121 = vadd.f32 0.0, %v4120
      %v4122 = vpop.f32.mrf.mxu0
      %v4123 = vadd.f32 0.0, %v4122
      %4124 = vmatmul.bf16.gmra.mxu0 %v4052
      %v4125 = vpop.f32.mrf.mxu0
      %v4126 = vadd.f32 0.0, %v4125
      %v4127 = vpop.f32.mrf.mxu0
      %v4128 = vadd.f32 0.0, %v4127
      %4129 = vmatmul.bf16.gmra.mxu0 %v4055
      %v4130 = vpop.f32.mrf.mxu0
      %v4131 = vadd.f32 0.0, %v4130
      %v4132 = vpop.f32.mrf.mxu0
      %v4133 = vadd.f32 0.0, %v4132
      %4134 = vmatmul.bf16.gmra.mxu0 %v4058
      %v4135 = vpop.f32.mrf.mxu0
      %v4136 = vadd.f32 0.0, %v4135
      %v4137 = vpop.f32.mrf.mxu0
      %v4138 = vadd.f32 0.0, %v4137
      %4139 = vmatmul.bf16.gmra.mxu0 %v4061
      %v4140 = vpop.f32.mrf.mxu0
      %v4141 = vadd.f32 0.0, %v4140
      %v4142 = vpop.f32.mrf.mxu0
      %v4143 = vadd.f32 0.0, %v4142
      %4144 = vmatmul.bf16.gmra.mxu0 %v4064
      %v4145 = vpop.f32.mrf.mxu0
      %v4146 = vadd.f32 0.0, %v4145
      %v4147 = vpop.f32.mrf.mxu0
      %v4148 = vadd.f32 0.0, %v4147
      %4149 = vmatmul.bf16.gmra.mxu0 %v4067
      %v4150 = vpop.f32.mrf.mxu0
      %v4151 = vadd.f32 0.0, %v4150
      %v4152 = vpop.f32.mrf.mxu0
      %v4153 = vadd.f32 0.0, %v4152
      %4154 = vmatmul.bf16.gmra.mxu0 %v4070
      %v4155 = vpop.f32.mrf.mxu0
      %v4156 = vadd.f32 0.0, %v4155
      %v4157 = vpop.f32.mrf.mxu0
      %v4158 = vadd.f32 0.0, %v4157
      %4159 = vmatmul.bf16.gmra.mxu0 %v4073
      %v4160 = vpop.f32.mrf.mxu0
      %v4161 = vadd.f32 0.0, %v4160
      %v4162 = vpop.f32.mrf.mxu0
      %v4163 = vadd.f32 0.0, %v4162
      %4164 = vmatmul.bf16.gmra.mxu0 %v4076
      %v4165 = vpop.f32.mrf.mxu0
      %v4166 = vadd.f32 0.0, %v4165
      %v4167 = vpop.f32.mrf.mxu0
      %v4168 = vadd.f32 0.0, %v4167
      %4169 = vdwg.mxu0
      %v4170 = vld [vmem:[%s5] sm:$0x1]
      %v4171 = vld [vmem:[%s6] sm:$0x1]
      %v4172 = vsel %vm1915, %v4091, 0.0
      %v4173 = vsel %vm1915, %v4093, 0.0
      %v4174 = vadd.f32 %v4172, %v4173
      %v4175 = vsel %vm1915, %v4096, 0.0
      %v4176 = vadd.f32 %v4174, %v4175
      %v4177 = vsel %vm1915, %v4098, 0.0
      %v4178 = vadd.f32 %v4176, %v4177
      %v4179 = vsel %vm1915, %v4101, 0.0
      %v4180 = vadd.f32 %v4178, %v4179
      %v4181 = vsel %vm1915, %v4103, 0.0
      %v4182 = vadd.f32 %v4180, %v4181
      %v4183 = vsel %vm1915, %v4106, 0.0
      %v4184 = vadd.f32 %v4182, %v4183
      %v4185 = vsel %vm1915, %v4108, 0.0
      %v4186 = vadd.f32 %v4184, %v4185
      %v4187 = vsel %vm1915, %v4111, 0.0
      %v4188 = vadd.f32 %v4186, %v4187
      %v4189 = vsel %vm1915, %v4113, 0.0
      %v4190 = vadd.f32 %v4188, %v4189
      %v4191 = vsel %vm1915, %v4116, 0.0
      %v4192 = vadd.f32 %v4190, %v4191
      %v4193 = vsel %vm1915, %v4118, 0.0
      %v4194 = vadd.f32 %v4192, %v4193
      %v4195 = vsel %vm1915, %v4121, 0.0
      %v4196 = vadd.f32 %v4194, %v4195
      %v4197 = vsel %vm1915, %v4123, 0.0
      %v4198 = vadd.f32 %v4196, %v4197
      %v4199 = vsel %vm1915, %v4126, 0.0
      %v4200 = vadd.f32 %v4198, %v4199
      %v4201 = vsel %vm1915, %v4128, 0.0
      %v4202 = vadd.f32 %v4200, %v4201
      %v4203 = vsel %vm1915, %v4131, 0.0
      %v4204 = vadd.f32 %v4202, %v4203
      %v4205 = vsel %vm1915, %v4133, 0.0
      %v4206 = vadd.f32 %v4204, %v4205
      %v4207 = vsel %vm1915, %v4136, 0.0
      %v4208 = vadd.f32 %v4206, %v4207
      %v4209 = vsel %vm1915, %v4138, 0.0
      %v4210 = vadd.f32 %v4208, %v4209
      %v4211 = vsel %vm1915, %v4141, 0.0
      %v4212 = vadd.f32 %v4210, %v4211
      %v4213 = vsel %vm1915, %v4143, 0.0
      %v4214 = vadd.f32 %v4212, %v4213
      %v4215 = vsel %vm1915, %v4146, 0.0
      %v4216 = vadd.f32 %v4214, %v4215
      %v4217 = vsel %vm1915, %v4148, 0.0
      %v4218 = vadd.f32 %v4216, %v4217
      %v4219 = vsel %vm1915, %v4151, 0.0
      %v4220 = vadd.f32 %v4218, %v4219
      %v4221 = vsel %vm1915, %v4153, 0.0
      %v4222 = vadd.f32 %v4220, %v4221
      %v4223 = vsel %vm1915, %v4156, 0.0
      %v4224 = vadd.f32 %v4222, %v4223
      %v4225 = vsel %vm1915, %v4158, 0.0
      %v4226 = vadd.f32 %v4224, %v4225
      %v4227 = vsel %vm1915, %v4161, 0.0
      %v4228 = vadd.f32 %v4226, %v4227
      %v4229 = vsel %vm1915, %v4163, 0.0
      %v4230 = vadd.f32 %v4228, %v4229
      %v4231 = vsel %vm1915, %v4166, 0.0
      %v4232 = vadd.f32 %v4230, %v4231
      %v4233 = vsel %vm1915, %v4168, 0.0
      %v4234 = vadd.f32 %v4232, %v4233
      %4235 = vadd.xlane.f32.xlu0 %v4234
      %v4236 = vpop.xlane.xlu0 %4235
      %v4237 = vrot.slane %v4236, 4
      %v4238 = vadd.f32 %v4236, %v4237
      %v4239 = vrot.slane %v4238, 2
      %v4240 = vadd.f32 %v4238, %v4239
      %v4241 = vrot.slane %v4240, 1
      %v4242 = vadd.f32 %v4240, %v4241
      %s4243 = vtos %v4242
      %v4244 = vstv %s4243
      %v4245 = vmul.f32 %v4244, %v1995
      %v4246 = vmul.f32 %v4091, %v4091
      %v4247 = vmul.f32 %v4093, %v4093
      %v4248 = vmul.f32 %v4096, %v4096
      %v4249 = vmul.f32 %v4098, %v4098
      %v4250 = vmul.f32 %v4101, %v4101
      %v4251 = vmul.f32 %v4103, %v4103
      %v4252 = vmul.f32 %v4106, %v4106
      %v4253 = vmul.f32 %v4108, %v4108
      %v4254 = vmul.f32 %v4111, %v4111
      %v4255 = vmul.f32 %v4113, %v4113
      %v4256 = vmul.f32 %v4116, %v4116
      %v4257 = vmul.f32 %v4118, %v4118
      %v4258 = vmul.f32 %v4121, %v4121
      %v4259 = vmul.f32 %v4123, %v4123
      %v4260 = vmul.f32 %v4126, %v4126
      %v4261 = vmul.f32 %v4128, %v4128
      %v4262 = vmul.f32 %v4131, %v4131
      %v4263 = vmul.f32 %v4133, %v4133
      %v4264 = vmul.f32 %v4136, %v4136
      %v4265 = vmul.f32 %v4138, %v4138
      %v4266 = vmul.f32 %v4141, %v4141
      %v4267 = vmul.f32 %v4143, %v4143
      %v4268 = vmul.f32 %v4146, %v4146
      %v4269 = vmul.f32 %v4148, %v4148
      %v4270 = vmul.f32 %v4151, %v4151
      %v4271 = vmul.f32 %v4153, %v4153
      %v4272 = vmul.f32 %v4156, %v4156
      %v4273 = vmul.f32 %v4158, %v4158
      %v4274 = vmul.f32 %v4161, %v4161
      %v4275 = vmul.f32 %v4163, %v4163
      %v4276 = vmul.f32 %v4166, %v4166
      %v4277 = vmul.f32 %v4168, %v4168
      %v4278 = vsel %vm1915, %v4246, 0.0
      %v4279 = vsel %vm1915, %v4247, 0.0
      %v4280 = vadd.f32 %v4278, %v4279
      %v4281 = vsel %vm1915, %v4248, 0.0
      %v4282 = vadd.f32 %v4280, %v4281
      %v4283 = vsel %vm1915, %v4249, 0.0
      %v4284 = vadd.f32 %v4282, %v4283
      %v4285 = vsel %vm1915, %v4250, 0.0
      %v4286 = vadd.f32 %v4284, %v4285
      %v4287 = vsel %vm1915, %v4251, 0.0
      %v4288 = vadd.f32 %v4286, %v4287
      %v4289 = vsel %vm1915, %v4252, 0.0
      %v4290 = vadd.f32 %v4288, %v4289
      %v4291 = vsel %vm1915, %v4253, 0.0
      %v4292 = vadd.f32 %v4290, %v4291
      %v4293 = vsel %vm1915, %v4254, 0.0
      %v4294 = vadd.f32 %v4292, %v4293
      %v4295 = vsel %vm1915, %v4255, 0.0
      %v4296 = vadd.f32 %v4294, %v4295
      %v4297 = vsel %vm1915, %v4256, 0.0
      %v4298 = vadd.f32 %v4296, %v4297
      %v4299 = vsel %vm1915, %v4257, 0.0
      %v4300 = vadd.f32 %v4298, %v4299
      %v4301 = vsel %vm1915, %v4258, 0.0
      %v4302 = vadd.f32 %v4300, %v4301
      %v4303 = vsel %vm1915, %v4259, 0.0
      %v4304 = vadd.f32 %v4302, %v4303
      %v4305 = vsel %vm1915, %v4260, 0.0
      %v4306 = vadd.f32 %v4304, %v4305
      %v4307 = vsel %vm1915, %v4261, 0.0
      %v4308 = vadd.f32 %v4306, %v4307
      %v4309 = vsel %vm1915, %v4262, 0.0
      %v4310 = vadd.f32 %v4308, %v4309
      %v4311 = vsel %vm1915, %v4263, 0.0
      %v4312 = vadd.f32 %v4310, %v4311
      %v4313 = vsel %vm1915, %v4264, 0.0
      %v4314 = vadd.f32 %v4312, %v4313
      %v4315 = vsel %vm1915, %v4265, 0.0
      %v4316 = vadd.f32 %v4314, %v4315
      %v4317 = vsel %vm1915, %v4266, 0.0
      %v4318 = vadd.f32 %v4316, %v4317
      %v4319 = vsel %vm1915, %v4267, 0.0
      %v4320 = vadd.f32 %v4318, %v4319
      %v4321 = vsel %vm1915, %v4268, 0.0
      %v4322 = vadd.f32 %v4320, %v4321
      %v4323 = vsel %vm1915, %v4269, 0.0
      %v4324 = vadd.f32 %v4322, %v4323
      %v4325 = vsel %vm1915, %v4270, 0.0
      %v4326 = vadd.f32 %v4324, %v4325
      %v4327 = vsel %vm1915, %v4271, 0.0
      %v4328 = vadd.f32 %v4326, %v4327
      %v4329 = vsel %vm1915, %v4272, 0.0
      %v4330 = vadd.f32 %v4328, %v4329
      %v4331 = vsel %vm1915, %v4273, 0.0
      %v4332 = vadd.f32 %v4330, %v4331
      %v4333 = vsel %vm1915, %v4274, 0.0
      %v4334 = vadd.f32 %v4332, %v4333
      %v4335 = vsel %vm1915, %v4275, 0.0
      %v4336 = vadd.f32 %v4334, %v4335
      %v4337 = vsel %vm1915, %v4276, 0.0
      %v4338 = vadd.f32 %v4336, %v4337
      %v4339 = vsel %vm1915, %v4277, 0.0
      %v4340 = vadd.f32 %v4338, %v4339
      %4341 = vadd.xlane.f32.xlu0 %v4340
      %v4342 = vpop.xlane.xlu0 %4341
      %v4343 = vrot.slane %v4342, 4
      %v4344 = vadd.f32 %v4342, %v4343
      %v4345 = vrot.slane %v4344, 2
      %v4346 = vadd.f32 %v4344, %v4345
      %v4347 = vrot.slane %v4346, 1
      %v4348 = vadd.f32 %v4346, %v4347
      %s4349 = vtos %v4348
      %v4350 = vstv %s4349
      %v4351 = vmul.f32 %v4350, %v1995
      %v4352 = vmul.f32 %v4245, %v4245
      %v4353 = vsub.f32 %v4351, %v4352
      %v4354 = vsel %vm2107, %v4245, 0.0
      %v4355 = vsel %vm2107, %v4353, 0.0
      %4388 = vrot.lane.b32.xlu0 %v4091, 124
      %v4389 = vpop.permute.xlu0 %4388
      %4390 = vrot.lane.b32.xlu0 %v4093, 124
      %v4391 = vpop.permute.xlu0 %4390
      %4392 = vrot.lane.b32.xlu0 %v4096, 124
      %v4393 = vpop.permute.xlu0 %4392
      %4394 = vrot.lane.b32.xlu0 %v4098, 124
      %v4395 = vpop.permute.xlu0 %4394
      %4396 = vrot.lane.b32.xlu0 %v4101, 124
      %v4397 = vpop.permute.xlu0 %4396
      %4398 = vrot.lane.b32.xlu0 %v4103, 124
      %v4399 = vpop.permute.xlu0 %4398
      %4400 = vrot.lane.b32.xlu0 %v4106, 124
      %v4401 = vpop.permute.xlu0 %4400
      %4402 = vrot.lane.b32.xlu0 %v4108, 124
      %v4403 = vpop.permute.xlu0 %4402
      %4404 = vrot.lane.b32.xlu0 %v4111, 124
      %v4405 = vpop.permute.xlu0 %4404
      %4406 = vrot.lane.b32.xlu0 %v4113, 124
      %v4407 = vpop.permute.xlu0 %4406
      %4408 = vrot.lane.b32.xlu0 %v4116, 124
      %v4409 = vpop.permute.xlu0 %4408
      %4410 = vrot.lane.b32.xlu0 %v4118, 124
      %v4411 = vpop.permute.xlu0 %4410
      %4412 = vrot.lane.b32.xlu0 %v4121, 124
      %v4413 = vpop.permute.xlu0 %4412
      %4414 = vrot.lane.b32.xlu0 %v4123, 124
      %v4415 = vpop.permute.xlu0 %4414
      %4416 = vrot.lane.b32.xlu0 %v4126, 124
      %v4417 = vpop.permute.xlu0 %4416
      %4418 = vrot.lane.b32.xlu0 %v4128, 124
      %v4419 = vpop.permute.xlu0 %4418
      %4420 = vrot.lane.b32.xlu0 %v4131, 124
      %v4421 = vpop.permute.xlu0 %4420
      %4422 = vrot.lane.b32.xlu0 %v4133, 124
      %v4423 = vpop.permute.xlu0 %4422
      %4424 = vrot.lane.b32.xlu0 %v4136, 124
      %v4425 = vpop.permute.xlu0 %4424
      %4426 = vrot.lane.b32.xlu0 %v4138, 124
      %v4427 = vpop.permute.xlu0 %4426
      %4428 = vrot.lane.b32.xlu0 %v4141, 124
      %v4429 = vpop.permute.xlu0 %4428
      %4430 = vrot.lane.b32.xlu0 %v4143, 124
      %v4431 = vpop.permute.xlu0 %4430
      %4432 = vrot.lane.b32.xlu0 %v4146, 124
      %v4433 = vpop.permute.xlu0 %4432
      %4434 = vrot.lane.b32.xlu0 %v4148, 124
      %v4435 = vpop.permute.xlu0 %4434
      %4436 = vrot.lane.b32.xlu0 %v4151, 124
      %v4437 = vpop.permute.xlu0 %4436
      %4438 = vrot.lane.b32.xlu0 %v4153, 124
      %v4439 = vpop.permute.xlu0 %4438
      %4440 = vrot.lane.b32.xlu0 %v4156, 124
      %v4441 = vpop.permute.xlu0 %4440
      %4442 = vrot.lane.b32.xlu0 %v4158, 124
      %v4443 = vpop.permute.xlu0 %4442
      %4444 = vrot.lane.b32.xlu0 %v4161, 124
      %v4445 = vpop.permute.xlu0 %4444
      %4446 = vrot.lane.b32.xlu0 %v4163, 124
      %v4447 = vpop.permute.xlu0 %4446
      %4448 = vrot.lane.b32.xlu0 %v4166, 124
      %v4449 = vpop.permute.xlu0 %4448
      %4450 = vrot.lane.b32.xlu0 %v4168, 124
      %v4451 = vpop.permute.xlu0 %4450
      %v4484 = vsel %vm1915, %v4389, 0.0
      %v4485 = vsel %vm1915, %v4391, 0.0
      %v4486 = vadd.f32 %v4484, %v4485
      %v4487 = vsel %vm1915, %v4393, 0.0
      %v4488 = vadd.f32 %v4486, %v4487
      %v4489 = vsel %vm1915, %v4395, 0.0
      %v4490 = vadd.f32 %v4488, %v4489
      %v4491 = vsel %vm1915, %v4397, 0.0
      %v4492 = vadd.f32 %v4490, %v4491
      %v4493 = vsel %vm1915, %v4399, 0.0
      %v4494 = vadd.f32 %v4492, %v4493
      %v4495 = vsel %vm1915, %v4401, 0.0
      %v4496 = vadd.f32 %v4494, %v4495
      %v4497 = vsel %vm1915, %v4403, 0.0
      %v4498 = vadd.f32 %v4496, %v4497
      %v4499 = vsel %vm1915, %v4405, 0.0
      %v4500 = vadd.f32 %v4498, %v4499
      %v4501 = vsel %vm1915, %v4407, 0.0
      %v4502 = vadd.f32 %v4500, %v4501
      %v4503 = vsel %vm1915, %v4409, 0.0
      %v4504 = vadd.f32 %v4502, %v4503
      %v4505 = vsel %vm1915, %v4411, 0.0
      %v4506 = vadd.f32 %v4504, %v4505
      %v4507 = vsel %vm1915, %v4413, 0.0
      %v4508 = vadd.f32 %v4506, %v4507
      %v4509 = vsel %vm1915, %v4415, 0.0
      %v4510 = vadd.f32 %v4508, %v4509
      %v4511 = vsel %vm1915, %v4417, 0.0
      %v4512 = vadd.f32 %v4510, %v4511
      %v4513 = vsel %vm1915, %v4419, 0.0
      %v4514 = vadd.f32 %v4512, %v4513
      %v4515 = vsel %vm1915, %v4421, 0.0
      %v4516 = vadd.f32 %v4514, %v4515
      %v4517 = vsel %vm1915, %v4423, 0.0
      %v4518 = vadd.f32 %v4516, %v4517
      %v4519 = vsel %vm1915, %v4425, 0.0
      %v4520 = vadd.f32 %v4518, %v4519
      %v4521 = vsel %vm1915, %v4427, 0.0
      %v4522 = vadd.f32 %v4520, %v4521
      %v4523 = vsel %vm1915, %v4429, 0.0
      %v4524 = vadd.f32 %v4522, %v4523
      %v4525 = vsel %vm1915, %v4431, 0.0
      %v4526 = vadd.f32 %v4524, %v4525
      %v4527 = vsel %vm1915, %v4433, 0.0
      %v4528 = vadd.f32 %v4526, %v4527
      %v4529 = vsel %vm1915, %v4435, 0.0
      %v4530 = vadd.f32 %v4528, %v4529
      %v4531 = vsel %vm1915, %v4437, 0.0
      %v4532 = vadd.f32 %v4530, %v4531
      %v4533 = vsel %vm1915, %v4439, 0.0
      %v4534 = vadd.f32 %v4532, %v4533
      %v4535 = vsel %vm1915, %v4441, 0.0
      %v4536 = vadd.f32 %v4534, %v4535
      %v4537 = vsel %vm1915, %v4443, 0.0
      %v4538 = vadd.f32 %v4536, %v4537
      %v4539 = vsel %vm1915, %v4445, 0.0
      %v4540 = vadd.f32 %v4538, %v4539
      %v4541 = vsel %vm1915, %v4447, 0.0
      %v4542 = vadd.f32 %v4540, %v4541
      %v4543 = vsel %vm1915, %v4449, 0.0
      %v4544 = vadd.f32 %v4542, %v4543
      %v4545 = vsel %vm1915, %v4451, 0.0
      %v4546 = vadd.f32 %v4544, %v4545
      %4547 = vadd.xlane.f32.xlu0 %v4546
      %v4548 = vpop.xlane.xlu0 %4547
      %v4549 = vrot.slane %v4548, 4
      %v4550 = vadd.f32 %v4548, %v4549
      %v4551 = vrot.slane %v4550, 2
      %v4552 = vadd.f32 %v4550, %v4551
      %v4553 = vrot.slane %v4552, 1
      %v4554 = vadd.f32 %v4552, %v4553
      %s4555 = vtos %v4554
      %v4556 = vstv %s4555
      %v4557 = vmul.f32 %v4556, %v1995
      %4590 = vrot.lane.b32.xlu0 %v4246, 124
      %v4591 = vpop.permute.xlu0 %4590
      %4592 = vrot.lane.b32.xlu0 %v4247, 124
      %v4593 = vpop.permute.xlu0 %4592
      %4594 = vrot.lane.b32.xlu0 %v4248, 124
      %v4595 = vpop.permute.xlu0 %4594
      %4596 = vrot.lane.b32.xlu0 %v4249, 124
      %v4597 = vpop.permute.xlu0 %4596
      %4598 = vrot.lane.b32.xlu0 %v4250, 124
      %v4599 = vpop.permute.xlu0 %4598
      %4600 = vrot.lane.b32.xlu0 %v4251, 124
      %v4601 = vpop.permute.xlu0 %4600
      %4602 = vrot.lane.b32.xlu0 %v4252, 124
      %v4603 = vpop.permute.xlu0 %4602
      %4604 = vrot.lane.b32.xlu0 %v4253, 124
      %v4605 = vpop.permute.xlu0 %4604
      %4606 = vrot.lane.b32.xlu0 %v4254, 124
      %v4607 = vpop.permute.xlu0 %4606
      %4608 = vrot.lane.b32.xlu0 %v4255, 124
      %v4609 = vpop.permute.xlu0 %4608
      %4610 = vrot.lane.b32.xlu0 %v4256, 124
      %v4611 = vpop.permute.xlu0 %4610
      %4612 = vrot.lane.b32.xlu0 %v4257, 124
      %v4613 = vpop.permute.xlu0 %4612
      %4614 = vrot.lane.b32.xlu0 %v4258, 124
      %v4615 = vpop.permute.xlu0 %4614
      %4616 = vrot.lane.b32.xlu0 %v4259, 124
      %v4617 = vpop.permute.xlu0 %4616
      %4618 = vrot.lane.b32.xlu0 %v4260, 124
      %v4619 = vpop.permute.xlu0 %4618
      %4620 = vrot.lane.b32.xlu0 %v4261, 124
      %v4621 = vpop.permute.xlu0 %4620
      %4622 = vrot.lane.b32.xlu0 %v4262, 124
      %v4623 = vpop.permute.xlu0 %4622
      %4624 = vrot.lane.b32.xlu0 %v4263, 124
      %v4625 = vpop.permute.xlu0 %4624
      %4626 = vrot.lane.b32.xlu0 %v4264, 124
      %v4627 = vpop.permute.xlu0 %4626
      %4628 = vrot.lane.b32.xlu0 %v4265, 124
      %v4629 = vpop.permute.xlu0 %4628
      %4630 = vrot.lane.b32.xlu0 %v4266, 124
      %v4631 = vpop.permute.xlu0 %4630
      %4632 = vrot.lane.b32.xlu0 %v4267, 124
      %v4633 = vpop.permute.xlu0 %4632
      %4634 = vrot.lane.b32.xlu0 %v4268, 124
      %v4635 = vpop.permute.xlu0 %4634
      %4636 = vrot.lane.b32.xlu0 %v4269, 124
      %v4637 = vpop.permute.xlu0 %4636
      %4638 = vrot.lane.b32.xlu0 %v4270, 124
      %v4639 = vpop.permute.xlu0 %4638
      %4640 = vrot.lane.b32.xlu0 %v4271, 124
      %v4641 = vpop.permute.xlu0 %4640
      %4642 = vrot.lane.b32.xlu0 %v4272, 124
      %v4643 = vpop.permute.xlu0 %4642
      %4644 = vrot.lane.b32.xlu0 %v4273, 124
      %v4645 = vpop.permute.xlu0 %4644
      %4646 = vrot.lane.b32.xlu0 %v4274, 124
      %v4647 = vpop.permute.xlu0 %4646
      %4648 = vrot.lane.b32.xlu0 %v4275, 124
      %v4649 = vpop.permute.xlu0 %4648
      %4650 = vrot.lane.b32.xlu0 %v4276, 124
      %v4651 = vpop.permute.xlu0 %4650
      %4652 = vrot.lane.b32.xlu0 %v4277, 124
      %v4653 = vpop.permute.xlu0 %4652
      %v4686 = vsel %vm1915, %v4591, 0.0
      %v4687 = vsel %vm1915, %v4593, 0.0
      %v4688 = vadd.f32 %v4686, %v4687
      %v4689 = vsel %vm1915, %v4595, 0.0
      %v4690 = vadd.f32 %v4688, %v4689
      %v4691 = vsel %vm1915, %v4597, 0.0
      %v4692 = vadd.f32 %v4690, %v4691
      %v4693 = vsel %vm1915, %v4599, 0.0
      %v4694 = vadd.f32 %v4692, %v4693
      %v4695 = vsel %vm1915, %v4601, 0.0
      %v4696 = vadd.f32 %v4694, %v4695
      %v4697 = vsel %vm1915, %v4603, 0.0
      %v4698 = vadd.f32 %v4696, %v4697
      %v4699 = vsel %vm1915, %v4605, 0.0
      %v4700 = vadd.f32 %v4698, %v4699
      %v4701 = vsel %vm1915, %v4607, 0.0
      %v4702 = vadd.f32 %v4700, %v4701
      %v4703 = vsel %vm1915, %v4609, 0.0
      %v4704 = vadd.f32 %v4702, %v4703
      %v4705 = vsel %vm1915, %v4611, 0.0
      %v4706 = vadd.f32 %v4704, %v4705
      %v4707 = vsel %vm1915, %v4613, 0.0
      %v4708 = vadd.f32 %v4706, %v4707
      %v4709 = vsel %vm1915, %v4615, 0.0
      %v4710 = vadd.f32 %v4708, %v4709
      %v4711 = vsel %vm1915, %v4617, 0.0
      %v4712 = vadd.f32 %v4710, %v4711
      %v4713 = vsel %vm1915, %v4619, 0.0
      %v4714 = vadd.f32 %v4712, %v4713
      %v4715 = vsel %vm1915, %v4621, 0.0
      %v4716 = vadd.f32 %v4714, %v4715
      %v4717 = vsel %vm1915, %v4623, 0.0
      %v4718 = vadd.f32 %v4716, %v4717
      %v4719 = vsel %vm1915, %v4625, 0.0
      %v4720 = vadd.f32 %v4718, %v4719
      %v4721 = vsel %vm1915, %v4627, 0.0
      %v4722 = vadd.f32 %v4720, %v4721
      %v4723 = vsel %vm1915, %v4629, 0.0
      %v4724 = vadd.f32 %v4722, %v4723
      %v4725 = vsel %vm1915, %v4631, 0.0
      %v4726 = vadd.f32 %v4724, %v4725
      %v4727 = vsel %vm1915, %v4633, 0.0
      %v4728 = vadd.f32 %v4726, %v4727
      %v4729 = vsel %vm1915, %v4635, 0.0
      %v4730 = vadd.f32 %v4728, %v4729
      %v4731 = vsel %vm1915, %v4637, 0.0
      %v4732 = vadd.f32 %v4730, %v4731
      %v4733 = vsel %vm1915, %v4639, 0.0
      %v4734 = vadd.f32 %v4732, %v4733
      %v4735 = vsel %vm1915, %v4641, 0.0
      %v4736 = vadd.f32 %v4734, %v4735
      %v4737 = vsel %vm1915, %v4643, 0.0
      %v4738 = vadd.f32 %v4736, %v4737
      %v4739 = vsel %vm1915, %v4645, 0.0
      %v4740 = vadd.f32 %v4738, %v4739
      %v4741 = vsel %vm1915, %v4647, 0.0
      %v4742 = vadd.f32 %v4740, %v4741
      %v4743 = vsel %vm1915, %v4649, 0.0
      %v4744 = vadd.f32 %v4742, %v4743
      %v4745 = vsel %vm1915, %v4651, 0.0
      %v4746 = vadd.f32 %v4744, %v4745
      %v4747 = vsel %vm1915, %v4653, 0.0
      %v4748 = vadd.f32 %v4746, %v4747
      %4749 = vadd.xlane.f32.xlu0 %v4748
      %v4750 = vpop.xlane.xlu0 %4749
      %v4751 = vrot.slane %v4750, 4
      %v4752 = vadd.f32 %v4750, %v4751
      %v4753 = vrot.slane %v4752, 2
      %v4754 = vadd.f32 %v4752, %v4753
      %v4755 = vrot.slane %v4754, 1
      %v4756 = vadd.f32 %v4754, %v4755
      %s4757 = vtos %v4756
      %v4758 = vstv %s4757
      %v4759 = vmul.f32 %v4758, %v1995
      %v4760 = vmul.f32 %v4557, %v4557
      %v4761 = vsub.f32 %v4759, %v4760
      %v4762 = vsel %vm2518, %v4557, %v4354
      %v4763 = vsel %vm2518, %v4761, %v4355
      %v4764 = vadd.f32 %v4763, 1e-05
      %v4765 = vrsqrt.pop %v4764
      %v4766 = vmul.f32 %v4765, %v4764
      %v4767 = vmul.f32 %v4766, %v4765
      %v4768 = vmul.f32 0.5, %v4767
      %v4769 = vsub.f32 1.5, %v4768
      %v4770 = vmul.f32 %v4765, %v4769
      %vm4771 = vweird.f32 %v4764
      %vm4772 = vweird.f32 %v4765
      %vm4773 = vmor %vm4771, %vm4772
      %v4774 = vsel %vm4773, %v4765, %v4770
      %v4775 = vmul.f32 %v4170, %v4774
      %v4776 = vmul.f32 %v4762, %v4775
      %v4777 = vsub.f32 %v4171, %v4776
      %v4779 = vperm.slane %v4775, 0
      %v4781 = vmul.f32 %v4091, %v4779
      %v4782 = vmul.f32 %v4093, %v4779
      %v4783 = vmul.f32 %v4096, %v4779
      %v4784 = vmul.f32 %v4098, %v4779
      %v4785 = vmul.f32 %v4101, %v4779
      %v4786 = vmul.f32 %v4103, %v4779
      %v4787 = vmul.f32 %v4106, %v4779
      %v4788 = vmul.f32 %v4108, %v4779
      %v4789 = vmul.f32 %v4111, %v4779
      %v4790 = vmul.f32 %v4113, %v4779
      %v4791 = vmul.f32 %v4116, %v4779
      %v4792 = vmul.f32 %v4118, %v4779
      %v4793 = vmul.f32 %v4121, %v4779
      %v4794 = vmul.f32 %v4123, %v4779
      %v4795 = vmul.f32 %v4126, %v4779
      %v4796 = vmul.f32 %v4128, %v4779
      %v4797 = vmul.f32 %v4131, %v4779
      %v4798 = vmul.f32 %v4133, %v4779
      %v4799 = vmul.f32 %v4136, %v4779
      %v4800 = vmul.f32 %v4138, %v4779
      %v4801 = vmul.f32 %v4141, %v4779
      %v4802 = vmul.f32 %v4143, %v4779
      %v4803 = vmul.f32 %v4146, %v4779
      %v4804 = vmul.f32 %v4148, %v4779
      %v4805 = vmul.f32 %v4151, %v4779
      %v4806 = vmul.f32 %v4153, %v4779
      %v4807 = vmul.f32 %v4156, %v4779
      %v4808 = vmul.f32 %v4158, %v4779
      %v4809 = vmul.f32 %v4161, %v4779
      %v4810 = vmul.f32 %v4163, %v4779
      %v4811 = vmul.f32 %v4166, %v4779
      %v4812 = vmul.f32 %v4168, %v4779
      %v4814 = vperm.slane %v4777, 0
      %v4816 = vadd.f32 %v4781, %v4814
      %v4817 = vadd.f32 %v4782, %v4814
      %v4818 = vadd.f32 %v4783, %v4814
      %v4819 = vadd.f32 %v4784, %v4814
      %v4820 = vadd.f32 %v4785, %v4814
      %v4821 = vadd.f32 %v4786, %v4814
      %v4822 = vadd.f32 %v4787, %v4814
      %v4823 = vadd.f32 %v4788, %v4814
      %v4824 = vadd.f32 %v4789, %v4814
      %v4825 = vadd.f32 %v4790, %v4814
      %v4826 = vadd.f32 %v4791, %v4814
      %v4827 = vadd.f32 %v4792, %v4814
      %v4828 = vadd.f32 %v4793, %v4814
      %v4829 = vadd.f32 %v4794, %v4814
      %v4830 = vadd.f32 %v4795, %v4814
      %v4831 = vadd.f32 %v4796, %v4814
      %v4832 = vadd.f32 %v4797, %v4814
      %v4833 = vadd.f32 %v4798, %v4814
      %v4834 = vadd.f32 %v4799, %v4814
      %v4835 = vadd.f32 %v4800, %v4814
      %v4836 = vadd.f32 %v4801, %v4814
      %v4837 = vadd.f32 %v4802, %v4814
      %v4838 = vadd.f32 %v4803, %v4814
      %v4839 = vadd.f32 %v4804, %v4814
      %v4840 = vadd.f32 %v4805, %v4814
      %v4841 = vadd.f32 %v4806, %v4814
      %v4842 = vadd.f32 %v4807, %v4814
      %v4843 = vadd.f32 %v4808, %v4814
      %v4844 = vadd.f32 %v4809, %v4814
      %v4845 = vadd.f32 %v4810, %v4814
      %v4846 = vadd.f32 %v4811, %v4814
      %v4847 = vadd.f32 %v4812, %v4814
      %v4848 = vadd.f32 %v4816, %v280
      %v4849 = vadd.f32 %v4817, %v281
      %v4850 = vadd.f32 %v4818, %v282
      %v4851 = vadd.f32 %v4819, %v283
      %v4852 = vadd.f32 %v4820, %v284
      %v4853 = vadd.f32 %v4821, %v285
      %v4854 = vadd.f32 %v4822, %v286
      %v4855 = vadd.f32 %v4823, %v287
      %v4856 = vadd.f32 %v4824, %v288
      %v4857 = vadd.f32 %v4825, %v289
      %v4858 = vadd.f32 %v4826, %v290
      %v4859 = vadd.f32 %v4827, %v291
      %v4860 = vadd.f32 %v4828, %v292
      %v4861 = vadd.f32 %v4829, %v293
      %v4862 = vadd.f32 %v4830, %v294
      %v4863 = vadd.f32 %v4831, %v295
      %v4864 = vadd.f32 %v4832, %v296
      %v4865 = vadd.f32 %v4833, %v297
      %v4866 = vadd.f32 %v4834, %v298
      %v4867 = vadd.f32 %v4835, %v299
      %v4868 = vadd.f32 %v4836, %v300
      %v4869 = vadd.f32 %v4837, %v301
      %v4870 = vadd.f32 %v4838, %v302
      %v4871 = vadd.f32 %v4839, %v303
      %v4872 = vadd.f32 %v4840, %v304
      %v4873 = vadd.f32 %v4841, %v305
      %v4874 = vadd.f32 %v4842, %v306
      %v4875 = vadd.f32 %v4843, %v307
      %v4876 = vadd.f32 %v4844, %v308
      %v4877 = vadd.f32 %v4845, %v309
      %v4878 = vadd.f32 %v4846, %v310
      %v4879 = vadd.f32 %v4847, %v311
      %v4880 = vmax.f32 %v4848, 0.0
      %v4881 = vmax.f32 %v4849, 0.0
      %v4882 = vmax.f32 %v4850, 0.0
      %v4883 = vmax.f32 %v4851, 0.0
      %v4884 = vmax.f32 %v4852, 0.0
      %v4885 = vmax.f32 %v4853, 0.0
      %v4886 = vmax.f32 %v4854, 0.0
      %v4887 = vmax.f32 %v4855, 0.0
      %v4888 = vmax.f32 %v4856, 0.0
      %v4889 = vmax.f32 %v4857, 0.0
      %v4890 = vmax.f32 %v4858, 0.0
      %v4891 = vmax.f32 %v4859, 0.0
      %v4892 = vmax.f32 %v4860, 0.0
      %v4893 = vmax.f32 %v4861, 0.0
      %v4894 = vmax.f32 %v4862, 0.0
      %v4895 = vmax.f32 %v4863, 0.0
      %v4896 = vmax.f32 %v4864, 0.0
      %v4897 = vmax.f32 %v4865, 0.0
      %v4898 = vmax.f32 %v4866, 0.0
      %v4899 = vmax.f32 %v4867, 0.0
      %v4900 = vmax.f32 %v4868, 0.0
      %v4901 = vmax.f32 %v4869, 0.0
      %v4902 = vmax.f32 %v4870, 0.0
      %v4903 = vmax.f32 %v4871, 0.0
      %v4904 = vmax.f32 %v4872, 0.0
      %v4905 = vmax.f32 %v4873, 0.0
      %v4906 = vmax.f32 %v4874, 0.0
      %v4907 = vmax.f32 %v4875, 0.0
      %v4908 = vmax.f32 %v4876, 0.0
      %v4909 = vmax.f32 %v4877, 0.0
      %v4910 = vmax.f32 %v4878, 0.0
      %v4911 = vmax.f32 %v4879, 0.0
      %4912 = vst.msk [vmem:[%s278] sm:$0xff] %vm1453, %v4880
      %4913 = vst.msk [vmem:[%s278 + $0x8] sm:$0xff] %vm1453, %v4881
      %4914 = vst.msk [vmem:[%s278 + $0x10] sm:$0xff] %vm1453, %v4882
      %4915 = vst.msk [vmem:[%s278 + $0x18] sm:$0xff] %vm1453, %v4883
      %4916 = vst.msk [vmem:[%s278 + $0x20] sm:$0xff] %vm1453, %v4884
      %4917 = vst.msk [vmem:[%s278 + $0x28] sm:$0xff] %vm1453, %v4885
      %4918 = vst.msk [vmem:[%s278 + $0x30] sm:$0xff] %vm1453, %v4886
      %4919 = vst.msk [vmem:[%s278 + $0x38] sm:$0xff] %vm1453, %v4887
      %4920 = vst.msk [vmem:[%s278 + $0x40] sm:$0xff] %vm1453, %v4888
      %4921 = vst.msk [vmem:[%s278 + $0x48] sm:$0xff] %vm1453, %v4889
      %4922 = vst.msk [vmem:[%s278 + $0x50] sm:$0xff] %vm1453, %v4890
      %4923 = vst.msk [vmem:[%s278 + $0x58] sm:$0xff] %vm1453, %v4891
      %4924 = vst.msk [vmem:[%s278 + $0x60] sm:$0xff] %vm1453, %v4892
      %4925 = vst.msk [vmem:[%s278 + $0x68] sm:$0xff] %vm1453, %v4893
      %4926 = vst.msk [vmem:[%s278 + $0x70] sm:$0xff] %vm1453, %v4894
      %4927 = vst.msk [vmem:[%s278 + $0x78] sm:$0xff] %vm1453, %v4895
      %4928 = vst.msk [vmem:[%s278 + $0x80] sm:$0xff] %vm1453, %v4896
      %4929 = vst.msk [vmem:[%s278 + $0x88] sm:$0xff] %vm1453, %v4897
      %4930 = vst.msk [vmem:[%s278 + $0x90] sm:$0xff] %vm1453, %v4898
      %4931 = vst.msk [vmem:[%s278 + $0x98] sm:$0xff] %vm1453, %v4899
      %4932 = vst.msk [vmem:[%s278 + $0xa0] sm:$0xff] %vm1453, %v4900
      %4933 = vst.msk [vmem:[%s278 + $0xa8] sm:$0xff] %vm1453, %v4901
      %4934 = vst.msk [vmem:[%s278 + $0xb0] sm:$0xff] %vm1453, %v4902
      %4935 = vst.msk [vmem:[%s278 + $0xb8] sm:$0xff] %vm1453, %v4903
      %4936 = vst.msk [vmem:[%s278 + $0xc0] sm:$0xff] %vm1453, %v4904
      %4937 = vst.msk [vmem:[%s278 + $0xc8] sm:$0xff] %vm1453, %v4905
      %4938 = vst.msk [vmem:[%s278 + $0xd0] sm:$0xff] %vm1453, %v4906
      %4939 = vst.msk [vmem:[%s278 + $0xd8] sm:$0xff] %vm1453, %v4907
      %4940 = vst.msk [vmem:[%s278 + $0xe0] sm:$0xff] %vm1453, %v4908
      %4941 = vst.msk [vmem:[%s278 + $0xe8] sm:$0xff] %vm1453, %v4909
      %4942 = vst.msk [vmem:[%s278 + $0xf0] sm:$0xff] %vm1453, %v4910
      %4943 = vst.msk [vmem:[%s278 + $0xf8] sm:$0xff] %vm1453, %v4911
      %p4944 = scmp.lt.s32.totalorder %s18, 1
      %s4945 = scalar_select %p4944, %s18, 1
      %s4946 = smul.addr %s4945, 32
      %s4947 = smul.addr %s4946, 8
      %s4948 = scalar_lea.vmem %s7, %s4947
      // Predicated region
      $region49: #{resnet_forward.4} parent=47 // pred_check
        %p4949 = pneg %p188
      $region50: #{resnet_forward.4} parent=47 // pred_check_branch
        %4951 = sbr.rel (%p4949) target = $region52
      $region51: #{resnet_forward.4} parent=47 // pred_region
        _
      $region52: #{resnet_forward.4} parent=47 // pred_fallthru
        _
    $region48: #{resnet_forward.4} parent=5 // pred_fallthru
      _
    %p4952 = scmp.le.s32.totalorder 2, %s13
    // Predicated region
    $region53: #{resnet_forward.4} parent=5 // pred_check
      %p4953 = pneg %p4952
    $region54: #{resnet_forward.4} parent=5 // pred_check_branch
      %4955 = sbr.rel (%p4953) target = $region56
    $region55: #{resnet_forward.4} parent=5 // pred_region
      %s4956 = ssub.s32 %s13, 2
      // Predicated region
      $region57: #{resnet_forward.4} parent=55 // pred_check
        %p4957 = pneg %p194
      $region58: #{resnet_forward.4} parent=55 // pred_check_branch
        %4959 = sbr.rel (%p4957) target = $region60
      $region59: #{resnet_forward.4} parent=55 // pred_region
        %p4960 = scmp.lt.s32.totalorder %s19, 1
        %s4961 = scalar_select %p4960, %s19, 1
        %s4962 = smul.addr %s4961, 32
        %s4963 = smul.addr %s4962, 8
        %s4964 = scalar_lea.vmem %s7, %s4963
      $region60: #{resnet_forward.4} parent=55 // pred_fallthru
        _
    $region56: #{resnet_forward.4} parent=5 // pred_fallthru
      _
  $region6: #{resnet_forward.4} parent=0 // loop_footer
    %s17 = sadd.s32 1, %s13
  $region7: #{resnet_forward.4} parent=0 // loop_footer_branch
    %12 = sbr.rel target = $region3
  $region8: #{resnet_forward.4} parent=0 // loop_exit
    _

// kernel: resnet_forward.5
$region0: #{resnet_forward.5}
  #allocation0 [shape = 'u32[]', space=smem, size = 0x4, offset = 0x4, fixed_abs, tag = 'smem constant byte address 0x4 - core index']
  #allocation1 [shape = 'u32[72,128]{1,0:T(1,128)}', space=vmem, size = 0x9000, scoped, tag = 'internal scratch']
  %s0 = inlined_call_operand.vmem [shape: bf16[2,64,72], index: 0, kind: input, shape index: {}]
  %s1 = inlined_call_operand.vmem [shape: bf16[2,64,8], index: 1, kind: input, shape index: {}]
  %s2 = inlined_call_operand.vmem [shape: bf16[72,16], index: 2, kind: input, shape index: {}]
  %s3 = inlined_call_operand.vmem [shape: f32[1,16], index: 3, kind: input, shape index: {}, may-alias: {3,6,9}]
  %s4 = inlined_call_operand.vmem [shape: f32[1,16], index: 4, kind: input, shape index: {}, may-alias: {4,7,10}]
  %s5 = inlined_call_operand.vmem [shape: bf16[144,16], index: 5, kind: input, shape index: {}]
  %s6 = inlined_call_operand.vmem [shape: f32[1,16], index: 6, kind: input, shape index: {}, may-alias: {3,6,9}]
  %s7 = inlined_call_operand.vmem [shape: f32[1,16], index: 7, kind: input, shape index: {}, may-alias: {4,7,10}]
  %s8 = inlined_call_operand.vmem [shape: bf16[8,16], index: 8, kind: input, shape index: {}]
  %s9 = inlined_call_operand.vmem [shape: f32[1,16], index: 9, kind: input, shape index: {}, may-alias: {3,6,9}]
  %s10 = inlined_call_operand.vmem [shape: f32[1,16], index: 10, kind: input, shape index: {}, may-alias: {4,7,10}]
  %s11 = inlined_call_operand.vmem [shape: f32[16,10], index: 11, kind: input, shape index: {}]
  %s12 = inlined_call_operand.vmem [shape: f32[1,10], index: 12, kind: input, shape index: {}]
  %s13 = inlined_call_operand.hbm [shape: f32[2,1,10], index: 13, kind: output, shape index: {}]
  %s14 = sld [smem:[#allocation0]]
  $region85: #{resnet_forward.5} parent=0
    _
  %s16 = ssub.s32 1, %s14
  %s17 = scalar_select 0, %s16, %s14
  $region1: #{resnet_forward.5} parent=0
    #allocation2 [shape = 'u8[1024]{0}', space=vmem, size = 0x400, scoped, tag = 'output window, operand 0']
    #allocation3 [shape = 's32[2]{0}', space=sflag, size = 0x8, scoped, tag = 'scoped memory for resnet_forward.5']
    %18 = vsyncpa [#allocation3], 0
    %s19 = scalar_lea.sflag [#allocation3], 1
    %20 = vsyncpa %s19, 0
    loop: start=0, step=1, limit=4
    $region2: #{resnet_forward.5} parent=1 // loop_pre_header
      _
    $region3: #{resnet_forward.5} parent=1 // loop_header
      %s22 = sphi 0, %s26
      %p23 = scmp.ge.s32.totalorder %s22, 4
      %s32 = sphi 0, %s34
      %s35 = sphi 0, %s32
      %s36 = sphi 0, %s35
      %s52 = sphi 0, %s36
      %s58 = sphi 0, %s60
      %s61 = sphi 0, %s58
      %s62 = sphi 0, %s61
      %s78 = sphi 0, %s62
      %s82 = sphi 0, %s82
      %s84 = sphi 0, %s82
      %s85 = sphi 0, %s84
      %s99 = sphi 0, %s85
      %s103 = sphi 0, %s103
      %s105 = sphi 0, %s103
      %s106 = sphi 0, %s105
      %s120 = sphi 0, %s106
      %s124 = sphi 0, %s124
      %s126 = sphi 0, %s124
      %s127 = sphi 0, %s126
      %s141 = sphi 0, %s127
      %s145 = sphi 0, %s145
      %s147 = sphi 0, %s145
      %s148 = sphi 0, %s147
      %s162 = sphi 0, %s148
      %s166 = sphi 0, %s166
      %s168 = sphi 0, %s166
      %s169 = sphi 0, %s168
      %s183 = sphi 0, %s169
      %s187 = sphi 0, %s187
      %s189 = sphi 0, %s187
      %s190 = sphi 0, %s189
      %s204 = sphi 0, %s190
      %s208 = sphi 0, %s208
      %s210 = sphi 0, %s208
      %s211 = sphi 0, %s210
      %s225 = sphi 0, %s211
      %s229 = sphi 0, %s229
      %s231 = sphi 0, %s229
      %s232 = sphi 0, %s231
      %s246 = sphi 0, %s232
      %s250 = sphi 0, %s250
      %s252 = sphi 0, %s250
      %s253 = sphi 0, %s252
      %s267 = sphi 0, %s253
      %s271 = sphi 0, %s271
      %s273 = sphi 0, %s271
      %s274 = sphi 0, %s273
      %s288 = sphi 0, %s274
      %s292 = sphi 0, %s292
      %s294 = sphi 0, %s292
      %s295 = sphi 0, %s294
      %s309 = sphi 0, %s295
      %s315 = sphi 0, %s317
      %s318 = sphi 0, %s315
      %s319 = sphi 0, %s318
      %s335 = sphi 0, %s319
    $region4: #{resnet_forward.5} parent=1 // loop_header_branch
      %25 = sbr.rel (%p23) target = $region8
    $region5: #{resnet_forward.5} parent=1 // loop_body
      %s27 = ssub.s32 %s22, 1
      %s28 = ssub.s32 %s22, 2
      %s29 = sadd.s32 %s22, 1
      %s30 = ssub.s32 %s22, %s29
      %p31 = scmp.eq.s32.totalorder %s30, 0
      %s33 = sadd.s32 %s32, 1
      %s34 = scalar_select %p31, %s32, %s33
      %p37 = pneg %p31
      %p38 = scmp.eq.s32.totalorder %s22, 1
      %p39 = por %p37, %p38
      %p40 = scmp.ne.s32.totalorder %s32, %s35
      %p41 = scmp.eq.s32.totalorder %s22, 0
      %p42 = por %p40, %p41
      %p43 = scmp.ne.s32.totalorder %s32, %s35
      %p44 = scmp.eq.s32.totalorder %s27, 1
      %p45 = por %p43, %p44
      %p46 = scmp.ne.s32.totalorder %s35, %s36
      %p47 = scmp.eq.s32.totalorder %s27, 0
      %p48 = por %p46, %p47
      %p49 = scmp.ne.s32.totalorder %s35, %s36
      %p50 = scmp.eq.s32.totalorder %s28, 1
      %p51 = por %p49, %p50
      %p53 = scmp.ne.s32.totalorder %s36, %s52
      %p54 = scmp.eq.s32.totalorder %s28, 0
      %p55 = por %p53, %p54
      %s56 = ssub.s32 %s22, %s29
      %p57 = scmp.eq.s32.totalorder %s56, 0
      %s59 = sadd.s32 %s58, 1
      %s60 = scalar_select %p57, %s58, %s59
      %p63 = pneg %p57
      %p64 = scmp.eq.s32.totalorder %s22, 1
      %p65 = por %p63, %p64
      %p66 = scmp.ne.s32.totalorder %s58, %s61
      %p67 = scmp.eq.s32.totalorder %s22, 0
      %p68 = por %p66, %p67
      %p69 = scmp.ne.s32.totalorder %s58, %s61
      %p70 = scmp.eq.s32.totalorder %s27, 1
      %p71 = por %p69, %p70
      %p72 = scmp.ne.s32.totalorder %s61, %s62
      %p73 = scmp.eq.s32.totalorder %s27, 0
      %p74 = por %p72, %p73
      %p75 = scmp.ne.s32.totalorder %s61, %s62
      %p76 = scmp.eq.s32.totalorder %s28, 1
      %p77 = por %p75, %p76
      %p79 = scmp.ne.s32.totalorder %s62, %s78
      %p80 = scmp.eq.s32.totalorder %s28, 0
      %p81 = por %p79, %p80
      %s83 = sadd.s32 %s82, 1
      %p86 = scmp.eq.s32.totalorder %s22, 1
      %p87 = scmp.ne.s32.totalorder %s82, %s84
      %p88 = scmp.eq.s32.totalorder %s22, 0
      %p89 = por %p87, %p88
      %p90 = scmp.ne.s32.totalorder %s82, %s84
      %p91 = scmp.eq.s32.totalorder %s27, 1
      %p92 = por %p90, %p91
      %p93 = scmp.ne.s32.totalorder %s84, %s85
      %p94 = scmp.eq.s32.totalorder %s27, 0
      %p95 = por %p93, %p94
      %p96 = scmp.ne.s32.totalorder %s84, %s85
      %p97 = scmp.eq.s32.totalorder %s28, 1
      %p98 = por %p96, %p97
      %p100 = scmp.ne.s32.totalorder %s85, %s99
      %p101 = scmp.eq.s32.totalorder %s28, 0
      %p102 = por %p100, %p101
      %s104 = sadd.s32 %s103, 1
      %p107 = scmp.eq.s32.totalorder %s22, 1
      %p108 = scmp.ne.s32.totalorder %s103, %s105
      %p109 = scmp.eq.s32.totalorder %s22, 0
      %p110 = por %p108, %p109
      %p111 = scmp.ne.s32.totalorder %s103, %s105
      %p112 = scmp.eq.s32.totalorder %s27, 1
      %p113 = por %p111, %p112
      %p114 = scmp.ne.s32.totalorder %s105, %s106
      %p115 = scmp.eq.s32.totalorder %s27, 0
      %p116 = por %p114, %p115
      %p117 = scmp.ne.s32.totalorder %s105, %s106
      %p118 = scmp.eq.s32.totalorder %s28, 1
      %p119 = por %p117, %p118
      %p121 = scmp.ne.s32.totalorder %s106, %s120
      %p122 = scmp.eq.s32.totalorder %s28, 0
      %p123 = por %p121, %p122
      %s125 = sadd.s32 %s124, 1
      %p128 = scmp.eq.s32.totalorder %s22, 1
      %p129 = scmp.ne.s32.totalorder %s124, %s126
      %p130 = scmp.eq.s32.totalorder %s22, 0
      %p131 = por %p129, %p130
      %p132 = scmp.ne.s32.totalorder %s124, %s126
      %p133 = scmp.eq.s32.totalorder %s27, 1
      %p134 = por %p132, %p133
      %p135 = scmp.ne.s32.totalorder %s126, %s127
      %p136 = scmp.eq.s32.totalorder %s27, 0
      %p137 = por %p135, %p136
      %p138 = scmp.ne.s32.totalorder %s126, %s127
      %p139 = scmp.eq.s32.totalorder %s28, 1
      %p140 = por %p138, %p139
      %p142 = scmp.ne.s32.totalorder %s127, %s141
      %p143 = scmp.eq.s32.totalorder %s28, 0
      %p144 = por %p142, %p143
      %s146 = sadd.s32 %s145, 1
      %p149 = scmp.eq.s32.totalorder %s22, 1
      %p150 = scmp.ne.s32.totalorder %s145, %s147
      %p151 = scmp.eq.s32.totalorder %s22, 0
      %p152 = por %p150, %p151
      %p153 = scmp.ne.s32.totalorder %s145, %s147
      %p154 = scmp.eq.s32.totalorder %s27, 1
      %p155 = por %p153, %p154
      %p156 = scmp.ne.s32.totalorder %s147, %s148
      %p157 = scmp.eq.s32.totalorder %s27, 0
      %p158 = por %p156, %p157
      %p159 = scmp.ne.s32.totalorder %s147, %s148
      %p160 = scmp.eq.s32.totalorder %s28, 1
      %p161 = por %p159, %p160
      %p163 = scmp.ne.s32.totalorder %s148, %s162
      %p164 = scmp.eq.s32.totalorder %s28, 0
      %p165 = por %p163, %p164
      %s167 = sadd.s32 %s166, 1
      %p170 = scmp.eq.s32.totalorder %s22, 1
      %p171 = scmp.ne.s32.totalorder %s166, %s168
      %p172 = scmp.eq.s32.totalorder %s22, 0
      %p173 = por %p171, %p172
      %p174 = scmp.ne.s32.totalorder %s166, %s168
      %p175 = scmp.eq.s32.totalorder %s27, 1
      %p176 = por %p174, %p175
      %p177 = scmp.ne.s32.totalorder %s168, %s169
      %p178 = scmp.eq.s32.totalorder %s27, 0
      %p179 = por %p177, %p178
      %p180 = scmp.ne.s32.totalorder %s168, %s169
      %p181 = scmp.eq.s32.totalorder %s28, 1
      %p182 = por %p180, %p181
      %p184 = scmp.ne.s32.totalorder %s169, %s183
      %p185 = scmp.eq.s32.totalorder %s28, 0
      %p186 = por %p184, %p185
      %s188 = sadd.s32 %s187, 1
      %p191 = scmp.eq.s32.totalorder %s22, 1
      %p192 = scmp.ne.s32.totalorder %s187, %s189
      %p193 = scmp.eq.s32.totalorder %s22, 0
      %p194 = por %p192, %p193
      %p195 = scmp.ne.s32.totalorder %s187, %s189
      %p196 = scmp.eq.s32.totalorder %s27, 1
      %p197 = por %p195, %p196
      %p198 = scmp.ne.s32.totalorder %s189, %s190
      %p199 = scmp.eq.s32.totalorder %s27, 0
      %p200 = por %p198, %p199
      %p201 = scmp.ne.s32.totalorder %s189, %s190
      %p202 = scmp.eq.s32.totalorder %s28, 1
      %p203 = por %p201, %p202
      %p205 = scmp.ne.s32.totalorder %s190, %s204
      %p206 = scmp.eq.s32.totalorder %s28, 0
      %p207 = por %p205, %p206
      %s209 = sadd.s32 %s208, 1
      %p212 = scmp.eq.s32.totalorder %s22, 1
      %p213 = scmp.ne.s32.totalorder %s208, %s210
      %p214 = scmp.eq.s32.totalorder %s22, 0
      %p215 = por %p213, %p214
      %p216 = scmp.ne.s32.totalorder %s208, %s210
      %p217 = scmp.eq.s32.totalorder %s27, 1
      %p218 = por %p216, %p217
      %p219 = scmp.ne.s32.totalorder %s210, %s211
      %p220 = scmp.eq.s32.totalorder %s27, 0
      %p221 = por %p219, %p220
      %p222 = scmp.ne.s32.totalorder %s210, %s211
      %p223 = scmp.eq.s32.totalorder %s28, 1
      %p224 = por %p222, %p223
      %p226 = scmp.ne.s32.totalorder %s211, %s225
      %p227 = scmp.eq.s32.totalorder %s28, 0
      %p228 = por %p226, %p227
      %s230 = sadd.s32 %s229, 1
      %p233 = scmp.eq.s32.totalorder %s22, 1
      %p234 = scmp.ne.s32.totalorder %s229, %s231
      %p235 = scmp.eq.s32.totalorder %s22, 0
      %p236 = por %p234, %p235
      %p237 = scmp.ne.s32.totalorder %s229, %s231
      %p238 = scmp.eq.s32.totalorder %s27, 1
      %p239 = por %p237, %p238
      %p240 = scmp.ne.s32.totalorder %s231, %s232
      %p241 = scmp.eq.s32.totalorder %s27, 0
      %p242 = por %p240, %p241
      %p243 = scmp.ne.s32.totalorder %s231, %s232
      %p244 = scmp.eq.s32.totalorder %s28, 1
      %p245 = por %p243, %p244
      %p247 = scmp.ne.s32.totalorder %s232, %s246
      %p248 = scmp.eq.s32.totalorder %s28, 0
      %p249 = por %p247, %p248
      %s251 = sadd.s32 %s250, 1
      %p254 = scmp.eq.s32.totalorder %s22, 1
      %p255 = scmp.ne.s32.totalorder %s250, %s252
      %p256 = scmp.eq.s32.totalorder %s22, 0
      %p257 = por %p255, %p256
      %p258 = scmp.ne.s32.totalorder %s250, %s252
      %p259 = scmp.eq.s32.totalorder %s27, 1
      %p260 = por %p258, %p259
      %p261 = scmp.ne.s32.totalorder %s252, %s253
      %p262 = scmp.eq.s32.totalorder %s27, 0
      %p263 = por %p261, %p262
      %p264 = scmp.ne.s32.totalorder %s252, %s253
      %p265 = scmp.eq.s32.totalorder %s28, 1
      %p266 = por %p264, %p265
      %p268 = scmp.ne.s32.totalorder %s253, %s267
      %p269 = scmp.eq.s32.totalorder %s28, 0
      %p270 = por %p268, %p269
      %s272 = sadd.s32 %s271, 1
      %p275 = scmp.eq.s32.totalorder %s22, 1
      %p276 = scmp.ne.s32.totalorder %s271, %s273
      %p277 = scmp.eq.s32.totalorder %s22, 0
      %p278 = por %p276, %p277
      %p279 = scmp.ne.s32.totalorder %s271, %s273
      %p280 = scmp.eq.s32.totalorder %s27, 1
      %p281 = por %p279, %p280
      %p282 = scmp.ne.s32.totalorder %s273, %s274
      %p283 = scmp.eq.s32.totalorder %s27, 0
      %p284 = por %p282, %p283
      %p285 = scmp.ne.s32.totalorder %s273, %s274
      %p286 = scmp.eq.s32.totalorder %s28, 1
      %p287 = por %p285, %p286
      %p289 = scmp.ne.s32.totalorder %s274, %s288
      %p290 = scmp.eq.s32.totalorder %s28, 0
      %p291 = por %p289, %p290
      %s293 = sadd.s32 %s292, 1
      %p296 = scmp.eq.s32.totalorder %s22, 1
      %p297 = scmp.ne.s32.totalorder %s292, %s294
      %p298 = scmp.eq.s32.totalorder %s22, 0
      %p299 = por %p297, %p298
      %p300 = scmp.ne.s32.totalorder %s292, %s294
      %p301 = scmp.eq.s32.totalorder %s27, 1
      %p302 = por %p300, %p301
      %p303 = scmp.ne.s32.totalorder %s294, %s295
      %p304 = scmp.eq.s32.totalorder %s27, 0
      %p305 = por %p303, %p304
      %p306 = scmp.ne.s32.totalorder %s294, %s295
      %p307 = scmp.eq.s32.totalorder %s28, 1
      %p308 = por %p306, %p307
      %p310 = scmp.ne.s32.totalorder %s295, %s309
      %p311 = scmp.eq.s32.totalorder %s28, 0
      %p312 = por %p310, %p311
      %s313 = ssub.s32 %s22, %s29
      %p314 = scmp.eq.s32.totalorder %s313, 0
      %s316 = sadd.s32 %s315, 1
      %s317 = scalar_select %p314, %s315, %s316
      %p320 = pneg %p314
      %p321 = scmp.eq.s32.totalorder %s22, 1
      %p322 = por %p320, %p321
      %p323 = scmp.ne.s32.totalorder %s315, %s318
      %p324 = scmp.eq.s32.totalorder %s22, 0
      %p325 = por %p323, %p324
      %p326 = scmp.ne.s32.totalorder %s315, %s318
      %p327 = scmp.eq.s32.totalorder %s27, 1
      %p328 = por %p326, %p327
      %p329 = scmp.ne.s32.totalorder %s318, %s319
      %p330 = scmp.eq.s32.totalorder %s27, 0
      %p331 = por %p329, %p330
      %p332 = scmp.ne.s32.totalorder %s318, %s319
      %p333 = scmp.eq.s32.totalorder %s28, 1
      %p334 = por %p332, %p333
      %p336 = scmp.ne.s32.totalorder %s319, %s335
      %p337 = scmp.eq.s32.totalorder %s28, 0
      %p338 = por %p336, %p337
      %p339 = scmp.le.s32.totalorder 1, %s22
      %p340 = scmp.lt.s32.totalorder %s22, 3
      %p341 = pnand %p339, %p340
      %p342 = pneg %p341
      // Predicated region
      $region9: #{resnet_forward.5} parent=5 // pred_check
        _
      $region10: #{resnet_forward.5} parent=5 // pred_check_branch
        %344 = sbr.rel (%p341) target = $region12
      $region11: #{resnet_forward.5} parent=5 // pred_region
        %s345 = ssub.s32 %s22, 1
        // Predicated region
        $region13: #{resnet_forward.5} parent=11 // pred_check
          %p346 = pneg %p95
        $region14: #{resnet_forward.5} parent=11 // pred_check_branch
          %348 = sbr.rel (%p346) target = $region16
        $region15: #{resnet_forward.5} parent=11 // pred_region
          _
        $region16: #{resnet_forward.5} parent=11 // pred_fallthru
          _
        // Predicated region
        $region17: #{resnet_forward.5} parent=11 // pred_check
          %p349 = pneg %p116
        $region18: #{resnet_forward.5} parent=11 // pred_check_branch
          %351 = sbr.rel (%p349) target = $region20
        $region19: #{resnet_forward.5} parent=11 // pred_region
          _
        $region20: #{resnet_forward.5} parent=11 // pred_fallthru
          _
        // Predicated region
        $region21: #{resnet_forward.5} parent=11 // pred_check
          %p352 = pneg %p137
        $region22: #{resnet_forward.5} parent=11 // pred_check_branch
          %354 = sbr.rel (%p352) target = $region24
        $region23: #{resnet_forward.5} parent=11 // pred_region
          _
        $region24: #{resnet_forward.5} parent=11 // pred_fallthru
          _
        // Predicated region
        $region25: #{resnet_forward.5} parent=11 // pred_check
          %p355 = pneg %p158
        $region26: #{resnet_forward.5} parent=11 // pred_check_branch
          %357 = sbr.rel (%p355) target = $region28
        $region27: #{resnet_forward.5} parent=11 // pred_region
          _
        $region28: #{resnet_forward.5} parent=11 // pred_fallthru
          _
        // Predicated region
        $region29: #{resnet_forward.5} parent=11 // pred_check
          %p358 = pneg %p179
        $region30: #{resnet_forward.5} parent=11 // pred_check_branch
          %360 = sbr.rel (%p358) target = $region32
        $region31: #{resnet_forward.5} parent=11 // pred_region
          _
        $region32: #{resnet_forward.5} parent=11 // pred_fallthru
          _
        // Predicated region
        $region33: #{resnet_forward.5} parent=11 // pred_check
          %p361 = pneg %p200
        $region34: #{resnet_forward.5} parent=11 // pred_check_branch
          %363 = sbr.rel (%p361) target = $region36
        $region35: #{resnet_forward.5} parent=11 // pred_region
          _
        $region36: #{resnet_forward.5} parent=11 // pred_fallthru
          _
        // Predicated region
        $region37: #{resnet_forward.5} parent=11 // pred_check
          %p364 = pneg %p221
        $region38: #{resnet_forward.5} parent=11 // pred_check_branch
          %366 = sbr.rel (%p364) target = $region40
        $region39: #{resnet_forward.5} parent=11 // pred_region
          _
        $region40: #{resnet_forward.5} parent=11 // pred_fallthru
          _
        // Predicated region
        $region41: #{resnet_forward.5} parent=11 // pred_check
          %p367 = pneg %p242
        $region42: #{resnet_forward.5} parent=11 // pred_check_branch
          %369 = sbr.rel (%p367) target = $region44
        $region43: #{resnet_forward.5} parent=11 // pred_region
          _
        $region44: #{resnet_forward.5} parent=11 // pred_fallthru
          _
        // Predicated region
        $region45: #{resnet_forward.5} parent=11 // pred_check
          %p370 = pneg %p263
        $region46: #{resnet_forward.5} parent=11 // pred_check_branch
          %372 = sbr.rel (%p370) target = $region48
        $region47: #{resnet_forward.5} parent=11 // pred_region
          _
        $region48: #{resnet_forward.5} parent=11 // pred_fallthru
          _
        // Predicated region
        $region49: #{resnet_forward.5} parent=11 // pred_check
          %p373 = pneg %p284
        $region50: #{resnet_forward.5} parent=11 // pred_check_branch
          %375 = sbr.rel (%p373) target = $region52
        $region51: #{resnet_forward.5} parent=11 // pred_region
          _
        $region52: #{resnet_forward.5} parent=11 // pred_fallthru
          _
        // Predicated region
        $region53: #{resnet_forward.5} parent=11 // pred_check
          %p376 = pneg %p305
        $region54: #{resnet_forward.5} parent=11 // pred_check_branch
          %378 = sbr.rel (%p376) target = $region56
        $region55: #{resnet_forward.5} parent=11 // pred_region
          _
        $region56: #{resnet_forward.5} parent=11 // pred_fallthru
          _
      $region12: #{resnet_forward.5} parent=5 // pred_fallthru
        _
      %p379 = scmp.lt.s32.totalorder %s22, 2
      // Predicated region
      $region57: #{resnet_forward.5} parent=5 // pred_check
        %p380 = pneg %p379
      $region58: #{resnet_forward.5} parent=5 // pred_check_branch
        %382 = sbr.rel (%p380) target = $region60
      $region59: #{resnet_forward.5} parent=5 // pred_region
        // Predicated region
        $region61: #{resnet_forward.5} parent=59 // pred_check
          %p383 = pneg %p42
        $region62: #{resnet_forward.5} parent=59 // pred_check_branch
          %385 = sbr.rel (%p383) target = $region64
        $region63: #{resnet_forward.5} parent=59 // pred_region
          %p386 = scmp.lt.s32.totalorder %s22, 1
          %s387 = scalar_select %p386, %s22, 1
          %s388 = smul.addr %s387, 8
          %s389 = smul.addr %s388, 4
          %s390 = scalar_lea.vmem %s0, %s389
        $region64: #{resnet_forward.5} parent=59 // pred_fallthru
          _
        // Predicated region
        $region65: #{resnet_forward.5} parent=59 // pred_check
          %p391 = pneg %p68
        $region66: #{resnet_forward.5} parent=59 // pred_check_branch
          %393 = sbr.rel (%p391) target = $region68
        $region67: #{resnet_forward.5} parent=59 // pred_region
          %p394 = scmp.lt.s32.totalorder %s22, 1
          %s395 = scalar_select %p394, %s22, 1
          %s396 = smul.addr %s395, 8
          %s397 = smul.addr %s396, 4
          %s398 = scalar_lea.vmem %s1, %s397
        $region68: #{resnet_forward.5} parent=59 // pred_fallthru
          _
      $region60: #{resnet_forward.5} parent=5 // pred_fallthru
        _
      %p399 = scmp.le.s32.totalorder 1, %s22
      %p400 = scmp.lt.s32.totalorder %s22, 3
      %p401 = pnand %p399, %p400
      %p402 = pneg %p401
      // Predicated region
      $region69: #{resnet_forward.5} parent=5 // pred_check
        _
      $region70: #{resnet_forward.5} parent=5 // pred_check_branch
        %404 = sbr.rel (%p401) target = $region72
      $region71: #{resnet_forward.5} parent=5 // pred_region
        %s405 = ssub.s32 %s22, 1
        %p406 = scmp.lt.s32.totalorder %s27, 1
        %s407 = scalar_select %p406, %s27, 1
        %s408 = smul.addr %s407, 8
        %s409 = smul.addr %s408, 4
        %s410 = scalar_lea.vmem %s0, %s409
        %p411 = pneg %p48
        %p412 = pneg %p45
        %p413 = scmp.lt.s32.totalorder %s27, 1
        %s414 = scalar_select %p413, %s27, 1
        %s415 = smul.addr %s414, 8
        %s416 = smul.addr %s415, 4
        %s417 = scalar_lea.vmem %s1, %s416
        %p418 = pneg %p74
        %p419 = pneg %p71
        %p420 = pneg %p95
        %p421 = pneg %p92
        %p422 = pneg %p116
        %p423 = pneg %p113
        %p424 = pneg %p137
        %p425 = pneg %p134
        %p426 = pneg %p158
        %p427 = pneg %p155
        %p428 = pneg %p179
        %p429 = pneg %p176
        %p430 = pneg %p200
        %p431 = pneg %p197
        %p432 = pneg %p221
        %p433 = pneg %p218
        %p434 = pneg %p242
        %p435 = pneg %p239
        %p436 = pneg %p263
        %p437 = pneg %p260
        %p438 = pneg %p284
        %p439 = pneg %p281
        %p440 = pneg %p305
        %p441 = pneg %p302
        %p442 = pneg %p331
        %p443 = pneg %p328
        %s444 = sand.u32 %s318, 1
        %s445 = scalar_lea.sflag [#allocation3], %s444
        %s446 = sand.u32 %s318, 1
        %s447 = scalar_lea.vmem [#allocation2], %s446
        %p448 = scmp.lt.s32.totalorder %s27, 1
        %s449 = scalar_select %p448, %s27, 1
        %s450 = smul.addr %s449, 8
        %s451 = smul.addr %s450, 4
        %s452 = scalar_lea.vmem %s0, %s451
        %p453 = scmp.lt.s32.totalorder %s27, 1
        %s454 = scalar_select %p453, %s27, 1
        %s455 = smul.addr %s454, 8
        %s456 = smul.addr %s455, 4
        %s457 = scalar_lea.vmem %s1, %s456
        %v459 = vld [vmem:[%s452] sm:$0xf]
        %v460 = vld [vmem:[%s452 + $0x4] sm:$0xf]
        %v461 = vld [vmem:[%s452 + $0x8] sm:$0xf]
        %v462 = vld [vmem:[%s452 + $0xc] sm:$0xf]
        %v463 = vld [vmem:[%s452 + $0x10] sm:$0xf]
        %v464 = vld [vmem:[%s452 + $0x14] sm:$0xf]
        %v465 = vld [vmem:[%s452 + $0x18] sm:$0xf]
        %v466 = vld [vmem:[%s452 + $0x1c] sm:$0xf]
        %v467 = vld [vmem:[%s2] sm:$0xf]
        %v468 = vld [vmem:[%s2 + $0x4] sm:$0xf]
        %v469 = vld [vmem:[%s2 + $0x8] sm:$0xf]
        %v470 = vld [vmem:[%s2 + $0xc] sm:$0xf]
        %v471 = vld [vmem:[%s2 + $0x10] sm:$0xf]
        %v472 = vld [vmem:[%s2 + $0x14] sm:$0xf]
        %v473 = vld [vmem:[%s2 + $0x18] sm:$0xf]
        %v474 = vld [vmem:[%s2 + $0x1c] sm:$0xf]
        %v475 = vld [vmem:[%s2 + $0x20] sm:$0xf]
        %v484 = vunpack.c.l.b16 %v459
        %v485 = vunpack.c.l.b16 %v460
        %v486 = vunpack.c.l.b16 %v461
        %v487 = vunpack.c.l.b16 %v462
        %v488 = vunpack.c.l.b16 %v463
        %v489 = vunpack.c.l.b16 %v464
        %v490 = vunpack.c.l.b16 %v465
        %v491 = vunpack.c.l.b16 %v466
        %v492 = vpack.c.b16 %v485, %v484
        %v493 = vpack.c.b16 %v487, %v486
        %v494 = vpack.c.b16 %v489, %v488
        %v495 = vpack.c.b16 %v491, %v490
        %v505 = vunpack.c.l.b16 %v467
        %v506 = vunpack.c.l.b16 %v468
        %v507 = vunpack.c.l.b16 %v469
        %v508 = vunpack.c.l.b16 %v470
        %v509 = vunpack.c.l.b16 %v471
        %v510 = vunpack.c.l.b16 %v472
        %v511 = vunpack.c.l.b16 %v473
        %v512 = vunpack.c.l.b16 %v474
        %v513 = vunpack.c.l.b16 %v475
        %v514 = vpack.c.b16 %v506, %v505
        %v515 = vpack.c.b16 %v508, %v507
        %v516 = vpack.c.b16 %v510, %v509
        %v517 = vpack.c.b16 %v512, %v511
        %v518 = vpack.c.b16 %v513, %v513
        %vm523 = vcmask 588800
        %v525 = vsel %vm523, %v492, 0
        %v528 = vsel %vm523, %v493, 0
        %v531 = vsel %vm523, %v494, 0
        %v534 = vsel %vm523, %v495, 0
        %vm536 = vcmask 1043456
        %v538 = vsel %vm536, %v518, 0
        %540 = vmatpush.bf16.msra.mxu0 0
        %541 = vmatpush.bf16.msra.mxu0 0
        %542 = vmatpush.bf16.msra.mxu0 0
        %543 = vmatpush.bf16.msra.mxu0 %v538
        %544 = vmatpush.bf16.msra.mxu0 %v517
        %545 = vmatpush.bf16.msra.mxu0 %v516
        %546 = vmatpush.bf16.msra.mxu0 %v515
        %547 = vmatpush.bf16.msra.mxu0 %v514
        %548 = vmatmul.bf16.gmra.mxu0 %v525
        %v549 = vpop.f32.mrf.mxu0
        %v550 = vadd.f32 0.0, %v549
        %v551 = vpop.f32.mrf.mxu0
        %v552 = vadd.f32 0.0, %v551
        %553 = vmatmul.bf16.gmra.mxu0 %v528
        %v554 = vpop.f32.mrf.mxu0
        %v555 = vadd.f32 0.0, %v554
        %v556 = vpop.f32.mrf.mxu0
        %v557 = vadd.f32 0.0, %v556
        %558 = vmatmul.bf16.gmra.mxu0 %v531
        %v559 = vpop.f32.mrf.mxu0
        %v560 = vadd.f32 0.0, %v559
        %v561 = vpop.f32.mrf.mxu0
        %v562 = vadd.f32 0.0, %v561
        %563 = vmatmul.bf16.gmra.mxu0 %v534
        %v564 = vpop.f32.mrf.mxu0
        %v565 = vadd.f32 0.0, %v564
        %v566 = vpop.f32.mrf.mxu0
        %v567 = vadd.f32 0.0, %v566
        %568 = vdwg.mxu0
        %v569 = vld [vmem:[%s3] sm:$0x1]
        %v570 = vld [vmem:[%s4] sm:$0x1]
        %v571 = vlaneseq
        %v572 = vand.u32 %v571, 127
        %vm573 = vcmask 64512
        %v574 = vsel %vm573, %v550, 0.0
        %v575 = vsel %vm573, %v552, 0.0
        %v576 = vadd.f32 %v574, %v575
        %v577 = vsel %vm573, %v555, 0.0
        %v578 = vadd.f32 %v576, %v577
        %v579 = vsel %vm573, %v557, 0.0
        %v580 = vadd.f32 %v578, %v579
        %v581 = vsel %vm573, %v560, 0.0
        %v582 = vadd.f32 %v580, %v581
        %v583 = vsel %vm573, %v562, 0.0
        %v584 = vadd.f32 %v582, %v583
        %v585 = vsel %vm573, %v565, 0.0
        %v586 = vadd.f32 %v584, %v585
        %v587 = vsel %vm573, %v567, 0.0
        %v588 = vadd.f32 %v586, %v587
        %589 = vadd.xlane.f32.xlu0 %v588
        %v590 = vpop.xlane.xlu0 %589
        %v591 = vrot.slane %v590, 4
        %v592 = vadd.f32 %v590, %v591
        %v593 = vrot.slane %v592, 2
        %v594 = vadd.f32 %v592, %v593
        %v595 = vrot.slane %v594, 1
        %v596 = vadd.f32 %v594, %v595
        %s597 = vtos %v596
        %v598 = vstv %s597
        %v599 = vrcp.pop 512.0
        %v600 = vmul.f32 512.0, %v599
        %v601 = vsub.f32 1.0, %v600
        %v602 = vmul.f32 %v599, %v601
        %v603 = vadd.f32 %v599, %v602
        %vm604 = vweird.f32 %v599
        %v605 = vsel %vm604, %v599, %v603
        %v606 = vmul.f32 %v598, %v605
        %v607 = vmul.f32 %v550, %v550
        %v608 = vmul.f32 %v552, %v552
        %v609 = vmul.f32 %v555, %v555
        %v610 = vmul.f32 %v557, %v557
        %v611 = vmul.f32 %v560, %v560
        %v612 = vmul.f32 %v562, %v562
        %v613 = vmul.f32 %v565, %v565
        %v614 = vmul.f32 %v567, %v567
        %v615 = vsel %vm573, %v607, 0.0
        %v616 = vsel %vm573, %v608, 0.0
        %v617 = vadd.f32 %v615, %v616
        %v618 = vsel %vm573, %v609, 0.0
        %v619 = vadd.f32 %v617, %v618
        %v620 = vsel %vm573, %v610, 0.0
        %v621 = vadd.f32 %v619, %v620
        %v622 = vsel %vm573, %v611, 0.0
        %v623 = vadd.f32 %v621, %v622
        %v624 = vsel %vm573, %v612, 0.0
        %v625 = vadd.f32 %v623, %v624
        %v626 = vsel %vm573, %v613, 0.0
        %v627 = vadd.f32 %v625, %v626
        %v628 = vsel %vm573, %v614, 0.0
        %v629 = vadd.f32 %v627, %v628
        %630 = vadd.xlane.f32.xlu0 %v629
        %v631 = vpop.xlane.xlu0 %630
        %v632 = vrot.slane %v631, 4
        %v633 = vadd.f32 %v631, %v632
        %v634 = vrot.slane %v633, 2
        %v635 = vadd.f32 %v633, %v634
        %v636 = vrot.slane %v635, 1
        %v637 = vadd.f32 %v635, %v636
        %s638 = vtos %v637
        %v639 = vstv %s638
        %v640 = vmul.f32 %v639, %v605
        %v641 = vmul.f32 %v606, %v606
        %v642 = vsub.f32 %v640, %v641
        %vm643 = vcmp.ge.s32.totalorder %v572, 0
        %vm644 = vcmp.lt.s32.totalorder %v572, 8
        %vm645 = vmand %vm643, %vm644
        %v646 = vsel %vm645, %v606, 0.0
        %v647 = vsel %vm645, %v642, 0.0
        %656 = vrot.lane.b32.xlu0 %v550, 120
        %v657 = vpop.permute.xlu0 %656
        %658 = vrot.lane.b32.xlu0 %v552, 120
        %v659 = vpop.permute.xlu0 %658
        %660 = vrot.lane.b32.xlu0 %v555, 120
        %v661 = vpop.permute.xlu0 %660
        %662 = vrot.lane.b32.xlu0 %v557, 120
        %v663 = vpop.permute.xlu0 %662
        %664 = vrot.lane.b32.xlu0 %v560, 120
        %v665 = vpop.permute.xlu0 %664
        %666 = vrot.lane.b32.xlu0 %v562, 120
        %v667 = vpop.permute.xlu0 %666
        %668 = vrot.lane.b32.xlu0 %v565, 120
        %v669 = vpop.permute.xlu0 %668
        %670 = vrot.lane.b32.xlu0 %v567, 120
        %v671 = vpop.permute.xlu0 %670
        %v680 = vsel %vm573, %v657, 0.0
        %v681 = vsel %vm573, %v659, 0.0
        %v682 = vadd.f32 %v680, %v681
        %v683 = vsel %vm573, %v661, 0.0
        %v684 = vadd.f32 %v682, %v683
        %v685 = vsel %vm573, %v663, 0.0
        %v686 = vadd.f32 %v684, %v685
        %v687 = vsel %vm573, %v665, 0.0
        %v688 = vadd.f32 %v686, %v687
        %v689 = vsel %vm573, %v667, 0.0
        %v690 = vadd.f32 %v688, %v689
        %v691 = vsel %vm573, %v669, 0.0
        %v692 = vadd.f32 %v690, %v691
        %v693 = vsel %vm573, %v671, 0.0
        %v694 = vadd.f32 %v692, %v693
        %695 = vadd.xlane.f32.xlu0 %v694
        %v696 = vpop.xlane.xlu0 %695
        %v697 = vrot.slane %v696, 4
        %v698 = vadd.f32 %v696, %v697
        %v699 = vrot.slane %v698, 2
        %v700 = vadd.f32 %v698, %v699
        %v701 = vrot.slane %v700, 1
        %v702 = vadd.f32 %v700, %v701
        %s703 = vtos %v702
        %v704 = vstv %s703
        %v705 = vmul.f32 %v704, %v605
        %714 = vrot.lane.b32.xlu0 %v607, 120
        %v715 = vpop.permute.xlu0 %714
        %716 = vrot.lane.b32.xlu0 %v608, 120
        %v717 = vpop.permute.xlu0 %716
        %718 = vrot.lane.b32.xlu0 %v609, 120
        %v719 = vpop.permute.xlu0 %718
        %720 = vrot.lane.b32.xlu0 %v610, 120
        %v721 = vpop.permute.xlu0 %720
        %722 = vrot.lane.b32.xlu0 %v611, 120
        %v723 = vpop.permute.xlu0 %722
        %724 = vrot.lane.b32.xlu0 %v612, 120
        %v725 = vpop.permute.xlu0 %724
        %726 = vrot.lane.b32.xlu0 %v613, 120
        %v727 = vpop.permute.xlu0 %726
        %728 = vrot.lane.b32.xlu0 %v614, 120
        %v729 = vpop.permute.xlu0 %728
        %v738 = vsel %vm573, %v715, 0.0
        %v739 = vsel %vm573, %v717, 0.0
        %v740 = vadd.f32 %v738, %v739
        %v741 = vsel %vm573, %v719, 0.0
        %v742 = vadd.f32 %v740, %v741
        %v743 = vsel %vm573, %v721, 0.0
        %v744 = vadd.f32 %v742, %v743
        %v745 = vsel %vm573, %v723, 0.0
        %v746 = vadd.f32 %v744, %v745
        %v747 = vsel %vm573, %v725, 0.0
        %v748 = vadd.f32 %v746, %v747
        %v749 = vsel %vm573, %v727, 0.0
        %v750 = vadd.f32 %v748, %v749
        %v751 = vsel %vm573, %v729, 0.0
        %v752 = vadd.f32 %v750, %v751
        %753 = vadd.xlane.f32.xlu0 %v752
        %v754 = vpop.xlane.xlu0 %753
        %v755 = vrot.slane %v754, 4
        %v756 = vadd.f32 %v754, %v755
        %v757 = vrot.slane %v756, 2
        %v758 = vadd.f32 %v756, %v757
        %v759 = vrot.slane %v758, 1
        %v760 = vadd.f32 %v758, %v759
        %s761 = vtos %v760
        %v762 = vstv %s761
        %v763 = vmul.f32 %v762, %v605
        %v764 = vmul.f32 %v705, %v705
        %v765 = vsub.f32 %v763, %v764
        %vm766 = vcmp.ge.s32.totalorder %v572, 8
        %vm767 = vcmp.lt.s32.totalorder %v572, 16
        %vm768 = vmand %vm766, %vm767
        %v769 = vsel %vm768, %v705, %v646
        %v770 = vsel %vm768, %v765, %v647
        %v771 = vadd.f32 %v770, 1e-05
        %v772 = vrsqrt.pop %v771
        %v773 = vmul.f32 %v772, %v771
        %v774 = vmul.f32 %v773, %v772
        %v775 = vmul.f32 0.5, %v774
        %v776 = vsub.f32 1.5, %v775
        %v777 = vmul.f32 %v772, %v776
        %vm778 = vweird.f32 %v771
        %vm779 = vweird.f32 %v772
        %vm780 = vmor %vm778, %vm779
        %v781 = vsel %vm780, %v772, %v777
        %v782 = vmul.f32 %v569, %v781
        %v783 = vmul.f32 %v769, %v782
        %v784 = vsub.f32 %v570, %v783
        %v786 = vperm.slane %v782, 0
        %v788 = vmul.f32 %v550, %v786
        %v789 = vmul.f32 %v552, %v786
        %v790 = vmul.f32 %v555, %v786
        %v791 = vmul.f32 %v557, %v786
        %v792 = vmul.f32 %v560, %v786
        %v793 = vmul.f32 %v562, %v786
        %v794 = vmul.f32 %v565, %v786
        %v795 = vmul.f32 %v567, %v786
        %v797 = vperm.slane %v784, 0
        %v799 = vadd.f32 %v788, %v797
        %v800 = vadd.f32 %v789, %v797
        %v801 = vadd.f32 %v790, %v797
        %v802 = vadd.f32 %v791, %v797
        %v803 = vadd.f32 %v792, %v797
        %v804 = vadd.f32 %v793, %v797
        %v805 = vadd.f32 %v794, %v797
        %v806 = vadd.f32 %v795, %v797
        %v807 = vmax.f32 %v799, 0.0
        %v808 = vmax.f32 %v800, 0.0
        %v809 = vmax.f32 %v801, 0.0
        %v810 = vmax.f32 %v802, 0.0
        %v811 = vmax.f32 %v803, 0.0
        %v812 = vmax.f32 %v804, 0.0
        %v813 = vmax.f32 %v805, 0.0
        %v814 = vmax.f32 %v806, 0.0
        %v824 = vrot.slane 0.0, 7
        %v825 = vrot.slane %v807, 7
        %v826 = vrot.slane %v808, 7
        %v827 = vrot.slane %v809, 7
        %v828 = vrot.slane %v810, 7
        %v829 = vrot.slane %v811, 7
        %v830 = vrot.slane %v812, 7
        %v831 = vrot.slane %v813, 7
        %v832 = vrot.slane %v814, 7
        %vm842 = vcmask 1040384
        %v843 = vsel %vm842, 0.0, %v824
        %v844 = vsel %vm842, 0.0, %v825
        %v845 = vsel %vm842, 0.0, %v826
        %v846 = vsel %vm842, 0.0, %v827
        %v847 = vsel %vm842, 0.0, %v828
        %v848 = vsel %vm842, 0.0, %v829
        %v849 = vsel %vm842, 0.0, %v830
        %v850 = vsel %vm842, 0.0, %v831
        %v851 = vsel %vm842, 0.0, %v832
        %v852 = vsel %vm842, %v824, 0.0
        %v853 = vsel %vm842, %v825, 0.0
        %v854 = vsel %vm842, %v826, 0.0
        %v855 = vsel %vm842, %v827, 0.0
        %v856 = vsel %vm842, %v828, 0.0
        %v857 = vsel %vm842, %v829, 0.0
        %v858 = vsel %vm842, %v830, 0.0
        %v859 = vsel %vm842, %v831, 0.0
        %v860 = vsel %vm842, %v832, 0.0
        %vm877 = vcmask 1046528
        %v878 = vrot.slane %v843, 1
        %v879 = vrot.slane %v852, 1
        %v880 = vsel %vm877, %v878, %v879
        %v881 = vrot.slane %v844, 1
        %v882 = vrot.slane %v853, 1
        %v883 = vsel %vm877, %v881, %v882
        %v884 = vrot.slane %v845, 1
        %v885 = vrot.slane %v854, 1
        %v886 = vsel %vm877, %v884, %v885
        %v887 = vrot.slane %v846, 1
        %v888 = vrot.slane %v855, 1
        %v889 = vsel %vm877, %v887, %v888
        %v890 = vrot.slane %v847, 1
        %v891 = vrot.slane %v856, 1
        %v892 = vsel %vm877, %v890, %v891
        %v893 = vrot.slane %v848, 1
        %v894 = vrot.slane %v857, 1
        %v895 = vsel %vm877, %v893, %v894
        %v896 = vrot.slane %v849, 1
        %v897 = vrot.slane %v858, 1
        %v898 = vsel %vm877, %v896, %v897
        %v899 = vrot.slane %v850, 1
        %v900 = vrot.slane %v859, 1
        %v901 = vsel %vm877, %v899, %v900
        %902 = vrot.lane.b32.xlu0 %v880, 16
        %v903 = vpop.permute.xlu0 %902
        %904 = vrot.lane.b32.xlu0 %v883, 16
        %v905 = vpop.permute.xlu0 %904
        %906 = vrot.lane.b32.xlu0 %v886, 16
        %v907 = vpop.permute.xlu0 %906
        %908 = vrot.lane.b32.xlu0 %v889, 16
        %v909 = vpop.permute.xlu0 %908
        %910 = vrot.lane.b32.xlu0 %v892, 16
        %v911 = vpop.permute.xlu0 %910
        %912 = vrot.lane.b32.xlu0 %v895, 16
        %v913 = vpop.permute.xlu0 %912
        %914 = vrot.lane.b32.xlu0 %v898, 16
        %v915 = vpop.permute.xlu0 %914
        %916 = vrot.lane.b32.xlu0 %v901, 16
        %v917 = vpop.permute.xlu0 %916
        %vm926 = vcmask 1045504
        %v927 = vrot.slane %v843, 2
        %v928 = vrot.slane %v852, 2
        %v929 = vsel %vm926, %v927, %v928
        %v930 = vrot.slane %v844, 2
        %v931 = vrot.slane %v853, 2
        %v932 = vsel %vm926, %v930, %v931
        %v933 = vrot.slane %v845, 2
        %v934 = vrot.slane %v854, 2
        %v935 = vsel %vm926, %v933, %v934
        %v936 = vrot.slane %v846, 2
        %v937 = vrot.slane %v855, 2
        %v938 = vsel %vm926, %v936, %v937
        %v939 = vrot.slane %v847, 2
        %v940 = vrot.slane %v856, 2
        %v941 = vsel %vm926, %v939, %v940
        %v942 = vrot.slane %v848, 2
        %v943 = vrot.slane %v857, 2
        %v944 = vsel %vm926, %v942, %v943
        %v945 = vrot.slane %v849, 2
        %v946 = vrot.slane %v858, 2
        %v947 = vsel %vm926, %v945, %v946
        %v948 = vrot.slane %v850, 2
        %v949 = vrot.slane %v859, 2
        %v950 = vsel %vm926, %v948, %v949
        %951 = vrot.lane.b32.xlu0 %v929, 32
        %v952 = vpop.permute.xlu0 %951
        %953 = vrot.lane.b32.xlu0 %v932, 32
        %v954 = vpop.permute.xlu0 %953
        %955 = vrot.lane.b32.xlu0 %v935, 32
        %v956 = vpop.permute.xlu0 %955
        %957 = vrot.lane.b32.xlu0 %v938, 32
        %v958 = vpop.permute.xlu0 %957
        %959 = vrot.lane.b32.xlu0 %v941, 32
        %v960 = vpop.permute.xlu0 %959
        %961 = vrot.lane.b32.xlu0 %v944, 32
        %v962 = vpop.permute.xlu0 %961
        %963 = vrot.lane.b32.xlu0 %v947, 32
        %v964 = vpop.permute.xlu0 %963
        %965 = vrot.lane.b32.xlu0 %v950, 32
        %v966 = vpop.permute.xlu0 %965
        %976 = vrot.lane.b32.xlu0 %v844, 48
        %v977 = vpop.permute.xlu0 %976
        %978 = vrot.lane.b32.xlu0 %v845, 48
        %v979 = vpop.permute.xlu0 %978
        %980 = vrot.lane.b32.xlu0 %v846, 48
        %v981 = vpop.permute.xlu0 %980
        %982 = vrot.lane.b32.xlu0 %v847, 48
        %v983 = vpop.permute.xlu0 %982
        %984 = vrot.lane.b32.xlu0 %v848, 48
        %v985 = vpop.permute.xlu0 %984
        %986 = vrot.lane.b32.xlu0 %v849, 48
        %v987 = vpop.permute.xlu0 %986
        %988 = vrot.lane.b32.xlu0 %v850, 48
        %v989 = vpop.permute.xlu0 %988
        %990 = vrot.lane.b32.xlu0 %v851, 48
        %v991 = vpop.permute.xlu0 %990
        %v1001 = vrot.slane %v851, 1
        %v1002 = vrot.slane %v860, 1
        %v1003 = vsel %vm877, %v1001, %v1002
        %1004 = vrot.lane.b32.xlu0 %v883, 64
        %v1005 = vpop.permute.xlu0 %1004
        %1006 = vrot.lane.b32.xlu0 %v886, 64
        %v1007 = vpop.permute.xlu0 %1006
        %1008 = vrot.lane.b32.xlu0 %v889, 64
        %v1009 = vpop.permute.xlu0 %1008
        %1010 = vrot.lane.b32.xlu0 %v892, 64
        %v1011 = vpop.permute.xlu0 %1010
        %1012 = vrot.lane.b32.xlu0 %v895, 64
        %v1013 = vpop.permute.xlu0 %1012
        %1014 = vrot.lane.b32.xlu0 %v898, 64
        %v1015 = vpop.permute.xlu0 %1014
        %1016 = vrot.lane.b32.xlu0 %v901, 64
        %v1017 = vpop.permute.xlu0 %1016
        %1018 = vrot.lane.b32.xlu0 %v1003, 64
        %v1019 = vpop.permute.xlu0 %1018
        %v1028 = vrot.slane %v851, 2
        %v1029 = vrot.slane %v860, 2
        %v1030 = vsel %vm926, %v1028, %v1029
        %1031 = vrot.lane.b32.xlu0 %v932, 80
        %v1032 = vpop.permute.xlu0 %1031
        %1033 = vrot.lane.b32.xlu0 %v935, 80
        %v1034 = vpop.permute.xlu0 %1033
        %1035 = vrot.lane.b32.xlu0 %v938, 80
        %v1036 = vpop.permute.xlu0 %1035
        %1037 = vrot.lane.b32.xlu0 %v941, 80
        %v1038 = vpop.permute.xlu0 %1037
        %1039 = vrot.lane.b32.xlu0 %v944, 80
        %v1040 = vpop.permute.xlu0 %1039
        %1041 = vrot.lane.b32.xlu0 %v947, 80
        %v1042 = vpop.permute.xlu0 %1041
        %1043 = vrot.lane.b32.xlu0 %v950, 80
        %v1044 = vpop.permute.xlu0 %1043
        %1045 = vrot.lane.b32.xlu0 %v1030, 80
        %v1046 = vpop.permute.xlu0 %1045
        %1055 = vrot.lane.b32.xlu0 %v845, 96
        %v1056 = vpop.permute.xlu0 %1055
        %1057 = vrot.lane.b32.xlu0 %v846, 96
        %v1058 = vpop.permute.xlu0 %1057
        %1059 = vrot.lane.b32.xlu0 %v847, 96
        %v1060 = vpop.permute.xlu0 %1059
        %1061 = vrot.lane.b32.xlu0 %v848, 96
        %v1062 = vpop.permute.xlu0 %1061
        %1063 = vrot.lane.b32.xlu0 %v849, 96
        %v1064 = vpop.permute.xlu0 %1063
        %1065 = vrot.lane.b32.xlu0 %v850, 96
        %v1066 = vpop.permute.xlu0 %1065
        %1067 = vrot.lane.b32.xlu0 %v851, 96
        %v1068 = vpop.permute.xlu0 %1067
        %1069 = vrot.lane.b32.xlu0 %v843, 96
        %v1070 = vpop.permute.xlu0 %1069
        %1079 = vrot.lane.b32.xlu0 %v886, 112
        %v1080 = vpop.permute.xlu0 %1079
        %1081 = vrot.lane.b32.xlu0 %v889, 112
        %v1082 = vpop.permute.xlu0 %1081
        %1083 = vrot.lane.b32.xlu0 %v892, 112
        %v1084 = vpop.permute.xlu0 %1083
        %1085 = vrot.lane.b32.xlu0 %v895, 112
        %v1086 = vpop.permute.xlu0 %1085
        %1087 = vrot.lane.b32.xlu0 %v898, 112
        %v1088 = vpop.permute.xlu0 %1087
        %1089 = vrot.lane.b32.xlu0 %v901, 112
        %v1090 = vpop.permute.xlu0 %1089
        %1091 = vrot.lane.b32.xlu0 %v1003, 112
        %v1092 = vpop.permute.xlu0 %1091
        %1093 = vrot.lane.b32.xlu0 %v880, 112
        %v1094 = vpop.permute.xlu0 %1093
        %vm1111 = vcmask 130048
        %v1112 = vsel %vm1111, %v843, %v903
        %v1113 = vsel %vm1111, %v844, %v905
        %v1114 = vsel %vm1111, %v845, %v907
        %v1115 = vsel %vm1111, %v846, %v909
        %v1116 = vsel %vm1111, %v847, %v911
        %v1117 = vsel %vm1111, %v848, %v913
        %v1118 = vsel %vm1111, %v849, %v915
        %v1119 = vsel %vm1111, %v850, %v917
        %vm1120 = vcmask 261120
        %v1121 = vsel %vm1120, %v1112, %v952
        %v1122 = vsel %vm1120, %v1113, %v954
        %v1123 = vsel %vm1120, %v1114, %v956
        %v1124 = vsel %vm1120, %v1115, %v958
        %v1125 = vsel %vm1120, %v1116, %v960
        %v1126 = vsel %vm1120, %v1117, %v962
        %v1127 = vsel %vm1120, %v1118, %v964
        %v1128 = vsel %vm1120, %v1119, %v966
        %vm1129 = vcmask 392192
        %v1130 = vsel %vm1129, %v1121, %v977
        %v1131 = vsel %vm1129, %v1122, %v979
        %v1132 = vsel %vm1129, %v1123, %v981
        %v1133 = vsel %vm1129, %v1124, %v983
        %v1134 = vsel %vm1129, %v1125, %v985
        %v1135 = vsel %vm1129, %v1126, %v987
        %v1136 = vsel %vm1129, %v1127, %v989
        %v1137 = vsel %vm1129, %v1128, %v991
        %vm1138 = vcmask 523264
        %v1139 = vsel %vm1138, %v1130, %v1005
        %v1140 = vsel %vm1138, %v1131, %v1007
        %v1141 = vsel %vm1138, %v1132, %v1009
        %v1142 = vsel %vm1138, %v1133, %v1011
        %v1143 = vsel %vm1138, %v1134, %v1013
        %v1144 = vsel %vm1138, %v1135, %v1015
        %v1145 = vsel %vm1138, %v1136, %v1017
        %v1146 = vsel %vm1138, %v1137, %v1019
        %vm1147 = vcmask 654336
        %v1148 = vsel %vm1147, %v1139, %v1032
        %v1149 = vsel %vm1147, %v1140, %v1034
        %v1150 = vsel %vm1147, %v1141, %v1036
        %v1151 = vsel %vm1147, %v1142, %v1038
        %v1152 = vsel %vm1147, %v1143, %v1040
        %v1153 = vsel %vm1147, %v1144, %v1042
        %v1154 = vsel %vm1147, %v1145, %v1044
        %v1155 = vsel %vm1147, %v1146, %v1046
        %vm1156 = vcmask 785408
        %v1157 = vsel %vm1156, %v1148, %v1056
        %v1158 = vsel %vm1156, %v1149, %v1058
        %v1159 = vsel %vm1156, %v1150, %v1060
        %v1160 = vsel %vm1156, %v1151, %v1062
        %v1161 = vsel %vm1156, %v1152, %v1064
        %v1162 = vsel %vm1156, %v1153, %v1066
        %v1163 = vsel %vm1156, %v1154, %v1068
        %v1164 = vsel %vm1156, %v1155, %v1070
        %vm1165 = vcmask 916480
        %v1166 = vsel %vm1165, %v1157, %v1080
        %v1167 = vsel %vm1165, %v1158, %v1082
        %v1168 = vsel %vm1165, %v1159, %v1084
        %v1169 = vsel %vm1165, %v1160, %v1086
        %v1170 = vsel %vm1165, %v1161, %v1088
        %v1171 = vsel %vm1165, %v1162, %v1090
        %v1172 = vsel %vm1165, %v1163, %v1092
        %v1173 = vsel %vm1165, %v1164, %v1094
        %v1174 = vpack.c.bf16 %v1167, %v1166
        %v1175 = vpack.c.bf16 %v938, %v935
        %v1176 = vpack.c.bf16 %v1169, %v1168
        %v1177 = vpack.c.bf16 %v944, %v941
        %v1178 = vpack.c.bf16 %v1171, %v1170
        %v1179 = vpack.c.bf16 %v950, %v947
        %v1180 = vpack.c.bf16 %v1173, %v1172
        %v1181 = vpack.c.bf16 %v929, %v1030
        %v1182 = vld [vmem:[%s5] sm:$0xf]
        %v1183 = vld [vmem:[%s5 + $0x4] sm:$0xf]
        %v1184 = vld [vmem:[%s5 + $0x8] sm:$0xf]
        %v1185 = vld [vmem:[%s5 + $0xc] sm:$0xf]
        %v1186 = vld [vmem:[%s5 + $0x10] sm:$0xf]
        %v1187 = vld [vmem:[%s5 + $0x14] sm:$0xf]
        %v1188 = vld [vmem:[%s5 + $0x18] sm:$0xf]
        %v1189 = vld [vmem:[%s5 + $0x1c] sm:$0xf]
        %v1190 = vld [vmem:[%s5 + $0x20] sm:$0xf]
        %v1191 = vld [vmem:[%s5 + $0x24] sm:$0xf]
        %v1192 = vld [vmem:[%s5 + $0x28] sm:$0xf]
        %v1193 = vld [vmem:[%s5 + $0x2c] sm:$0xf]
        %v1194 = vld [vmem:[%s5 + $0x30] sm:$0xf]
        %v1195 = vld [vmem:[%s5 + $0x34] sm:$0xf]
        %v1196 = vld [vmem:[%s5 + $0x38] sm:$0xf]
        %v1197 = vld [vmem:[%s5 + $0x3c] sm:$0xf]
        %v1198 = vld [vmem:[%s5 + $0x40] sm:$0xf]
        %v1199 = vld [vmem:[%s5 + $0x44] sm:$0xf]
        %v1218 = vunpack.c.l.b16 %v1182
        %v1219 = vunpack.c.l.b16 %v1183
        %v1220 = vunpack.c.l.b16 %v1184
        %v1221 = vunpack.c.l.b16 %v1185
        %v1222 = vunpack.c.l.b16 %v1186
        %v1223 = vunpack.c.l.b16 %v1187
        %v1224 = vunpack.c.l.b16 %v1188
        %v1225 = vunpack.c.l.b16 %v1189
        %v1226 = vunpack.c.l.b16 %v1190
        %v1227 = vunpack.c.l.b16 %v1191
        %v1228 = vunpack.c.l.b16 %v1192
        %v1229 = vunpack.c.l.b16 %v1193
        %v1230 = vunpack.c.l.b16 %v1194
        %v1231 = vunpack.c.l.b16 %v1195
        %v1232 = vunpack.c.l.b16 %v1196
        %v1233 = vunpack.c.l.b16 %v1197
        %v1234 = vunpack.c.l.b16 %v1198
        %v1235 = vunpack.c.l.b16 %v1199
        %v1236 = vpack.c.b16 %v1219, %v1218
        %v1237 = vpack.c.b16 %v1221, %v1220
        %v1238 = vpack.c.b16 %v1223, %v1222
        %v1239 = vpack.c.b16 %v1225, %v1224
        %v1240 = vpack.c.b16 %v1227, %v1226
        %v1241 = vpack.c.b16 %v1229, %v1228
        %v1242 = vpack.c.b16 %v1231, %v1230
        %v1243 = vpack.c.b16 %v1233, %v1232
        %v1244 = vpack.c.b16 %v1235, %v1234
        %v1255 = vsel %vm1111, %v1175, 0
        %v1258 = vsel %vm1111, %v1177, 0
        %v1261 = vsel %vm1111, %v1179, 0
        %v1264 = vsel %vm1111, %v1181, 0
        %1266 = vmatpush.bf16.msra.mxu0 %v1243
        %1267 = vmatpush.bf16.msra.mxu0 %v1242
        %1268 = vmatpush.bf16.msra.mxu0 %v1241
        %1269 = vmatpush.bf16.msra.mxu0 %v1240
        %1270 = vmatpush.bf16.msra.mxu0 %v1239
        %1271 = vmatpush.bf16.msra.mxu0 %v1238
        %1272 = vmatpush.bf16.msra.mxu0 %v1237
        %1273 = vmatpush.bf16.msra.mxu0 %v1236
        %1274 = vmatmul.bf16.gmra.mxu0 %v1174
        %v1275 = vpop.f32.mrf.mxu0
        %v1276 = vadd.f32 0.0, %v1275
        %v1277 = vpop.f32.mrf.mxu0
        %v1278 = vadd.f32 0.0, %v1277
        %1279 = vmatmul.bf16.gmra.mxu0 %v1176
        %v1280 = vpop.f32.mrf.mxu0
        %v1281 = vadd.f32 0.0, %v1280
        %v1282 = vpop.f32.mrf.mxu0
        %v1283 = vadd.f32 0.0, %v1282
        %1284 = vmatmul.bf16.gmra.mxu0 %v1178
        %v1285 = vpop.f32.mrf.mxu0
        %v1286 = vadd.f32 0.0, %v1285
        %v1287 = vpop.f32.mrf.mxu0
        %v1288 = vadd.f32 0.0, %v1287
        %1289 = vmatmul.bf16.gmra.mxu0 %v1180
        %v1290 = vpop.f32.mrf.mxu0
        %v1291 = vadd.f32 0.0, %v1290
        %v1292 = vpop.f32.mrf.mxu0
        %v1293 = vadd.f32 0.0, %v1292
        %1294 = vdwg.mxu0
        %1295 = vmatpush.bf16.msra.mxu0 0
        %1296 = vmatpush.bf16.msra.mxu0 0
        %1297 = vmatpush.bf16.msra.mxu0 0
        %1298 = vmatpush.bf16.msra.mxu0 0
        %1299 = vmatpush.bf16.msra.mxu0 0
        %1300 = vmatpush.bf16.msra.mxu0 0
        %1301 = vmatpush.bf16.msra.mxu0 0
        %1302 = vmatpush.bf16.msra.mxu0 %v1244
        %1303 = vmatmul.bf16.gmra.mxu0 %v1255
        %v1304 = vpop.f32.mrf.mxu0
        %v1305 = vadd.f32 %v1276, %v1304
        %v1306 = vpop.f32.mrf.mxu0
        %v1307 = vadd.f32 %v1278, %v1306
        %1308 = vmatmul.bf16.gmra.mxu0 %v1258
        %v1309 = vpop.f32.mrf.mxu0
        %v1310 = vadd.f32 %v1281, %v1309
        %v1311 = vpop.f32.mrf.mxu0
        %v1312 = vadd.f32 %v1283, %v1311
        %1313 = vmatmul.bf16.gmra.mxu0 %v1261
        %v1314 = vpop.f32.mrf.mxu0
        %v1315 = vadd.f32 %v1286, %v1314
        %v1316 = vpop.f32.mrf.mxu0
        %v1317 = vadd.f32 %v1288, %v1316
        %1318 = vmatmul.bf16.gmra.mxu0 %v1264
        %v1319 = vpop.f32.mrf.mxu0
        %v1320 = vadd.f32 %v1291, %v1319
        %v1321 = vpop.f32.mrf.mxu0
        %v1322 = vadd.f32 %v1293, %v1321
        %1323 = vdwg.mxu0
        %v1324 = vld [vmem:[%s6] sm:$0x1]
        %v1325 = vld [vmem:[%s7] sm:$0x1]
        %v1326 = vsel %vm573, %v1305, 0.0
        %v1327 = vsel %vm573, %v1307, 0.0
        %v1328 = vadd.f32 %v1326, %v1327
        %v1329 = vsel %vm573, %v1310, 0.0
        %v1330 = vadd.f32 %v1328, %v1329
        %v1331 = vsel %vm573, %v1312, 0.0
        %v1332 = vadd.f32 %v1330, %v1331
        %v1333 = vsel %vm573, %v1315, 0.0
        %v1334 = vadd.f32 %v1332, %v1333
        %v1335 = vsel %vm573, %v1317, 0.0
        %v1336 = vadd.f32 %v1334, %v1335
        %v1337 = vsel %vm573, %v1320, 0.0
        %v1338 = vadd.f32 %v1336, %v1337
        %v1339 = vsel %vm573, %v1322, 0.0
        %v1340 = vadd.f32 %v1338, %v1339
        %1341 = vadd.xlane.f32.xlu0 %v1340
        %v1342 = vpop.xlane.xlu0 %1341
        %v1343 = vrot.slane %v1342, 4
        %v1344 = vadd.f32 %v1342, %v1343
        %v1345 = vrot.slane %v1344, 2
        %v1346 = vadd.f32 %v1344, %v1345
        %v1347 = vrot.slane %v1346, 1
        %v1348 = vadd.f32 %v1346, %v1347
        %s1349 = vtos %v1348
        %v1350 = vstv %s1349
        %v1351 = vmul.f32 %v1350, %v605
        %v1352 = vmul.f32 %v1305, %v1305
        %v1353 = vmul.f32 %v1307, %v1307
        %v1354 = vmul.f32 %v1310, %v1310
        %v1355 = vmul.f32 %v1312, %v1312
        %v1356 = vmul.f32 %v1315, %v1315
        %v1357 = vmul.f32 %v1317, %v1317
        %v1358 = vmul.f32 %v1320, %v1320
        %v1359 = vmul.f32 %v1322, %v1322
        %v1360 = vsel %vm573, %v1352, 0.0
        %v1361 = vsel %vm573, %v1353, 0.0
        %v1362 = vadd.f32 %v1360, %v1361
        %v1363 = vsel %vm573, %v1354, 0.0
        %v1364 = vadd.f32 %v1362, %v1363
        %v1365 = vsel %vm573, %v1355, 0.0
        %v1366 = vadd.f32 %v1364, %v1365
        %v1367 = vsel %vm573, %v1356, 0.0
        %v1368 = vadd.f32 %v1366, %v1367
        %v1369 = vsel %vm573, %v1357, 0.0
        %v1370 = vadd.f32 %v1368, %v1369
        %v1371 = vsel %vm573, %v1358, 0.0
        %v1372 = vadd.f32 %v1370, %v1371
        %v1373 = vsel %vm573, %v1359, 0.0
        %v1374 = vadd.f32 %v1372, %v1373
        %1375 = vadd.xlane.f32.xlu0 %v1374
        %v1376 = vpop.xlane.xlu0 %1375
        %v1377 = vrot.slane %v1376, 4
        %v1378 = vadd.f32 %v1376, %v1377
        %v1379 = vrot.slane %v1378, 2
        %v1380 = vadd.f32 %v1378, %v1379
        %v1381 = vrot.slane %v1380, 1
        %v1382 = vadd.f32 %v1380, %v1381
        %s1383 = vtos %v1382
        %v1384 = vstv %s1383
        %v1385 = vmul.f32 %v1384, %v605
        %v1386 = vmul.f32 %v1351, %v1351
        %v1387 = vsub.f32 %v1385, %v1386
        %v1388 = vsel %vm645, %v1351, 0.0
        %v1389 = vsel %vm645, %v1387, 0.0
        %1398 = vrot.lane.b32.xlu0 %v1305, 120
        %v1399 = vpop.permute.xlu0 %1398
        %1400 = vrot.lane.b32.xlu0 %v1307, 120
        %v1401 = vpop.permute.xlu0 %1400
        %1402 = vrot.lane.b32.xlu0 %v1310, 120
        %v1403 = vpop.permute.xlu0 %1402
        %1404 = vrot.lane.b32.xlu0 %v1312, 120
        %v1405 = vpop.permute.xlu0 %1404
        %1406 = vrot.lane.b32.xlu0 %v1315, 120
        %v1407 = vpop.permute.xlu0 %1406
        %1408 = vrot.lane.b32.xlu0 %v1317, 120
        %v1409 = vpop.permute.xlu0 %1408
        %1410 = vrot.lane.b32.xlu0 %v1320, 120
        %v1411 = vpop.permute.xlu0 %1410
        %1412 = vrot.lane.b32.xlu0 %v1322, 120
        %v1413 = vpop.permute.xlu0 %1412
        %v1422 = vsel %vm573, %v1399, 0.0
        %v1423 = vsel %vm573, %v1401, 0.0
        %v1424 = vadd.f32 %v1422, %v1423
        %v1425 = vsel %vm573, %v1403, 0.0
        %v1426 = vadd.f32 %v1424, %v1425
        %v1427 = vsel %vm573, %v1405, 0.0
        %v1428 = vadd.f32 %v1426, %v1427
        %v1429 = vsel %vm573, %v1407, 0.0
        %v1430 = vadd.f32 %v1428, %v1429
        %v1431 = vsel %vm573, %v1409, 0.0
        %v1432 = vadd.f32 %v1430, %v1431
        %v1433 = vsel %vm573, %v1411, 0.0
        %v1434 = vadd.f32 %v1432, %v1433
        %v1435 = vsel %vm573, %v1413, 0.0
        %v1436 = vadd.f32 %v1434, %v1435
        %1437 = vadd.xlane.f32.xlu0 %v1436
        %v1438 = vpop.xlane.xlu0 %1437
        %v1439 = vrot.slane %v1438, 4
        %v1440 = vadd.f32 %v1438, %v1439
        %v1441 = vrot.slane %v1440, 2
        %v1442 = vadd.f32 %v1440, %v1441
        %v1443 = vrot.slane %v1442, 1
        %v1444 = vadd.f32 %v1442, %v1443
        %s1445 = vtos %v1444
        %v1446 = vstv %s1445
        %v1447 = vmul.f32 %v1446, %v605
        %1456 = vrot.lane.b32.xlu0 %v1352, 120
        %v1457 = vpop.permute.xlu0 %1456
        %1458 = vrot.lane.b32.xlu0 %v1353, 120
        %v1459 = vpop.permute.xlu0 %1458
        %1460 = vrot.lane.b32.xlu0 %v1354, 120
        %v1461 = vpop.permute.xlu0 %1460
        %1462 = vrot.lane.b32.xlu0 %v1355, 120
        %v1463 = vpop.permute.xlu0 %1462
        %1464 = vrot.lane.b32.xlu0 %v1356, 120
        %v1465 = vpop.permute.xlu0 %1464
        %1466 = vrot.lane.b32.xlu0 %v1357, 120
        %v1467 = vpop.permute.xlu0 %1466
        %1468 = vrot.lane.b32.xlu0 %v1358, 120
        %v1469 = vpop.permute.xlu0 %1468
        %1470 = vrot.lane.b32.xlu0 %v1359, 120
        %v1471 = vpop.permute.xlu0 %1470
        %v1480 = vsel %vm573, %v1457, 0.0
        %v1481 = vsel %vm573, %v1459, 0.0
        %v1482 = vadd.f32 %v1480, %v1481
        %v1483 = vsel %vm573, %v1461, 0.0
        %v1484 = vadd.f32 %v1482, %v1483
        %v1485 = vsel %vm573, %v1463, 0.0
        %v1486 = vadd.f32 %v1484, %v1485
        %v1487 = vsel %vm573, %v1465, 0.0
        %v1488 = vadd.f32 %v1486, %v1487
        %v1489 = vsel %vm573, %v1467, 0.0
        %v1490 = vadd.f32 %v1488, %v1489
        %v1491 = vsel %vm573, %v1469, 0.0
        %v1492 = vadd.f32 %v1490, %v1491
        %v1493 = vsel %vm573, %v1471, 0.0
        %v1494 = vadd.f32 %v1492, %v1493
        %1495 = vadd.xlane.f32.xlu0 %v1494
        %v1496 = vpop.xlane.xlu0 %1495
        %v1497 = vrot.slane %v1496, 4
        %v1498 = vadd.f32 %v1496, %v1497
        %v1499 = vrot.slane %v1498, 2
        %v1500 = vadd.f32 %v1498, %v1499
        %v1501 = vrot.slane %v1500, 1
        %v1502 = vadd.f32 %v1500, %v1501
        %s1503 = vtos %v1502
        %v1504 = vstv %s1503
        %v1505 = vmul.f32 %v1504, %v605
        %v1506 = vmul.f32 %v1447, %v1447
        %v1507 = vsub.f32 %v1505, %v1506
        %v1508 = vsel %vm768, %v1447, %v1388
        %v1509 = vsel %vm768, %v1507, %v1389
        %v1510 = vadd.f32 %v1509, 1e-05
        %v1511 = vrsqrt.pop %v1510
        %v1512 = vmul.f32 %v1511, %v1510
        %v1513 = vmul.f32 %v1512, %v1511
        %v1514 = vmul.f32 0.5, %v1513
        %v1515 = vsub.f32 1.5, %v1514
        %v1516 = vmul.f32 %v1511, %v1515
        %vm1517 = vweird.f32 %v1510
        %vm1518 = vweird.f32 %v1511
        %vm1519 = vmor %vm1517, %vm1518
        %v1520 = vsel %vm1519, %v1511, %v1516
        %v1521 = vmul.f32 %v1324, %v1520
        %v1522 = vmul.f32 %v1508, %v1521
        %v1523 = vsub.f32 %v1325, %v1522
        %v1525 = vperm.slane %v1521, 0
        %v1527 = vmul.f32 %v1305, %v1525
        %v1528 = vmul.f32 %v1307, %v1525
        %v1529 = vmul.f32 %v1310, %v1525
        %v1530 = vmul.f32 %v1312, %v1525
        %v1531 = vmul.f32 %v1315, %v1525
        %v1532 = vmul.f32 %v1317, %v1525
        %v1533 = vmul.f32 %v1320, %v1525
        %v1534 = vmul.f32 %v1322, %v1525
        %v1536 = vperm.slane %v1523, 0
        %v1538 = vadd.f32 %v1527, %v1536
        %v1539 = vadd.f32 %v1528, %v1536
        %v1540 = vadd.f32 %v1529, %v1536
        %v1541 = vadd.f32 %v1530, %v1536
        %v1542 = vadd.f32 %v1531, %v1536
        %v1543 = vadd.f32 %v1532, %v1536
        %v1544 = vadd.f32 %v1533, %v1536
        %v1545 = vadd.f32 %v1534, %v1536
        %v1546 = vld [vmem:[%s457] sm:$0xf]
        %v1547 = vld [vmem:[%s457 + $0x4] sm:$0xf]
        %v1548 = vld [vmem:[%s457 + $0x8] sm:$0xf]
        %v1549 = vld [vmem:[%s457 + $0xc] sm:$0xf]
        %v1550 = vld [vmem:[%s457 + $0x10] sm:$0xf]
        %v1551 = vld [vmem:[%s457 + $0x14] sm:$0xf]
        %v1552 = vld [vmem:[%s457 + $0x18] sm:$0xf]
        %v1553 = vld [vmem:[%s457 + $0x1c] sm:$0xf]
        %v1554 = vld [vmem:[%s8] sm:$0xf]
        %v1563 = vunpack.c.l.b16 %v1546
        %v1564 = vunpack.c.l.b16 %v1547
        %v1565 = vunpack.c.l.b16 %v1548
        %v1566 = vunpack.c.l.b16 %v1549
        %v1567 = vunpack.c.l.b16 %v1550
        %v1568 = vunpack.c.l.b16 %v1551
        %v1569 = vunpack.c.l.b16 %v1552
        %v1570 = vunpack.c.l.b16 %v1553
        %v1571 = vpack.c.b16 %v1564, %v1563
        %v1572 = vpack.c.b16 %v1566, %v1565
        %v1573 = vpack.c.b16 %v1568, %v1567
        %v1574 = vpack.c.b16 %v1570, %v1569
        %v1576 = vsel %vm573, %v1571, 0
        %v1579 = vsel %vm573, %v1572, 0
        %v1582 = vsel %vm573, %v1573, 0
        %v1585 = vsel %vm573, %v1574, 0
        %v1588 = vsel %vm536, %v1554, 0
        %1590 = vmatpush.bf16.msra.mxu0 0
        %1591 = vmatpush.bf16.msra.mxu0 0
        %1592 = vmatpush.bf16.msra.mxu0 0
        %1593 = vmatpush.bf16.msra.mxu0 0
        %1594 = vmatpush.bf16.msra.mxu0 0
        %1595 = vmatpush.bf16.msra.mxu0 0
        %1596 = vmatpush.bf16.msra.mxu0 0
        %1597 = vmatpush.bf16.msra.mxu0 %v1588
        %1598 = vmatmul.bf16.gmra.mxu0 %v1576
        %v1599 = vpop.f32.mrf.mxu0
        %v1600 = vadd.f32 0.0, %v1599
        %v1601 = vpop.f32.mrf.mxu0
        %v1602 = vadd.f32 0.0, %v1601
        %1603 = vmatmul.bf16.gmra.mxu0 %v1579
        %v1604 = vpop.f32.mrf.mxu0
        %v1605 = vadd.f32 0.0, %v1604
        %v1606 = vpop.f32.mrf.mxu0
        %v1607 = vadd.f32 0.0, %v1606
        %1608 = vmatmul.bf16.gmra.mxu0 %v1582
        %v1609 = vpop.f32.mrf.mxu0
        %v1610 = vadd.f32 0.0, %v1609
        %v1611 = vpop.f32.mrf.mxu0
        %v1612 = vadd.f32 0.0, %v1611
        %1613 = vmatmul.bf16.gmra.mxu0 %v1585
        %v1614 = vpop.f32.mrf.mxu0
        %v1615 = vadd.f32 0.0, %v1614
        %v1616 = vpop.f32.mrf.mxu0
        %v1617 = vadd.f32 0.0, %v1616
        %1618 = vdwg.mxu0
        %v1619 = vld [vmem:[%s9] sm:$0x1]
        %v1620 = vld [vmem:[%s10] sm:$0x1]
        %v1621 = vsel %vm573, %v1600, 0.0
        %v1622 = vsel %vm573, %v1602, 0.0
        %v1623 = vadd.f32 %v1621, %v1622
        %v1624 = vsel %vm573, %v1605, 0.0
        %v1625 = vadd.f32 %v1623, %v1624
        %v1626 = vsel %vm573, %v1607, 0.0
        %v1627 = vadd.f32 %v1625, %v1626
        %v1628 = vsel %vm573, %v1610, 0.0
        %v1629 = vadd.f32 %v1627, %v1628
        %v1630 = vsel %vm573, %v1612, 0.0
        %v1631 = vadd.f32 %v1629, %v1630
        %v1632 = vsel %vm573, %v1615, 0.0
        %v1633 = vadd.f32 %v1631, %v1632
        %v1634 = vsel %vm573, %v1617, 0.0
        %v1635 = vadd.f32 %v1633, %v1634
        %1636 = vadd.xlane.f32.xlu0 %v1635
        %v1637 = vpop.xlane.xlu0 %1636
        %v1638 = vrot.slane %v1637, 4
        %v1639 = vadd.f32 %v1637, %v1638
        %v1640 = vrot.slane %v1639, 2
        %v1641 = vadd.f32 %v1639, %v1640
        %v1642 = vrot.slane %v1641, 1
        %v1643 = vadd.f32 %v1641, %v1642
        %s1644 = vtos %v1643
        %v1645 = vstv %s1644
        %v1646 = vmul.f32 %v1645, %v605
        %v1647 = vmul.f32 %v1600, %v1600
        %v1648 = vmul.f32 %v1602, %v1602
        %v1649 = vmul.f32 %v1605, %v1605
        %v1650 = vmul.f32 %v1607, %v1607
        %v1651 = vmul.f32 %v1610, %v1610
        %v1652 = vmul.f32 %v1612, %v1612
        %v1653 = vmul.f32 %v1615, %v1615
        %v1654 = vmul.f32 %v1617, %v1617
        %v1655 = vsel %vm573, %v1647, 0.0
        %v1656 = vsel %vm573, %v1648, 0.0
        %v1657 = vadd.f32 %v1655, %v1656
        %v1658 = vsel %vm573, %v1649, 0.0
        %v1659 = vadd.f32 %v1657, %v1658
        %v1660 = vsel %vm573, %v1650, 0.0
        %v1661 = vadd.f32 %v1659, %v1660
        %v1662 = vsel %vm573, %v1651, 0.0
        %v1663 = vadd.f32 %v1661, %v1662
        %v1664 = vsel %vm573, %v1652, 0.0
        %v1665 = vadd.f32 %v1663, %v1664
        %v1666 = vsel %vm573, %v1653, 0.0
        %v1667 = vadd.f32 %v1665, %v1666
        %v1668 = vsel %vm573, %v1654, 0.0
        %v1669 = vadd.f32 %v1667, %v1668
        %1670 = vadd.xlane.f32.xlu0 %v1669
        %v1671 = vpop.xlane.xlu0 %1670
        %v1672 = vrot.slane %v1671, 4
        %v1673 = vadd.f32 %v1671, %v1672
        %v1674 = vrot.slane %v1673, 2
        %v1675 = vadd.f32 %v1673, %v1674
        %v1676 = vrot.slane %v1675, 1
        %v1677 = vadd.f32 %v1675, %v1676
        %s1678 = vtos %v1677
        %v1679 = vstv %s1678
        %v1680 = vmul.f32 %v1679, %v605
        %v1681 = vmul.f32 %v1646, %v1646
        %v1682 = vsub.f32 %v1680, %v1681
        %v1683 = vsel %vm645, %v1646, 0.0
        %v1684 = vsel %vm645, %v1682, 0.0
        %1693 = vrot.lane.b32.xlu0 %v1600, 120
        %v1694 = vpop.permute.xlu0 %1693
        %1695 = vrot.lane.b32.xlu0 %v1602, 120
        %v1696 = vpop.permute.xlu0 %1695
        %1697 = vrot.lane.b32.xlu0 %v1605, 120
        %v1698 = vpop.permute.xlu0 %1697
        %1699 = vrot.lane.b32.xlu0 %v1607, 120
        %v1700 = vpop.permute.xlu0 %1699
        %1701 = vrot.lane.b32.xlu0 %v1610, 120
        %v1702 = vpop.permute.xlu0 %1701
        %1703 = vrot.lane.b32.xlu0 %v1612, 120
        %v1704 = vpop.permute.xlu0 %1703
        %1705 = vrot.lane.b32.xlu0 %v1615, 120
        %v1706 = vpop.permute.xlu0 %1705
        %1707 = vrot.lane.b32.xlu0 %v1617, 120
        %v1708 = vpop.permute.xlu0 %1707
        %v1717 = vsel %vm573, %v1694, 0.0
        %v1718 = vsel %vm573, %v1696, 0.0
        %v1719 = vadd.f32 %v1717, %v1718
        %v1720 = vsel %vm573, %v1698, 0.0
        %v1721 = vadd.f32 %v1719, %v1720
        %v1722 = vsel %vm573, %v1700, 0.0
        %v1723 = vadd.f32 %v1721, %v1722
        %v1724 = vsel %vm573, %v1702, 0.0
        %v1725 = vadd.f32 %v1723, %v1724
        %v1726 = vsel %vm573, %v1704, 0.0
        %v1727 = vadd.f32 %v1725, %v1726
        %v1728 = vsel %vm573, %v1706, 0.0
        %v1729 = vadd.f32 %v1727, %v1728
        %v1730 = vsel %vm573, %v1708, 0.0
        %v1731 = vadd.f32 %v1729, %v1730
        %1732 = vadd.xlane.f32.xlu0 %v1731
        %v1733 = vpop.xlane.xlu0 %1732
        %v1734 = vrot.slane %v1733, 4
        %v1735 = vadd.f32 %v1733, %v1734
        %v1736 = vrot.slane %v1735, 2
        %v1737 = vadd.f32 %v1735, %v1736
        %v1738 = vrot.slane %v1737, 1
        %v1739 = vadd.f32 %v1737, %v1738
        %s1740 = vtos %v1739
        %v1741 = vstv %s1740
        %v1742 = vmul.f32 %v1741, %v605
        %1751 = vrot.lane.b32.xlu0 %v1647, 120
        %v1752 = vpop.permute.xlu0 %1751
        %1753 = vrot.lane.b32.xlu0 %v1648, 120
        %v1754 = vpop.permute.xlu0 %1753
        %1755 = vrot.lane.b32.xlu0 %v1649, 120
        %v1756 = vpop.permute.xlu0 %1755
        %1757 = vrot.lane.b32.xlu0 %v1650, 120
        %v1758 = vpop.permute.xlu0 %1757
        %1759 = vrot.lane.b32.xlu0 %v1651, 120
        %v1760 = vpop.permute.xlu0 %1759
        %1761 = vrot.lane.b32.xlu0 %v1652, 120
        %v1762 = vpop.permute.xlu0 %1761
        %1763 = vrot.lane.b32.xlu0 %v1653, 120
        %v1764 = vpop.permute.xlu0 %1763
        %1765 = vrot.lane.b32.xlu0 %v1654, 120
        %v1766 = vpop.permute.xlu0 %1765
        %v1775 = vsel %vm573, %v1752, 0.0
        %v1776 = vsel %vm573, %v1754, 0.0
        %v1777 = vadd.f32 %v1775, %v1776
        %v1778 = vsel %vm573, %v1756, 0.0
        %v1779 = vadd.f32 %v1777, %v1778
        %v1780 = vsel %vm573, %v1758, 0.0
        %v1781 = vadd.f32 %v1779, %v1780
        %v1782 = vsel %vm573, %v1760, 0.0
        %v1783 = vadd.f32 %v1781, %v1782
        %v1784 = vsel %vm573, %v1762, 0.0
        %v1785 = vadd.f32 %v1783, %v1784
        %v1786 = vsel %vm573, %v1764, 0.0
        %v1787 = vadd.f32 %v1785, %v1786
        %v1788 = vsel %vm573, %v1766, 0.0
        %v1789 = vadd.f32 %v1787, %v1788
        %1790 = vadd.xlane.f32.xlu0 %v1789
        %v1791 = vpop.xlane.xlu0 %1790
        %v1792 = vrot.slane %v1791, 4
        %v1793 = vadd.f32 %v1791, %v1792
        %v1794 = vrot.slane %v1793, 2
        %v1795 = vadd.f32 %v1793, %v1794
        %v1796 = vrot.slane %v1795, 1
        %v1797 = vadd.f32 %v1795, %v1796
        %s1798 = vtos %v1797
        %v1799 = vstv %s1798
        %v1800 = vmul.f32 %v1799, %v605
        %v1801 = vmul.f32 %v1742, %v1742
        %v1802 = vsub.f32 %v1800, %v1801
        %v1803 = vsel %vm768, %v1742, %v1683
        %v1804 = vsel %vm768, %v1802, %v1684
        %v1805 = vadd.f32 %v1804, 1e-05
        %v1806 = vrsqrt.pop %v1805
        %v1807 = vmul.f32 %v1806, %v1805
        %v1808 = vmul.f32 %v1807, %v1806
        %v1809 = vmul.f32 0.5, %v1808
        %v1810 = vsub.f32 1.5, %v1809
        %v1811 = vmul.f32 %v1806, %v1810
        %vm1812 = vweird.f32 %v1805
        %vm1813 = vweird.f32 %v1806
        %vm1814 = vmor %vm1812, %vm1813
        %v1815 = vsel %vm1814, %v1806, %v1811
        %v1816 = vmul.f32 %v1619, %v1815
        %v1817 = vmul.f32 %v1803, %v1816
        %v1818 = vsub.f32 %v1620, %v1817
        %v1820 = vperm.slane %v1816, 0
        %v1822 = vmul.f32 %v1600, %v1820
        %v1823 = vmul.f32 %v1602, %v1820
        %v1824 = vmul.f32 %v1605, %v1820
        %v1825 = vmul.f32 %v1607, %v1820
        %v1826 = vmul.f32 %v1610, %v1820
        %v1827 = vmul.f32 %v1612, %v1820
        %v1828 = vmul.f32 %v1615, %v1820
        %v1829 = vmul.f32 %v1617, %v1820
        %v1831 = vperm.slane %v1818, 0
        %v1833 = vadd.f32 %v1822, %v1831
        %v1834 = vadd.f32 %v1823, %v1831
        %v1835 = vadd.f32 %v1824, %v1831
        %v1836 = vadd.f32 %v1825, %v1831
        %v1837 = vadd.f32 %v1826, %v1831
        %v1838 = vadd.f32 %v1827, %v1831
        %v1839 = vadd.f32 %v1828, %v1831
        %v1840 = vadd.f32 %v1829, %v1831
        %v1841 = vadd.f32 %v1538, %v1833
        %v1842 = vadd.f32 %v1539, %v1834
        %v1843 = vadd.f32 %v1540, %v1835
        %v1844 = vadd.f32 %v1541, %v1836
        %v1845 = vadd.f32 %v1542, %v1837
        %v1846 = vadd.f32 %v1543, %v1838
        %v1847 = vadd.f32 %v1544, %v1839
        %v1848 = vadd.f32 %v1545, %v1840
        %v1849 = vmax.f32 %v1841, 0.0
        %v1850 = vmax.f32 %v1842, 0.0
        %v1851 = vmax.f32 %v1843, 0.0
        %v1852 = vmax.f32 %v1844, 0.0
        %v1853 = vmax.f32 %v1845, 0.0
        %v1854 = vmax.f32 %v1846, 0.0
        %v1855 = vmax.f32 %v1847, 0.0
        %v1856 = vmax.f32 %v1848, 0.0
        %v1857 = vsel %vm1111, %v1849, 0.0
        %v1858 = vsel %vm1111, %v1850, 0.0
        %v1859 = vadd.f32 %v1857, %v1858
        %v1860 = vsel %vm1111, %v1851, 0.0
        %v1861 = vadd.f32 %v1859, %v1860
        %v1862 = vsel %vm1111, %v1852, 0.0
        %v1863 = vadd.f32 %v1861, %v1862
        %v1864 = vsel %vm1111, %v1853, 0.0
        %v1865 = vadd.f32 %v1863, %v1864
        %v1866 = vsel %vm1111, %v1854, 0.0
        %v1867 = vadd.f32 %v1865, %v1866
        %v1868 = vsel %vm1111, %v1855, 0.0
        %v1869 = vadd.f32 %v1867, %v1868
        %v1870 = vsel %vm1111, %v1856, 0.0
        %v1871 = vadd.f32 %v1869, %v1870
        %v1872 = vrot.slane %v1871, 4
        %v1873 = vadd.f32 %v1871, %v1872
        %v1874 = vrot.slane %v1873, 2
        %v1875 = vadd.f32 %v1873, %v1874
        %v1876 = vrot.slane %v1875, 1
        %v1877 = vadd.f32 %v1875, %v1876
        %v1878 = vrcp.pop 64.0
        %v1879 = vmul.f32 64.0, %v1878
        %v1880 = vsub.f32 1.0, %v1879
        %v1881 = vmul.f32 %v1878, %v1880
        %v1882 = vadd.f32 %v1878, %v1881
        %vm1883 = vweird.f32 %v1878
        %v1884 = vsel %vm1883, %v1878, %v1882
        %v1885 = vmul.f32 %v1877, %v1884
        %v1886 = vld [vmem:[%s11] sm:$0xff]
        %v1887 = vld [vmem:[%s11 + $0x8] sm:$0xff]
        %v1888 = vld [vmem:[%s12] sm:$0x1]
        %v1890 = vsel %vm1111, %v1885, 0
        %1892 = vmatpush.msra.mxu0 0.0
        %1893 = vmatpush.msra.mxu0 0.0
        %1894 = vmatpush.msra.mxu0 0.0
        %1895 = vmatpush.msra.mxu0 0.0
        %1896 = vmatpush.msra.mxu0 0.0
        %1897 = vmatpush.msra.mxu0 0.0
        %1898 = vmatpush.msra.mxu0 0.0
        %1899 = vmatpush.msra.mxu0 0.0
        %1900 = vmatpush.msra.mxu0 0.0
        %1901 = vmatpush.msra.mxu0 0.0
        %1902 = vmatpush.msra.mxu0 0.0
        %1903 = vmatpush.msra.mxu0 0.0
        %1904 = vmatpush.msra.mxu0 0.0
        %1905 = vmatpush.msra.mxu0 0.0
        %1906 = vmatpush.msra.mxu0 %v1887
        %1907 = vmatpush.msra.mxu0 %v1886
        %1908 = vmatmul.f32.gmra.mxu0 %v1890
        %v1909 = vpop.f32.mrf.mxu0
        %v1910 = vadd.f32 %v1888, %v1909
        %1911 = vdwg.mxu0
        %vm1912 = vcmask 73728
        %1913 = vst.msk [vmem:[%s447] sm:$0x1] %vm1912, %v1910
        %s1914 = sand.u32 %s318, 1
        %s1915 = scalar_lea.sflag [#allocation3], %s1914
        %s1916 = sand.u32 %s318, 1
        %s1917 = scalar_lea.vmem [#allocation2], %s1916
        // Predicated region
        $region73: #{resnet_forward.5} parent=71 // pred_check
          %p1918 = pneg %p328
        $region74: #{resnet_forward.5} parent=71 // pred_check_branch
          %1920 = sbr.rel (%p1918) target = $region76
        $region75: #{resnet_forward.5} parent=71 // pred_region
          %1922 = vsyncadd %s1915, 0
          %s1923 = scalar_lea.hbm %s13, %s27
          %s1925 = sshll.u32 %s1917, 4
          %s1926 = int_to_ptr.vmem [resolvable:$true] %s1925
          %s1927 = sshll.u32 %s1923, 4
          %s1928 = int_to_ptr.hbm [resolvable:$true] %s1927
          %1930 = dma.vmem_to_hbm [thread:$0]  %s1926, 16, %s1928, %s1915
        $region76: #{resnet_forward.5} parent=71 // pred_fallthru
          _
      $region72: #{resnet_forward.5} parent=5 // pred_fallthru
        _
      %p1931 = scmp.le.s32.totalorder 2, %s22
      // Predicated region
      $region77: #{resnet_forward.5} parent=5 // pred_check
        %p1932 = pneg %p1931
      $region78: #{resnet_forward.5} parent=5 // pred_check_branch
        %1934 = sbr.rel (%p1932) target = $region80
      $region79: #{resnet_forward.5} parent=5 // pred_region
        %s1935 = ssub.s32 %s22, 2
        // Predicated region
        $region81: #{resnet_forward.5} parent=79 // pred_check
          %p1936 = pneg %p334
        $region82: #{resnet_forward.5} parent=79 // pred_check_branch
          %1938 = sbr.rel (%p1936) target = $region84
        $region83: #{resnet_forward.5} parent=79 // pred_region
          %s1939 = sand.u32 %s319, 1
          %s1940 = scalar_lea.sflag [#allocation3], %s1939
          %s1941 = sand.u32 %s319, 1
          %s1942 = scalar_lea.vmem [#allocation2], %s1941
          %1944 = dma.done %s1940, 16
        $region84: #{resnet_forward.5} parent=79 // pred_fallthru
          _
      $region80: #{resnet_forward.5} parent=5 // pred_fallthru
        _
    $region6: #{resnet_forward.5} parent=1 // loop_footer
      %s26 = sadd.s32 1, %s22
    $region7: #{resnet_forward.5} parent=1 // loop_footer_branch
      %21 = sbr.rel target = $region3
    $region8: #{resnet_forward.5} parent=1 // loop_exit
      _
    %1945 = vsyncpa [#allocation3], 1
    %s1946 = scalar_lea.sflag [#allocation3], 1
    %1947 = vsyncpa %s1946, 1

</llo_original>
